<compile_context>
chip_gen: v6e
topology: v6e:2x2x1
jax: 0.10.0
libtpu: 0.0.40
codegen_flags: <defaults>
</compile_context>

<pallas_src>
import functools

import jax
import jax.numpy as jnp
from jax.experimental import pallas as pl
from jax.experimental.pallas import tpu as pltpu


LANE = 128


def _pad_to(c, m=LANE):
    return ((c + m - 1) // m) * m


def _tpu_vmem_bytes():
    # 128 MiB on v5e/v6e, 64 MiB per TensorCore on v7x; conservative fallback.
    try:
        return int(pltpu.get_tpu_info().vmem_capacity_bytes)
    except Exception:
        return 64 * 1024 * 1024


_VMEM_CAP = _tpu_vmem_bytes()
VMEM_LIMIT = (_VMEM_CAP * 3) // 4                 # ~75% soft guard per generation
_BIG_VMEM = _VMEM_CAP >= (100 << 20)              # v5e / v6e
TILE_M_DEFAULT = 2048 if _BIG_VMEM else 1024      # 1x1-conv row tiles
TILE_HW_DEFAULT = 1024 if _BIG_VMEM else 512


def _cparams(semantics):
    return pltpu.CompilerParams(dimension_semantics=semantics,
                                vmem_limit_bytes=VMEM_LIMIT)


def _pick_tile(m, want, unit=8):
    """Largest row tile <= want, but force >=2 grid steps (v7x megacore)."""
    tm = max(unit, min(want, m))
    if m > unit and pl.cdiv(m, tm) < 2:
        half = (((m + 1) // 2) + unit - 1) // unit * unit
        tm = min(half, m)
    return tm


def _pick_row_tile(h, w, c):
    """Rows per depthwise tile: bound the bf16 halo scratch plus the pipelined
    output blocks to a slice of VMEM, and keep >=2 row tiles when possible."""
    budget = max(VMEM_LIMIT // 6, 1 << 20)
    per_row = w * c * 2 * 3              # scratch row + double-buffered out rows
    max_rows = max(1, budget // per_row)
    th = 1
    for d in range(1, h + 1):
        if h % d == 0 and d <= max_rows:
            th = d
    if th == h and h > 1:                # ensure >=2 row tiles (pipeline / megacore)
        th = max(d for d in range(1, h) if h % d == 0)
    return th


# ----------------------------------------------------------------------------
# Kernel 1: row-tiled matmul + folded BN + optional swish  (stem & expand 1x1)
# ----------------------------------------------------------------------------

def _matmul_bn_act_kernel(x_ref, w_ref, scale_ref, bias_ref, o_ref, *, act):
    # x: [TM, K] bf16, w: [K, N] bf16 (resident), scale/bias: [1, N] f32
    y = jnp.dot(x_ref[...], w_ref[...], preferred_element_type=jnp.float32)
    y = y * scale_ref[...] + bias_ref[...]
    if act == "swish":
        y = y * jax.nn.sigmoid(y)
    o_ref[...] = y.astype(o_ref.dtype)


def matmul_bn_act(x, w, scale, bias, act="none", tile_m=None):
    m, k = x.shape
    k2, n = w.shape
    assert k == k2
    tm = _pick_tile(m, tile_m or TILE_M_DEFAULT)
    kern = functools.partial(_matmul_bn_act_kernel, act=act)
    return pl.pallas_call(
        kern,
        out_shape=jax.ShapeDtypeStruct((m, n), jnp.bfloat16),
        grid=(pl.cdiv(m, tm),),
        in_specs=[
            pl.BlockSpec((tm, k), lambda i: (i, 0)),
            pl.BlockSpec((k, n), lambda i: (0, 0)),      # weight stays resident
            pl.BlockSpec((1, n), lambda i: (0, 0)),
            pl.BlockSpec((1, n), lambda i: (0, 0)),
        ],
        out_specs=pl.BlockSpec((tm, n), lambda i: (i, 0)),
        compiler_params=_cparams(("parallel",)),
    )(x, w, scale.reshape(1, n), bias.reshape(1, n))


# ----------------------------------------------------------------------------
# Kernel 2: row-tiled depthwise 3x3 + BN + swish, with the global average pool
#           accumulated across row tiles and the squeeze-excite MLP fused into
#           the last-tile epilogue.  Input stays in HBM (memory_space=pl.ANY);
#           each step DMAs its TH-row tile plus a 1-row halo into a bf16
#           scratch (only the image-border halo rows are zeroed).
# ----------------------------------------------------------------------------

def _dwconv_se_kernel(x_hbm, k_ref, scale_ref, bias_ref,
                      w1_ref, b1_ref, w2_ref, b2_ref,
                      y_ref, g_ref, xp_ref, pool_ref, *, th, inv_hw):
    b = pl.program_id(0)
    i = pl.program_id(1)
    nt = pl.num_programs(1)
    w = xp_ref.shape[1]
    c = xp_ref.shape[2]
    row0 = i * th

    # --- fetch current TH-row tile + 1-row halos into the bf16 VMEM scratch ---
    pltpu.sync_copy(x_hbm.at[b, pl.ds(row0, th), :, :],
                    xp_ref.at[pl.ds(1, th), :, :])

    @pl.when(i > 0)
    def _():
        pltpu.sync_copy(x_hbm.at[b, pl.ds(row0 - 1, 1), :, :],
                        xp_ref.at[pl.ds(0, 1), :, :])

    @pl.when(i == 0)
    def _():
        xp_ref[0] = jnp.zeros((w, c), xp_ref.dtype)       # top image-border halo

    @pl.when(i < nt - 1)
    def _():
        pltpu.sync_copy(x_hbm.at[b, pl.ds(row0 + th, 1), :, :],
                        xp_ref.at[pl.ds(th + 1, 1), :, :])

    @pl.when(i == nt - 1)
    def _():
        xp_ref[th + 1] = jnp.zeros((w, c), xp_ref.dtype)  # bottom image-border halo

    # --- 9-tap depthwise MAC: bf16 multiplies, f32 accumulation ---
    xs = xp_ref[...]                                      # (TH+2, W, C) bf16
    zc = jnp.zeros((th + 2, 1, c), xs.dtype)
    cols = (jnp.concatenate([zc, xs[:, :w - 1, :]], axis=1),   # column j-1
            xs,                                                # column j
            jnp.concatenate([xs[:, 1:, :], zc], axis=1))       # column j+1
    k = k_ref[...]                                        # (9, C) bf16, hoisted once
    acc = jnp.zeros((th, w, c), jnp.float32)
    for dy in range(3):
        for dx in range(3):
            acc = acc + (cols[dx][dy:dy + th] * k[dy * 3 + dx]).astype(jnp.float32)

    y = acc * scale_ref[...] + bias_ref[...]              # folded BN
    y = y * jax.nn.sigmoid(y)                             # swish
    y_ref[0] = y.astype(y_ref.dtype)

    # --- fused global average pool: partial sums across row tiles ---
    @pl.when(i == 0)
    def _():
        pool_ref[...] = jnp.zeros_like(pool_ref)

    pool_ref[...] += jnp.sum(y, axis=(0, 1)).reshape(1, c)

    # --- fused squeeze-excite MLP on the last row tile (pooled vec is resident) ---
    @pl.when(i == nt - 1)
    def _():
        pooled = pool_ref[...] * inv_hw                   # mean over full H*W
        s = jnp.dot(pooled, w1_ref[...], preferred_element_type=jnp.float32)
        s = s + b1_ref[...]
        s = s * jax.nn.sigmoid(s)                         # swish
        g = jnp.dot(s, w2_ref[...], preferred_element_type=jnp.float32)
        g = g + b2_ref[...]
        g_ref[0] = jax.nn.sigmoid(g).astype(g_ref.dtype)  # SE gate, bf16


def dwconv3x3_bn_swish_se(x, k9c, scale, bias, w1, b1, w2, b2):
    n, h, w, c = x.shape
    th = _pick_row_tile(h, w, c)
    nt = h // th
    cse = w1.shape[1]
    kern = functools.partial(_dwconv_se_kernel, th=th, inv_hw=1.0 / float(h * w))
    y, gate = pl.pallas_call(
        kern,
        out_shape=(jax.ShapeDtypeStruct((n, h, w, c), jnp.bfloat16),
                   jax.ShapeDtypeStruct((n, 1, c), jnp.bfloat16)),
        grid=(n, nt),
        in_specs=[
            pl.BlockSpec(memory_space=pl.ANY),            # full activation in HBM
            pl.BlockSpec((9, c), lambda b, i: (0, 0)),
            pl.BlockSpec((1, c), lambda b, i: (0, 0)),
            pl.BlockSpec((1, c), lambda b, i: (0, 0)),
            pl.BlockSpec((c, cse), lambda b, i: (0, 0)),
            pl.BlockSpec((1, cse), lambda b, i: (0, 0)),
            pl.BlockSpec((cse, c), lambda b, i: (0, 0)),
            pl.BlockSpec((1, c), lambda b, i: (0, 0)),
        ],
        out_specs=(pl.BlockSpec((1, th, w, c), lambda b, i: (b, i, 0, 0)),
                   pl.BlockSpec((1, 1, c), lambda b, i: (b, 0, 0))),
        scratch_shapes=[pltpu.VMEM((th + 2, w, c), jnp.bfloat16),
                        pltpu.VMEM((1, c), jnp.float32)],
        compiler_params=_cparams(("parallel", "arbitrary")),
    )(x, k9c, scale.reshape(1, c), bias.reshape(1, c),
      w1, b1.reshape(1, cse), w2, b2.reshape(1, c))
    return y, gate


# ----------------------------------------------------------------------------
# Kernel 3: fused SE gating * x -> project 1x1 conv + BN -> (+ residual)
# ----------------------------------------------------------------------------

def _gate_proj_res_kernel(*refs, has_skip):
    if has_skip:
        x_ref, g_ref, w_ref, scale_ref, bias_ref, skip_ref, o_ref = refs
    else:
        x_ref, g_ref, w_ref, scale_ref, bias_ref, o_ref = refs
    xg = x_ref[0] * g_ref[0]                     # SE gating kept in bf16
    y = jnp.dot(xg, w_ref[...], preferred_element_type=jnp.float32)
    y = y * scale_ref[...] + bias_ref[...]       # folded BN
    if has_skip:
        y = y + skip_ref[0].astype(jnp.float32)  # fused residual add
    o_ref[0] = y.astype(o_ref.dtype)


def gate_project_residual(x, gate, w, scale, bias, skip=None, tile_hw=None):
    n, hw, cexp = x.shape
    cout = w.shape[1]
    t = _pick_tile(hw, tile_hw or TILE_HW_DEFAULT)
    has_skip = skip is not None
    in_specs = [
        pl.BlockSpec((1, t, cexp), lambda b, i: (b, i, 0)),
        pl.BlockSpec((1, 1, cexp), lambda b, i: (b, 0, 0)),
        pl.BlockSpec((cexp, cout), lambda b, i: (0, 0)),   # weight resident
        pl.BlockSpec((1, cout), lambda b, i: (0, 0)),
        pl.BlockSpec((1, cout), lambda b, i: (0, 0)),
    ]
    args = [x, gate, w, scale.reshape(1, cout), bias.reshape(1, cout)]
    if has_skip:
        in_specs.append(pl.BlockSpec((1, t, cout), lambda b, i: (b, i, 0)))
        args.append(skip)
    kern = functools.partial(_gate_proj_res_kernel, has_skip=has_skip)
    return pl.pallas_call(
        kern,
        out_shape=jax.ShapeDtypeStruct((n, hw, cout), jnp.bfloat16),
        grid=(n, pl.cdiv(hw, t)),
        in_specs=in_specs,
        out_specs=pl.BlockSpec((1, t, cout), lambda b, i: (b, i, 0)),
        compiler_params=_cparams(("parallel", "parallel")),
    )(*args)


# ----------------------------------------------------------------------------
# Glue: im2col for the stem conv (see TODO at top of file).
# ----------------------------------------------------------------------------

def im2col_3x3(x_nhwc, stride):
    # TF-style SAME padding (matches EfficientNet's Conv2dStaticSamePadding).
    n, h, w, c = x_nhwc.shape
    oh = -(-h // stride)
    ow = -(-w // stride)
    pad_h = max((oh - 1) * stride + 3 - h, 0)
    pad_w = max((ow - 1) * stride + 3 - w, 0)
    xp = jnp.pad(x_nhwc, ((0, 0),
                          (pad_h // 2, pad_h - pad_h // 2),
                          (pad_w // 2, pad_w - pad_w // 2),
                          (0, 0)))
    cols = []
    for dy in range(3):
        for dx in range(3):
            cols.append(xp[:, dy:dy + (oh - 1) * stride + 1:stride,
                           dx:dx + (ow - 1) * stride + 1:stride, :])
    patches = jnp.concatenate(cols, axis=-1)               # [N, OH, OW, 9*C]
    return patches.reshape(n * oh * ow, 9 * c), oh, ow


# ----------------------------------------------------------------------------
# Parameters (deterministic, synthetic; BN folded; channels padded to 128)
# ----------------------------------------------------------------------------

BLOCK_CFG = [(32, 32, 4, 0.25),
             (32, 48, 4, 0.25),
             (48, 48, 4, 0.25),
             (48, 48, 4, 0.25)]
STEM_OUT = 32
DROP_CONNECT_RATE = 0.2  # mirrors _global_params.drop_connect_rate (eval: no-op)


def _pad1(a, n):
    return jnp.pad(a, (0, n - a.shape[0]))


def _pad2(a, r, c):
    return jnp.pad(a, ((0, r - a.shape[0]), (0, c - a.shape[1])))


def _fold_bn(key, c, c_pad, eps=1e-3):
    k1, k2, k3, k4 = jax.random.split(key, 4)
    gamma = 1.0 + 0.1 * jax.random.normal(k1, (c,), jnp.float32)
    beta = 0.1 * jax.random.normal(k2, (c,), jnp.float32)
    mean = 0.1 * jax.random.normal(k3, (c,), jnp.float32)
    var = jnp.abs(jax.random.normal(k4, (c,), jnp.float32)) + 0.5
    scale = gamma / jnp.sqrt(var + eps)
    bias = beta - mean * scale
    return _pad1(scale, c_pad), _pad1(bias, c_pad)   # pads stay exactly zero


def init_params(key, cin_img=3):
    keys = iter(jax.random.split(key, 64))
    params = {}
    stem_p = _pad_to(STEM_OUT)
    stem_w = 0.1 * jax.random.normal(next(keys), (9 * cin_img, STEM_OUT), jnp.float32)
    s, b = _fold_bn(next(keys), STEM_OUT, stem_p)
    params["stem"] = dict(w=_pad2(stem_w, 9 * cin_img, stem_p).astype(jnp.bfloat16),
                          scale=s, bias=b)

    blocks = []
    for (cin, cout, er, sr) in BLOCK_CFG:
        cexp = cin * er
        cse = max(1, int(cin * sr))
        cin_p, cout_p, cexp_p, cse_p = (_pad_to(cin), _pad_to(cout),
                                        _pad_to(cexp), _pad_to(cse))
        bp = {}
        w = 0.1 * jax.random.normal(next(keys), (cin, cexp), jnp.float32)
        bp["expand_w"] = _pad2(w, cin_p, cexp_p).astype(jnp.bfloat16)
        bp["expand_scale"], bp["expand_bias"] = _fold_bn(next(keys), cexp, cexp_p)
        k9 = 0.1 * jax.random.normal(next(keys), (9, cexp), jnp.float32)
        bp["dw_k"] = _pad2(k9, 9, cexp_p).astype(jnp.bfloat16)
        bp["dw_scale"], bp["dw_bias"] = _fold_bn(next(keys), cexp, cexp_p)
        w1 = 0.1 * jax.random.normal(next(keys), (cexp, cse), jnp.float32)
        bp["se_w1"] = _pad2(w1, cexp_p, cse_p)          # SE kept f32 (tiny)
        bp["se_b1"] = _pad1(0.01 * jax.random.normal(next(keys), (cse,), jnp.float32), cse_p)
        w2 = 0.1 * jax.random.normal(next(keys), (cse, cexp), jnp.float32)
        bp["se_w2"] = _pad2(w2, cse_p, cexp_p)
        bp["se_b2"] = _pad1(0.01 * jax.random.normal(next(keys), (cexp,), jnp.float32), cexp_p)
        wp = 0.1 * jax.random.normal(next(keys), (cexp, cout), jnp.float32)
        bp["proj_w"] = _pad2(wp, cexp_p, cout_p).astype(jnp.bfloat16)
        bp["proj_scale"], bp["proj_bias"] = _fold_bn(next(keys), cout, cout_p)
        bp["has_skip"] = (cin == cout)                  # stride 1 + same channels
        bp["real_cout"] = cout
        blocks.append(bp)
    params["blocks"] = blocks
    return params


# ----------------------------------------------------------------------------
# Forward pass (mirrors FeatureExtractor.forward)
# ----------------------------------------------------------------------------

def mbconv_block(p, x):
    n, h, w, cin_p = x.shape
    inp = x
    cexp_p = p["expand_w"].shape[1]
    # expand 1x1 conv + BN + swish (row-tiled matmul)
    y = matmul_bn_act(x.reshape(n * h * w, cin_p), p["expand_w"],
                      p["expand_scale"], p["expand_bias"], act="swish")
    x = y.reshape(n, h, w, cexp_p)
    # row-tiled depthwise 3x3 + BN + swish; pool + squeeze-excite MLP fused in
    x, gate = dwconv3x3_bn_swish_se(x, p["dw_k"], p["dw_scale"], p["dw_bias"],
                                    p["se_w1"], p["se_b1"],
                                    p["se_w2"], p["se_b2"])   # gate: (N, 1, Cexp) bf16
    # fused: gate * x -> project 1x1 conv + BN -> (+ residual)
    # (drop_connect would precede the residual in training; identity at eval)
    cout_p = p["proj_w"].shape[1]
    skip = inp.reshape(n, h * w, cin_p) if p["has_skip"] else None
    y = gate_project_residual(x.reshape(n, h * w, cexp_p), gate,
                              p["proj_w"], p["proj_scale"], p["proj_bias"],
                              skip=skip)
    return y.reshape(n, h, w, cout_p)


def feature_extractor_forward(params, x_nchw, layer_idx):
    x = jnp.transpose(x_nchw.astype(jnp.float32), (0, 2, 3, 1))  # NCHW -> NHWC
    n = x.shape[0]
    # stem: conv 3x3 stride 2 (im2col + tiled Pallas matmul) + BN + swish
    patches, oh, ow = im2col_3x3(x, stride=2)
    sp = params["stem"]
    y = matmul_bn_act(patches.astype(jnp.bfloat16), sp["w"],
                      sp["scale"], sp["bias"], act="swish")
    x = y.reshape(n, oh, ow, sp["w"].shape[1])

    num_blocks = len(params["blocks"])
    # note: PyTorch returns None if layer_idx is out of range; we clamp instead.
    layer_idx = min(layer_idx, num_blocks - 1)
    out = None
    for idx, bp in enumerate(params["blocks"]):
        drop_connect_rate = DROP_CONNECT_RATE
        if drop_connect_rate:
            drop_connect_rate *= float(idx) / num_blocks
        # drop_connect is stochastic depth: identity at inference -> no-op
        x = mbconv_block(bp, x)
        if idx == layer_idx:
            out = x
            break
    # slice away lane-padding channels, back to NCHW f32 (PyTorch convention)
    real_cout = params["blocks"][layer_idx]["real_cout"]
    out = out[..., :real_cout].astype(jnp.float32)
    return jnp.transpose(out, (0, 3, 1, 2))


if __name__ == "__main__":
    x = jax.random.normal(jax.random.PRNGKey(0), (2, 3, 16, 16), jnp.float32)  # NCHW
    params = init_params(jax.random.PRNGKey(1))
    fwd = jax.jit(functools.partial(feature_extractor_forward, params, layer_idx=3))
    out = jax.block_until_ready(fwd(x))
    assert out.shape == (2, 48, 8, 8), out.shape
    assert bool(jnp.all(jnp.isfinite(out)))
    print("KERNEL_OK")
</pallas_src>

<mosaic_0001>
module attributes {stable_mosaic.version = 11 : i64} {
  func.func @_matmul_bn_act_kernel(%arg0: i32, %arg1: memref<64x27xbf16, #tpu.memory_space<vmem>>, %arg2: memref<27x128xbf16, #tpu.memory_space<vmem>>, %arg3: memref<1x128xf32, #tpu.memory_space<vmem>>, %arg4: memref<1x128xf32, #tpu.memory_space<vmem>>, %arg5: memref<64x128xbf16, #tpu.memory_space<vmem>>) attributes {dimension_semantics = [#tpu.dimension_semantics<parallel>], iteration_bounds = array<i64: 2>, scalar_prefetch = 0 : i64, scratch_operands = 0 : i64, tpu.core_type = #tpu.core_type<tc>, window_params = [{transform_indices = @transform_0, window_bounds = array<i64: 64, 27>}, {pipeline_mode = #tpu.pipeline_mode<synchronous>, transform_indices = @transform_1, window_bounds = array<i64: 27, 128>}, {pipeline_mode = #tpu.pipeline_mode<synchronous>, transform_indices = @transform_2, window_bounds = array<i64: 1, 128>}, {pipeline_mode = #tpu.pipeline_mode<synchronous>, transform_indices = @transform_3, window_bounds = array<i64: 1, 128>}, {transform_indices = @transform_4, window_bounds = array<i64: 64, 128>}]} {
    %c0 = arith.constant 0 : index
    %c0_0 = arith.constant 0 : index
    %0 = vector.load %arg1[%c0, %c0_0] : memref<64x27xbf16, #tpu.memory_space<vmem>>, vector<64x27xbf16>
    %c0_1 = arith.constant 0 : index
    %c0_2 = arith.constant 0 : index
    %1 = vector.load %arg2[%c0_1, %c0_2] : memref<27x128xbf16, #tpu.memory_space<vmem>>, vector<27x128xbf16>
    %cst = arith.constant dense<0.000000e+00> : vector<64x128xf32>
    %2 = tpu.matmul %0, %1, %cst {dimension_numbers = #tpu.dot_dimension_numbers<[1], [0], [0], [1], [0, 0, 1, 1], [], []>} : vector<64x27xbf16>, vector<27x128xbf16>, vector<64x128xf32> -> vector<64x128xf32>
    %c0_3 = arith.constant 0 : index
    %c0_4 = arith.constant 0 : index
    %3 = vector.load %arg3[%c0_3, %c0_4] : memref<1x128xf32, #tpu.memory_space<vmem>>, vector<1x128xf32>
    %4 = vector.broadcast %3 : vector<1x128xf32> to vector<64x128xf32>
    %5 = arith.mulf %2, %4 : vector<64x128xf32>
    %c0_5 = arith.constant 0 : index
    %c0_6 = arith.constant 0 : index
    %6 = vector.load %arg4[%c0_5, %c0_6] : memref<1x128xf32, #tpu.memory_space<vmem>>, vector<1x128xf32>
    %7 = vector.broadcast %6 : vector<1x128xf32> to vector<64x128xf32>
    %8 = arith.addf %5, %7 : vector<64x128xf32>
    %9 = arith.negf %8 : vector<64x128xf32>
    %10 = math.exp %9 : vector<64x128xf32>
    %cst_7 = arith.constant 1.000000e+00 : f32
    %11 = vector.broadcast %cst_7 : f32 to vector<64x128xf32>
    %12 = arith.addf %11, %10 : vector<64x128xf32>
    %13 = arith.divf %11, %12 : vector<64x128xf32>
    %14 = arith.mulf %8, %13 : vector<64x128xf32>
    %15 = arith.truncf %14 : vector<64x128xf32> to vector<64x128xbf16>
    %c0_8 = arith.constant 0 : index
    %c0_9 = arith.constant 0 : index
    %16 = vector.load %arg5[%c0_8, %c0_9] : memref<64x128xbf16, #tpu.memory_space<vmem>>, vector<64x128xbf16>
    tpu.vector_store %arg5[%c0_8, %c0_9], %15 {strides = array<i32>} : memref<64x128xbf16, #tpu.memory_space<vmem>>, vector<64x128xbf16>,
    return
  }
  func.func @transform_0(%arg0: i32) -> (i32, i32) {
    %c0_i32 = arith.constant 0 : i32
    %c0_i32_0 = arith.constant 0 : i32
    return %arg0, %c0_i32 : i32, i32
  }
  func.func @transform_1(%arg0: i32) -> (i32, i32) {
    %c0_i32 = arith.constant 0 : i32
    %c0_i32_0 = arith.constant 0 : i32
    %c0_i32_1 = arith.constant 0 : i32
    return %c0_i32, %c0_i32_0 : i32, i32
  }
  func.func @transform_2(%arg0: i32) -> (i32, i32) {
    %c0_i32 = arith.constant 0 : i32
    %c0_i32_0 = arith.constant 0 : i32
    %c0_i32_1 = arith.constant 0 : i32
    return %c0_i32, %c0_i32_0 : i32, i32
  }
  func.func @transform_3(%arg0: i32) -> (i32, i32) {
    %c0_i32 = arith.constant 0 : i32
    %c0_i32_0 = arith.constant 0 : i32
    %c0_i32_1 = arith.constant 0 : i32
    return %c0_i32, %c0_i32_0 : i32, i32
  }
  func.func @transform_4(%arg0: i32) -> (i32, i32) {
    %c0_i32 = arith.constant 0 : i32
    %c0_i32_0 = arith.constant 0 : i32
    return %arg0, %c0_i32 : i32, i32
  }
}

module attributes {stable_mosaic.version = 11 : i64} {
  func.func @_matmul_bn_act_kernel(%arg0: i32, %arg1: memref<64x128xbf16, #tpu.memory_space<vmem>>, %arg2: memref<128x128xbf16, #tpu.memory_space<vmem>>, %arg3: memref<1x128xf32, #tpu.memory_space<vmem>>, %arg4: memref<1x128xf32, #tpu.memory_space<vmem>>, %arg5: memref<64x128xbf16, #tpu.memory_space<vmem>>) attributes {dimension_semantics = [#tpu.dimension_semantics<parallel>], iteration_bounds = array<i64: 2>, scalar_prefetch = 0 : i64, scratch_operands = 0 : i64, tpu.core_type = #tpu.core_type<tc>, window_params = [{transform_indices = @transform_0, window_bounds = array<i64: 64, 128>}, {pipeline_mode = #tpu.pipeline_mode<synchronous>, transform_indices = @transform_1, window_bounds = array<i64: 128, 128>}, {pipeline_mode = #tpu.pipeline_mode<synchronous>, transform_indices = @transform_2, window_bounds = array<i64: 1, 128>}, {pipeline_mode = #tpu.pipeline_mode<synchronous>, transform_indices = @transform_3, window_bounds = array<i64: 1, 128>}, {transform_indices = @transform_4, window_bounds = array<i64: 64, 128>}]} {
    %c0 = arith.constant 0 : index
    %c0_0 = arith.constant 0 : index
    %0 = vector.load %arg1[%c0, %c0_0] : memref<64x128xbf16, #tpu.memory_space<vmem>>, vector<64x128xbf16>
    %c0_1 = arith.constant 0 : index
    %c0_2 = arith.constant 0 : index
    %1 = vector.load %arg2[%c0_1, %c0_2] : memref<128x128xbf16, #tpu.memory_space<vmem>>, vector<128x128xbf16>
    %cst = arith.constant dense<0.000000e+00> : vector<64x128xf32>
    %2 = tpu.matmul %0, %1, %cst {dimension_numbers = #tpu.dot_dimension_numbers<[1], [0], [0], [1], [0, 0, 1, 1], [], []>} : vector<64x128xbf16>, vector<128x128xbf16>, vector<64x128xf32> -> vector<64x128xf32>
    %c0_3 = arith.constant 0 : index
    %c0_4 = arith.constant 0 : index
    %3 = vector.load %arg3[%c0_3, %c0_4] : memref<1x128xf32, #tpu.memory_space<vmem>>, vector<1x128xf32>
    %4 = vector.broadcast %3 : vector<1x128xf32> to vector<64x128xf32>
    %5 = arith.mulf %2, %4 : vector<64x128xf32>
    %c0_5 = arith.constant 0 : index
    %c0_6 = arith.constant 0 : index
    %6 = vector.load %arg4[%c0_5, %c0_6] : memref<1x128xf32, #tpu.memory_space<vmem>>, vector<1x128xf32>
    %7 = vector.broadcast %6 : vector<1x128xf32> to vector<64x128xf32>
    %8 = arith.addf %5, %7 : vector<64x128xf32>
    %9 = arith.negf %8 : vector<64x128xf32>
    %10 = math.exp %9 : vector<64x128xf32>
    %cst_7 = arith.constant 1.000000e+00 : f32
    %11 = vector.broadcast %cst_7 : f32 to vector<64x128xf32>
    %12 = arith.addf %11, %10 : vector<64x128xf32>
    %13 = arith.divf %11, %12 : vector<64x128xf32>
    %14 = arith.mulf %8, %13 : vector<64x128xf32>
    %15 = arith.truncf %14 : vector<64x128xf32> to vector<64x128xbf16>
    %c0_8 = arith.constant 0 : index
    %c0_9 = arith.constant 0 : index
    %16 = vector.load %arg5[%c0_8, %c0_9] : memref<64x128xbf16, #tpu.memory_space<vmem>>, vector<64x128xbf16>
    tpu.vector_store %arg5[%c0_8, %c0_9], %15 {strides = array<i32>} : memref<64x128xbf16, #tpu.memory_space<vmem>>, vector<64x128xbf16>,
    return
  }
  func.func @transform_0(%arg0: i32) -> (i32, i32) {
    %c0_i32 = arith.constant 0 : i32
    %c0_i32_0 = arith.constant 0 : i32
    return %arg0, %c0_i32 : i32, i32
  }
  func.func @transform_1(%arg0: i32) -> (i32, i32) {
    %c0_i32 = arith.constant 0 : i32
    %c0_i32_0 = arith.constant 0 : i32
    %c0_i32_1 = arith.constant 0 : i32
    return %c0_i32, %c0_i32_0 : i32, i32
  }
  func.func @transform_2(%arg0: i32) -> (i32, i32) {
    %c0_i32 = arith.constant 0 : i32
    %c0_i32_0 = arith.constant 0 : i32
    %c0_i32_1 = arith.constant 0 : i32
    return %c0_i32, %c0_i32_0 : i32, i32
  }
  func.func @transform_3(%arg0: i32) -> (i32, i32) {
    %c0_i32 = arith.constant 0 : i32
    %c0_i32_0 = arith.constant 0 : i32
    %c0_i32_1 = arith.constant 0 : i32
    return %c0_i32, %c0_i32_0 : i32, i32
  }
  func.func @transform_4(%arg0: i32) -> (i32, i32) {
    %c0_i32 = arith.constant 0 : i32
    %c0_i32_0 = arith.constant 0 : i32
    return %arg0, %c0_i32 : i32, i32
  }
}

module attributes {stable_mosaic.version = 11 : i64} {
  func.func @_dwconv_se_kernel(%arg0: i32, %arg1: i32, %arg2: memref<2x8x8x128xbf16, #tpu.memory_space<any>>, %arg3: memref<9x128xbf16, #tpu.memory_space<vmem>>, %arg4: memref<1x128xf32, #tpu.memory_space<vmem>>, %arg5: memref<1x128xf32, #tpu.memory_space<vmem>>, %arg6: memref<128x128xf32, #tpu.memory_space<vmem>>, %arg7: memref<1x128xf32, #tpu.memory_space<vmem>>, %arg8: memref<128x128xf32, #tpu.memory_space<vmem>>, %arg9: memref<1x128xf32, #tpu.memory_space<vmem>>, %arg10: memref<1x4x8x128xbf16, #tpu.memory_space<vmem>>, %arg11: memref<1x1x128xbf16, #tpu.memory_space<vmem>>, %arg12: memref<6x8x128xbf16, #tpu.memory_space<vmem>>, %arg13: memref<1x128xf32, #tpu.memory_space<vmem>>) attributes {dimension_semantics = [#tpu.dimension_semantics<parallel>, #tpu.dimension_semantics<arbitrary>], iteration_bounds = array<i64: 2, 2>, scalar_prefetch = 0 : i64, scratch_operands = 2 : i64, tpu.core_type = #tpu.core_type<tc>, window_params = [{}, {pipeline_mode = #tpu.pipeline_mode<synchronous>, transform_indices = @transform_1, window_bounds = array<i64: 9, 128>}, {pipeline_mode = #tpu.pipeline_mode<synchronous>, transform_indices = @transform_2, window_bounds = array<i64: 1, 128>}, {pipeline_mode = #tpu.pipeline_mode<synchronous>, transform_indices = @transform_3, window_bounds = array<i64: 1, 128>}, {pipeline_mode = #tpu.pipeline_mode<synchronous>, transform_indices = @transform_4, window_bounds = array<i64: 128, 128>}, {pipeline_mode = #tpu.pipeline_mode<synchronous>, transform_indices = @transform_5, window_bounds = array<i64: 1, 128>}, {pipeline_mode = #tpu.pipeline_mode<synchronous>, transform_indices = @transform_6, window_bounds = array<i64: 128, 128>}, {pipeline_mode = #tpu.pipeline_mode<synchronous>, transform_indices = @transform_7, window_bounds = array<i64: 1, 128>}, {transform_indices = @transform_8, window_bounds = array<i64: 1, 4, 8, 128>}, {transform_indices = @transform_9, window_bounds = array<i64: 1, 1, 128>}]} {
    %c4_i32 = arith.constant 4 : i32
    %0 = arith.muli %arg1, %c4_i32 : i32
    "tpu.region"() ({
      %122 = tpu.sem_alloc : memref<!tpu.dma_semaphore, #tpu.memory_space<semaphore_mem>>
      %c0_i32_29 = arith.constant 0 : i32
      %c0_i32_30 = arith.constant 0 : i32
      %123 = tpu.memref_slice %arg2[%arg0, %0, %c0_i32_29, %c0_i32_30] : memref<2x8x8x128xbf16, #tpu.memory_space<any>> -> memref<1x4x8x128xbf16, #tpu.memory_space<any>>
      %124 = tpu.memref_squeeze %123 : memref<1x4x8x128xbf16, #tpu.memory_space<any>> -> memref<4x8x128xbf16, #tpu.memory_space<any>>
      %c1_i32_31 = arith.constant 1 : i32
      %c0_i32_32 = arith.constant 0 : i32
      %c0_i32_33 = arith.constant 0 : i32
      %125 = tpu.memref_slice %arg12[%c1_i32_31, %c0_i32_32, %c0_i32_33] : memref<6x8x128xbf16, #tpu.memory_space<vmem>> -> memref<4x8x128xbf16, #tpu.memory_space<vmem>>
      tpu.enqueue_dma source(%124 : memref<4x8x128xbf16, #tpu.memory_space<any>>) target(%125 : memref<4x8x128xbf16, #tpu.memory_space<vmem>>) target_semaphore(%122 : memref<!tpu.dma_semaphore, #tpu.memory_space<semaphore_mem>>)
      %c0_i32_34 = arith.constant 0 : i32
      %c0_i32_35 = arith.constant 0 : i32
      %126 = tpu.memref_slice %arg2[%arg0, %0, %c0_i32_34, %c0_i32_35] : memref<2x8x8x128xbf16, #tpu.memory_space<any>> -> memref<1x4x8x128xbf16, #tpu.memory_space<any>>
      %127 = tpu.memref_squeeze %126 : memref<1x4x8x128xbf16, #tpu.memory_space<any>> -> memref<4x8x128xbf16, #tpu.memory_space<any>>
      %c1_i32_36 = arith.constant 1 : i32
      %c0_i32_37 = arith.constant 0 : i32
      %c0_i32_38 = arith.constant 0 : i32
      %128 = tpu.memref_slice %arg12[%c1_i32_36, %c0_i32_37, %c0_i32_38] : memref<6x8x128xbf16, #tpu.memory_space<vmem>> -> memref<4x8x128xbf16, #tpu.memory_space<vmem>>
      tpu.wait_dma2 semaphore(%122 : memref<!tpu.dma_semaphore, #tpu.memory_space<semaphore_mem>>) src(%127 : memref<4x8x128xbf16, #tpu.memory_space<any>>) dst(%128 : memref<4x8x128xbf16, #tpu.memory_space<vmem>>)
      tpu.yield
    }) : () -> ()
    %c0_i32 = arith.constant 0 : i32
    %1 = arith.cmpi sgt, %arg1, %c0_i32 : i32
    %2 = arith.extui %1 : i1 to i32
    %c0_i32_0 = arith.constant 0 : i32
    %3 = arith.cmpi ne, %2, %c0_i32_0 : i32
    scf.if %3 {
      %c1_i32_29 = arith.constant 1 : i32
      %122 = arith.subi %0, %c1_i32_29 : i32
      "tpu.region"() ({
        %123 = tpu.sem_alloc : memref<!tpu.dma_semaphore, #tpu.memory_space<semaphore_mem>>
        %c0_i32_30 = arith.constant 0 : i32
        %c0_i32_31 = arith.constant 0 : i32
        %124 = tpu.memref_slice %arg2[%arg0, %122, %c0_i32_30, %c0_i32_31] : memref<2x8x8x128xbf16, #tpu.memory_space<any>> -> memref<1x1x8x128xbf16, #tpu.memory_space<any>>
        %125 = tpu.memref_squeeze %124 : memref<1x1x8x128xbf16, #tpu.memory_space<any>> -> memref<1x8x128xbf16, #tpu.memory_space<any>>
        %c0_i32_32 = arith.constant 0 : i32
        %c0_i32_33 = arith.constant 0 : i32
        %c0_i32_34 = arith.constant 0 : i32
        %126 = tpu.memref_slice %arg12[%c0_i32_32, %c0_i32_33, %c0_i32_34] : memref<6x8x128xbf16, #tpu.memory_space<vmem>> -> memref<1x8x128xbf16, #tpu.memory_space<vmem>>
        tpu.enqueue_dma source(%125 : memref<1x8x128xbf16, #tpu.memory_space<any>>) target(%126 : memref<1x8x128xbf16, #tpu.memory_space<vmem>>) target_semaphore(%123 : memref<!tpu.dma_semaphore, #tpu.memory_space<semaphore_mem>>)
        %c0_i32_35 = arith.constant 0 : i32
        %c0_i32_36 = arith.constant 0 : i32
        %127 = tpu.memref_slice %arg2[%arg0, %122, %c0_i32_35, %c0_i32_36] : memref<2x8x8x128xbf16, #tpu.memory_space<any>> -> memref<1x1x8x128xbf16, #tpu.memory_space<any>>
        %128 = tpu.memref_squeeze %127 : memref<1x1x8x128xbf16, #tpu.memory_space<any>> -> memref<1x8x128xbf16, #tpu.memory_space<any>>
        %c0_i32_37 = arith.constant 0 : i32
        %c0_i32_38 = arith.constant 0 : i32
        %c0_i32_39 = arith.constant 0 : i32
        %129 = tpu.memref_slice %arg12[%c0_i32_37, %c0_i32_38, %c0_i32_39] : memref<6x8x128xbf16, #tpu.memory_space<vmem>> -> memref<1x8x128xbf16, #tpu.memory_space<vmem>>
        tpu.wait_dma2 semaphore(%123 : memref<!tpu.dma_semaphore, #tpu.memory_space<semaphore_mem>>) src(%128 : memref<1x8x128xbf16, #tpu.memory_space<any>>) dst(%129 : memref<1x8x128xbf16, #tpu.memory_space<vmem>>)
        tpu.yield
      }) : () -> ()
    } else {
    }
    %c0_i32_1 = arith.constant 0 : i32
    %4 = arith.cmpi eq, %arg1, %c0_i32_1 : i32
    %5 = arith.extui %4 : i1 to i32
    %c0_i32_2 = arith.constant 0 : i32
    %6 = arith.cmpi ne, %5, %c0_i32_2 : i32
    scf.if %6 {
      %cst_29 = arith.constant 0.000000e+00 : bf16
      %122 = vector.broadcast %cst_29 : bf16 to vector<8x128xbf16>
      %c0_30 = arith.constant 0 : index
      %c0_31 = arith.constant 0 : index
      %c0_32 = arith.constant 0 : index
      %123 = vector.load %arg12[%c0_30, %c0_31, %c0_32] : memref<6x8x128xbf16, #tpu.memory_space<vmem>>, vector<1x8x128xbf16>
      %124 = vector.shape_cast %123 : vector<1x8x128xbf16> to vector<8x128xbf16>
      %125 = vector.shape_cast %122 : vector<8x128xbf16> to vector<1x8x128xbf16>
      tpu.vector_store %arg12[%c0_30, %c0_31, %c0_32], %125 {strides = array<i32>} : memref<6x8x128xbf16, #tpu.memory_space<vmem>>, vector<1x8x128xbf16>,
    } else {
    }
    %c1_i32 = arith.constant 1 : i32
    %7 = arith.cmpi slt, %arg1, %c1_i32 : i32
    %8 = arith.extui %7 : i1 to i32
    %c0_i32_3 = arith.constant 0 : i32
    %9 = arith.cmpi ne, %8, %c0_i32_3 : i32
    scf.if %9 {
      %c4_i32_29 = arith.constant 4 : i32
      %122 = arith.addi %0, %c4_i32_29 : i32
      "tpu.region"() ({
        %123 = tpu.sem_alloc : memref<!tpu.dma_semaphore, #tpu.memory_space<semaphore_mem>>
        %c0_i32_30 = arith.constant 0 : i32
        %c0_i32_31 = arith.constant 0 : i32
        %124 = tpu.memref_slice %arg2[%arg0, %122, %c0_i32_30, %c0_i32_31] : memref<2x8x8x128xbf16, #tpu.memory_space<any>> -> memref<1x1x8x128xbf16, #tpu.memory_space<any>>
        %125 = tpu.memref_squeeze %124 : memref<1x1x8x128xbf16, #tpu.memory_space<any>> -> memref<1x8x128xbf16, #tpu.memory_space<any>>
        %c5_i32 = arith.constant 5 : i32
        %c0_i32_32 = arith.constant 0 : i32
        %c0_i32_33 = arith.constant 0 : i32
        %126 = tpu.memref_slice %arg12[%c5_i32, %c0_i32_32, %c0_i32_33] : memref<6x8x128xbf16, #tpu.memory_space<vmem>> -> memref<1x8x128xbf16, #tpu.memory_space<vmem>>
        tpu.enqueue_dma source(%125 : memref<1x8x128xbf16, #tpu.memory_space<any>>) target(%126 : memref<1x8x128xbf16, #tpu.memory_space<vmem>>) target_semaphore(%123 : memref<!tpu.dma_semaphore, #tpu.memory_space<semaphore_mem>>)
        %c0_i32_34 = arith.constant 0 : i32
        %c0_i32_35 = arith.constant 0 : i32
        %127 = tpu.memref_slice %arg2[%arg0, %122, %c0_i32_34, %c0_i32_35] : memref<2x8x8x128xbf16, #tpu.memory_space<any>> -> memref<1x1x8x128xbf16, #tpu.memory_space<any>>
        %128 = tpu.memref_squeeze %127 : memref<1x1x8x128xbf16, #tpu.memory_space<any>> -> memref<1x8x128xbf16, #tpu.memory_space<any>>
        %c5_i32_36 = arith.constant 5 : i32
        %c0_i32_37 = arith.constant 0 : i32
        %c0_i32_38 = arith.constant 0 : i32
        %129 = tpu.memref_slice %arg12[%c5_i32_36, %c0_i32_37, %c0_i32_38] : memref<6x8x128xbf16, #tpu.memory_space<vmem>> -> memref<1x8x128xbf16, #tpu.memory_space<vmem>>
        tpu.wait_dma2 semaphore(%123 : memref<!tpu.dma_semaphore, #tpu.memory_space<semaphore_mem>>) src(%128 : memref<1x8x128xbf16, #tpu.memory_space<any>>) dst(%129 : memref<1x8x128xbf16, #tpu.memory_space<vmem>>)
        tpu.yield
      }) : () -> ()
    } else {
    }
    %c1_i32_4 = arith.constant 1 : i32
    %10 = arith.cmpi eq, %arg1, %c1_i32_4 : i32
    %11 = arith.extui %10 : i1 to i32
    %c0_i32_5 = arith.constant 0 : i32
    %12 = arith.cmpi ne, %11, %c0_i32_5 : i32
    scf.if %12 {
      %cst_29 = arith.constant 0.000000e+00 : bf16
      %122 = vector.broadcast %cst_29 : bf16 to vector<8x128xbf16>
      %c5 = arith.constant 5 : index
      %c0_30 = arith.constant 0 : index
      %c0_31 = arith.constant 0 : index
      %123 = vector.load %arg12[%c5, %c0_30, %c0_31] : memref<6x8x128xbf16, #tpu.memory_space<vmem>>, vector<1x8x128xbf16>
      %124 = vector.shape_cast %123 : vector<1x8x128xbf16> to vector<8x128xbf16>
      %125 = vector.shape_cast %122 : vector<8x128xbf16> to vector<1x8x128xbf16>
      tpu.vector_store %arg12[%c5, %c0_30, %c0_31], %125 {strides = array<i32>} : memref<6x8x128xbf16, #tpu.memory_space<vmem>>, vector<1x8x128xbf16>,
    } else {
    }
    %c0 = arith.constant 0 : index
    %c0_6 = arith.constant 0 : index
    %c0_7 = arith.constant 0 : index
    %13 = vector.load %arg12[%c0, %c0_6, %c0_7] : memref<6x8x128xbf16, #tpu.memory_space<vmem>>, vector<6x8x128xbf16>
    %cst = arith.constant 0.000000e+00 : bf16
    %14 = vector.broadcast %cst : bf16 to vector<6x1x128xbf16>
    %15 = vector.extract_strided_slice %13 {offsets = [0, 0, 0], sizes = [6, 7, 128], strides = [1, 1, 1]} : vector<6x8x128xbf16> to vector<6x7x128xbf16>
    %16 = tpu.concatenate %14, %15 in 1 : vector<6x1x128xbf16>, vector<6x7x128xbf16> -> vector<6x8x128xbf16>
    %17 = vector.extract_strided_slice %13 {offsets = [0, 1, 0], sizes = [6, 7, 128], strides = [1, 1, 1]} : vector<6x8x128xbf16> to vector<6x7x128xbf16>
    %18 = tpu.concatenate %17, %14 in 1 : vector<6x7x128xbf16>, vector<6x1x128xbf16> -> vector<6x8x128xbf16>
    %c0_8 = arith.constant 0 : index
    %c0_9 = arith.constant 0 : index
    %19 = vector.load %arg3[%c0_8, %c0_9] : memref<9x128xbf16, #tpu.memory_space<vmem>>, vector<9x128xbf16>
    %cst_10 = arith.constant 0.000000e+00 : f32
    %20 = vector.broadcast %cst_10 : f32 to vector<4x8x128xf32>
    %21 = vector.extract_strided_slice %16 {offsets = [0, 0, 0], sizes = [4, 8, 128], strides = [1, 1, 1]} : vector<6x8x128xbf16> to vector<4x8x128xbf16>
    %22 = vector.extract_strided_slice %19 {offsets = [0, 0], sizes = [1, 128], strides = [1, 1]} : vector<9x128xbf16> to vector<1x128xbf16>
    %23 = vector.shape_cast %22 : vector<1x128xbf16> to vector<128xbf16>
    %24 = vector.shape_cast %23 : vector<128xbf16> to vector<1x1x128xbf16>
    %25 = vector.broadcast %24 : vector<1x1x128xbf16> to vector<4x8x128xbf16>
    %26 = arith.mulf %21, %25 : vector<4x8x128xbf16>
    %27 = arith.extf %26 : vector<4x8x128xbf16> to vector<4x8x128xf32>
    %28 = arith.addf %20, %27 : vector<4x8x128xf32>
    %29 = vector.extract_strided_slice %13 {offsets = [0, 0, 0], sizes = [4, 8, 128], strides = [1, 1, 1]} : vector<6x8x128xbf16> to vector<4x8x128xbf16>
    %30 = vector.extract_strided_slice %19 {offsets = [1, 0], sizes = [1, 128], strides = [1, 1]} : vector<9x128xbf16> to vector<1x128xbf16>
    %31 = vector.shape_cast %30 : vector<1x128xbf16> to vector<128xbf16>
    %32 = vector.shape_cast %31 : vector<128xbf16> to vector<1x1x128xbf16>
    %33 = vector.broadcast %32 : vector<1x1x128xbf16> to vector<4x8x128xbf16>
    %34 = arith.mulf %29, %33 : vector<4x8x128xbf16>
    %35 = arith.extf %34 : vector<4x8x128xbf16> to vector<4x8x128xf32>
    %36 = arith.addf %28, %35 : vector<4x8x128xf32>
    %37 = vector.extract_strided_slice %18 {offsets = [0, 0, 0], sizes = [4, 8, 128], strides = [1, 1, 1]} : vector<6x8x128xbf16> to vector<4x8x128xbf16>
    %38 = vector.extract_strided_slice %19 {offsets = [2, 0], sizes = [1, 128], strides = [1, 1]} : vector<9x128xbf16> to vector<1x128xbf16>
    %39 = vector.shape_cast %38 : vector<1x128xbf16> to vector<128xbf16>
    %40 = vector.shape_cast %39 : vector<128xbf16> to vector<1x1x128xbf16>
    %41 = vector.broadcast %40 : vector<1x1x128xbf16> to vector<4x8x128xbf16>
    %42 = arith.mulf %37, %41 : vector<4x8x128xbf16>
    %43 = arith.extf %42 : vector<4x8x128xbf16> to vector<4x8x128xf32>
    %44 = arith.addf %36, %43 : vector<4x8x128xf32>
    %45 = vector.extract_strided_slice %16 {offsets = [1, 0, 0], sizes = [4, 8, 128], strides = [1, 1, 1]} : vector<6x8x128xbf16> to vector<4x8x128xbf16>
    %46 = vector.extract_strided_slice %19 {offsets = [3, 0], sizes = [1, 128], strides = [1, 1]} : vector<9x128xbf16> to vector<1x128xbf16>
    %47 = vector.shape_cast %46 : vector<1x128xbf16> to vector<128xbf16>
    %48 = vector.shape_cast %47 : vector<128xbf16> to vector<1x1x128xbf16>
    %49 = vector.broadcast %48 : vector<1x1x128xbf16> to vector<4x8x128xbf16>
    %50 = arith.mulf %45, %49 : vector<4x8x128xbf16>
    %51 = arith.extf %50 : vector<4x8x128xbf16> to vector<4x8x128xf32>
    %52 = arith.addf %44, %51 : vector<4x8x128xf32>
    %53 = vector.extract_strided_slice %13 {offsets = [1, 0, 0], sizes = [4, 8, 128], strides = [1, 1, 1]} : vector<6x8x128xbf16> to vector<4x8x128xbf16>
    %54 = vector.extract_strided_slice %19 {offsets = [4, 0], sizes = [1, 128], strides = [1, 1]} : vector<9x128xbf16> to vector<1x128xbf16>
    %55 = vector.shape_cast %54 : vector<1x128xbf16> to vector<128xbf16>
    %56 = vector.shape_cast %55 : vector<128xbf16> to vector<1x1x128xbf16>
    %57 = vector.broadcast %56 : vector<1x1x128xbf16> to vector<4x8x128xbf16>
    %58 = arith.mulf %53, %57 : vector<4x8x128xbf16>
    %59 = arith.extf %58 : vector<4x8x128xbf16> to vector<4x8x128xf32>
    %60 = arith.addf %52, %59 : vector<4x8x128xf32>
    %61 = vector.extract_strided_slice %18 {offsets = [1, 0, 0], sizes = [4, 8, 128], strides = [1, 1, 1]} : vector<6x8x128xbf16> to vector<4x8x128xbf16>
    %62 = vector.extract_strided_slice %19 {offsets = [5, 0], sizes = [1, 128], strides = [1, 1]} : vector<9x128xbf16> to vector<1x128xbf16>
    %63 = vector.shape_cast %62 : vector<1x128xbf16> to vector<128xbf16>
    %64 = vector.shape_cast %63 : vector<128xbf16> to vector<1x1x128xbf16>
    %65 = vector.broadcast %64 : vector<1x1x128xbf16> to vector<4x8x128xbf16>
    %66 = arith.mulf %61, %65 : vector<4x8x128xbf16>
    %67 = arith.extf %66 : vector<4x8x128xbf16> to vector<4x8x128xf32>
    %68 = arith.addf %60, %67 : vector<4x8x128xf32>
    %69 = vector.extract_strided_slice %16 {offsets = [2, 0, 0], sizes = [4, 8, 128], strides = [1, 1, 1]} : vector<6x8x128xbf16> to vector<4x8x128xbf16>
    %70 = vector.extract_strided_slice %19 {offsets = [6, 0], sizes = [1, 128], strides = [1, 1]} : vector<9x128xbf16> to vector<1x128xbf16>
    %71 = vector.shape_cast %70 : vector<1x128xbf16> to vector<128xbf16>
    %72 = vector.shape_cast %71 : vector<128xbf16> to vector<1x1x128xbf16>
    %73 = vector.broadcast %72 : vector<1x1x128xbf16> to vector<4x8x128xbf16>
    %74 = arith.mulf %69, %73 : vector<4x8x128xbf16>
    %75 = arith.extf %74 : vector<4x8x128xbf16> to vector<4x8x128xf32>
    %76 = arith.addf %68, %75 : vector<4x8x128xf32>
    %77 = vector.extract_strided_slice %13 {offsets = [2, 0, 0], sizes = [4, 8, 128], strides = [1, 1, 1]} : vector<6x8x128xbf16> to vector<4x8x128xbf16>
    %78 = vector.extract_strided_slice %19 {offsets = [7, 0], sizes = [1, 128], strides = [1, 1]} : vector<9x128xbf16> to vector<1x128xbf16>
    %79 = vector.shape_cast %78 : vector<1x128xbf16> to vector<128xbf16>
    %80 = vector.shape_cast %79 : vector<128xbf16> to vector<1x1x128xbf16>
    %81 = vector.broadcast %80 : vector<1x1x128xbf16> to vector<4x8x128xbf16>
    %82 = arith.mulf %77, %81 : vector<4x8x128xbf16>
    %83 = arith.extf %82 : vector<4x8x128xbf16> to vector<4x8x128xf32>
    %84 = arith.addf %76, %83 : vector<4x8x128xf32>
    %85 = vector.extract_strided_slice %18 {offsets = [2, 0, 0], sizes = [4, 8, 128], strides = [1, 1, 1]} : vector<6x8x128xbf16> to vector<4x8x128xbf16>
    %86 = vector.extract_strided_slice %19 {offsets = [8, 0], sizes = [1, 128], strides = [1, 1]} : vector<9x128xbf16> to vector<1x128xbf16>
    %87 = vector.shape_cast %86 : vector<1x128xbf16> to vector<128xbf16>
    %88 = vector.shape_cast %87 : vector<128xbf16> to vector<1x1x128xbf16>
    %89 = vector.broadcast %88 : vector<1x1x128xbf16> to vector<4x8x128xbf16>
    %90 = arith.mulf %85, %89 : vector<4x8x128xbf16>
    %91 = arith.extf %90 : vector<4x8x128xbf16> to vector<4x8x128xf32>
    %92 = arith.addf %84, %91 : vector<4x8x128xf32>
    %c0_11 = arith.constant 0 : index
    %c0_12 = arith.constant 0 : index
    %93 = vector.load %arg4[%c0_11, %c0_12] : memref<1x128xf32, #tpu.memory_space<vmem>>, vector<1x128xf32>
    %94 = vector.shape_cast %93 : vector<1x128xf32> to vector<1x1x128xf32>
    %95 = vector.broadcast %94 : vector<1x1x128xf32> to vector<4x8x128xf32>
    %96 = arith.mulf %92, %95 : vector<4x8x128xf32>
    %c0_13 = arith.constant 0 : index
    %c0_14 = arith.constant 0 : index
    %97 = vector.load %arg5[%c0_13, %c0_14] : memref<1x128xf32, #tpu.memory_space<vmem>>, vector<1x128xf32>
    %98 = vector.shape_cast %97 : vector<1x128xf32> to vector<1x1x128xf32>
    %99 = vector.broadcast %98 : vector<1x1x128xf32> to vector<4x8x128xf32>
    %100 = arith.addf %96, %99 : vector<4x8x128xf32>
    %101 = arith.negf %100 : vector<4x8x128xf32>
    %102 = math.exp %101 : vector<4x8x128xf32>
    %cst_15 = arith.constant 1.000000e+00 : f32
    %103 = vector.broadcast %cst_15 : f32 to vector<4x8x128xf32>
    %104 = arith.addf %103, %102 : vector<4x8x128xf32>
    %105 = arith.divf %103, %104 : vector<4x8x128xf32>
    %106 = arith.mulf %100, %105 : vector<4x8x128xf32>
    %107 = arith.truncf %106 : vector<4x8x128xf32> to vector<4x8x128xbf16>
    %c0_16 = arith.constant 0 : index
    %c0_17 = arith.constant 0 : index
    %c0_18 = arith.constant 0 : index
    %c0_19 = arith.constant 0 : index
    %108 = vector.load %arg10[%c0_16, %c0_17, %c0_18, %c0_19] : memref<1x4x8x128xbf16, #tpu.memory_space<vmem>>, vector<1x4x8x128xbf16>
    %109 = vector.shape_cast %108 : vector<1x4x8x128xbf16> to vector<4x8x128xbf16>
    %110 = vector.shape_cast %107 : vector<4x8x128xbf16> to vector<1x4x8x128xbf16>
    tpu.vector_store %arg10[%c0_16, %c0_17, %c0_18, %c0_19], %110 {strides = array<i32>} : memref<1x4x8x128xbf16, #tpu.memory_space<vmem>>, vector<1x4x8x128xbf16>,
    %c0_i32_20 = arith.constant 0 : i32
    %111 = arith.cmpi eq, %arg1, %c0_i32_20 : i32
    %112 = arith.extui %111 : i1 to i32
    %c0_i32_21 = arith.constant 0 : i32
    %113 = arith.cmpi ne, %112, %c0_i32_21 : i32
    scf.if %113 {
      %cst_29 = arith.constant 0.000000e+00 : f32
      %122 = vector.broadcast %cst_29 : f32 to vector<1x128xf32>
      %c0_30 = arith.constant 0 : index
      %c0_31 = arith.constant 0 : index
      %123 = vector.load %arg13[%c0_30, %c0_31] : memref<1x128xf32, #tpu.memory_space<vmem>>, vector<1x128xf32>
      tpu.vector_store %arg13[%c0_30, %c0_31], %122 {strides = array<i32>} : memref<1x128xf32, #tpu.memory_space<vmem>>, vector<1x128xf32>,
    } else {
    }
    %c0_22 = arith.constant 0 : index
    %c0_23 = arith.constant 0 : index
    %114 = vector.load %arg13[%c0_22, %c0_23] : memref<1x128xf32, #tpu.memory_space<vmem>>, vector<1x128xf32>
    %cst_24 = arith.constant dense<0.000000e+00> : vector<128xf32>
    %115 = vector.multi_reduction <add>, %106, %cst_24 [0, 1] : vector<4x8x128xf32> to vector<128xf32>
    %116 = vector.shape_cast %115 : vector<128xf32> to vector<1x128xf32>
    %117 = arith.addf %114, %116 : vector<1x128xf32>
    %c0_25 = arith.constant 0 : index
    %c0_26 = arith.constant 0 : index
    %118 = vector.load %arg13[%c0_25, %c0_26] : memref<1x128xf32, #tpu.memory_space<vmem>>, vector<1x128xf32>
    tpu.vector_store %arg13[%c0_25, %c0_26], %117 {strides = array<i32>} : memref<1x128xf32, #tpu.memory_space<vmem>>, vector<1x128xf32>,
    %c1_i32_27 = arith.constant 1 : i32
    %119 = arith.cmpi eq, %arg1, %c1_i32_27 : i32
    %120 = arith.extui %119 : i1 to i32
    %c0_i32_28 = arith.constant 0 : i32
    %121 = arith.cmpi ne, %120, %c0_i32_28 : i32
    scf.if %121 {
      %c0_29 = arith.constant 0 : index
      %c0_30 = arith.constant 0 : index
      %122 = vector.load %arg13[%c0_29, %c0_30] : memref<1x128xf32, #tpu.memory_space<vmem>>, vector<1x128xf32>
      %cst_31 = arith.constant 1.562500e-02 : f32
      %123 = vector.broadcast %cst_31 : f32 to vector<1x128xf32>
      %124 = arith.mulf %122, %123 : vector<1x128xf32>
      %c0_32 = arith.constant 0 : index
      %c0_33 = arith.constant 0 : index
      %125 = vector.load %arg6[%c0_32, %c0_33] : memref<128x128xf32, #tpu.memory_space<vmem>>, vector<128x128xf32>
      %cst_34 = arith.constant dense<0.000000e+00> : vector<1x128xf32>
      %126 = tpu.matmul %124, %125, %cst_34 {dimension_numbers = #tpu.dot_dimension_numbers<[1], [0], [0], [1], [0, 0, 1, 1], [], []>} : vector<1x128xf32>, vector<128x128xf32>, vector<1x128xf32> -> vector<1x128xf32>
      %c0_35 = arith.constant 0 : index
      %c0_36 = arith.constant 0 : index
      %127 = vector.load %arg7[%c0_35, %c0_36] : memref<1x128xf32, #tpu.memory_space<vmem>>, vector<1x128xf32>
      %128 = arith.addf %126, %127 : vector<1x128xf32>
      %129 = arith.negf %128 : vector<1x128xf32>
      %130 = math.exp %129 : vector<1x128xf32>
      %cst_37 = arith.constant 1.000000e+00 : f32
      %131 = vector.broadcast %cst_37 : f32 to vector<1x128xf32>
      %132 = arith.addf %131, %130 : vector<1x128xf32>
      %133 = arith.divf %131, %132 : vector<1x128xf32>
      %134 = arith.mulf %128, %133 : vector<1x128xf32>
      %c0_38 = arith.constant 0 : index
      %c0_39 = arith.constant 0 : index
      %135 = vector.load %arg8[%c0_38, %c0_39] : memref<128x128xf32, #tpu.memory_space<vmem>>, vector<128x128xf32>
      %cst_40 = arith.constant dense<0.000000e+00> : vector<1x128xf32>
      %136 = tpu.matmul %134, %135, %cst_40 {dimension_numbers = #tpu.dot_dimension_numbers<[1], [0], [0], [1], [0, 0, 1, 1], [], []>} : vector<1x128xf32>, vector<128x128xf32>, vector<1x128xf32> -> vector<1x128xf32>
      %c0_41 = arith.constant 0 : index
      %c0_42 = arith.constant 0 : index
      %137 = vector.load %arg9[%c0_41, %c0_42] : memref<1x128xf32, #tpu.memory_space<vmem>>, vector<1x128xf32>
      %138 = arith.addf %136, %137 : vector<1x128xf32>
      %139 = arith.negf %138 : vector<1x128xf32>
      %140 = math.exp %139 : vector<1x128xf32>
      %cst_43 = arith.constant 1.000000e+00 : f32
      %141 = vector.broadcast %cst_43 : f32 to vector<1x128xf32>
      %142 = arith.addf %141, %140 : vector<1x128xf32>
      %143 = arith.divf %141, %142 : vector<1x128xf32>
      %144 = arith.truncf %143 : vector<1x128xf32> to vector<1x128xbf16>
      %c0_44 = arith.constant 0 : index
      %c0_45 = arith.constant 0 : index
      %c0_46 = arith.constant 0 : index
      %145 = vector.load %arg11[%c0_44, %c0_45, %c0_46] : memref<1x1x128xbf16, #tpu.memory_space<vmem>>, vector<1x1x128xbf16>
      %146 = vector.shape_cast %145 : vector<1x1x128xbf16> to vector<1x128xbf16>
      %147 = vector.shape_cast %144 : vector<1x128xbf16> to vector<1x1x128xbf16>
      tpu.vector_store %arg11[%c0_44, %c0_45, %c0_46], %147 {strides = array<i32>} : memref<1x1x128xbf16, #tpu.memory_space<vmem>>, vector<1x1x128xbf16>,
    } else {
    }
    return
  }
  func.func @transform_1(%arg0: i32, %arg1: i32) -> (i32, i32) {
    %c0_i32 = arith.constant 0 : i32
    %c0_i32_0 = arith.constant 0 : i32
    %c0_i32_1 = arith.constant 0 : i32
    return %c0_i32, %c0_i32_0 : i32, i32
  }
  func.func @transform_2(%arg0: i32, %arg1: i32) -> (i32, i32) {
    %c0_i32 = arith.constant 0 : i32
    %c0_i32_0 = arith.constant 0 : i32
    %c0_i32_1 = arith.constant 0 : i32
    return %c0_i32, %c0_i32_0 : i32, i32
  }
  func.func @transform_3(%arg0: i32, %arg1: i32) -> (i32, i32) {
    %c0_i32 = arith.constant 0 : i32
    %c0_i32_0 = arith.constant 0 : i32
    %c0_i32_1 = arith.constant 0 : i32
    return %c0_i32, %c0_i32_0 : i32, i32
  }
  func.func @transform_4(%arg0: i32, %arg1: i32) -> (i32, i32) {
    %c0_i32 = arith.constant 0 : i32
    %c0_i32_0 = arith.constant 0 : i32
    %c0_i32_1 = arith.constant 0 : i32
    return %c0_i32, %c0_i32_0 : i32, i32
  }
  func.func @transform_5(%arg0: i32, %arg1: i32) -> (i32, i32) {
    %c0_i32 = arith.constant 0 : i32
    %c0_i32_0 = arith.constant 0 : i32
    %c0_i32_1 = arith.constant 0 : i32
    return %c0_i32, %c0_i32_0 : i32, i32
  }
  func.func @transform_6(%arg0: i32, %arg1: i32) -> (i32, i32) {
    %c0_i32 = arith.constant 0 : i32
    %c0_i32_0 = arith.constant 0 : i32
    %c0_i32_1 = arith.constant 0 : i32
    return %c0_i32, %c0_i32_0 : i32, i32
  }
  func.func @transform_7(%arg0: i32, %arg1: i32) -> (i32, i32) {
    %c0_i32 = arith.constant 0 : i32
    %c0_i32_0 = arith.constant 0 : i32
    %c0_i32_1 = arith.constant 0 : i32
    return %c0_i32, %c0_i32_0 : i32, i32
  }
  func.func @transform_8(%arg0: i32, %arg1: i32) -> (i32, i32, i32, i32) {
    %c0_i32 = arith.constant 0 : i32
    %c0_i32_0 = arith.constant 0 : i32
    %c0_i32_1 = arith.constant 0 : i32
    return %arg0, %arg1, %c0_i32, %c0_i32_0 : i32, i32, i32, i32
  }
  func.func @transform_9(%arg0: i32, %arg1: i32) -> (i32, i32, i32) {
    %c0_i32 = arith.constant 0 : i32
    %c0_i32_0 = arith.constant 0 : i32
    %c0_i32_1 = arith.constant 0 : i32
    return %arg0, %c0_i32, %c0_i32_0 : i32, i32, i32
  }
}

module attributes {stable_mosaic.version = 11 : i64} {
  func.func @_gate_proj_res_kernel(%arg0: i32, %arg1: i32, %arg2: memref<1x32x128xbf16, #tpu.memory_space<vmem>>, %arg3: memref<1x1x128xbf16, #tpu.memory_space<vmem>>, %arg4: memref<128x128xbf16, #tpu.memory_space<vmem>>, %arg5: memref<1x128xf32, #tpu.memory_space<vmem>>, %arg6: memref<1x128xf32, #tpu.memory_space<vmem>>, %arg7: memref<1x32x128xbf16, #tpu.memory_space<vmem>>, %arg8: memref<1x32x128xbf16, #tpu.memory_space<vmem>>) attributes {dimension_semantics = [#tpu.dimension_semantics<parallel>, #tpu.dimension_semantics<parallel>], iteration_bounds = array<i64: 2, 2>, scalar_prefetch = 0 : i64, scratch_operands = 0 : i64, tpu.core_type = #tpu.core_type<tc>, window_params = [{transform_indices = @transform_0, window_bounds = array<i64: 1, 32, 128>}, {transform_indices = @transform_1, window_bounds = array<i64: 1, 1, 128>}, {pipeline_mode = #tpu.pipeline_mode<synchronous>, transform_indices = @transform_2, window_bounds = array<i64: 128, 128>}, {pipeline_mode = #tpu.pipeline_mode<synchronous>, transform_indices = @transform_3, window_bounds = array<i64: 1, 128>}, {pipeline_mode = #tpu.pipeline_mode<synchronous>, transform_indices = @transform_4, window_bounds = array<i64: 1, 128>}, {transform_indices = @transform_5, window_bounds = array<i64: 1, 32, 128>}, {transform_indices = @transform_6, window_bounds = array<i64: 1, 32, 128>}]} {
    %c0 = arith.constant 0 : index
    %c0_0 = arith.constant 0 : index
    %c0_1 = arith.constant 0 : index
    %0 = vector.load %arg2[%c0, %c0_0, %c0_1] : memref<1x32x128xbf16, #tpu.memory_space<vmem>>, vector<1x32x128xbf16>
    %1 = vector.shape_cast %0 : vector<1x32x128xbf16> to vector<32x128xbf16>
    %c0_2 = arith.constant 0 : index
    %c0_3 = arith.constant 0 : index
    %c0_4 = arith.constant 0 : index
    %2 = vector.load %arg3[%c0_2, %c0_3, %c0_4] : memref<1x1x128xbf16, #tpu.memory_space<vmem>>, vector<1x1x128xbf16>
    %3 = vector.shape_cast %2 : vector<1x1x128xbf16> to vector<1x128xbf16>
    %4 = vector.broadcast %3 : vector<1x128xbf16> to vector<32x128xbf16>
    %5 = arith.mulf %1, %4 : vector<32x128xbf16>
    %c0_5 = arith.constant 0 : index
    %c0_6 = arith.constant 0 : index
    %6 = vector.load %arg4[%c0_5, %c0_6] : memref<128x128xbf16, #tpu.memory_space<vmem>>, vector<128x128xbf16>
    %cst = arith.constant dense<0.000000e+00> : vector<32x128xf32>
    %7 = tpu.matmul %5, %6, %cst {dimension_numbers = #tpu.dot_dimension_numbers<[1], [0], [0], [1], [0, 0, 1, 1], [], []>} : vector<32x128xbf16>, vector<128x128xbf16>, vector<32x128xf32> -> vector<32x128xf32>
    %c0_7 = arith.constant 0 : index
    %c0_8 = arith.constant 0 : index
    %8 = vector.load %arg5[%c0_7, %c0_8] : memref<1x128xf32, #tpu.memory_space<vmem>>, vector<1x128xf32>
    %9 = vector.broadcast %8 : vector<1x128xf32> to vector<32x128xf32>
    %10 = arith.mulf %7, %9 : vector<32x128xf32>
    %c0_9 = arith.constant 0 : index
    %c0_10 = arith.constant 0 : index
    %11 = vector.load %arg6[%c0_9, %c0_10] : memref<1x128xf32, #tpu.memory_space<vmem>>, vector<1x128xf32>
    %12 = vector.broadcast %11 : vector<1x128xf32> to vector<32x128xf32>
    %13 = arith.addf %10, %12 : vector<32x128xf32>
    %c0_11 = arith.constant 0 : index
    %c0_12 = arith.constant 0 : index
    %c0_13 = arith.constant 0 : index
    %14 = vector.load %arg7[%c0_11, %c0_12, %c0_13] : memref<1x32x128xbf16, #tpu.memory_space<vmem>>, vector<1x32x128xbf16>
    %15 = vector.shape_cast %14 : vector<1x32x128xbf16> to vector<32x128xbf16>
    %16 = arith.extf %15 : vector<32x128xbf16> to vector<32x128xf32>
    %17 = arith.addf %13, %16 : vector<32x128xf32>
    %18 = arith.truncf %17 : vector<32x128xf32> to vector<32x128xbf16>
    %c0_14 = arith.constant 0 : index
    %c0_15 = arith.constant 0 : index
    %c0_16 = arith.constant 0 : index
    %19 = vector.load %arg8[%c0_14, %c0_15, %c0_16] : memref<1x32x128xbf16, #tpu.memory_space<vmem>>, vector<1x32x128xbf16>
    %20 = vector.shape_cast %19 : vector<1x32x128xbf16> to vector<32x128xbf16>
    %21 = vector.shape_cast %18 : vector<32x128xbf16> to vector<1x32x128xbf16>
    tpu.vector_store %arg8[%c0_14, %c0_15, %c0_16], %21 {strides = array<i32>} : memref<1x32x128xbf16, #tpu.memory_space<vmem>>, vector<1x32x128xbf16>,
    return
  }
  func.func @transform_0(%arg0: i32, %arg1: i32) -> (i32, i32, i32) {
    %c0_i32 = arith.constant 0 : i32
    %c0_i32_0 = arith.constant 0 : i32
    return %arg0, %arg1, %c0_i32 : i32, i32, i32
  }
  func.func @transform_1(%arg0: i32, %arg1: i32) -> (i32, i32, i32) {
    %c0_i32 = arith.constant 0 : i32
    %c0_i32_0 = arith.constant 0 : i32
    %c0_i32_1 = arith.constant 0 : i32
    return %arg0, %c0_i32, %c0_i32_0 : i32, i32, i32
  }
  func.func @transform_2(%arg0: i32, %arg1: i32) -> (i32, i32) {
    %c0_i32 = arith.constant 0 : i32
    %c0_i32_0 = arith.constant 0 : i32
    %c0_i32_1 = arith.constant 0 : i32
    return %c0_i32, %c0_i32_0 : i32, i32
  }
  func.func @transform_3(%arg0: i32, %arg1: i32) -> (i32, i32) {
    %c0_i32 = arith.constant 0 : i32
    %c0_i32_0 = arith.constant 0 : i32
    %c0_i32_1 = arith.constant 0 : i32
    return %c0_i32, %c0_i32_0 : i32, i32
  }
  func.func @transform_4(%arg0: i32, %arg1: i32) -> (i32, i32) {
    %c0_i32 = arith.constant 0 : i32
    %c0_i32_0 = arith.constant 0 : i32
    %c0_i32_1 = arith.constant 0 : i32
    return %c0_i32, %c0_i32_0 : i32, i32
  }
  func.func @transform_5(%arg0: i32, %arg1: i32) -> (i32, i32, i32) {
    %c0_i32 = arith.constant 0 : i32
    %c0_i32_0 = arith.constant 0 : i32
    return %arg0, %arg1, %c0_i32 : i32, i32, i32
  }
  func.func @transform_6(%arg0: i32, %arg1: i32) -> (i32, i32, i32) {
    %c0_i32 = arith.constant 0 : i32
    %c0_i32_0 = arith.constant 0 : i32
    return %arg0, %arg1, %c0_i32 : i32, i32, i32
  }
}

module attributes {stable_mosaic.version = 11 : i64} {
  func.func @_gate_proj_res_kernel(%arg0: i32, %arg1: i32, %arg2: memref<1x32x128xbf16, #tpu.memory_space<vmem>>, %arg3: memref<1x1x128xbf16, #tpu.memory_space<vmem>>, %arg4: memref<128x128xbf16, #tpu.memory_space<vmem>>, %arg5: memref<1x128xf32, #tpu.memory_space<vmem>>, %arg6: memref<1x128xf32, #tpu.memory_space<vmem>>, %arg7: memref<1x32x128xbf16, #tpu.memory_space<vmem>>) attributes {dimension_semantics = [#tpu.dimension_semantics<parallel>, #tpu.dimension_semantics<parallel>], iteration_bounds = array<i64: 2, 2>, scalar_prefetch = 0 : i64, scratch_operands = 0 : i64, tpu.core_type = #tpu.core_type<tc>, window_params = [{transform_indices = @transform_0, window_bounds = array<i64: 1, 32, 128>}, {transform_indices = @transform_1, window_bounds = array<i64: 1, 1, 128>}, {pipeline_mode = #tpu.pipeline_mode<synchronous>, transform_indices = @transform_2, window_bounds = array<i64: 128, 128>}, {pipeline_mode = #tpu.pipeline_mode<synchronous>, transform_indices = @transform_3, window_bounds = array<i64: 1, 128>}, {pipeline_mode = #tpu.pipeline_mode<synchronous>, transform_indices = @transform_4, window_bounds = array<i64: 1, 128>}, {transform_indices = @transform_5, window_bounds = array<i64: 1, 32, 128>}]} {
    %c0 = arith.constant 0 : index
    %c0_0 = arith.constant 0 : index
    %c0_1 = arith.constant 0 : index
    %0 = vector.load %arg2[%c0, %c0_0, %c0_1] : memref<1x32x128xbf16, #tpu.memory_space<vmem>>, vector<1x32x128xbf16>
    %1 = vector.shape_cast %0 : vector<1x32x128xbf16> to vector<32x128xbf16>
    %c0_2 = arith.constant 0 : index
    %c0_3 = arith.constant 0 : index
    %c0_4 = arith.constant 0 : index
    %2 = vector.load %arg3[%c0_2, %c0_3, %c0_4] : memref<1x1x128xbf16, #tpu.memory_space<vmem>>, vector<1x1x128xbf16>
    %3 = vector.shape_cast %2 : vector<1x1x128xbf16> to vector<1x128xbf16>
    %4 = vector.broadcast %3 : vector<1x128xbf16> to vector<32x128xbf16>
    %5 = arith.mulf %1, %4 : vector<32x128xbf16>
    %c0_5 = arith.constant 0 : index
    %c0_6 = arith.constant 0 : index
    %6 = vector.load %arg4[%c0_5, %c0_6] : memref<128x128xbf16, #tpu.memory_space<vmem>>, vector<128x128xbf16>
    %cst = arith.constant dense<0.000000e+00> : vector<32x128xf32>
    %7 = tpu.matmul %5, %6, %cst {dimension_numbers = #tpu.dot_dimension_numbers<[1], [0], [0], [1], [0, 0, 1, 1], [], []>} : vector<32x128xbf16>, vector<128x128xbf16>, vector<32x128xf32> -> vector<32x128xf32>
    %c0_7 = arith.constant 0 : index
    %c0_8 = arith.constant 0 : index
    %8 = vector.load %arg5[%c0_7, %c0_8] : memref<1x128xf32, #tpu.memory_space<vmem>>, vector<1x128xf32>
    %9 = vector.broadcast %8 : vector<1x128xf32> to vector<32x128xf32>
    %10 = arith.mulf %7, %9 : vector<32x128xf32>
    %c0_9 = arith.constant 0 : index
    %c0_10 = arith.constant 0 : index
    %11 = vector.load %arg6[%c0_9, %c0_10] : memref<1x128xf32, #tpu.memory_space<vmem>>, vector<1x128xf32>
    %12 = vector.broadcast %11 : vector<1x128xf32> to vector<32x128xf32>
    %13 = arith.addf %10, %12 : vector<32x128xf32>
    %14 = arith.truncf %13 : vector<32x128xf32> to vector<32x128xbf16>
    %c0_11 = arith.constant 0 : index
    %c0_12 = arith.constant 0 : index
    %c0_13 = arith.constant 0 : index
    %15 = vector.load %arg7[%c0_11, %c0_12, %c0_13] : memref<1x32x128xbf16, #tpu.memory_space<vmem>>, vector<1x32x128xbf16>
    %16 = vector.shape_cast %15 : vector<1x32x128xbf16> to vector<32x128xbf16>
    %17 = vector.shape_cast %14 : vector<32x128xbf16> to vector<1x32x128xbf16>
    tpu.vector_store %arg7[%c0_11, %c0_12, %c0_13], %17 {strides = array<i32>} : memref<1x32x128xbf16, #tpu.memory_space<vmem>>, vector<1x32x128xbf16>,
    return
  }
  func.func @transform_0(%arg0: i32, %arg1: i32) -> (i32, i32, i32) {
    %c0_i32 = arith.constant 0 : i32
    %c0_i32_0 = arith.constant 0 : i32
    return %arg0, %arg1, %c0_i32 : i32, i32, i32
  }
  func.func @transform_1(%arg0: i32, %arg1: i32) -> (i32, i32, i32) {
    %c0_i32 = arith.constant 0 : i32
    %c0_i32_0 = arith.constant 0 : i32
    %c0_i32_1 = arith.constant 0 : i32
    return %arg0, %c0_i32, %c0_i32_0 : i32, i32, i32
  }
  func.func @transform_2(%arg0: i32, %arg1: i32) -> (i32, i32) {
    %c0_i32 = arith.constant 0 : i32
    %c0_i32_0 = arith.constant 0 : i32
    %c0_i32_1 = arith.constant 0 : i32
    return %c0_i32, %c0_i32_0 : i32, i32
  }
  func.func @transform_3(%arg0: i32, %arg1: i32) -> (i32, i32) {
    %c0_i32 = arith.constant 0 : i32
    %c0_i32_0 = arith.constant 0 : i32
    %c0_i32_1 = arith.constant 0 : i32
    return %c0_i32, %c0_i32_0 : i32, i32
  }
  func.func @transform_4(%arg0: i32, %arg1: i32) -> (i32, i32) {
    %c0_i32 = arith.constant 0 : i32
    %c0_i32_0 = arith.constant 0 : i32
    %c0_i32_1 = arith.constant 0 : i32
    return %c0_i32, %c0_i32_0 : i32, i32
  }
  func.func @transform_5(%arg0: i32, %arg1: i32) -> (i32, i32, i32) {
    %c0_i32 = arith.constant 0 : i32
    %c0_i32_0 = arith.constant 0 : i32
    return %arg0, %arg1, %c0_i32 : i32, i32, i32
  }
}

module attributes {stable_mosaic.version = 11 : i64} {
  func.func @_matmul_bn_act_kernel(%arg0: i32, %arg1: memref<64x128xbf16, #tpu.memory_space<vmem>>, %arg2: memref<128x256xbf16, #tpu.memory_space<vmem>>, %arg3: memref<1x256xf32, #tpu.memory_space<vmem>>, %arg4: memref<1x256xf32, #tpu.memory_space<vmem>>, %arg5: memref<64x256xbf16, #tpu.memory_space<vmem>>) attributes {dimension_semantics = [#tpu.dimension_semantics<parallel>], iteration_bounds = array<i64: 2>, scalar_prefetch = 0 : i64, scratch_operands = 0 : i64, tpu.core_type = #tpu.core_type<tc>, window_params = [{transform_indices = @transform_0, window_bounds = array<i64: 64, 128>}, {pipeline_mode = #tpu.pipeline_mode<synchronous>, transform_indices = @transform_1, window_bounds = array<i64: 128, 256>}, {pipeline_mode = #tpu.pipeline_mode<synchronous>, transform_indices = @transform_2, window_bounds = array<i64: 1, 256>}, {pipeline_mode = #tpu.pipeline_mode<synchronous>, transform_indices = @transform_3, window_bounds = array<i64: 1, 256>}, {transform_indices = @transform_4, window_bounds = array<i64: 64, 256>}]} {
    %c0 = arith.constant 0 : index
    %c0_0 = arith.constant 0 : index
    %0 = vector.load %arg1[%c0, %c0_0] : memref<64x128xbf16, #tpu.memory_space<vmem>>, vector<64x128xbf16>
    %c0_1 = arith.constant 0 : index
    %c0_2 = arith.constant 0 : index
    %1 = vector.load %arg2[%c0_1, %c0_2] : memref<128x256xbf16, #tpu.memory_space<vmem>>, vector<128x256xbf16>
    %cst = arith.constant dense<0.000000e+00> : vector<64x256xf32>
    %2 = tpu.matmul %0, %1, %cst {dimension_numbers = #tpu.dot_dimension_numbers<[1], [0], [0], [1], [0, 0, 1, 1], [], []>} : vector<64x128xbf16>, vector<128x256xbf16>, vector<64x256xf32> -> vector<64x256xf32>
    %c0_3 = arith.constant 0 : index
    %c0_4 = arith.constant 0 : index
    %3 = vector.load %arg3[%c0_3, %c0_4] : memref<1x256xf32, #tpu.memory_space<vmem>>, vector<1x256xf32>
    %4 = vector.broadcast %3 : vector<1x256xf32> to vector<64x256xf32>
    %5 = arith.mulf %2, %4 : vector<64x256xf32>
    %c0_5 = arith.constant 0 : index
    %c0_6 = arith.constant 0 : index
    %6 = vector.load %arg4[%c0_5, %c0_6] : memref<1x256xf32, #tpu.memory_space<vmem>>, vector<1x256xf32>
    %7 = vector.broadcast %6 : vector<1x256xf32> to vector<64x256xf32>
    %8 = arith.addf %5, %7 : vector<64x256xf32>
    %9 = arith.negf %8 : vector<64x256xf32>
    %10 = math.exp %9 : vector<64x256xf32>
    %cst_7 = arith.constant 1.000000e+00 : f32
    %11 = vector.broadcast %cst_7 : f32 to vector<64x256xf32>
    %12 = arith.addf %11, %10 : vector<64x256xf32>
    %13 = arith.divf %11, %12 : vector<64x256xf32>
    %14 = arith.mulf %8, %13 : vector<64x256xf32>
    %15 = arith.truncf %14 : vector<64x256xf32> to vector<64x256xbf16>
    %c0_8 = arith.constant 0 : index
    %c0_9 = arith.constant 0 : index
    %16 = vector.load %arg5[%c0_8, %c0_9] : memref<64x256xbf16, #tpu.memory_space<vmem>>, vector<64x256xbf16>
    tpu.vector_store %arg5[%c0_8, %c0_9], %15 {strides = array<i32>} : memref<64x256xbf16, #tpu.memory_space<vmem>>, vector<64x256xbf16>,
    return
  }
  func.func @transform_0(%arg0: i32) -> (i32, i32) {
    %c0_i32 = arith.constant 0 : i32
    %c0_i32_0 = arith.constant 0 : i32
    return %arg0, %c0_i32 : i32, i32
  }
  func.func @transform_1(%arg0: i32) -> (i32, i32) {
    %c0_i32 = arith.constant 0 : i32
    %c0_i32_0 = arith.constant 0 : i32
    %c0_i32_1 = arith.constant 0 : i32
    return %c0_i32, %c0_i32_0 : i32, i32
  }
  func.func @transform_2(%arg0: i32) -> (i32, i32) {
    %c0_i32 = arith.constant 0 : i32
    %c0_i32_0 = arith.constant 0 : i32
    %c0_i32_1 = arith.constant 0 : i32
    return %c0_i32, %c0_i32_0 : i32, i32
  }
  func.func @transform_3(%arg0: i32) -> (i32, i32) {
    %c0_i32 = arith.constant 0 : i32
    %c0_i32_0 = arith.constant 0 : i32
    %c0_i32_1 = arith.constant 0 : i32
    return %c0_i32, %c0_i32_0 : i32, i32
  }
  func.func @transform_4(%arg0: i32) -> (i32, i32) {
    %c0_i32 = arith.constant 0 : i32
    %c0_i32_0 = arith.constant 0 : i32
    return %arg0, %c0_i32 : i32, i32
  }
}

module attributes {stable_mosaic.version = 11 : i64} {
  func.func @_dwconv_se_kernel(%arg0: i32, %arg1: i32, %arg2: memref<2x8x8x256xbf16, #tpu.memory_space<any>>, %arg3: memref<9x256xbf16, #tpu.memory_space<vmem>>, %arg4: memref<1x256xf32, #tpu.memory_space<vmem>>, %arg5: memref<1x256xf32, #tpu.memory_space<vmem>>, %arg6: memref<256x128xf32, #tpu.memory_space<vmem>>, %arg7: memref<1x128xf32, #tpu.memory_space<vmem>>, %arg8: memref<128x256xf32, #tpu.memory_space<vmem>>, %arg9: memref<1x256xf32, #tpu.memory_space<vmem>>, %arg10: memref<1x4x8x256xbf16, #tpu.memory_space<vmem>>, %arg11: memref<1x1x256xbf16, #tpu.memory_space<vmem>>, %arg12: memref<6x8x256xbf16, #tpu.memory_space<vmem>>, %arg13: memref<1x256xf32, #tpu.memory_space<vmem>>) attributes {dimension_semantics = [#tpu.dimension_semantics<parallel>, #tpu.dimension_semantics<arbitrary>], iteration_bounds = array<i64: 2, 2>, scalar_prefetch = 0 : i64, scratch_operands = 2 : i64, tpu.core_type = #tpu.core_type<tc>, window_params = [{}, {pipeline_mode = #tpu.pipeline_mode<synchronous>, transform_indices = @transform_1, window_bounds = array<i64: 9, 256>}, {pipeline_mode = #tpu.pipeline_mode<synchronous>, transform_indices = @transform_2, window_bounds = array<i64: 1, 256>}, {pipeline_mode = #tpu.pipeline_mode<synchronous>, transform_indices = @transform_3, window_bounds = array<i64: 1, 256>}, {pipeline_mode = #tpu.pipeline_mode<synchronous>, transform_indices = @transform_4, window_bounds = array<i64: 256, 128>}, {pipeline_mode = #tpu.pipeline_mode<synchronous>, transform_indices = @transform_5, window_bounds = array<i64: 1, 128>}, {pipeline_mode = #tpu.pipeline_mode<synchronous>, transform_indices = @transform_6, window_bounds = array<i64: 128, 256>}, {pipeline_mode = #tpu.pipeline_mode<synchronous>, transform_indices = @transform_7, window_bounds = array<i64: 1, 256>}, {transform_indices = @transform_8, window_bounds = array<i64: 1, 4, 8, 256>}, {transform_indices = @transform_9, window_bounds = array<i64: 1, 1, 256>}]} {
    %c4_i32 = arith.constant 4 : i32
    %0 = arith.muli %arg1, %c4_i32 : i32
    "tpu.region"() ({
      %122 = tpu.sem_alloc : memref<!tpu.dma_semaphore, #tpu.memory_space<semaphore_mem>>
      %c0_i32_29 = arith.constant 0 : i32
      %c0_i32_30 = arith.constant 0 : i32
      %123 = tpu.memref_slice %arg2[%arg0, %0, %c0_i32_29, %c0_i32_30] : memref<2x8x8x256xbf16, #tpu.memory_space<any>> -> memref<1x4x8x256xbf16, #tpu.memory_space<any>>
      %124 = tpu.memref_squeeze %123 : memref<1x4x8x256xbf16, #tpu.memory_space<any>> -> memref<4x8x256xbf16, #tpu.memory_space<any>>
      %c1_i32_31 = arith.constant 1 : i32
      %c0_i32_32 = arith.constant 0 : i32
      %c0_i32_33 = arith.constant 0 : i32
      %125 = tpu.memref_slice %arg12[%c1_i32_31, %c0_i32_32, %c0_i32_33] : memref<6x8x256xbf16, #tpu.memory_space<vmem>> -> memref<4x8x256xbf16, #tpu.memory_space<vmem>>
      tpu.enqueue_dma source(%124 : memref<4x8x256xbf16, #tpu.memory_space<any>>) target(%125 : memref<4x8x256xbf16, #tpu.memory_space<vmem>>) target_semaphore(%122 : memref<!tpu.dma_semaphore, #tpu.memory_space<semaphore_mem>>)
      %c0_i32_34 = arith.constant 0 : i32
      %c0_i32_35 = arith.constant 0 : i32
      %126 = tpu.memref_slice %arg2[%arg0, %0, %c0_i32_34, %c0_i32_35] : memref<2x8x8x256xbf16, #tpu.memory_space<any>> -> memref<1x4x8x256xbf16, #tpu.memory_space<any>>
      %127 = tpu.memref_squeeze %126 : memref<1x4x8x256xbf16, #tpu.memory_space<any>> -> memref<4x8x256xbf16, #tpu.memory_space<any>>
      %c1_i32_36 = arith.constant 1 : i32
      %c0_i32_37 = arith.constant 0 : i32
      %c0_i32_38 = arith.constant 0 : i32
      %128 = tpu.memref_slice %arg12[%c1_i32_36, %c0_i32_37, %c0_i32_38] : memref<6x8x256xbf16, #tpu.memory_space<vmem>> -> memref<4x8x256xbf16, #tpu.memory_space<vmem>>
      tpu.wait_dma2 semaphore(%122 : memref<!tpu.dma_semaphore, #tpu.memory_space<semaphore_mem>>) src(%127 : memref<4x8x256xbf16, #tpu.memory_space<any>>) dst(%128 : memref<4x8x256xbf16, #tpu.memory_space<vmem>>)
      tpu.yield
    }) : () -> ()
    %c0_i32 = arith.constant 0 : i32
    %1 = arith.cmpi sgt, %arg1, %c0_i32 : i32
    %2 = arith.extui %1 : i1 to i32
    %c0_i32_0 = arith.constant 0 : i32
    %3 = arith.cmpi ne, %2, %c0_i32_0 : i32
    scf.if %3 {
      %c1_i32_29 = arith.constant 1 : i32
      %122 = arith.subi %0, %c1_i32_29 : i32
      "tpu.region"() ({
        %123 = tpu.sem_alloc : memref<!tpu.dma_semaphore, #tpu.memory_space<semaphore_mem>>
        %c0_i32_30 = arith.constant 0 : i32
        %c0_i32_31 = arith.constant 0 : i32
        %124 = tpu.memref_slice %arg2[%arg0, %122, %c0_i32_30, %c0_i32_31] : memref<2x8x8x256xbf16, #tpu.memory_space<any>> -> memref<1x1x8x256xbf16, #tpu.memory_space<any>>
        %125 = tpu.memref_squeeze %124 : memref<1x1x8x256xbf16, #tpu.memory_space<any>> -> memref<1x8x256xbf16, #tpu.memory_space<any>>
        %c0_i32_32 = arith.constant 0 : i32
        %c0_i32_33 = arith.constant 0 : i32
        %c0_i32_34 = arith.constant 0 : i32
        %126 = tpu.memref_slice %arg12[%c0_i32_32, %c0_i32_33, %c0_i32_34] : memref<6x8x256xbf16, #tpu.memory_space<vmem>> -> memref<1x8x256xbf16, #tpu.memory_space<vmem>>
        tpu.enqueue_dma source(%125 : memref<1x8x256xbf16, #tpu.memory_space<any>>) target(%126 : memref<1x8x256xbf16, #tpu.memory_space<vmem>>) target_semaphore(%123 : memref<!tpu.dma_semaphore, #tpu.memory_space<semaphore_mem>>)
        %c0_i32_35 = arith.constant 0 : i32
        %c0_i32_36 = arith.constant 0 : i32
        %127 = tpu.memref_slice %arg2[%arg0, %122, %c0_i32_35, %c0_i32_36] : memref<2x8x8x256xbf16, #tpu.memory_space<any>> -> memref<1x1x8x256xbf16, #tpu.memory_space<any>>
        %128 = tpu.memref_squeeze %127 : memref<1x1x8x256xbf16, #tpu.memory_space<any>> -> memref<1x8x256xbf16, #tpu.memory_space<any>>
        %c0_i32_37 = arith.constant 0 : i32
        %c0_i32_38 = arith.constant 0 : i32
        %c0_i32_39 = arith.constant 0 : i32
        %129 = tpu.memref_slice %arg12[%c0_i32_37, %c0_i32_38, %c0_i32_39] : memref<6x8x256xbf16, #tpu.memory_space<vmem>> -> memref<1x8x256xbf16, #tpu.memory_space<vmem>>
        tpu.wait_dma2 semaphore(%123 : memref<!tpu.dma_semaphore, #tpu.memory_space<semaphore_mem>>) src(%128 : memref<1x8x256xbf16, #tpu.memory_space<any>>) dst(%129 : memref<1x8x256xbf16, #tpu.memory_space<vmem>>)
        tpu.yield
      }) : () -> ()
    } else {
    }
    %c0_i32_1 = arith.constant 0 : i32
    %4 = arith.cmpi eq, %arg1, %c0_i32_1 : i32
    %5 = arith.extui %4 : i1 to i32
    %c0_i32_2 = arith.constant 0 : i32
    %6 = arith.cmpi ne, %5, %c0_i32_2 : i32
    scf.if %6 {
      %cst_29 = arith.constant 0.000000e+00 : bf16
      %122 = vector.broadcast %cst_29 : bf16 to vector<8x256xbf16>
      %c0_30 = arith.constant 0 : index
      %c0_31 = arith.constant 0 : index
      %c0_32 = arith.constant 0 : index
      %123 = vector.load %arg12[%c0_30, %c0_31, %c0_32] : memref<6x8x256xbf16, #tpu.memory_space<vmem>>, vector<1x8x256xbf16>
      %124 = vector.shape_cast %123 : vector<1x8x256xbf16> to vector<8x256xbf16>
      %125 = vector.shape_cast %122 : vector<8x256xbf16> to vector<1x8x256xbf16>
      tpu.vector_store %arg12[%c0_30, %c0_31, %c0_32], %125 {strides = array<i32>} : memref<6x8x256xbf16, #tpu.memory_space<vmem>>, vector<1x8x256xbf16>,
    } else {
    }
    %c1_i32 = arith.constant 1 : i32
    %7 = arith.cmpi slt, %arg1, %c1_i32 : i32
    %8 = arith.extui %7 : i1 to i32
    %c0_i32_3 = arith.constant 0 : i32
    %9 = arith.cmpi ne, %8, %c0_i32_3 : i32
    scf.if %9 {
      %c4_i32_29 = arith.constant 4 : i32
      %122 = arith.addi %0, %c4_i32_29 : i32
      "tpu.region"() ({
        %123 = tpu.sem_alloc : memref<!tpu.dma_semaphore, #tpu.memory_space<semaphore_mem>>
        %c0_i32_30 = arith.constant 0 : i32
        %c0_i32_31 = arith.constant 0 : i32
        %124 = tpu.memref_slice %arg2[%arg0, %122, %c0_i32_30, %c0_i32_31] : memref<2x8x8x256xbf16, #tpu.memory_space<any>> -> memref<1x1x8x256xbf16, #tpu.memory_space<any>>
        %125 = tpu.memref_squeeze %124 : memref<1x1x8x256xbf16, #tpu.memory_space<any>> -> memref<1x8x256xbf16, #tpu.memory_space<any>>
        %c5_i32 = arith.constant 5 : i32
        %c0_i32_32 = arith.constant 0 : i32
        %c0_i32_33 = arith.constant 0 : i32
        %126 = tpu.memref_slice %arg12[%c5_i32, %c0_i32_32, %c0_i32_33] : memref<6x8x256xbf16, #tpu.memory_space<vmem>> -> memref<1x8x256xbf16, #tpu.memory_space<vmem>>
        tpu.enqueue_dma source(%125 : memref<1x8x256xbf16, #tpu.memory_space<any>>) target(%126 : memref<1x8x256xbf16, #tpu.memory_space<vmem>>) target_semaphore(%123 : memref<!tpu.dma_semaphore, #tpu.memory_space<semaphore_mem>>)
        %c0_i32_34 = arith.constant 0 : i32
        %c0_i32_35 = arith.constant 0 : i32
        %127 = tpu.memref_slice %arg2[%arg0, %122, %c0_i32_34, %c0_i32_35] : memref<2x8x8x256xbf16, #tpu.memory_space<any>> -> memref<1x1x8x256xbf16, #tpu.memory_space<any>>
        %128 = tpu.memref_squeeze %127 : memref<1x1x8x256xbf16, #tpu.memory_space<any>> -> memref<1x8x256xbf16, #tpu.memory_space<any>>
        %c5_i32_36 = arith.constant 5 : i32
        %c0_i32_37 = arith.constant 0 : i32
        %c0_i32_38 = arith.constant 0 : i32
        %129 = tpu.memref_slice %arg12[%c5_i32_36, %c0_i32_37, %c0_i32_38] : memref<6x8x256xbf16, #tpu.memory_space<vmem>> -> memref<1x8x256xbf16, #tpu.memory_space<vmem>>
        tpu.wait_dma2 semaphore(%123 : memref<!tpu.dma_semaphore, #tpu.memory_space<semaphore_mem>>) src(%128 : memref<1x8x256xbf16, #tpu.memory_space<any>>) dst(%129 : memref<1x8x256xbf16, #tpu.memory_space<vmem>>)
        tpu.yield
      }) : () -> ()
    } else {
    }
    %c1_i32_4 = arith.constant 1 : i32
    %10 = arith.cmpi eq, %arg1, %c1_i32_4 : i32
    %11 = arith.extui %10 : i1 to i32
    %c0_i32_5 = arith.constant 0 : i32
    %12 = arith.cmpi ne, %11, %c0_i32_5 : i32
    scf.if %12 {
      %cst_29 = arith.constant 0.000000e+00 : bf16
      %122 = vector.broadcast %cst_29 : bf16 to vector<8x256xbf16>
      %c5 = arith.constant 5 : index
      %c0_30 = arith.constant 0 : index
      %c0_31 = arith.constant 0 : index
      %123 = vector.load %arg12[%c5, %c0_30, %c0_31] : memref<6x8x256xbf16, #tpu.memory_space<vmem>>, vector<1x8x256xbf16>
      %124 = vector.shape_cast %123 : vector<1x8x256xbf16> to vector<8x256xbf16>
      %125 = vector.shape_cast %122 : vector<8x256xbf16> to vector<1x8x256xbf16>
      tpu.vector_store %arg12[%c5, %c0_30, %c0_31], %125 {strides = array<i32>} : memref<6x8x256xbf16, #tpu.memory_space<vmem>>, vector<1x8x256xbf16>,
    } else {
    }
    %c0 = arith.constant 0 : index
    %c0_6 = arith.constant 0 : index
    %c0_7 = arith.constant 0 : index
    %13 = vector.load %arg12[%c0, %c0_6, %c0_7] : memref<6x8x256xbf16, #tpu.memory_space<vmem>>, vector<6x8x256xbf16>
    %cst = arith.constant 0.000000e+00 : bf16
    %14 = vector.broadcast %cst : bf16 to vector<6x1x256xbf16>
    %15 = vector.extract_strided_slice %13 {offsets = [0, 0, 0], sizes = [6, 7, 256], strides = [1, 1, 1]} : vector<6x8x256xbf16> to vector<6x7x256xbf16>
    %16 = tpu.concatenate %14, %15 in 1 : vector<6x1x256xbf16>, vector<6x7x256xbf16> -> vector<6x8x256xbf16>
    %17 = vector.extract_strided_slice %13 {offsets = [0, 1, 0], sizes = [6, 7, 256], strides = [1, 1, 1]} : vector<6x8x256xbf16> to vector<6x7x256xbf16>
    %18 = tpu.concatenate %17, %14 in 1 : vector<6x7x256xbf16>, vector<6x1x256xbf16> -> vector<6x8x256xbf16>
    %c0_8 = arith.constant 0 : index
    %c0_9 = arith.constant 0 : index
    %19 = vector.load %arg3[%c0_8, %c0_9] : memref<9x256xbf16, #tpu.memory_space<vmem>>, vector<9x256xbf16>
    %cst_10 = arith.constant 0.000000e+00 : f32
    %20 = vector.broadcast %cst_10 : f32 to vector<4x8x256xf32>
    %21 = vector.extract_strided_slice %16 {offsets = [0, 0, 0], sizes = [4, 8, 256], strides = [1, 1, 1]} : vector<6x8x256xbf16> to vector<4x8x256xbf16>
    %22 = vector.extract_strided_slice %19 {offsets = [0, 0], sizes = [1, 256], strides = [1, 1]} : vector<9x256xbf16> to vector<1x256xbf16>
    %23 = vector.shape_cast %22 : vector<1x256xbf16> to vector<256xbf16>
    %24 = vector.shape_cast %23 : vector<256xbf16> to vector<1x1x256xbf16>
    %25 = vector.broadcast %24 : vector<1x1x256xbf16> to vector<4x8x256xbf16>
    %26 = arith.mulf %21, %25 : vector<4x8x256xbf16>
    %27 = arith.extf %26 : vector<4x8x256xbf16> to vector<4x8x256xf32>
    %28 = arith.addf %20, %27 : vector<4x8x256xf32>
    %29 = vector.extract_strided_slice %13 {offsets = [0, 0, 0], sizes = [4, 8, 256], strides = [1, 1, 1]} : vector<6x8x256xbf16> to vector<4x8x256xbf16>
    %30 = vector.extract_strided_slice %19 {offsets = [1, 0], sizes = [1, 256], strides = [1, 1]} : vector<9x256xbf16> to vector<1x256xbf16>
    %31 = vector.shape_cast %30 : vector<1x256xbf16> to vector<256xbf16>
    %32 = vector.shape_cast %31 : vector<256xbf16> to vector<1x1x256xbf16>
    %33 = vector.broadcast %32 : vector<1x1x256xbf16> to vector<4x8x256xbf16>
    %34 = arith.mulf %29, %33 : vector<4x8x256xbf16>
    %35 = arith.extf %34 : vector<4x8x256xbf16> to vector<4x8x256xf32>
    %36 = arith.addf %28, %35 : vector<4x8x256xf32>
    %37 = vector.extract_strided_slice %18 {offsets = [0, 0, 0], sizes = [4, 8, 256], strides = [1, 1, 1]} : vector<6x8x256xbf16> to vector<4x8x256xbf16>
    %38 = vector.extract_strided_slice %19 {offsets = [2, 0], sizes = [1, 256], strides = [1, 1]} : vector<9x256xbf16> to vector<1x256xbf16>
    %39 = vector.shape_cast %38 : vector<1x256xbf16> to vector<256xbf16>
    %40 = vector.shape_cast %39 : vector<256xbf16> to vector<1x1x256xbf16>
    %41 = vector.broadcast %40 : vector<1x1x256xbf16> to vector<4x8x256xbf16>
    %42 = arith.mulf %37, %41 : vector<4x8x256xbf16>
    %43 = arith.extf %42 : vector<4x8x256xbf16> to vector<4x8x256xf32>
    %44 = arith.addf %36, %43 : vector<4x8x256xf32>
    %45 = vector.extract_strided_slice %16 {offsets = [1, 0, 0], sizes = [4, 8, 256], strides = [1, 1, 1]} : vector<6x8x256xbf16> to vector<4x8x256xbf16>
    %46 = vector.extract_strided_slice %19 {offsets = [3, 0], sizes = [1, 256], strides = [1, 1]} : vector<9x256xbf16> to vector<1x256xbf16>
    %47 = vector.shape_cast %46 : vector<1x256xbf16> to vector<256xbf16>
    %48 = vector.shape_cast %47 : vector<256xbf16> to vector<1x1x256xbf16>
    %49 = vector.broadcast %48 : vector<1x1x256xbf16> to vector<4x8x256xbf16>
    %50 = arith.mulf %45, %49 : vector<4x8x256xbf16>
    %51 = arith.extf %50 : vector<4x8x256xbf16> to vector<4x8x256xf32>
    %52 = arith.addf %44, %51 : vector<4x8x256xf32>
    %53 = vector.extract_strided_slice %13 {offsets = [1, 0, 0], sizes = [4, 8, 256], strides = [1, 1, 1]} : vector<6x8x256xbf16> to vector<4x8x256xbf16>
    %54 = vector.extract_strided_slice %19 {offsets = [4, 0], sizes = [1, 256], strides = [1, 1]} : vector<9x256xbf16> to vector<1x256xbf16>
    %55 = vector.shape_cast %54 : vector<1x256xbf16> to vector<256xbf16>
    %56 = vector.shape_cast %55 : vector<256xbf16> to vector<1x1x256xbf16>
    %57 = vector.broadcast %56 : vector<1x1x256xbf16> to vector<4x8x256xbf16>
    %58 = arith.mulf %53, %57 : vector<4x8x256xbf16>
    %59 = arith.extf %58 : vector<4x8x256xbf16> to vector<4x8x256xf32>
    %60 = arith.addf %52, %59 : vector<4x8x256xf32>
    %61 = vector.extract_strided_slice %18 {offsets = [1, 0, 0], sizes = [4, 8, 256], strides = [1, 1, 1]} : vector<6x8x256xbf16> to vector<4x8x256xbf16>
    %62 = vector.extract_strided_slice %19 {offsets = [5, 0], sizes = [1, 256], strides = [1, 1]} : vector<9x256xbf16> to vector<1x256xbf16>
    %63 = vector.shape_cast %62 : vector<1x256xbf16> to vector<256xbf16>
    %64 = vector.shape_cast %63 : vector<256xbf16> to vector<1x1x256xbf16>
    %65 = vector.broadcast %64 : vector<1x1x256xbf16> to vector<4x8x256xbf16>
    %66 = arith.mulf %61, %65 : vector<4x8x256xbf16>
    %67 = arith.extf %66 : vector<4x8x256xbf16> to vector<4x8x256xf32>
    %68 = arith.addf %60, %67 : vector<4x8x256xf32>
    %69 = vector.extract_strided_slice %16 {offsets = [2, 0, 0], sizes = [4, 8, 256], strides = [1, 1, 1]} : vector<6x8x256xbf16> to vector<4x8x256xbf16>
    %70 = vector.extract_strided_slice %19 {offsets = [6, 0], sizes = [1, 256], strides = [1, 1]} : vector<9x256xbf16> to vector<1x256xbf16>
    %71 = vector.shape_cast %70 : vector<1x256xbf16> to vector<256xbf16>
    %72 = vector.shape_cast %71 : vector<256xbf16> to vector<1x1x256xbf16>
    %73 = vector.broadcast %72 : vector<1x1x256xbf16> to vector<4x8x256xbf16>
    %74 = arith.mulf %69, %73 : vector<4x8x256xbf16>
    %75 = arith.extf %74 : vector<4x8x256xbf16> to vector<4x8x256xf32>
    %76 = arith.addf %68, %75 : vector<4x8x256xf32>
    %77 = vector.extract_strided_slice %13 {offsets = [2, 0, 0], sizes = [4, 8, 256], strides = [1, 1, 1]} : vector<6x8x256xbf16> to vector<4x8x256xbf16>
    %78 = vector.extract_strided_slice %19 {offsets = [7, 0], sizes = [1, 256], strides = [1, 1]} : vector<9x256xbf16> to vector<1x256xbf16>
    %79 = vector.shape_cast %78 : vector<1x256xbf16> to vector<256xbf16>
    %80 = vector.shape_cast %79 : vector<256xbf16> to vector<1x1x256xbf16>
    %81 = vector.broadcast %80 : vector<1x1x256xbf16> to vector<4x8x256xbf16>
    %82 = arith.mulf %77, %81 : vector<4x8x256xbf16>
    %83 = arith.extf %82 : vector<4x8x256xbf16> to vector<4x8x256xf32>
    %84 = arith.addf %76, %83 : vector<4x8x256xf32>
    %85 = vector.extract_strided_slice %18 {offsets = [2, 0, 0], sizes = [4, 8, 256], strides = [1, 1, 1]} : vector<6x8x256xbf16> to vector<4x8x256xbf16>
    %86 = vector.extract_strided_slice %19 {offsets = [8, 0], sizes = [1, 256], strides = [1, 1]} : vector<9x256xbf16> to vector<1x256xbf16>
    %87 = vector.shape_cast %86 : vector<1x256xbf16> to vector<256xbf16>
    %88 = vector.shape_cast %87 : vector<256xbf16> to vector<1x1x256xbf16>
    %89 = vector.broadcast %88 : vector<1x1x256xbf16> to vector<4x8x256xbf16>
    %90 = arith.mulf %85, %89 : vector<4x8x256xbf16>
    %91 = arith.extf %90 : vector<4x8x256xbf16> to vector<4x8x256xf32>
    %92 = arith.addf %84, %91 : vector<4x8x256xf32>
    %c0_11 = arith.constant 0 : index
    %c0_12 = arith.constant 0 : index
    %93 = vector.load %arg4[%c0_11, %c0_12] : memref<1x256xf32, #tpu.memory_space<vmem>>, vector<1x256xf32>
    %94 = vector.shape_cast %93 : vector<1x256xf32> to vector<1x1x256xf32>
    %95 = vector.broadcast %94 : vector<1x1x256xf32> to vector<4x8x256xf32>
    %96 = arith.mulf %92, %95 : vector<4x8x256xf32>
    %c0_13 = arith.constant 0 : index
    %c0_14 = arith.constant 0 : index
    %97 = vector.load %arg5[%c0_13, %c0_14] : memref<1x256xf32, #tpu.memory_space<vmem>>, vector<1x256xf32>
    %98 = vector.shape_cast %97 : vector<1x256xf32> to vector<1x1x256xf32>
    %99 = vector.broadcast %98 : vector<1x1x256xf32> to vector<4x8x256xf32>
    %100 = arith.addf %96, %99 : vector<4x8x256xf32>
    %101 = arith.negf %100 : vector<4x8x256xf32>
    %102 = math.exp %101 : vector<4x8x256xf32>
    %cst_15 = arith.constant 1.000000e+00 : f32
    %103 = vector.broadcast %cst_15 : f32 to vector<4x8x256xf32>
    %104 = arith.addf %103, %102 : vector<4x8x256xf32>
    %105 = arith.divf %103, %104 : vector<4x8x256xf32>
    %106 = arith.mulf %100, %105 : vector<4x8x256xf32>
    %107 = arith.truncf %106 : vector<4x8x256xf32> to vector<4x8x256xbf16>
    %c0_16 = arith.constant 0 : index
    %c0_17 = arith.constant 0 : index
    %c0_18 = arith.constant 0 : index
    %c0_19 = arith.constant 0 : index
    %108 = vector.load %arg10[%c0_16, %c0_17, %c0_18, %c0_19] : memref<1x4x8x256xbf16, #tpu.memory_space<vmem>>, vector<1x4x8x256xbf16>
    %109 = vector.shape_cast %108 : vector<1x4x8x256xbf16> to vector<4x8x256xbf16>
    %110 = vector.shape_cast %107 : vector<4x8x256xbf16> to vector<1x4x8x256xbf16>
    tpu.vector_store %arg10[%c0_16, %c0_17, %c0_18, %c0_19], %110 {strides = array<i32>} : memref<1x4x8x256xbf16, #tpu.memory_space<vmem>>, vector<1x4x8x256xbf16>,
    %c0_i32_20 = arith.constant 0 : i32
    %111 = arith.cmpi eq, %arg1, %c0_i32_20 : i32
    %112 = arith.extui %111 : i1 to i32
    %c0_i32_21 = arith.constant 0 : i32
    %113 = arith.cmpi ne, %112, %c0_i32_21 : i32
    scf.if %113 {
      %cst_29 = arith.constant 0.000000e+00 : f32
      %122 = vector.broadcast %cst_29 : f32 to vector<1x256xf32>
      %c0_30 = arith.constant 0 : index
      %c0_31 = arith.constant 0 : index
      %123 = vector.load %arg13[%c0_30, %c0_31] : memref<1x256xf32, #tpu.memory_space<vmem>>, vector<1x256xf32>
      tpu.vector_store %arg13[%c0_30, %c0_31], %122 {strides = array<i32>} : memref<1x256xf32, #tpu.memory_space<vmem>>, vector<1x256xf32>,
    } else {
    }
    %c0_22 = arith.constant 0 : index
    %c0_23 = arith.constant 0 : index
    %114 = vector.load %arg13[%c0_22, %c0_23] : memref<1x256xf32, #tpu.memory_space<vmem>>, vector<1x256xf32>
    %cst_24 = arith.constant dense<0.000000e+00> : vector<256xf32>
    %115 = vector.multi_reduction <add>, %106, %cst_24 [0, 1] : vector<4x8x256xf32> to vector<256xf32>
    %116 = vector.shape_cast %115 : vector<256xf32> to vector<1x256xf32>
    %117 = arith.addf %114, %116 : vector<1x256xf32>
    %c0_25 = arith.constant 0 : index
    %c0_26 = arith.constant 0 : index
    %118 = vector.load %arg13[%c0_25, %c0_26] : memref<1x256xf32, #tpu.memory_space<vmem>>, vector<1x256xf32>
    tpu.vector_store %arg13[%c0_25, %c0_26], %117 {strides = array<i32>} : memref<1x256xf32, #tpu.memory_space<vmem>>, vector<1x256xf32>,
    %c1_i32_27 = arith.constant 1 : i32
    %119 = arith.cmpi eq, %arg1, %c1_i32_27 : i32
    %120 = arith.extui %119 : i1 to i32
    %c0_i32_28 = arith.constant 0 : i32
    %121 = arith.cmpi ne, %120, %c0_i32_28 : i32
    scf.if %121 {
      %c0_29 = arith.constant 0 : index
      %c0_30 = arith.constant 0 : index
      %122 = vector.load %arg13[%c0_29, %c0_30] : memref<1x256xf32, #tpu.memory_space<vmem>>, vector<1x256xf32>
      %cst_31 = arith.constant 1.562500e-02 : f32
      %123 = vector.broadcast %cst_31 : f32 to vector<1x256xf32>
      %124 = arith.mulf %122, %123 : vector<1x256xf32>
      %c0_32 = arith.constant 0 : index
      %c0_33 = arith.constant 0 : index
      %125 = vector.load %arg6[%c0_32, %c0_33] : memref<256x128xf32, #tpu.memory_space<vmem>>, vector<256x128xf32>
      %cst_34 = arith.constant dense<0.000000e+00> : vector<1x128xf32>
      %126 = tpu.matmul %124, %125, %cst_34 {dimension_numbers = #tpu.dot_dimension_numbers<[1], [0], [0], [1], [0, 0, 1, 1], [], []>} : vector<1x256xf32>, vector<256x128xf32>, vector<1x128xf32> -> vector<1x128xf32>
      %c0_35 = arith.constant 0 : index
      %c0_36 = arith.constant 0 : index
      %127 = vector.load %arg7[%c0_35, %c0_36] : memref<1x128xf32, #tpu.memory_space<vmem>>, vector<1x128xf32>
      %128 = arith.addf %126, %127 : vector<1x128xf32>
      %129 = arith.negf %128 : vector<1x128xf32>
      %130 = math.exp %129 : vector<1x128xf32>
      %cst_37 = arith.constant 1.000000e+00 : f32
      %131 = vector.broadcast %cst_37 : f32 to vector<1x128xf32>
      %132 = arith.addf %131, %130 : vector<1x128xf32>
      %133 = arith.divf %131, %132 : vector<1x128xf32>
      %134 = arith.mulf %128, %133 : vector<1x128xf32>
      %c0_38 = arith.constant 0 : index
      %c0_39 = arith.constant 0 : index
      %135 = vector.load %arg8[%c0_38, %c0_39] : memref<128x256xf32, #tpu.memory_space<vmem>>, vector<128x256xf32>
      %cst_40 = arith.constant dense<0.000000e+00> : vector<1x256xf32>
      %136 = tpu.matmul %134, %135, %cst_40 {dimension_numbers = #tpu.dot_dimension_numbers<[1], [0], [0], [1], [0, 0, 1, 1], [], []>} : vector<1x128xf32>, vector<128x256xf32>, vector<1x256xf32> -> vector<1x256xf32>
      %c0_41 = arith.constant 0 : index
      %c0_42 = arith.constant 0 : index
      %137 = vector.load %arg9[%c0_41, %c0_42] : memref<1x256xf32, #tpu.memory_space<vmem>>, vector<1x256xf32>
      %138 = arith.addf %136, %137 : vector<1x256xf32>
      %139 = arith.negf %138 : vector<1x256xf32>
      %140 = math.exp %139 : vector<1x256xf32>
      %cst_43 = arith.constant 1.000000e+00 : f32
      %141 = vector.broadcast %cst_43 : f32 to vector<1x256xf32>
      %142 = arith.addf %141, %140 : vector<1x256xf32>
      %143 = arith.divf %141, %142 : vector<1x256xf32>
      %144 = arith.truncf %143 : vector<1x256xf32> to vector<1x256xbf16>
      %c0_44 = arith.constant 0 : index
      %c0_45 = arith.constant 0 : index
      %c0_46 = arith.constant 0 : index
      %145 = vector.load %arg11[%c0_44, %c0_45, %c0_46] : memref<1x1x256xbf16, #tpu.memory_space<vmem>>, vector<1x1x256xbf16>
      %146 = vector.shape_cast %145 : vector<1x1x256xbf16> to vector<1x256xbf16>
      %147 = vector.shape_cast %144 : vector<1x256xbf16> to vector<1x1x256xbf16>
      tpu.vector_store %arg11[%c0_44, %c0_45, %c0_46], %147 {strides = array<i32>} : memref<1x1x256xbf16, #tpu.memory_space<vmem>>, vector<1x1x256xbf16>,
    } else {
    }
    return
  }
  func.func @transform_1(%arg0: i32, %arg1: i32) -> (i32, i32) {
    %c0_i32 = arith.constant 0 : i32
    %c0_i32_0 = arith.constant 0 : i32
    %c0_i32_1 = arith.constant 0 : i32
    return %c0_i32, %c0_i32_0 : i32, i32
  }
  func.func @transform_2(%arg0: i32, %arg1: i32) -> (i32, i32) {
    %c0_i32 = arith.constant 0 : i32
    %c0_i32_0 = arith.constant 0 : i32
    %c0_i32_1 = arith.constant 0 : i32
    return %c0_i32, %c0_i32_0 : i32, i32
  }
  func.func @transform_3(%arg0: i32, %arg1: i32) -> (i32, i32) {
    %c0_i32 = arith.constant 0 : i32
    %c0_i32_0 = arith.constant 0 : i32
    %c0_i32_1 = arith.constant 0 : i32
    return %c0_i32, %c0_i32_0 : i32, i32
  }
  func.func @transform_4(%arg0: i32, %arg1: i32) -> (i32, i32) {
    %c0_i32 = arith.constant 0 : i32
    %c0_i32_0 = arith.constant 0 : i32
    %c0_i32_1 = arith.constant 0 : i32
    return %c0_i32, %c0_i32_0 : i32, i32
  }
  func.func @transform_5(%arg0: i32, %arg1: i32) -> (i32, i32) {
    %c0_i32 = arith.constant 0 : i32
    %c0_i32_0 = arith.constant 0 : i32
    %c0_i32_1 = arith.constant 0 : i32
    return %c0_i32, %c0_i32_0 : i32, i32
  }
  func.func @transform_6(%arg0: i32, %arg1: i32) -> (i32, i32) {
    %c0_i32 = arith.constant 0 : i32
    %c0_i32_0 = arith.constant 0 : i32
    %c0_i32_1 = arith.constant 0 : i32
    return %c0_i32, %c0_i32_0 : i32, i32
  }
  func.func @transform_7(%arg0: i32, %arg1: i32) -> (i32, i32) {
    %c0_i32 = arith.constant 0 : i32
    %c0_i32_0 = arith.constant 0 : i32
    %c0_i32_1 = arith.constant 0 : i32
    return %c0_i32, %c0_i32_0 : i32, i32
  }
  func.func @transform_8(%arg0: i32, %arg1: i32) -> (i32, i32, i32, i32) {
    %c0_i32 = arith.constant 0 : i32
    %c0_i32_0 = arith.constant 0 : i32
    %c0_i32_1 = arith.constant 0 : i32
    return %arg0, %arg1, %c0_i32, %c0_i32_0 : i32, i32, i32, i32
  }
  func.func @transform_9(%arg0: i32, %arg1: i32) -> (i32, i32, i32) {
    %c0_i32 = arith.constant 0 : i32
    %c0_i32_0 = arith.constant 0 : i32
    %c0_i32_1 = arith.constant 0 : i32
    return %arg0, %c0_i32, %c0_i32_0 : i32, i32, i32
  }
}

module attributes {stable_mosaic.version = 11 : i64} {
  func.func @_gate_proj_res_kernel(%arg0: i32, %arg1: i32, %arg2: memref<1x32x256xbf16, #tpu.memory_space<vmem>>, %arg3: memref<1x1x256xbf16, #tpu.memory_space<vmem>>, %arg4: memref<256x128xbf16, #tpu.memory_space<vmem>>, %arg5: memref<1x128xf32, #tpu.memory_space<vmem>>, %arg6: memref<1x128xf32, #tpu.memory_space<vmem>>, %arg7: memref<1x32x128xbf16, #tpu.memory_space<vmem>>, %arg8: memref<1x32x128xbf16, #tpu.memory_space<vmem>>) attributes {dimension_semantics = [#tpu.dimension_semantics<parallel>, #tpu.dimension_semantics<parallel>], iteration_bounds = array<i64: 2, 2>, scalar_prefetch = 0 : i64, scratch_operands = 0 : i64, tpu.core_type = #tpu.core_type<tc>, window_params = [{transform_indices = @transform_0, window_bounds = array<i64: 1, 32, 256>}, {transform_indices = @transform_1, window_bounds = array<i64: 1, 1, 256>}, {pipeline_mode = #tpu.pipeline_mode<synchronous>, transform_indices = @transform_2, window_bounds = array<i64: 256, 128>}, {pipeline_mode = #tpu.pipeline_mode<synchronous>, transform_indices = @transform_3, window_bounds = array<i64: 1, 128>}, {pipeline_mode = #tpu.pipeline_mode<synchronous>, transform_indices = @transform_4, window_bounds = array<i64: 1, 128>}, {transform_indices = @transform_5, window_bounds = array<i64: 1, 32, 128>}, {transform_indices = @transform_6, window_bounds = array<i64: 1, 32, 128>}]} {
    %c0 = arith.constant 0 : index
    %c0_0 = arith.constant 0 : index
    %c0_1 = arith.constant 0 : index
    %0 = vector.load %arg2[%c0, %c0_0, %c0_1] : memref<1x32x256xbf16, #tpu.memory_space<vmem>>, vector<1x32x256xbf16>
    %1 = vector.shape_cast %0 : vector<1x32x256xbf16> to vector<32x256xbf16>
    %c0_2 = arith.constant 0 : index
    %c0_3 = arith.constant 0 : index
    %c0_4 = arith.constant 0 : index
    %2 = vector.load %arg3[%c0_2, %c0_3, %c0_4] : memref<1x1x256xbf16, #tpu.memory_space<vmem>>, vector<1x1x256xbf16>
    %3 = vector.shape_cast %2 : vector<1x1x256xbf16> to vector<1x256xbf16>
    %4 = vector.broadcast %3 : vector<1x256xbf16> to vector<32x256xbf16>
    %5 = arith.mulf %1, %4 : vector<32x256xbf16>
    %c0_5 = arith.constant 0 : index
    %c0_6 = arith.constant 0 : index
    %6 = vector.load %arg4[%c0_5, %c0_6] : memref<256x128xbf16, #tpu.memory_space<vmem>>, vector<256x128xbf16>
    %cst = arith.constant dense<0.000000e+00> : vector<32x128xf32>
    %7 = tpu.matmul %5, %6, %cst {dimension_numbers = #tpu.dot_dimension_numbers<[1], [0], [0], [1], [0, 0, 1, 1], [], []>} : vector<32x256xbf16>, vector<256x128xbf16>, vector<32x128xf32> -> vector<32x128xf32>
    %c0_7 = arith.constant 0 : index
    %c0_8 = arith.constant 0 : index
    %8 = vector.load %arg5[%c0_7, %c0_8] : memref<1x128xf32, #tpu.memory_space<vmem>>, vector<1x128xf32>
    %9 = vector.broadcast %8 : vector<1x128xf32> to vector<32x128xf32>
    %10 = arith.mulf %7, %9 : vector<32x128xf32>
    %c0_9 = arith.constant 0 : index
    %c0_10 = arith.constant 0 : index
    %11 = vector.load %arg6[%c0_9, %c0_10] : memref<1x128xf32, #tpu.memory_space<vmem>>, vector<1x128xf32>
    %12 = vector.broadcast %11 : vector<1x128xf32> to vector<32x128xf32>
    %13 = arith.addf %10, %12 : vector<32x128xf32>
    %c0_11 = arith.constant 0 : index
    %c0_12 = arith.constant 0 : index
    %c0_13 = arith.constant 0 : index
    %14 = vector.load %arg7[%c0_11, %c0_12, %c0_13] : memref<1x32x128xbf16, #tpu.memory_space<vmem>>, vector<1x32x128xbf16>
    %15 = vector.shape_cast %14 : vector<1x32x128xbf16> to vector<32x128xbf16>
    %16 = arith.extf %15 : vector<32x128xbf16> to vector<32x128xf32>
    %17 = arith.addf %13, %16 : vector<32x128xf32>
    %18 = arith.truncf %17 : vector<32x128xf32> to vector<32x128xbf16>
    %c0_14 = arith.constant 0 : index
    %c0_15 = arith.constant 0 : index
    %c0_16 = arith.constant 0 : index
    %19 = vector.load %arg8[%c0_14, %c0_15, %c0_16] : memref<1x32x128xbf16, #tpu.memory_space<vmem>>, vector<1x32x128xbf16>
    %20 = vector.shape_cast %19 : vector<1x32x128xbf16> to vector<32x128xbf16>
    %21 = vector.shape_cast %18 : vector<32x128xbf16> to vector<1x32x128xbf16>
    tpu.vector_store %arg8[%c0_14, %c0_15, %c0_16], %21 {strides = array<i32>} : memref<1x32x128xbf16, #tpu.memory_space<vmem>>, vector<1x32x128xbf16>,
    return
  }
  func.func @transform_0(%arg0: i32, %arg1: i32) -> (i32, i32, i32) {
    %c0_i32 = arith.constant 0 : i32
    %c0_i32_0 = arith.constant 0 : i32
    return %arg0, %arg1, %c0_i32 : i32, i32, i32
  }
  func.func @transform_1(%arg0: i32, %arg1: i32) -> (i32, i32, i32) {
    %c0_i32 = arith.constant 0 : i32
    %c0_i32_0 = arith.constant 0 : i32
    %c0_i32_1 = arith.constant 0 : i32
    return %arg0, %c0_i32, %c0_i32_0 : i32, i32, i32
  }
  func.func @transform_2(%arg0: i32, %arg1: i32) -> (i32, i32) {
    %c0_i32 = arith.constant 0 : i32
    %c0_i32_0 = arith.constant 0 : i32
    %c0_i32_1 = arith.constant 0 : i32
    return %c0_i32, %c0_i32_0 : i32, i32
  }
  func.func @transform_3(%arg0: i32, %arg1: i32) -> (i32, i32) {
    %c0_i32 = arith.constant 0 : i32
    %c0_i32_0 = arith.constant 0 : i32
    %c0_i32_1 = arith.constant 0 : i32
    return %c0_i32, %c0_i32_0 : i32, i32
  }
  func.func @transform_4(%arg0: i32, %arg1: i32) -> (i32, i32) {
    %c0_i32 = arith.constant 0 : i32
    %c0_i32_0 = arith.constant 0 : i32
    %c0_i32_1 = arith.constant 0 : i32
    return %c0_i32, %c0_i32_0 : i32, i32
  }
  func.func @transform_5(%arg0: i32, %arg1: i32) -> (i32, i32, i32) {
    %c0_i32 = arith.constant 0 : i32
    %c0_i32_0 = arith.constant 0 : i32
    return %arg0, %arg1, %c0_i32 : i32, i32, i32
  }
  func.func @transform_6(%arg0: i32, %arg1: i32) -> (i32, i32, i32) {
    %c0_i32 = arith.constant 0 : i32
    %c0_i32_0 = arith.constant 0 : i32
    return %arg0, %arg1, %c0_i32 : i32, i32, i32
  }
}

</mosaic_0001>

<llo_original>
// kernel: feature_extractor_forward.14
$region0: #{feature_extractor_forward.14}
  #allocation0 [shape = 'u32[]', space=smem, size = 0x4, offset = 0x4, fixed_abs, tag = 'smem constant byte address 0x4 - core index']
  #allocation1 [shape = 'u32[144,128]{1,0:T(1,128)}', space=vmem, size = 0x12000, scoped, tag = 'internal scratch']
  %s0 = inlined_call_operand.vmem [shape: bf16[128,128], index: 0, kind: input, shape index: {}]
  %s1 = inlined_call_operand.vmem [shape: bf16[128,128], index: 1, kind: input, shape index: {}]
  %s2 = inlined_call_operand.vmem [shape: f32[1,128], index: 2, kind: input, shape index: {}]
  %s3 = inlined_call_operand.vmem [shape: f32[1,128], index: 3, kind: input, shape index: {}]
  %s4 = inlined_call_operand.vmem [shape: bf16[128,128], index: 4, kind: output, shape index: {}]
  %s5 = sld [smem:[#allocation0]]
  $region49: #{feature_extractor_forward.14} parent=0
    _
  %s7 = ssub.s32 1, %s5
  %s8 = scalar_select 0, %s7, %s5
  loop: start=0, step=1, limit=4
  $region2: #{feature_extractor_forward.14} parent=0 // loop_pre_header
    _
  $region3: #{feature_extractor_forward.14} parent=0 // loop_header
    %s10 = sphi 0, %s14
    %p11 = scmp.ge.s32.totalorder %s10, 4
    %s20 = sphi 0, %s22
    %s23 = sphi 0, %s20
    %s24 = sphi 0, %s23
    %s40 = sphi 0, %s24
    %s44 = sphi 0, %s44
    %s46 = sphi 0, %s44
    %s47 = sphi 0, %s46
    %s61 = sphi 0, %s47
    %s65 = sphi 0, %s65
    %s67 = sphi 0, %s65
    %s68 = sphi 0, %s67
    %s82 = sphi 0, %s68
    %s86 = sphi 0, %s86
    %s88 = sphi 0, %s86
    %s89 = sphi 0, %s88
    %s103 = sphi 0, %s89
    %s109 = sphi 0, %s111
    %s112 = sphi 0, %s109
    %s113 = sphi 0, %s112
    %s129 = sphi 0, %s113
  $region4: #{feature_extractor_forward.14} parent=0 // loop_header_branch
    %13 = sbr.rel (%p11) target = $region8
  $region5: #{feature_extractor_forward.14} parent=0 // loop_body
    %s15 = ssub.s32 %s10, 1
    %s16 = ssub.s32 %s10, 2
    %s17 = sadd.s32 %s10, 1
    %s18 = ssub.s32 %s10, %s17
    %p19 = scmp.eq.s32.totalorder %s18, 0
    %s21 = sadd.s32 %s20, 1
    %s22 = scalar_select %p19, %s20, %s21
    %p25 = pneg %p19
    %p26 = scmp.eq.s32.totalorder %s10, 1
    %p27 = por %p25, %p26
    %p28 = scmp.ne.s32.totalorder %s20, %s23
    %p29 = scmp.eq.s32.totalorder %s10, 0
    %p30 = por %p28, %p29
    %p31 = scmp.ne.s32.totalorder %s20, %s23
    %p32 = scmp.eq.s32.totalorder %s15, 1
    %p33 = por %p31, %p32
    %p34 = scmp.ne.s32.totalorder %s23, %s24
    %p35 = scmp.eq.s32.totalorder %s15, 0
    %p36 = por %p34, %p35
    %p37 = scmp.ne.s32.totalorder %s23, %s24
    %p38 = scmp.eq.s32.totalorder %s16, 1
    %p39 = por %p37, %p38
    %p41 = scmp.ne.s32.totalorder %s24, %s40
    %p42 = scmp.eq.s32.totalorder %s16, 0
    %p43 = por %p41, %p42
    %s45 = sadd.s32 %s44, 1
    %p48 = scmp.eq.s32.totalorder %s10, 1
    %p49 = scmp.ne.s32.totalorder %s44, %s46
    %p50 = scmp.eq.s32.totalorder %s10, 0
    %p51 = por %p49, %p50
    %p52 = scmp.ne.s32.totalorder %s44, %s46
    %p53 = scmp.eq.s32.totalorder %s15, 1
    %p54 = por %p52, %p53
    %p55 = scmp.ne.s32.totalorder %s46, %s47
    %p56 = scmp.eq.s32.totalorder %s15, 0
    %p57 = por %p55, %p56
    %p58 = scmp.ne.s32.totalorder %s46, %s47
    %p59 = scmp.eq.s32.totalorder %s16, 1
    %p60 = por %p58, %p59
    %p62 = scmp.ne.s32.totalorder %s47, %s61
    %p63 = scmp.eq.s32.totalorder %s16, 0
    %p64 = por %p62, %p63
    %s66 = sadd.s32 %s65, 1
    %p69 = scmp.eq.s32.totalorder %s10, 1
    %p70 = scmp.ne.s32.totalorder %s65, %s67
    %p71 = scmp.eq.s32.totalorder %s10, 0
    %p72 = por %p70, %p71
    %p73 = scmp.ne.s32.totalorder %s65, %s67
    %p74 = scmp.eq.s32.totalorder %s15, 1
    %p75 = por %p73, %p74
    %p76 = scmp.ne.s32.totalorder %s67, %s68
    %p77 = scmp.eq.s32.totalorder %s15, 0
    %p78 = por %p76, %p77
    %p79 = scmp.ne.s32.totalorder %s67, %s68
    %p80 = scmp.eq.s32.totalorder %s16, 1
    %p81 = por %p79, %p80
    %p83 = scmp.ne.s32.totalorder %s68, %s82
    %p84 = scmp.eq.s32.totalorder %s16, 0
    %p85 = por %p83, %p84
    %s87 = sadd.s32 %s86, 1
    %p90 = scmp.eq.s32.totalorder %s10, 1
    %p91 = scmp.ne.s32.totalorder %s86, %s88
    %p92 = scmp.eq.s32.totalorder %s10, 0
    %p93 = por %p91, %p92
    %p94 = scmp.ne.s32.totalorder %s86, %s88
    %p95 = scmp.eq.s32.totalorder %s15, 1
    %p96 = por %p94, %p95
    %p97 = scmp.ne.s32.totalorder %s88, %s89
    %p98 = scmp.eq.s32.totalorder %s15, 0
    %p99 = por %p97, %p98
    %p100 = scmp.ne.s32.totalorder %s88, %s89
    %p101 = scmp.eq.s32.totalorder %s16, 1
    %p102 = por %p100, %p101
    %p104 = scmp.ne.s32.totalorder %s89, %s103
    %p105 = scmp.eq.s32.totalorder %s16, 0
    %p106 = por %p104, %p105
    %s107 = ssub.s32 %s10, %s17
    %p108 = scmp.eq.s32.totalorder %s107, 0
    %s110 = sadd.s32 %s109, 1
    %s111 = scalar_select %p108, %s109, %s110
    %p114 = pneg %p108
    %p115 = scmp.eq.s32.totalorder %s10, 1
    %p116 = por %p114, %p115
    %p117 = scmp.ne.s32.totalorder %s109, %s112
    %p118 = scmp.eq.s32.totalorder %s10, 0
    %p119 = por %p117, %p118
    %p120 = scmp.ne.s32.totalorder %s109, %s112
    %p121 = scmp.eq.s32.totalorder %s15, 1
    %p122 = por %p120, %p121
    %p123 = scmp.ne.s32.totalorder %s112, %s113
    %p124 = scmp.eq.s32.totalorder %s15, 0
    %p125 = por %p123, %p124
    %p126 = scmp.ne.s32.totalorder %s112, %s113
    %p127 = scmp.eq.s32.totalorder %s16, 1
    %p128 = por %p126, %p127
    %p130 = scmp.ne.s32.totalorder %s113, %s129
    %p131 = scmp.eq.s32.totalorder %s16, 0
    %p132 = por %p130, %p131
    %p133 = scmp.le.s32.totalorder 1, %s10
    %p134 = scmp.lt.s32.totalorder %s10, 3
    %p135 = pnand %p133, %p134
    %p136 = pneg %p135
    // Predicated region
    $region9: #{feature_extractor_forward.14} parent=5 // pred_check
      _
    $region10: #{feature_extractor_forward.14} parent=5 // pred_check_branch
      %138 = sbr.rel (%p135) target = $region12
    $region11: #{feature_extractor_forward.14} parent=5 // pred_region
      %s139 = ssub.s32 %s10, 1
      // Predicated region
      $region13: #{feature_extractor_forward.14} parent=11 // pred_check
        %p140 = pneg %p57
      $region14: #{feature_extractor_forward.14} parent=11 // pred_check_branch
        %142 = sbr.rel (%p140) target = $region16
      $region15: #{feature_extractor_forward.14} parent=11 // pred_region
        _
      $region16: #{feature_extractor_forward.14} parent=11 // pred_fallthru
        _
      // Predicated region
      $region17: #{feature_extractor_forward.14} parent=11 // pred_check
        %p143 = pneg %p78
      $region18: #{feature_extractor_forward.14} parent=11 // pred_check_branch
        %145 = sbr.rel (%p143) target = $region20
      $region19: #{feature_extractor_forward.14} parent=11 // pred_region
        _
      $region20: #{feature_extractor_forward.14} parent=11 // pred_fallthru
        _
      // Predicated region
      $region21: #{feature_extractor_forward.14} parent=11 // pred_check
        %p146 = pneg %p99
      $region22: #{feature_extractor_forward.14} parent=11 // pred_check_branch
        %148 = sbr.rel (%p146) target = $region24
      $region23: #{feature_extractor_forward.14} parent=11 // pred_region
        _
      $region24: #{feature_extractor_forward.14} parent=11 // pred_fallthru
        _
    $region12: #{feature_extractor_forward.14} parent=5 // pred_fallthru
      _
    %p149 = scmp.lt.s32.totalorder %s10, 2
    // Predicated region
    $region25: #{feature_extractor_forward.14} parent=5 // pred_check
      %p150 = pneg %p149
    $region26: #{feature_extractor_forward.14} parent=5 // pred_check_branch
      %152 = sbr.rel (%p150) target = $region28
    $region27: #{feature_extractor_forward.14} parent=5 // pred_region
      // Predicated region
      $region29: #{feature_extractor_forward.14} parent=27 // pred_check
        %p153 = pneg %p30
      $region30: #{feature_extractor_forward.14} parent=27 // pred_check_branch
        %155 = sbr.rel (%p153) target = $region32
      $region31: #{feature_extractor_forward.14} parent=27 // pred_region
        %s156 = smul.u32 8, %s10
        %p157 = scmp.lt.s32.totalorder %s156, 15
        %s158 = scalar_select %p157, %s156, 15
        %s159 = smul.addr %s158, 4
        %s160 = scalar_lea.vmem %s0, %s159
        %s161 = smul.u32 8, %s10
      $region32: #{feature_extractor_forward.14} parent=27 // pred_fallthru
        _
    $region28: #{feature_extractor_forward.14} parent=5 // pred_fallthru
      _
    %p162 = scmp.le.s32.totalorder 1, %s10
    %p163 = scmp.lt.s32.totalorder %s10, 3
    %p164 = pnand %p162, %p163
    %p165 = pneg %p164
    // Predicated region
    $region33: #{feature_extractor_forward.14} parent=5 // pred_check
      _
    $region34: #{feature_extractor_forward.14} parent=5 // pred_check_branch
      %167 = sbr.rel (%p164) target = $region36
    $region35: #{feature_extractor_forward.14} parent=5 // pred_region
      %s168 = ssub.s32 %s10, 1
      %s169 = smul.u32 8, %s15
      %p170 = scmp.lt.s32.totalorder %s169, 15
      %s171 = scalar_select %p170, %s169, 15
      %s172 = smul.addr %s171, 4
      %s173 = scalar_lea.vmem %s0, %s172
      %p174 = pneg %p36
      %p175 = pneg %p33
      %p176 = pneg %p57
      %p177 = pneg %p54
      %p178 = pneg %p78
      %p179 = pneg %p75
      %p180 = pneg %p99
      %p181 = pneg %p96
      %p182 = pneg %p125
      %p183 = pneg %p122
      %s184 = smul.u32 8, %s15
      %p185 = scmp.lt.s32.totalorder %s184, 15
      %s186 = scalar_select %p185, %s184, 15
      %s187 = smul.addr %s186, 4
      %s188 = scalar_lea.vmem %s4, %s187
      %s189 = smul.u32 8, %s15
      %p190 = scmp.lt.s32.totalorder %s189, 15
      %s191 = scalar_select %p190, %s189, 15
      %s192 = smul.addr %s191, 4
      %s193 = scalar_lea.vmem %s0, %s192
      %s194 = smul.u32 8, %s15
      %s195 = smul.u32 8, %s15
      %p196 = scmp.lt.s32.totalorder %s195, 15
      %s197 = scalar_select %p196, %s195, 15
      %s198 = smul.addr %s197, 4
      %s199 = scalar_lea.vmem %s4, %s198
      %s200 = smul.u32 8, %s15
      %v202 = vld [vmem:[%s193] sm:$0xf]
      %v203 = vld [vmem:[%s193 + $0x4] sm:$0xf]
      %v204 = vld [vmem:[%s193 + $0x8] sm:$0xf]
      %v205 = vld [vmem:[%s193 + $0xc] sm:$0xf]
      %v206 = vld [vmem:[%s193 + $0x10] sm:$0xf]
      %v207 = vld [vmem:[%s193 + $0x14] sm:$0xf]
      %v208 = vld [vmem:[%s193 + $0x18] sm:$0xf]
      %v209 = vld [vmem:[%s193 + $0x1c] sm:$0xf]
      %v210 = vld [vmem:[%s1] sm:$0xf]
      %v211 = vld [vmem:[%s1 + $0x4] sm:$0xf]
      %v212 = vld [vmem:[%s1 + $0x8] sm:$0xf]
      %v213 = vld [vmem:[%s1 + $0xc] sm:$0xf]
      %v214 = vld [vmem:[%s1 + $0x10] sm:$0xf]
      %v215 = vld [vmem:[%s1 + $0x14] sm:$0xf]
      %v216 = vld [vmem:[%s1 + $0x18] sm:$0xf]
      %v217 = vld [vmem:[%s1 + $0x1c] sm:$0xf]
      %v218 = vld [vmem:[%s1 + $0x20] sm:$0xf]
      %v219 = vld [vmem:[%s1 + $0x24] sm:$0xf]
      %v220 = vld [vmem:[%s1 + $0x28] sm:$0xf]
      %v221 = vld [vmem:[%s1 + $0x2c] sm:$0xf]
      %v222 = vld [vmem:[%s1 + $0x30] sm:$0xf]
      %v223 = vld [vmem:[%s1 + $0x34] sm:$0xf]
      %v224 = vld [vmem:[%s1 + $0x38] sm:$0xf]
      %v225 = vld [vmem:[%s1 + $0x3c] sm:$0xf]
      %v234 = vunpack.c.l.b16 %v202
      %v235 = vunpack.c.l.b16 %v203
      %v236 = vunpack.c.l.b16 %v204
      %v237 = vunpack.c.l.b16 %v205
      %v238 = vunpack.c.l.b16 %v206
      %v239 = vunpack.c.l.b16 %v207
      %v240 = vunpack.c.l.b16 %v208
      %v241 = vunpack.c.l.b16 %v209
      %v242 = vpack.c.b16 %v235, %v234
      %v243 = vpack.c.b16 %v237, %v236
      %v244 = vpack.c.b16 %v239, %v238
      %v245 = vpack.c.b16 %v241, %v240
      %v266 = vunpack.c.l.b16 %v210
      %v267 = vunpack.c.l.b16 %v211
      %v268 = vunpack.c.l.b16 %v212
      %v269 = vunpack.c.l.b16 %v213
      %v270 = vunpack.c.l.b16 %v214
      %v271 = vunpack.c.l.b16 %v215
      %v272 = vunpack.c.l.b16 %v216
      %v273 = vunpack.c.l.b16 %v217
      %v274 = vunpack.c.l.b16 %v218
      %v275 = vunpack.c.l.b16 %v219
      %v276 = vunpack.c.l.b16 %v220
      %v277 = vunpack.c.l.b16 %v221
      %v278 = vunpack.c.l.b16 %v222
      %v279 = vunpack.c.l.b16 %v223
      %v280 = vunpack.c.l.b16 %v224
      %v281 = vunpack.c.l.b16 %v225
      %v282 = vpack.c.b16 %v267, %v266
      %v283 = vpack.c.b16 %v269, %v268
      %v284 = vpack.c.b16 %v271, %v270
      %v285 = vpack.c.b16 %v273, %v272
      %v286 = vpack.c.b16 %v275, %v274
      %v287 = vpack.c.b16 %v277, %v276
      %v288 = vpack.c.b16 %v279, %v278
      %v289 = vpack.c.b16 %v281, %v280
      %298 = vmatprep.subr.bf16.mxu0 0
      %299 = vmatpush1.bf16.msra.mxu0 %v289
      %300 = vmatprep.subr.bf16.mxu0 0
      %301 = vmatpush1.bf16.msra.mxu0 %v288
      %302 = vmatprep.subr.bf16.mxu0 0
      %303 = vmatpush1.bf16.msra.mxu0 %v287
      %304 = vmatprep.subr.bf16.mxu0 0
      %305 = vmatpush1.bf16.msra.mxu0 %v286
      %306 = vmatprep.subr.bf16.mxu0 0
      %307 = vmatpush1.bf16.msra.mxu0 %v285
      %308 = vmatprep.subr.bf16.mxu0 0
      %309 = vmatpush1.bf16.msra.mxu0 %v284
      %310 = vmatprep.subr.bf16.mxu0 0
      %311 = vmatpush1.bf16.msra.mxu0 %v283
      %312 = vmatprep.subr.bf16.mxu0 0
      %313 = vmatpush1.bf16.msra.mxu0 %v282
      %314 = vmatprep.subr.bf16.mxu0 0
      %315 = vmatpush2.bf16.msra.mxu0 0
      %316 = vmatprep.subr.bf16.mxu0 0
      %317 = vmatpush2.bf16.msra.mxu0 0
      %318 = vmatprep.subr.bf16.mxu0 0
      %319 = vmatpush2.bf16.msra.mxu0 0
      %320 = vmatprep.subr.bf16.mxu0 0
      %321 = vmatpush2.bf16.msra.mxu0 0
      %322 = vmatprep.subr.bf16.mxu0 0
      %323 = vmatpush2.bf16.msra.mxu0 0
      %324 = vmatprep.subr.bf16.mxu0 0
      %325 = vmatpush2.bf16.msra.mxu0 0
      %326 = vmatprep.subr.bf16.mxu0 0
      %327 = vmatpush2.bf16.msra.mxu0 0
      %328 = vmatprep.subr.bf16.mxu0 0
      %329 = vmatpush2.bf16.msra.mxu0 0
      %330 = vmatprep.mubr.bf16.mxu0 0
      %331 = vmatmul.mubr.bf16.gmra.mxu0 %v242
      %v332 = vpop.f32.mrf.mxu0
      %v333 = vadd.f32 0.0, %v332
      %v334 = vpop.f32.mrf.mxu0
      %v335 = vpop.f32.mrf.mxu0
      %v336 = vadd.f32 0.0, %v335
      %v337 = vpop.f32.mrf.mxu0
      %338 = vmatprep.mubr.bf16.mxu0 0
      %339 = vmatmul.mubr.bf16.gmra.mxu0 %v243
      %v340 = vpop.f32.mrf.mxu0
      %v341 = vadd.f32 0.0, %v340
      %v342 = vpop.f32.mrf.mxu0
      %v343 = vpop.f32.mrf.mxu0
      %v344 = vadd.f32 0.0, %v343
      %v345 = vpop.f32.mrf.mxu0
      %346 = vmatprep.mubr.bf16.mxu0 0
      %347 = vmatmul.mubr.bf16.gmra.mxu0 %v244
      %v348 = vpop.f32.mrf.mxu0
      %v349 = vadd.f32 0.0, %v348
      %v350 = vpop.f32.mrf.mxu0
      %v351 = vpop.f32.mrf.mxu0
      %v352 = vadd.f32 0.0, %v351
      %v353 = vpop.f32.mrf.mxu0
      %354 = vmatprep.mubr.bf16.mxu0 0
      %355 = vmatmul.mubr.bf16.gmra.mxu0 %v245
      %v356 = vpop.f32.mrf.mxu0
      %v357 = vadd.f32 0.0, %v356
      %v358 = vpop.f32.mrf.mxu0
      %v359 = vpop.f32.mrf.mxu0
      %v360 = vadd.f32 0.0, %v359
      %v361 = vpop.f32.mrf.mxu0
      %362 = vdwg.mxu0
      %v363 = vld [vmem:[%s2] sm:$0x1]
      %v365 = vlaneseq
      %v366 = vshrl.u32 %v365, 7
      %v367 = vsub.s32 0, %v366
      %v368 = vrot.slane %v363, %v367
      %v370 = vmul.f32 %v333, %v368
      %v371 = vmul.f32 %v336, %v368
      %v372 = vmul.f32 %v341, %v368
      %v373 = vmul.f32 %v344, %v368
      %v374 = vmul.f32 %v349, %v368
      %v375 = vmul.f32 %v352, %v368
      %v376 = vmul.f32 %v357, %v368
      %v377 = vmul.f32 %v360, %v368
      %v378 = vld [vmem:[%s3] sm:$0x1]
      %v380 = vlaneseq
      %v381 = vshrl.u32 %v380, 7
      %v382 = vsub.s32 0, %v381
      %v383 = vrot.slane %v378, %v382
      %v385 = vadd.f32 %v370, %v383
      %v386 = vadd.f32 %v371, %v383
      %v387 = vadd.f32 %v372, %v383
      %v388 = vadd.f32 %v373, %v383
      %v389 = vadd.f32 %v374, %v383
      %v390 = vadd.f32 %v375, %v383
      %v391 = vadd.f32 %v376, %v383
      %v392 = vadd.f32 %v377, %v383
      %v393 = vxor.u32 %v385, 2147483648
      %v394 = vxor.u32 %v386, 2147483648
      %v395 = vxor.u32 %v387, 2147483648
      %v396 = vxor.u32 %v388, 2147483648
      %v397 = vxor.u32 %v389, 2147483648
      %v398 = vxor.u32 %v390, 2147483648
      %v399 = vxor.u32 %v391, 2147483648
      %v400 = vxor.u32 %v392, 2147483648
      %v401 = vmul.f32 %v393, 1.442695
      %v402 = vpow.pop %v401
      %v403 = vmul.f32 %v394, 1.442695
      %v404 = vpow.pop %v403
      %v405 = vmul.f32 %v395, 1.442695
      %v406 = vpow.pop %v405
      %v407 = vmul.f32 %v396, 1.442695
      %v408 = vpow.pop %v407
      %v409 = vmul.f32 %v397, 1.442695
      %v410 = vpow.pop %v409
      %v411 = vmul.f32 %v398, 1.442695
      %v412 = vpow.pop %v411
      %v413 = vmul.f32 %v399, 1.442695
      %v414 = vpow.pop %v413
      %v415 = vmul.f32 %v400, 1.442695
      %v416 = vpow.pop %v415
      %v417 = vadd.f32 %v402, 1.0
      %v418 = vadd.f32 %v404, 1.0
      %v419 = vadd.f32 %v406, 1.0
      %v420 = vadd.f32 %v408, 1.0
      %v421 = vadd.f32 %v410, 1.0
      %v422 = vadd.f32 %v412, 1.0
      %v423 = vadd.f32 %v414, 1.0
      %v424 = vadd.f32 %v416, 1.0
      %v425 = vrcp.pop %v417
      %v426 = vmul.f32 1.0, %v425
      %v427 = vrcp.pop %v418
      %v428 = vmul.f32 1.0, %v427
      %v429 = vrcp.pop %v419
      %v430 = vmul.f32 1.0, %v429
      %v431 = vrcp.pop %v420
      %v432 = vmul.f32 1.0, %v431
      %v433 = vrcp.pop %v421
      %v434 = vmul.f32 1.0, %v433
      %v435 = vrcp.pop %v422
      %v436 = vmul.f32 1.0, %v435
      %v437 = vrcp.pop %v423
      %v438 = vmul.f32 1.0, %v437
      %v439 = vrcp.pop %v424
      %v440 = vmul.f32 1.0, %v439
      %v441 = vmul.f32 %v385, %v426
      %v442 = vmul.f32 %v386, %v428
      %v443 = vmul.f32 %v387, %v430
      %v444 = vmul.f32 %v388, %v432
      %v445 = vmul.f32 %v389, %v434
      %v446 = vmul.f32 %v390, %v436
      %v447 = vmul.f32 %v391, %v438
      %v448 = vmul.f32 %v392, %v440
      %v449 = vpack.c.bf16 %v442, %v441
      %v450 = vpack.c.bf16 %v444, %v443
      %v451 = vpack.c.bf16 %v446, %v445
      %v452 = vpack.c.bf16 %v448, %v447
      %v457 = vunpack.c.l.b16 %v449
      %v458 = vunpack.c.h.b16 %v449
      %v459 = vunpack.c.l.b16 %v450
      %v460 = vunpack.c.h.b16 %v450
      %v461 = vunpack.c.l.b16 %v451
      %v462 = vunpack.c.h.b16 %v451
      %v463 = vunpack.c.l.b16 %v452
      %v464 = vunpack.c.h.b16 %v452
      %v465 = vpack.c.b16 %v457, %v457
      %v466 = vpack.c.b16 %v458, %v458
      %v467 = vpack.c.b16 %v459, %v459
      %v468 = vpack.c.b16 %v460, %v460
      %v469 = vpack.c.b16 %v461, %v461
      %v470 = vpack.c.b16 %v462, %v462
      %v471 = vpack.c.b16 %v463, %v463
      %v472 = vpack.c.b16 %v464, %v464
      %481 = vst [vmem:[%s199] sm:$0xf] %v465
      %482 = vst [vmem:[%s199 + $0x4] sm:$0xf] %v466
      %483 = vst [vmem:[%s199 + $0x8] sm:$0xf] %v467
      %484 = vst [vmem:[%s199 + $0xc] sm:$0xf] %v468
      %485 = vst [vmem:[%s199 + $0x10] sm:$0xf] %v469
      %486 = vst [vmem:[%s199 + $0x14] sm:$0xf] %v470
      %487 = vst [vmem:[%s199 + $0x18] sm:$0xf] %v471
      %488 = vst [vmem:[%s199 + $0x1c] sm:$0xf] %v472
      %s489 = smul.u32 8, %s15
      %p490 = scmp.lt.s32.totalorder %s489, 15
      %s491 = scalar_select %p490, %s489, 15
      %s492 = smul.addr %s491, 4
      %s493 = scalar_lea.vmem %s4, %s492
      // Predicated region
      $region37: #{feature_extractor_forward.14} parent=35 // pred_check
        %p494 = pneg %p122
      $region38: #{feature_extractor_forward.14} parent=35 // pred_check_branch
        %496 = sbr.rel (%p494) target = $region40
      $region39: #{feature_extractor_forward.14} parent=35 // pred_region
        %s497 = smul.u32 8, %s15
      $region40: #{feature_extractor_forward.14} parent=35 // pred_fallthru
        _
    $region36: #{feature_extractor_forward.14} parent=5 // pred_fallthru
      _
    %p498 = scmp.le.s32.totalorder 2, %s10
    // Predicated region
    $region41: #{feature_extractor_forward.14} parent=5 // pred_check
      %p499 = pneg %p498
    $region42: #{feature_extractor_forward.14} parent=5 // pred_check_branch
      %501 = sbr.rel (%p499) target = $region44
    $region43: #{feature_extractor_forward.14} parent=5 // pred_region
      %s502 = ssub.s32 %s10, 2
      // Predicated region
      $region45: #{feature_extractor_forward.14} parent=43 // pred_check
        %p503 = pneg %p128
      $region46: #{feature_extractor_forward.14} parent=43 // pred_check_branch
        %505 = sbr.rel (%p503) target = $region48
      $region47: #{feature_extractor_forward.14} parent=43 // pred_region
        %s506 = smul.u32 8, %s16
        %p507 = scmp.lt.s32.totalorder %s506, 15
        %s508 = scalar_select %p507, %s506, 15
        %s509 = smul.addr %s508, 4
        %s510 = scalar_lea.vmem %s4, %s509
      $region48: #{feature_extractor_forward.14} parent=43 // pred_fallthru
        _
    $region44: #{feature_extractor_forward.14} parent=5 // pred_fallthru
      _
  $region6: #{feature_extractor_forward.14} parent=0 // loop_footer
    %s14 = sadd.s32 1, %s10
  $region7: #{feature_extractor_forward.14} parent=0 // loop_footer_branch
    %9 = sbr.rel target = $region3
  $region8: #{feature_extractor_forward.14} parent=0 // loop_exit
    _

// kernel: feature_extractor_forward.13
$region0: #{feature_extractor_forward.13}
  #allocation0 [shape = 'u32[]', space=smem, size = 0x4, offset = 0x4, fixed_abs, tag = 'smem constant byte address 0x4 - core index']
  #allocation1 [shape = 'u32[144,128]{1,0:T(1,128)}', space=vmem, size = 0x12000, scoped, tag = 'internal scratch']
  %s0 = inlined_call_operand.vmem [shape: bf16[128,27], index: 0, kind: input, shape index: {}]
  %s1 = inlined_call_operand.vmem [shape: bf16[27,128], index: 1, kind: input, shape index: {}]
  %s2 = inlined_call_operand.vmem [shape: f32[1,128], index: 2, kind: input, shape index: {}]
  %s3 = inlined_call_operand.vmem [shape: f32[1,128], index: 3, kind: input, shape index: {}]
  %s4 = inlined_call_operand.vmem [shape: bf16[128,128], index: 4, kind: output, shape index: {}]
  %s5 = sld [smem:[#allocation0]]
  $region49: #{feature_extractor_forward.13} parent=0
    _
  %s7 = ssub.s32 1, %s5
  %s8 = scalar_select 0, %s7, %s5
  loop: start=0, step=1, limit=4
  $region2: #{feature_extractor_forward.13} parent=0 // loop_pre_header
    _
  $region3: #{feature_extractor_forward.13} parent=0 // loop_header
    %s10 = sphi 0, %s14
    %p11 = scmp.ge.s32.totalorder %s10, 4
    %s20 = sphi 0, %s22
    %s23 = sphi 0, %s20
    %s24 = sphi 0, %s23
    %s40 = sphi 0, %s24
    %s44 = sphi 0, %s44
    %s46 = sphi 0, %s44
    %s47 = sphi 0, %s46
    %s61 = sphi 0, %s47
    %s65 = sphi 0, %s65
    %s67 = sphi 0, %s65
    %s68 = sphi 0, %s67
    %s82 = sphi 0, %s68
    %s86 = sphi 0, %s86
    %s88 = sphi 0, %s86
    %s89 = sphi 0, %s88
    %s103 = sphi 0, %s89
    %s109 = sphi 0, %s111
    %s112 = sphi 0, %s109
    %s113 = sphi 0, %s112
    %s129 = sphi 0, %s113
  $region4: #{feature_extractor_forward.13} parent=0 // loop_header_branch
    %13 = sbr.rel (%p11) target = $region8
  $region5: #{feature_extractor_forward.13} parent=0 // loop_body
    %s15 = ssub.s32 %s10, 1
    %s16 = ssub.s32 %s10, 2
    %s17 = sadd.s32 %s10, 1
    %s18 = ssub.s32 %s10, %s17
    %p19 = scmp.eq.s32.totalorder %s18, 0
    %s21 = sadd.s32 %s20, 1
    %s22 = scalar_select %p19, %s20, %s21
    %p25 = pneg %p19
    %p26 = scmp.eq.s32.totalorder %s10, 1
    %p27 = por %p25, %p26
    %p28 = scmp.ne.s32.totalorder %s20, %s23
    %p29 = scmp.eq.s32.totalorder %s10, 0
    %p30 = por %p28, %p29
    %p31 = scmp.ne.s32.totalorder %s20, %s23
    %p32 = scmp.eq.s32.totalorder %s15, 1
    %p33 = por %p31, %p32
    %p34 = scmp.ne.s32.totalorder %s23, %s24
    %p35 = scmp.eq.s32.totalorder %s15, 0
    %p36 = por %p34, %p35
    %p37 = scmp.ne.s32.totalorder %s23, %s24
    %p38 = scmp.eq.s32.totalorder %s16, 1
    %p39 = por %p37, %p38
    %p41 = scmp.ne.s32.totalorder %s24, %s40
    %p42 = scmp.eq.s32.totalorder %s16, 0
    %p43 = por %p41, %p42
    %s45 = sadd.s32 %s44, 1
    %p48 = scmp.eq.s32.totalorder %s10, 1
    %p49 = scmp.ne.s32.totalorder %s44, %s46
    %p50 = scmp.eq.s32.totalorder %s10, 0
    %p51 = por %p49, %p50
    %p52 = scmp.ne.s32.totalorder %s44, %s46
    %p53 = scmp.eq.s32.totalorder %s15, 1
    %p54 = por %p52, %p53
    %p55 = scmp.ne.s32.totalorder %s46, %s47
    %p56 = scmp.eq.s32.totalorder %s15, 0
    %p57 = por %p55, %p56
    %p58 = scmp.ne.s32.totalorder %s46, %s47
    %p59 = scmp.eq.s32.totalorder %s16, 1
    %p60 = por %p58, %p59
    %p62 = scmp.ne.s32.totalorder %s47, %s61
    %p63 = scmp.eq.s32.totalorder %s16, 0
    %p64 = por %p62, %p63
    %s66 = sadd.s32 %s65, 1
    %p69 = scmp.eq.s32.totalorder %s10, 1
    %p70 = scmp.ne.s32.totalorder %s65, %s67
    %p71 = scmp.eq.s32.totalorder %s10, 0
    %p72 = por %p70, %p71
    %p73 = scmp.ne.s32.totalorder %s65, %s67
    %p74 = scmp.eq.s32.totalorder %s15, 1
    %p75 = por %p73, %p74
    %p76 = scmp.ne.s32.totalorder %s67, %s68
    %p77 = scmp.eq.s32.totalorder %s15, 0
    %p78 = por %p76, %p77
    %p79 = scmp.ne.s32.totalorder %s67, %s68
    %p80 = scmp.eq.s32.totalorder %s16, 1
    %p81 = por %p79, %p80
    %p83 = scmp.ne.s32.totalorder %s68, %s82
    %p84 = scmp.eq.s32.totalorder %s16, 0
    %p85 = por %p83, %p84
    %s87 = sadd.s32 %s86, 1
    %p90 = scmp.eq.s32.totalorder %s10, 1
    %p91 = scmp.ne.s32.totalorder %s86, %s88
    %p92 = scmp.eq.s32.totalorder %s10, 0
    %p93 = por %p91, %p92
    %p94 = scmp.ne.s32.totalorder %s86, %s88
    %p95 = scmp.eq.s32.totalorder %s15, 1
    %p96 = por %p94, %p95
    %p97 = scmp.ne.s32.totalorder %s88, %s89
    %p98 = scmp.eq.s32.totalorder %s15, 0
    %p99 = por %p97, %p98
    %p100 = scmp.ne.s32.totalorder %s88, %s89
    %p101 = scmp.eq.s32.totalorder %s16, 1
    %p102 = por %p100, %p101
    %p104 = scmp.ne.s32.totalorder %s89, %s103
    %p105 = scmp.eq.s32.totalorder %s16, 0
    %p106 = por %p104, %p105
    %s107 = ssub.s32 %s10, %s17
    %p108 = scmp.eq.s32.totalorder %s107, 0
    %s110 = sadd.s32 %s109, 1
    %s111 = scalar_select %p108, %s109, %s110
    %p114 = pneg %p108
    %p115 = scmp.eq.s32.totalorder %s10, 1
    %p116 = por %p114, %p115
    %p117 = scmp.ne.s32.totalorder %s109, %s112
    %p118 = scmp.eq.s32.totalorder %s10, 0
    %p119 = por %p117, %p118
    %p120 = scmp.ne.s32.totalorder %s109, %s112
    %p121 = scmp.eq.s32.totalorder %s15, 1
    %p122 = por %p120, %p121
    %p123 = scmp.ne.s32.totalorder %s112, %s113
    %p124 = scmp.eq.s32.totalorder %s15, 0
    %p125 = por %p123, %p124
    %p126 = scmp.ne.s32.totalorder %s112, %s113
    %p127 = scmp.eq.s32.totalorder %s16, 1
    %p128 = por %p126, %p127
    %p130 = scmp.ne.s32.totalorder %s113, %s129
    %p131 = scmp.eq.s32.totalorder %s16, 0
    %p132 = por %p130, %p131
    %p133 = scmp.le.s32.totalorder 1, %s10
    %p134 = scmp.lt.s32.totalorder %s10, 3
    %p135 = pnand %p133, %p134
    %p136 = pneg %p135
    // Predicated region
    $region9: #{feature_extractor_forward.13} parent=5 // pred_check
      _
    $region10: #{feature_extractor_forward.13} parent=5 // pred_check_branch
      %138 = sbr.rel (%p135) target = $region12
    $region11: #{feature_extractor_forward.13} parent=5 // pred_region
      %s139 = ssub.s32 %s10, 1
      // Predicated region
      $region13: #{feature_extractor_forward.13} parent=11 // pred_check
        %p140 = pneg %p57
      $region14: #{feature_extractor_forward.13} parent=11 // pred_check_branch
        %142 = sbr.rel (%p140) target = $region16
      $region15: #{feature_extractor_forward.13} parent=11 // pred_region
        _
      $region16: #{feature_extractor_forward.13} parent=11 // pred_fallthru
        _
      // Predicated region
      $region17: #{feature_extractor_forward.13} parent=11 // pred_check
        %p143 = pneg %p78
      $region18: #{feature_extractor_forward.13} parent=11 // pred_check_branch
        %145 = sbr.rel (%p143) target = $region20
      $region19: #{feature_extractor_forward.13} parent=11 // pred_region
        _
      $region20: #{feature_extractor_forward.13} parent=11 // pred_fallthru
        _
      // Predicated region
      $region21: #{feature_extractor_forward.13} parent=11 // pred_check
        %p146 = pneg %p99
      $region22: #{feature_extractor_forward.13} parent=11 // pred_check_branch
        %148 = sbr.rel (%p146) target = $region24
      $region23: #{feature_extractor_forward.13} parent=11 // pred_region
        _
      $region24: #{feature_extractor_forward.13} parent=11 // pred_fallthru
        _
    $region12: #{feature_extractor_forward.13} parent=5 // pred_fallthru
      _
    %p149 = scmp.lt.s32.totalorder %s10, 2
    // Predicated region
    $region25: #{feature_extractor_forward.13} parent=5 // pred_check
      %p150 = pneg %p149
    $region26: #{feature_extractor_forward.13} parent=5 // pred_check_branch
      %152 = sbr.rel (%p150) target = $region28
    $region27: #{feature_extractor_forward.13} parent=5 // pred_region
      // Predicated region
      $region29: #{feature_extractor_forward.13} parent=27 // pred_check
        %p153 = pneg %p30
      $region30: #{feature_extractor_forward.13} parent=27 // pred_check_branch
        %155 = sbr.rel (%p153) target = $region32
      $region31: #{feature_extractor_forward.13} parent=27 // pred_region
        %s156 = smul.u32 8, %s10
        %p157 = scmp.lt.s32.totalorder %s156, 15
        %s158 = scalar_select %p157, %s156, 15
        %s159 = smul.addr %s158, 4
        %s160 = scalar_lea.vmem %s0, %s159
        %s161 = smul.u32 8, %s10
      $region32: #{feature_extractor_forward.13} parent=27 // pred_fallthru
        _
    $region28: #{feature_extractor_forward.13} parent=5 // pred_fallthru
      _
    %p162 = scmp.le.s32.totalorder 1, %s10
    %p163 = scmp.lt.s32.totalorder %s10, 3
    %p164 = pnand %p162, %p163
    %p165 = pneg %p164
    // Predicated region
    $region33: #{feature_extractor_forward.13} parent=5 // pred_check
      _
    $region34: #{feature_extractor_forward.13} parent=5 // pred_check_branch
      %167 = sbr.rel (%p164) target = $region36
    $region35: #{feature_extractor_forward.13} parent=5 // pred_region
      %s168 = ssub.s32 %s10, 1
      %s169 = smul.u32 8, %s15
      %p170 = scmp.lt.s32.totalorder %s169, 15
      %s171 = scalar_select %p170, %s169, 15
      %s172 = smul.addr %s171, 4
      %s173 = scalar_lea.vmem %s0, %s172
      %p174 = pneg %p36
      %p175 = pneg %p33
      %p176 = pneg %p57
      %p177 = pneg %p54
      %p178 = pneg %p78
      %p179 = pneg %p75
      %p180 = pneg %p99
      %p181 = pneg %p96
      %p182 = pneg %p125
      %p183 = pneg %p122
      %s184 = smul.u32 8, %s15
      %p185 = scmp.lt.s32.totalorder %s184, 15
      %s186 = scalar_select %p185, %s184, 15
      %s187 = smul.addr %s186, 4
      %s188 = scalar_lea.vmem %s4, %s187
      %s189 = smul.u32 8, %s15
      %p190 = scmp.lt.s32.totalorder %s189, 15
      %s191 = scalar_select %p190, %s189, 15
      %s192 = smul.addr %s191, 4
      %s193 = scalar_lea.vmem %s0, %s192
      %s194 = smul.u32 8, %s15
      %s195 = smul.u32 8, %s15
      %p196 = scmp.lt.s32.totalorder %s195, 15
      %s197 = scalar_select %p196, %s195, 15
      %s198 = smul.addr %s197, 4
      %s199 = scalar_lea.vmem %s4, %s198
      %s200 = smul.u32 8, %s15
      %v202 = vld [vmem:[%s193] sm:$0xf]
      %v203 = vld [vmem:[%s193 + $0x4] sm:$0xf]
      %v204 = vld [vmem:[%s193 + $0x8] sm:$0xf]
      %v205 = vld [vmem:[%s193 + $0xc] sm:$0xf]
      %v206 = vld [vmem:[%s193 + $0x10] sm:$0xf]
      %v207 = vld [vmem:[%s193 + $0x14] sm:$0xf]
      %v208 = vld [vmem:[%s193 + $0x18] sm:$0xf]
      %v209 = vld [vmem:[%s193 + $0x1c] sm:$0xf]
      %v210 = vld [vmem:[%s1] sm:$0xf]
      %v211 = vld [vmem:[%s1 + $0x4] sm:$0xf]
      %v212 = vld [vmem:[%s1 + $0x8] sm:$0xf]
      %v213 = vld [vmem:[%s1 + $0xc] sm:$0x3]
      %v222 = vunpack.c.l.b16 %v202
      %v223 = vunpack.c.l.b16 %v203
      %v224 = vunpack.c.l.b16 %v204
      %v225 = vunpack.c.l.b16 %v205
      %v226 = vunpack.c.l.b16 %v206
      %v227 = vunpack.c.l.b16 %v207
      %v228 = vunpack.c.l.b16 %v208
      %v229 = vunpack.c.l.b16 %v209
      %v230 = vpack.c.b16 %v223, %v222
      %v231 = vpack.c.b16 %v225, %v224
      %v232 = vpack.c.b16 %v227, %v226
      %v233 = vpack.c.b16 %v229, %v228
      %v238 = vunpack.c.l.b16 %v210
      %v239 = vunpack.c.l.b16 %v211
      %v240 = vunpack.c.l.b16 %v212
      %v241 = vunpack.c.l.b16 %v213
      %v242 = vpack.c.b16 %v239, %v238
      %v243 = vpack.c.b16 %v241, %v240
      %vm245 = vcmask 220160
      %v247 = vsel %vm245, %v230, 0
      %v250 = vsel %vm245, %v231, 0
      %v253 = vsel %vm245, %v232, 0
      %v256 = vsel %vm245, %v233, 0
      %vm258 = vcmask 1044480
      %vm259 = vcmask 1045504
      %v260 = vsel %vm258, 4294967295, 65535
      %v261 = vsel %vm259, %v260, 0
      %v263 = vand.u32 %v243, %v261
      %265 = vmatprep.subr.bf16.mxu0 0
      %266 = vmatpush1.bf16.msra.mxu0 0
      %267 = vmatprep.subr.bf16.mxu0 0
      %268 = vmatpush1.bf16.msra.mxu0 0
      %269 = vmatprep.subr.bf16.mxu0 0
      %270 = vmatpush1.bf16.msra.mxu0 0
      %271 = vmatprep.subr.bf16.mxu0 0
      %272 = vmatpush1.bf16.msra.mxu0 0
      %273 = vmatprep.subr.bf16.mxu0 0
      %274 = vmatpush1.bf16.msra.mxu0 0
      %275 = vmatprep.subr.bf16.mxu0 0
      %276 = vmatpush1.bf16.msra.mxu0 0
      %277 = vmatprep.subr.bf16.mxu0 0
      %278 = vmatpush1.bf16.msra.mxu0 %v263
      %279 = vmatprep.subr.bf16.mxu0 0
      %280 = vmatpush1.bf16.msra.mxu0 %v242
      %281 = vmatprep.subr.bf16.mxu0 0
      %282 = vmatpush2.bf16.msra.mxu0 0
      %283 = vmatprep.subr.bf16.mxu0 0
      %284 = vmatpush2.bf16.msra.mxu0 0
      %285 = vmatprep.subr.bf16.mxu0 0
      %286 = vmatpush2.bf16.msra.mxu0 0
      %287 = vmatprep.subr.bf16.mxu0 0
      %288 = vmatpush2.bf16.msra.mxu0 0
      %289 = vmatprep.subr.bf16.mxu0 0
      %290 = vmatpush2.bf16.msra.mxu0 0
      %291 = vmatprep.subr.bf16.mxu0 0
      %292 = vmatpush2.bf16.msra.mxu0 0
      %293 = vmatprep.subr.bf16.mxu0 0
      %294 = vmatpush2.bf16.msra.mxu0 0
      %295 = vmatprep.subr.bf16.mxu0 0
      %296 = vmatpush2.bf16.msra.mxu0 0
      %297 = vmatprep.mubr.bf16.mxu0 0
      %298 = vmatmul.mubr.bf16.gmra.mxu0 %v247
      %v299 = vpop.f32.mrf.mxu0
      %v300 = vadd.f32 0.0, %v299
      %v301 = vpop.f32.mrf.mxu0
      %v302 = vpop.f32.mrf.mxu0
      %v303 = vadd.f32 0.0, %v302
      %v304 = vpop.f32.mrf.mxu0
      %305 = vmatprep.mubr.bf16.mxu0 0
      %306 = vmatmul.mubr.bf16.gmra.mxu0 %v250
      %v307 = vpop.f32.mrf.mxu0
      %v308 = vadd.f32 0.0, %v307
      %v309 = vpop.f32.mrf.mxu0
      %v310 = vpop.f32.mrf.mxu0
      %v311 = vadd.f32 0.0, %v310
      %v312 = vpop.f32.mrf.mxu0
      %313 = vmatprep.mubr.bf16.mxu0 0
      %314 = vmatmul.mubr.bf16.gmra.mxu0 %v253
      %v315 = vpop.f32.mrf.mxu0
      %v316 = vadd.f32 0.0, %v315
      %v317 = vpop.f32.mrf.mxu0
      %v318 = vpop.f32.mrf.mxu0
      %v319 = vadd.f32 0.0, %v318
      %v320 = vpop.f32.mrf.mxu0
      %321 = vmatprep.mubr.bf16.mxu0 0
      %322 = vmatmul.mubr.bf16.gmra.mxu0 %v256
      %v323 = vpop.f32.mrf.mxu0
      %v324 = vadd.f32 0.0, %v323
      %v325 = vpop.f32.mrf.mxu0
      %v326 = vpop.f32.mrf.mxu0
      %v327 = vadd.f32 0.0, %v326
      %v328 = vpop.f32.mrf.mxu0
      %329 = vdwg.mxu0
      %v330 = vld [vmem:[%s2] sm:$0x1]
      %v332 = vlaneseq
      %v333 = vshrl.u32 %v332, 7
      %v334 = vsub.s32 0, %v333
      %v335 = vrot.slane %v330, %v334
      %v337 = vmul.f32 %v300, %v335
      %v338 = vmul.f32 %v303, %v335
      %v339 = vmul.f32 %v308, %v335
      %v340 = vmul.f32 %v311, %v335
      %v341 = vmul.f32 %v316, %v335
      %v342 = vmul.f32 %v319, %v335
      %v343 = vmul.f32 %v324, %v335
      %v344 = vmul.f32 %v327, %v335
      %v345 = vld [vmem:[%s3] sm:$0x1]
      %v347 = vlaneseq
      %v348 = vshrl.u32 %v347, 7
      %v349 = vsub.s32 0, %v348
      %v350 = vrot.slane %v345, %v349
      %v352 = vadd.f32 %v337, %v350
      %v353 = vadd.f32 %v338, %v350
      %v354 = vadd.f32 %v339, %v350
      %v355 = vadd.f32 %v340, %v350
      %v356 = vadd.f32 %v341, %v350
      %v357 = vadd.f32 %v342, %v350
      %v358 = vadd.f32 %v343, %v350
      %v359 = vadd.f32 %v344, %v350
      %v360 = vxor.u32 %v352, 2147483648
      %v361 = vxor.u32 %v353, 2147483648
      %v362 = vxor.u32 %v354, 2147483648
      %v363 = vxor.u32 %v355, 2147483648
      %v364 = vxor.u32 %v356, 2147483648
      %v365 = vxor.u32 %v357, 2147483648
      %v366 = vxor.u32 %v358, 2147483648
      %v367 = vxor.u32 %v359, 2147483648
      %v368 = vmul.f32 %v360, 1.442695
      %v369 = vpow.pop %v368
      %v370 = vmul.f32 %v361, 1.442695
      %v371 = vpow.pop %v370
      %v372 = vmul.f32 %v362, 1.442695
      %v373 = vpow.pop %v372
      %v374 = vmul.f32 %v363, 1.442695
      %v375 = vpow.pop %v374
      %v376 = vmul.f32 %v364, 1.442695
      %v377 = vpow.pop %v376
      %v378 = vmul.f32 %v365, 1.442695
      %v379 = vpow.pop %v378
      %v380 = vmul.f32 %v366, 1.442695
      %v381 = vpow.pop %v380
      %v382 = vmul.f32 %v367, 1.442695
      %v383 = vpow.pop %v382
      %v384 = vadd.f32 %v369, 1.0
      %v385 = vadd.f32 %v371, 1.0
      %v386 = vadd.f32 %v373, 1.0
      %v387 = vadd.f32 %v375, 1.0
      %v388 = vadd.f32 %v377, 1.0
      %v389 = vadd.f32 %v379, 1.0
      %v390 = vadd.f32 %v381, 1.0
      %v391 = vadd.f32 %v383, 1.0
      %v392 = vrcp.pop %v384
      %v393 = vmul.f32 1.0, %v392
      %v394 = vrcp.pop %v385
      %v395 = vmul.f32 1.0, %v394
      %v396 = vrcp.pop %v386
      %v397 = vmul.f32 1.0, %v396
      %v398 = vrcp.pop %v387
      %v399 = vmul.f32 1.0, %v398
      %v400 = vrcp.pop %v388
      %v401 = vmul.f32 1.0, %v400
      %v402 = vrcp.pop %v389
      %v403 = vmul.f32 1.0, %v402
      %v404 = vrcp.pop %v390
      %v405 = vmul.f32 1.0, %v404
      %v406 = vrcp.pop %v391
      %v407 = vmul.f32 1.0, %v406
      %v408 = vmul.f32 %v352, %v393
      %v409 = vmul.f32 %v353, %v395
      %v410 = vmul.f32 %v354, %v397
      %v411 = vmul.f32 %v355, %v399
      %v412 = vmul.f32 %v356, %v401
      %v413 = vmul.f32 %v357, %v403
      %v414 = vmul.f32 %v358, %v405
      %v415 = vmul.f32 %v359, %v407
      %v416 = vpack.c.bf16 %v409, %v408
      %v417 = vpack.c.bf16 %v411, %v410
      %v418 = vpack.c.bf16 %v413, %v412
      %v419 = vpack.c.bf16 %v415, %v414
      %v424 = vunpack.c.l.b16 %v416
      %v425 = vunpack.c.h.b16 %v416
      %v426 = vunpack.c.l.b16 %v417
      %v427 = vunpack.c.h.b16 %v417
      %v428 = vunpack.c.l.b16 %v418
      %v429 = vunpack.c.h.b16 %v418
      %v430 = vunpack.c.l.b16 %v419
      %v431 = vunpack.c.h.b16 %v419
      %v432 = vpack.c.b16 %v424, %v424
      %v433 = vpack.c.b16 %v425, %v425
      %v434 = vpack.c.b16 %v426, %v426
      %v435 = vpack.c.b16 %v427, %v427
      %v436 = vpack.c.b16 %v428, %v428
      %v437 = vpack.c.b16 %v429, %v429
      %v438 = vpack.c.b16 %v430, %v430
      %v439 = vpack.c.b16 %v431, %v431
      %448 = vst [vmem:[%s199] sm:$0xf] %v432
      %449 = vst [vmem:[%s199 + $0x4] sm:$0xf] %v433
      %450 = vst [vmem:[%s199 + $0x8] sm:$0xf] %v434
      %451 = vst [vmem:[%s199 + $0xc] sm:$0xf] %v435
      %452 = vst [vmem:[%s199 + $0x10] sm:$0xf] %v436
      %453 = vst [vmem:[%s199 + $0x14] sm:$0xf] %v437
      %454 = vst [vmem:[%s199 + $0x18] sm:$0xf] %v438
      %455 = vst [vmem:[%s199 + $0x1c] sm:$0xf] %v439
      %s456 = smul.u32 8, %s15
      %p457 = scmp.lt.s32.totalorder %s456, 15
      %s458 = scalar_select %p457, %s456, 15
      %s459 = smul.addr %s458, 4
      %s460 = scalar_lea.vmem %s4, %s459
      // Predicated region
      $region37: #{feature_extractor_forward.13} parent=35 // pred_check
        %p461 = pneg %p122
      $region38: #{feature_extractor_forward.13} parent=35 // pred_check_branch
        %463 = sbr.rel (%p461) target = $region40
      $region39: #{feature_extractor_forward.13} parent=35 // pred_region
        %s464 = smul.u32 8, %s15
      $region40: #{feature_extractor_forward.13} parent=35 // pred_fallthru
        _
    $region36: #{feature_extractor_forward.13} parent=5 // pred_fallthru
      _
    %p465 = scmp.le.s32.totalorder 2, %s10
    // Predicated region
    $region41: #{feature_extractor_forward.13} parent=5 // pred_check
      %p466 = pneg %p465
    $region42: #{feature_extractor_forward.13} parent=5 // pred_check_branch
      %468 = sbr.rel (%p466) target = $region44
    $region43: #{feature_extractor_forward.13} parent=5 // pred_region
      %s469 = ssub.s32 %s10, 2
      // Predicated region
      $region45: #{feature_extractor_forward.13} parent=43 // pred_check
        %p470 = pneg %p128
      $region46: #{feature_extractor_forward.13} parent=43 // pred_check_branch
        %472 = sbr.rel (%p470) target = $region48
      $region47: #{feature_extractor_forward.13} parent=43 // pred_region
        %s473 = smul.u32 8, %s16
        %p474 = scmp.lt.s32.totalorder %s473, 15
        %s475 = scalar_select %p474, %s473, 15
        %s476 = smul.addr %s475, 4
        %s477 = scalar_lea.vmem %s4, %s476
      $region48: #{feature_extractor_forward.13} parent=43 // pred_fallthru
        _
    $region44: #{feature_extractor_forward.13} parent=5 // pred_fallthru
      _
  $region6: #{feature_extractor_forward.13} parent=0 // loop_footer
    %s14 = sadd.s32 1, %s10
  $region7: #{feature_extractor_forward.13} parent=0 // loop_footer_branch
    %9 = sbr.rel target = $region3
  $region8: #{feature_extractor_forward.13} parent=0 // loop_exit
    _

// kernel: feature_extractor_forward.15
$region0: #{feature_extractor_forward.15}
  #allocation0 [shape = 'u32[]', space=smem, size = 0x4, offset = 0x4, fixed_abs, tag = 'smem constant byte address 0x4 - core index']
  #allocation1 [shape = 'u32[144,128]{1,0:T(1,128)}', space=vmem, size = 0x12000, scoped, tag = 'internal scratch']
  #allocation2 [shape = 'bf16[6,8,128]{2,1,0:T(8,128)(2,1)}', space=vmem, size = 0x3000, scoped, tag = 'scratch operand']
  #allocation3 [shape = 'f32[1,128]{1,0:T(1,128)}', space=vmem, size = 0x200, scoped, tag = 'scratch operand']
  #allocation5 [shape = 's32[]', space=sflag, size = 0x4, offset = 0, fixed_abs, tag = 'sflag constant byte address 0x0 - dummy sync flag']
  #allocation7 [shape = 's32[]', space=sflag, size = 0x4, offset = 0, fixed_abs, tag = 'sflag constant byte address 0x0 - dummy sync flag']
  #allocation9 [shape = 's32[]', space=sflag, size = 0x4, offset = 0, fixed_abs, tag = 'sflag constant byte address 0x0 - dummy sync flag']
  %s0 = inlined_call_operand.vmem [shape: bf16[2,8,8,128], index: 0, kind: input, shape index: {}]
  %s1 = inlined_call_operand.vmem [shape: bf16[9,128], index: 1, kind: input, shape index: {}]
  %s2 = inlined_call_operand.vmem [shape: f32[1,128], index: 2, kind: input, shape index: {}]
  %s3 = inlined_call_operand.vmem [shape: f32[1,128], index: 3, kind: input, shape index: {}]
  %s4 = inlined_call_operand.vmem [shape: f32[128,128], index: 4, kind: input, shape index: {}]
  %s5 = inlined_call_operand.vmem [shape: f32[1,128], index: 5, kind: input, shape index: {}]
  %s6 = inlined_call_operand.vmem [shape: f32[128,128], index: 6, kind: input, shape index: {}]
  %s7 = inlined_call_operand.vmem [shape: f32[1,128], index: 7, kind: input, shape index: {}]
  %s8 = inlined_call_operand.vmem [shape: bf16[2,8,8,128], index: 8, kind: output, shape index: {0}]
  %s9 = inlined_call_operand.vmem [shape: bf16[2,1,128], index: 9, kind: output, shape index: {1}]
  %10 = xla_tuple %s8, %s9
  %s11 = sld [smem:[#allocation0]]
  $region190: #{feature_extractor_forward.15} parent=0
    _
  %s13 = ssub.s32 1, %s11
  %s14 = scalar_select 0, %s13, %s11
  loop: start=0, step=1, limit=6
  $region2: #{feature_extractor_forward.15} parent=0 // loop_pre_header
    _
  $region3: #{feature_extractor_forward.15} parent=0 // loop_header
    %s16 = sphi 0, %s20
    %p17 = scmp.ge.s32.totalorder %s16, 6
    %s23 = sphi 0, %s35
    %s24 = sphi 0, %s31
    %s25 = sphi 0, %s23
    %s26 = sphi 0, %s24
    %s27 = sphi 0, %s25
    %s28 = sphi 0, %s26
    %s36 = sphi 0, %s36
    %s38 = sphi 0, %s36
    %s39 = sphi 0, %s38
    %s53 = sphi 0, %s39
    %s57 = sphi 0, %s57
    %s59 = sphi 0, %s57
    %s60 = sphi 0, %s59
    %s74 = sphi 0, %s60
    %s78 = sphi 0, %s78
    %s80 = sphi 0, %s78
    %s81 = sphi 0, %s80
    %s95 = sphi 0, %s81
    %s99 = sphi 0, %s99
    %s101 = sphi 0, %s99
    %s102 = sphi 0, %s101
    %s116 = sphi 0, %s102
    %s120 = sphi 0, %s120
    %s122 = sphi 0, %s120
    %s123 = sphi 0, %s122
    %s137 = sphi 0, %s123
    %s141 = sphi 0, %s141
    %s143 = sphi 0, %s141
    %s144 = sphi 0, %s143
    %s158 = sphi 0, %s144
    %s162 = sphi 0, %s162
    %s164 = sphi 0, %s162
    %s165 = sphi 0, %s164
    %s179 = sphi 0, %s165
    %s187 = sphi 0, %s189
    %s190 = sphi 0, %s187
    %s191 = sphi 0, %s190
    %s207 = sphi 0, %s191
    %s213 = sphi 0, %s215
    %s216 = sphi 0, %s213
    %s217 = sphi 0, %s216
    %s233 = sphi 0, %s217
  $region4: #{feature_extractor_forward.15} parent=0 // loop_header_branch
    %19 = sbr.rel (%p17) target = $region8
  $region5: #{feature_extractor_forward.15} parent=0 // loop_body
    %s21 = ssub.s32 %s16, 1
    %s22 = ssub.s32 %s16, 2
    %s29 = sadd.s32 1, %s24
    %p30 = scmp.ge.s32.totalorder %s29, 2
    %s31 = scalar_select %p30, 0, %s29
    %s32 = sadd.s32 1, %s23
    %s33 = scalar_select %p30, %s32, %s23
    %p34 = scmp.ge.s32.totalorder %s33, 2
    %s35 = scalar_select %p34, 0, %s33
    %s37 = sadd.s32 %s36, 1
    %p40 = scmp.eq.s32.totalorder %s16, 3
    %p41 = scmp.ne.s32.totalorder %s36, %s38
    %p42 = scmp.eq.s32.totalorder %s16, 0
    %p43 = por %p41, %p42
    %p44 = scmp.ne.s32.totalorder %s36, %s38
    %p45 = scmp.eq.s32.totalorder %s21, 3
    %p46 = por %p44, %p45
    %p47 = scmp.ne.s32.totalorder %s38, %s39
    %p48 = scmp.eq.s32.totalorder %s21, 0
    %p49 = por %p47, %p48
    %p50 = scmp.ne.s32.totalorder %s38, %s39
    %p51 = scmp.eq.s32.totalorder %s22, 3
    %p52 = por %p50, %p51
    %p54 = scmp.ne.s32.totalorder %s39, %s53
    %p55 = scmp.eq.s32.totalorder %s22, 0
    %p56 = por %p54, %p55
    %s58 = sadd.s32 %s57, 1
    %p61 = scmp.eq.s32.totalorder %s16, 3
    %p62 = scmp.ne.s32.totalorder %s57, %s59
    %p63 = scmp.eq.s32.totalorder %s16, 0
    %p64 = por %p62, %p63
    %p65 = scmp.ne.s32.totalorder %s57, %s59
    %p66 = scmp.eq.s32.totalorder %s21, 3
    %p67 = por %p65, %p66
    %p68 = scmp.ne.s32.totalorder %s59, %s60
    %p69 = scmp.eq.s32.totalorder %s21, 0
    %p70 = por %p68, %p69
    %p71 = scmp.ne.s32.totalorder %s59, %s60
    %p72 = scmp.eq.s32.totalorder %s22, 3
    %p73 = por %p71, %p72
    %p75 = scmp.ne.s32.totalorder %s60, %s74
    %p76 = scmp.eq.s32.totalorder %s22, 0
    %p77 = por %p75, %p76
    %s79 = sadd.s32 %s78, 1
    %p82 = scmp.eq.s32.totalorder %s16, 3
    %p83 = scmp.ne.s32.totalorder %s78, %s80
    %p84 = scmp.eq.s32.totalorder %s16, 0
    %p85 = por %p83, %p84
    %p86 = scmp.ne.s32.totalorder %s78, %s80
    %p87 = scmp.eq.s32.totalorder %s21, 3
    %p88 = por %p86, %p87
    %p89 = scmp.ne.s32.totalorder %s80, %s81
    %p90 = scmp.eq.s32.totalorder %s21, 0
    %p91 = por %p89, %p90
    %p92 = scmp.ne.s32.totalorder %s80, %s81
    %p93 = scmp.eq.s32.totalorder %s22, 3
    %p94 = por %p92, %p93
    %p96 = scmp.ne.s32.totalorder %s81, %s95
    %p97 = scmp.eq.s32.totalorder %s22, 0
    %p98 = por %p96, %p97
    %s100 = sadd.s32 %s99, 1
    %p103 = scmp.eq.s32.totalorder %s16, 3
    %p104 = scmp.ne.s32.totalorder %s99, %s101
    %p105 = scmp.eq.s32.totalorder %s16, 0
    %p106 = por %p104, %p105
    %p107 = scmp.ne.s32.totalorder %s99, %s101
    %p108 = scmp.eq.s32.totalorder %s21, 3
    %p109 = por %p107, %p108
    %p110 = scmp.ne.s32.totalorder %s101, %s102
    %p111 = scmp.eq.s32.totalorder %s21, 0
    %p112 = por %p110, %p111
    %p113 = scmp.ne.s32.totalorder %s101, %s102
    %p114 = scmp.eq.s32.totalorder %s22, 3
    %p115 = por %p113, %p114
    %p117 = scmp.ne.s32.totalorder %s102, %s116
    %p118 = scmp.eq.s32.totalorder %s22, 0
    %p119 = por %p117, %p118
    %s121 = sadd.s32 %s120, 1
    %p124 = scmp.eq.s32.totalorder %s16, 3
    %p125 = scmp.ne.s32.totalorder %s120, %s122
    %p126 = scmp.eq.s32.totalorder %s16, 0
    %p127 = por %p125, %p126
    %p128 = scmp.ne.s32.totalorder %s120, %s122
    %p129 = scmp.eq.s32.totalorder %s21, 3
    %p130 = por %p128, %p129
    %p131 = scmp.ne.s32.totalorder %s122, %s123
    %p132 = scmp.eq.s32.totalorder %s21, 0
    %p133 = por %p131, %p132
    %p134 = scmp.ne.s32.totalorder %s122, %s123
    %p135 = scmp.eq.s32.totalorder %s22, 3
    %p136 = por %p134, %p135
    %p138 = scmp.ne.s32.totalorder %s123, %s137
    %p139 = scmp.eq.s32.totalorder %s22, 0
    %p140 = por %p138, %p139
    %s142 = sadd.s32 %s141, 1
    %p145 = scmp.eq.s32.totalorder %s16, 3
    %p146 = scmp.ne.s32.totalorder %s141, %s143
    %p147 = scmp.eq.s32.totalorder %s16, 0
    %p148 = por %p146, %p147
    %p149 = scmp.ne.s32.totalorder %s141, %s143
    %p150 = scmp.eq.s32.totalorder %s21, 3
    %p151 = por %p149, %p150
    %p152 = scmp.ne.s32.totalorder %s143, %s144
    %p153 = scmp.eq.s32.totalorder %s21, 0
    %p154 = por %p152, %p153
    %p155 = scmp.ne.s32.totalorder %s143, %s144
    %p156 = scmp.eq.s32.totalorder %s22, 3
    %p157 = por %p155, %p156
    %p159 = scmp.ne.s32.totalorder %s144, %s158
    %p160 = scmp.eq.s32.totalorder %s22, 0
    %p161 = por %p159, %p160
    %s163 = sadd.s32 %s162, 1
    %p166 = scmp.eq.s32.totalorder %s16, 3
    %p167 = scmp.ne.s32.totalorder %s162, %s164
    %p168 = scmp.eq.s32.totalorder %s16, 0
    %p169 = por %p167, %p168
    %p170 = scmp.ne.s32.totalorder %s162, %s164
    %p171 = scmp.eq.s32.totalorder %s21, 3
    %p172 = por %p170, %p171
    %p173 = scmp.ne.s32.totalorder %s164, %s165
    %p174 = scmp.eq.s32.totalorder %s21, 0
    %p175 = por %p173, %p174
    %p176 = scmp.ne.s32.totalorder %s164, %s165
    %p177 = scmp.eq.s32.totalorder %s22, 3
    %p178 = por %p176, %p177
    %p180 = scmp.ne.s32.totalorder %s165, %s179
    %p181 = scmp.eq.s32.totalorder %s22, 0
    %p182 = por %p180, %p181
    %s183 = ssub.s32 %s23, %s35
    %s184 = ssub.s32 %s24, %s31
    %s185 = sor.u32 %s183, %s184
    %p186 = scmp.eq.s32.totalorder %s185, 0
    %s188 = sadd.s32 %s187, 1
    %s189 = scalar_select %p186, %s187, %s188
    %p192 = pneg %p186
    %p193 = scmp.eq.s32.totalorder %s16, 3
    %p194 = por %p192, %p193
    %p195 = scmp.ne.s32.totalorder %s187, %s190
    %p196 = scmp.eq.s32.totalorder %s16, 0
    %p197 = por %p195, %p196
    %p198 = scmp.ne.s32.totalorder %s187, %s190
    %p199 = scmp.eq.s32.totalorder %s21, 3
    %p200 = por %p198, %p199
    %p201 = scmp.ne.s32.totalorder %s190, %s191
    %p202 = scmp.eq.s32.totalorder %s21, 0
    %p203 = por %p201, %p202
    %p204 = scmp.ne.s32.totalorder %s190, %s191
    %p205 = scmp.eq.s32.totalorder %s22, 3
    %p206 = por %p204, %p205
    %p208 = scmp.ne.s32.totalorder %s191, %s207
    %p209 = scmp.eq.s32.totalorder %s22, 0
    %p210 = por %p208, %p209
    %s211 = ssub.s32 %s23, %s35
    %p212 = scmp.eq.s32.totalorder %s211, 0
    %s214 = sadd.s32 %s213, 1
    %s215 = scalar_select %p212, %s213, %s214
    %p218 = pneg %p212
    %p219 = scmp.eq.s32.totalorder %s16, 3
    %p220 = por %p218, %p219
    %p221 = scmp.ne.s32.totalorder %s213, %s216
    %p222 = scmp.eq.s32.totalorder %s16, 0
    %p223 = por %p221, %p222
    %p224 = scmp.ne.s32.totalorder %s213, %s216
    %p225 = scmp.eq.s32.totalorder %s21, 3
    %p226 = por %p224, %p225
    %p227 = scmp.ne.s32.totalorder %s216, %s217
    %p228 = scmp.eq.s32.totalorder %s21, 0
    %p229 = por %p227, %p228
    %p230 = scmp.ne.s32.totalorder %s216, %s217
    %p231 = scmp.eq.s32.totalorder %s22, 3
    %p232 = por %p230, %p231
    %p234 = scmp.ne.s32.totalorder %s217, %s233
    %p235 = scmp.eq.s32.totalorder %s22, 0
    %p236 = por %p234, %p235
    %p237 = scmp.le.s32.totalorder 1, %s16
    %p238 = scmp.lt.s32.totalorder %s16, 5
    %p239 = pnand %p237, %p238
    %p240 = pneg %p239
    // Predicated region
    $region9: #{feature_extractor_forward.15} parent=5 // pred_check
      _
    $region10: #{feature_extractor_forward.15} parent=5 // pred_check_branch
      %242 = sbr.rel (%p239) target = $region12
    $region11: #{feature_extractor_forward.15} parent=5 // pred_region
      %s243 = ssub.s32 %s16, 1
      // Predicated region
      $region13: #{feature_extractor_forward.15} parent=11 // pred_check
        %p244 = pneg %p49
      $region14: #{feature_extractor_forward.15} parent=11 // pred_check_branch
        %246 = sbr.rel (%p244) target = $region16
      $region15: #{feature_extractor_forward.15} parent=11 // pred_region
        _
      $region16: #{feature_extractor_forward.15} parent=11 // pred_fallthru
        _
      // Predicated region
      $region17: #{feature_extractor_forward.15} parent=11 // pred_check
        %p247 = pneg %p70
      $region18: #{feature_extractor_forward.15} parent=11 // pred_check_branch
        %249 = sbr.rel (%p247) target = $region20
      $region19: #{feature_extractor_forward.15} parent=11 // pred_region
        _
      $region20: #{feature_extractor_forward.15} parent=11 // pred_fallthru
        _
      // Predicated region
      $region21: #{feature_extractor_forward.15} parent=11 // pred_check
        %p250 = pneg %p91
      $region22: #{feature_extractor_forward.15} parent=11 // pred_check_branch
        %252 = sbr.rel (%p250) target = $region24
      $region23: #{feature_extractor_forward.15} parent=11 // pred_region
        _
      $region24: #{feature_extractor_forward.15} parent=11 // pred_fallthru
        _
      // Predicated region
      $region25: #{feature_extractor_forward.15} parent=11 // pred_check
        %p253 = pneg %p112
      $region26: #{feature_extractor_forward.15} parent=11 // pred_check_branch
        %255 = sbr.rel (%p253) target = $region28
      $region27: #{feature_extractor_forward.15} parent=11 // pred_region
        _
      $region28: #{feature_extractor_forward.15} parent=11 // pred_fallthru
        _
      // Predicated region
      $region29: #{feature_extractor_forward.15} parent=11 // pred_check
        %p256 = pneg %p133
      $region30: #{feature_extractor_forward.15} parent=11 // pred_check_branch
        %258 = sbr.rel (%p256) target = $region32
      $region31: #{feature_extractor_forward.15} parent=11 // pred_region
        _
      $region32: #{feature_extractor_forward.15} parent=11 // pred_fallthru
        _
      // Predicated region
      $region33: #{feature_extractor_forward.15} parent=11 // pred_check
        %p259 = pneg %p154
      $region34: #{feature_extractor_forward.15} parent=11 // pred_check_branch
        %261 = sbr.rel (%p259) target = $region36
      $region35: #{feature_extractor_forward.15} parent=11 // pred_region
        _
      $region36: #{feature_extractor_forward.15} parent=11 // pred_fallthru
        _
      // Predicated region
      $region37: #{feature_extractor_forward.15} parent=11 // pred_check
        %p262 = pneg %p175
      $region38: #{feature_extractor_forward.15} parent=11 // pred_check_branch
        %264 = sbr.rel (%p262) target = $region40
      $region39: #{feature_extractor_forward.15} parent=11 // pred_region
        _
      $region40: #{feature_extractor_forward.15} parent=11 // pred_fallthru
        _
    $region12: #{feature_extractor_forward.15} parent=5 // pred_fallthru
      _
    %p265 = scmp.lt.s32.totalorder %s16, 4
    // Predicated region
    $region41: #{feature_extractor_forward.15} parent=5 // pred_check
      %p266 = pneg %p265
    $region42: #{feature_extractor_forward.15} parent=5 // pred_check_branch
      %268 = sbr.rel (%p266) target = $region44
    $region43: #{feature_extractor_forward.15} parent=5 // pred_region
      _
    $region44: #{feature_extractor_forward.15} parent=5 // pred_fallthru
      _
    %p269 = scmp.le.s32.totalorder 1, %s16
    %p270 = scmp.lt.s32.totalorder %s16, 5
    %p271 = pnand %p269, %p270
    %p272 = pneg %p271
    // Predicated region
    $region45: #{feature_extractor_forward.15} parent=5 // pred_check
      _
    $region46: #{feature_extractor_forward.15} parent=5 // pred_check_branch
      %274 = sbr.rel (%p271) target = $region48
    $region47: #{feature_extractor_forward.15} parent=5 // pred_region
      %s275 = ssub.s32 %s16, 1
      %p276 = pneg %p49
      %p277 = pneg %p46
      %p278 = pneg %p70
      %p279 = pneg %p67
      %p280 = pneg %p91
      %p281 = pneg %p88
      %p282 = pneg %p112
      %p283 = pneg %p109
      %p284 = pneg %p133
      %p285 = pneg %p130
      %p286 = pneg %p154
      %p287 = pneg %p151
      %p288 = pneg %p175
      %p289 = pneg %p172
      %p290 = pneg %p203
      %p291 = pneg %p200
      %s292 = smul.u32 4, %s26
      %p293 = scmp.lt.s32.totalorder %s25, 1
      %s294 = scalar_select %p293, %s25, 1
      %p295 = scmp.lt.s32.totalorder %s292, 7
      %s296 = scalar_select %p295, %s292, 7
      %s297 = smul.addr %s294, 8
      %s298 = sadd.s32 %s296, %s297
      %s299 = smul.addr %s298, 4
      %s300 = scalar_lea.vmem %s8, %s299
      %p301 = pneg %p229
      %p302 = pneg %p226
      %p303 = scmp.lt.s32.totalorder %s25, 1
      %s304 = scalar_select %p303, %s25, 1
      %s305 = scalar_lea.vmem %s9, %s304
      %s306 = smul.u32 4, %s26
      %p307 = scmp.lt.s32.totalorder %s25, 1
      %s308 = scalar_select %p307, %s25, 1
      %p309 = scmp.lt.s32.totalorder %s306, 7
      %s310 = scalar_select %p309, %s306, 7
      %s311 = smul.addr %s308, 8
      %s312 = sadd.s32 %s310, %s311
      %s313 = smul.addr %s312, 4
      %s314 = scalar_lea.vmem %s8, %s313
      %s315 = smul.u32 4, %s26
      %p316 = scmp.lt.s32.totalorder %s25, 1
      %s317 = scalar_select %p316, %s25, 1
      %s318 = scalar_lea.vmem %s9, %s317
      %s320 = smul.u32 %s26, 4
      $region49: #{feature_extractor_forward.15} parent=47
        #allocation4 [shape = 's32[1]{0}', space=sflag, size = 0x4, scoped, tag = 'scoped memory for feature_extractor_forward.15']
        %s321 = smul.u32 %s25, 8
        %s322 = sadd.s32 %s320, %s321
        %s323 = smul.addr %s322, 4
        %s324 = scalar_lea.vmem %s0, %s323
        %s325 = scalar_lea.vmem [#allocation2], 4
        %p327 = scmp.lt.u32.totalorder 16, 8
        %p328 = pneg %p327
        // Predicated region
        $region50: #{feature_extractor_forward.15} parent=49 // pred_check
          _
        $region51: #{feature_extractor_forward.15} parent=49 // pred_check_branch
          %330 = sbr.rel (%p327) target = $region53
        $region52: #{feature_extractor_forward.15} parent=49 // pred_region
          %s346 = sand.u32 16, 7
          %p347 = scmp.eq.s32.totalorder %s346, 0
          // Predicated region
          $region65: #{feature_extractor_forward.15} parent=52 // pred_check
            %p348 = pneg %p347
          $region66: #{feature_extractor_forward.15} parent=52 // pred_check_branch
            %350 = sbr.rel (%p348) target = $region68
          $region67: #{feature_extractor_forward.15} parent=52 // pred_region
            loop: start=0, step=1, limit=1
            $region69: #{feature_extractor_forward.15} parent=67 // loop_pre_header
              _
            $region70: #{feature_extractor_forward.15} parent=67 // loop_header
              %s352 = sphi 0, %s356
              %p353 = scmp.ge.s32.totalorder %s352, 1
              %s357 = sphi %s324, %s324
              %s358 = sphi %s325, %s325
            $region71: #{feature_extractor_forward.15} parent=67 // loop_header_branch
              %355 = sbr.rel (%p353) target = $region75
            $region72: #{feature_extractor_forward.15} parent=67 // loop_body
              %v359 = vld [vmem:[%s357] sm:$0xff]
              %360 = vst [vmem:[%s358] sm:$0xff] %v359
              %v361 = vld [vmem:[%s357 + $0x8] sm:$0xff]
              %362 = vst [vmem:[%s358 + $0x8] sm:$0xff] %v361
            $region73: #{feature_extractor_forward.15} parent=67 // loop_footer
              %s356 = sadd.s32 1, %s352
            $region74: #{feature_extractor_forward.15} parent=67 // loop_footer_branch
              %351 = sbr.rel target = $region70
            $region75: #{feature_extractor_forward.15} parent=67 // loop_exit
              _
          $region68: #{feature_extractor_forward.15} parent=52 // pred_fallthru
            _
          %p363 = pneg %p347
          // Predicated region
          $region76: #{feature_extractor_forward.15} parent=52 // pred_check
            _
          $region77: #{feature_extractor_forward.15} parent=52 // pred_check_branch
            %365 = sbr.rel (%p347) target = $region79
          $region78: #{feature_extractor_forward.15} parent=52 // pred_region
            %s366 = sand.u32 16, 7
          $region79: #{feature_extractor_forward.15} parent=52 // pred_fallthru
            _
        $region53: #{feature_extractor_forward.15} parent=49 // pred_fallthru
          _
        // Predicated region
        $region54: #{feature_extractor_forward.15} parent=49 // pred_check
          %p331 = pneg %p327
        $region55: #{feature_extractor_forward.15} parent=49 // pred_check_branch
          %333 = sbr.rel (%p331) target = $region57
        $region56: #{feature_extractor_forward.15} parent=49 // pred_region
          %s334 = sshll.u32 1, 16
          %s335 = ssub.s32 %s334, 1
          loop: start=0, step=1, limit=1
          $region58: #{feature_extractor_forward.15} parent=56 // loop_pre_header
            _
          $region59: #{feature_extractor_forward.15} parent=56 // loop_header
            %s337 = sphi 0, %s341
            %p338 = scmp.ge.s32.totalorder %s337, 1
            %s342 = sphi %s324, %s324
            %s343 = sphi %s325, %s325
          $region60: #{feature_extractor_forward.15} parent=56 // loop_header_branch
            %340 = sbr.rel (%p338) target = $region64
          $region61: #{feature_extractor_forward.15} parent=56 // loop_body
            %v344 = vld [vmem:[%s342] sm:%s335]
            %345 = vst [vmem:[%s343] sm:%s335] %v344
          $region62: #{feature_extractor_forward.15} parent=56 // loop_footer
            %s341 = sadd.s32 1, %s337
          $region63: #{feature_extractor_forward.15} parent=56 // loop_footer_branch
            %336 = sbr.rel target = $region59
          $region64: #{feature_extractor_forward.15} parent=56 // loop_exit
            _
        $region57: #{feature_extractor_forward.15} parent=49 // pred_fallthru
          _
        // Predicated region
        $region80: #{feature_extractor_forward.15} parent=49 // pred_check
          _
        $region81: #{feature_extractor_forward.15} parent=49 // pred_check_branch
          %369 = sbr.rel (0) target = $region83
        $region82: #{feature_extractor_forward.15} parent=49 // pred_region
          %370 = vsyncadd [#allocation4], 256
        $region83: #{feature_extractor_forward.15} parent=49 // pred_fallthru
          _
        %s371 = smul.u32 4, 4
        %s372 = smul.u32 %s371, 1
        %s373 = smul.u32 %s372, 1
        %s374 = sshll.u32 %s373, 4
        %375 = dma.done [#allocation4], %s374
      %p376 = scmp.gt.s32.totalorder %s26, 0
      // Predicated region
      $region84: #{feature_extractor_forward.15} parent=47 // pred_check
        %p377 = pneg %p376
      $region85: #{feature_extractor_forward.15} parent=47 // pred_check_branch
        %379 = sbr.rel (%p377) target = $region87
      $region86: #{feature_extractor_forward.15} parent=47 // pred_region
        %s380 = ssub.s32 %s320, 1
        $region88: #{feature_extractor_forward.15} parent=86
          #allocation6 [shape = 's32[1]{0}', space=sflag, size = 0x4, scoped, tag = 'scoped memory for feature_extractor_forward.15']
          %s381 = smul.u32 %s25, 8
          %s382 = sadd.s32 %s380, %s381
          %s383 = smul.addr %s382, 4
          %s384 = scalar_lea.vmem %s0, %s383
          %p386 = scmp.lt.u32.totalorder 4, 8
          %p387 = pneg %p386
          // Predicated region
          $region89: #{feature_extractor_forward.15} parent=88 // pred_check
            _
          $region90: #{feature_extractor_forward.15} parent=88 // pred_check_branch
            %389 = sbr.rel (%p386) target = $region92
          $region91: #{feature_extractor_forward.15} parent=88 // pred_region
            %s405 = sand.u32 4, 7
            %p406 = scmp.eq.s32.totalorder %s405, 0
            %p407 = pneg %p406
            // Predicated region
            $region104: #{feature_extractor_forward.15} parent=91 // pred_check
              _
            $region105: #{feature_extractor_forward.15} parent=91 // pred_check_branch
              %409 = sbr.rel (%p406) target = $region107
            $region106: #{feature_extractor_forward.15} parent=91 // pred_region
              %s410 = sand.u32 4, 7
              %s411 = ssub.s32 4, %s410
              %s412 = scalar_lea.vmem %s384, %s411
              %s413 = ssub.s32 4, %s410
              %s414 = scalar_lea.vmem [#allocation2], %s413
              %s415 = sshll.u32 1, %s410
              %s416 = ssub.s32 %s415, 1
              loop: start=0, step=1, limit=1
              $region108: #{feature_extractor_forward.15} parent=106 // loop_pre_header
                _
              $region109: #{feature_extractor_forward.15} parent=106 // loop_header
                %s418 = sphi 0, %s422
                %p419 = scmp.ge.s32.totalorder %s418, 1
                %s423 = sphi %s412, %s412
                %s424 = sphi %s414, %s414
              $region110: #{feature_extractor_forward.15} parent=106 // loop_header_branch
                %421 = sbr.rel (%p419) target = $region114
              $region111: #{feature_extractor_forward.15} parent=106 // loop_body
                %v425 = vld [vmem:[%s423] sm:%s416]
                %426 = vst [vmem:[%s424] sm:%s416] %v425
              $region112: #{feature_extractor_forward.15} parent=106 // loop_footer
                %s422 = sadd.s32 1, %s418
              $region113: #{feature_extractor_forward.15} parent=106 // loop_footer_branch
                %417 = sbr.rel target = $region109
              $region114: #{feature_extractor_forward.15} parent=106 // loop_exit
                _
            $region107: #{feature_extractor_forward.15} parent=91 // pred_fallthru
              _
          $region92: #{feature_extractor_forward.15} parent=88 // pred_fallthru
            _
          // Predicated region
          $region93: #{feature_extractor_forward.15} parent=88 // pred_check
            %p390 = pneg %p386
          $region94: #{feature_extractor_forward.15} parent=88 // pred_check_branch
            %392 = sbr.rel (%p390) target = $region96
          $region95: #{feature_extractor_forward.15} parent=88 // pred_region
            %s393 = sshll.u32 1, 4
            %s394 = ssub.s32 %s393, 1
            loop: start=0, step=1, limit=1
            $region97: #{feature_extractor_forward.15} parent=95 // loop_pre_header
              _
            $region98: #{feature_extractor_forward.15} parent=95 // loop_header
              %s396 = sphi 0, %s400
              %p397 = scmp.ge.s32.totalorder %s396, 1
              %s401 = sphi %s384, %s384
              %s402 = sphi [#allocation2], [#allocation2]
            $region99: #{feature_extractor_forward.15} parent=95 // loop_header_branch
              %399 = sbr.rel (%p397) target = $region103
            $region100: #{feature_extractor_forward.15} parent=95 // loop_body
              %v403 = vld [vmem:[%s401] sm:%s394]
              %404 = vst [vmem:[%s402] sm:%s394] %v403
            $region101: #{feature_extractor_forward.15} parent=95 // loop_footer
              %s400 = sadd.s32 1, %s396
            $region102: #{feature_extractor_forward.15} parent=95 // loop_footer_branch
              %395 = sbr.rel target = $region98
            $region103: #{feature_extractor_forward.15} parent=95 // loop_exit
              _
          $region96: #{feature_extractor_forward.15} parent=88 // pred_fallthru
            _
          // Predicated region
          $region115: #{feature_extractor_forward.15} parent=88 // pred_check
            _
          $region116: #{feature_extractor_forward.15} parent=88 // pred_check_branch
            %429 = sbr.rel (0) target = $region118
          $region117: #{feature_extractor_forward.15} parent=88 // pred_region
            %430 = vsyncadd [#allocation6], 64
          $region118: #{feature_extractor_forward.15} parent=88 // pred_fallthru
            _
          %s431 = smul.u32 4, 1
          %s432 = smul.u32 %s431, 1
          %s433 = smul.u32 %s432, 1
          %s434 = sshll.u32 %s433, 4
          %435 = dma.done [#allocation6], %s434
      $region87: #{feature_extractor_forward.15} parent=47 // pred_fallthru
        _
      %p436 = scmp.eq.s32.totalorder %s26, 0
      // Predicated region
      $region119: #{feature_extractor_forward.15} parent=47 // pred_check
        %p437 = pneg %p436
      $region120: #{feature_extractor_forward.15} parent=47 // pred_check_branch
        %439 = sbr.rel (%p437) target = $region122
      $region121: #{feature_extractor_forward.15} parent=47 // pred_region
        %440 = vst [vmem:[#allocation2] sm:$0xf] 0
      $region122: #{feature_extractor_forward.15} parent=47 // pred_fallthru
        _
      %p441 = scmp.lt.s32.totalorder %s26, 1
      // Predicated region
      $region123: #{feature_extractor_forward.15} parent=47 // pred_check
        %p442 = pneg %p441
      $region124: #{feature_extractor_forward.15} parent=47 // pred_check_branch
        %444 = sbr.rel (%p442) target = $region126
      $region125: #{feature_extractor_forward.15} parent=47 // pred_region
        %s445 = sadd.s32 %s320, 4
        $region127: #{feature_extractor_forward.15} parent=125
          #allocation8 [shape = 's32[1]{0}', space=sflag, size = 0x4, scoped, tag = 'scoped memory for feature_extractor_forward.15']
          %s446 = smul.u32 %s25, 8
          %s447 = sadd.s32 %s445, %s446
          %s448 = smul.addr %s447, 4
          %s449 = scalar_lea.vmem %s0, %s448
          %s450 = scalar_lea.vmem [#allocation2], 20
          %p452 = scmp.lt.u32.totalorder 4, 8
          %p453 = pneg %p452
          // Predicated region
          $region128: #{feature_extractor_forward.15} parent=127 // pred_check
            _
          $region129: #{feature_extractor_forward.15} parent=127 // pred_check_branch
            %455 = sbr.rel (%p452) target = $region131
          $region130: #{feature_extractor_forward.15} parent=127 // pred_region
            %s471 = sand.u32 4, 7
            %p472 = scmp.eq.s32.totalorder %s471, 0
            %p473 = pneg %p472
            // Predicated region
            $region143: #{feature_extractor_forward.15} parent=130 // pred_check
              _
            $region144: #{feature_extractor_forward.15} parent=130 // pred_check_branch
              %475 = sbr.rel (%p472) target = $region146
            $region145: #{feature_extractor_forward.15} parent=130 // pred_region
              %s476 = sand.u32 4, 7
              %s477 = ssub.s32 4, %s476
              %s478 = scalar_lea.vmem %s449, %s477
              %s479 = ssub.s32 4, %s476
              %s480 = scalar_lea.vmem %s450, %s479 [#allocation2]
              %s481 = sshll.u32 1, %s476
              %s482 = ssub.s32 %s481, 1
              loop: start=0, step=1, limit=1
              $region147: #{feature_extractor_forward.15} parent=145 // loop_pre_header
                _
              $region148: #{feature_extractor_forward.15} parent=145 // loop_header
                %s484 = sphi 0, %s488
                %p485 = scmp.ge.s32.totalorder %s484, 1
                %s489 = sphi %s478, %s478
                %s490 = sphi %s480, %s480
              $region149: #{feature_extractor_forward.15} parent=145 // loop_header_branch
                %487 = sbr.rel (%p485) target = $region153
              $region150: #{feature_extractor_forward.15} parent=145 // loop_body
                %v491 = vld [vmem:[%s489] sm:%s482]
                %492 = vst [vmem:[%s490] sm:%s482] %v491
              $region151: #{feature_extractor_forward.15} parent=145 // loop_footer
                %s488 = sadd.s32 1, %s484
              $region152: #{feature_extractor_forward.15} parent=145 // loop_footer_branch
                %483 = sbr.rel target = $region148
              $region153: #{feature_extractor_forward.15} parent=145 // loop_exit
                _
            $region146: #{feature_extractor_forward.15} parent=130 // pred_fallthru
              _
          $region131: #{feature_extractor_forward.15} parent=127 // pred_fallthru
            _
          // Predicated region
          $region132: #{feature_extractor_forward.15} parent=127 // pred_check
            %p456 = pneg %p452
          $region133: #{feature_extractor_forward.15} parent=127 // pred_check_branch
            %458 = sbr.rel (%p456) target = $region135
          $region134: #{feature_extractor_forward.15} parent=127 // pred_region
            %s459 = sshll.u32 1, 4
            %s460 = ssub.s32 %s459, 1
            loop: start=0, step=1, limit=1
            $region136: #{feature_extractor_forward.15} parent=134 // loop_pre_header
              _
            $region137: #{feature_extractor_forward.15} parent=134 // loop_header
              %s462 = sphi 0, %s466
              %p463 = scmp.ge.s32.totalorder %s462, 1
              %s467 = sphi %s449, %s449
              %s468 = sphi %s450, %s450
            $region138: #{feature_extractor_forward.15} parent=134 // loop_header_branch
              %465 = sbr.rel (%p463) target = $region142
            $region139: #{feature_extractor_forward.15} parent=134 // loop_body
              %v469 = vld [vmem:[%s467] sm:%s460]
              %470 = vst [vmem:[%s468] sm:%s460] %v469
            $region140: #{feature_extractor_forward.15} parent=134 // loop_footer
              %s466 = sadd.s32 1, %s462
            $region141: #{feature_extractor_forward.15} parent=134 // loop_footer_branch
              %461 = sbr.rel target = $region137
            $region142: #{feature_extractor_forward.15} parent=134 // loop_exit
              _
          $region135: #{feature_extractor_forward.15} parent=127 // pred_fallthru
            _
          // Predicated region
          $region154: #{feature_extractor_forward.15} parent=127 // pred_check
            _
          $region155: #{feature_extractor_forward.15} parent=127 // pred_check_branch
            %495 = sbr.rel (0) target = $region157
          $region156: #{feature_extractor_forward.15} parent=127 // pred_region
            %496 = vsyncadd [#allocation8], 64
          $region157: #{feature_extractor_forward.15} parent=127 // pred_fallthru
            _
          %s497 = smul.u32 4, 1
          %s498 = smul.u32 %s497, 1
          %s499 = smul.u32 %s498, 1
          %s500 = sshll.u32 %s499, 4
          %501 = dma.done [#allocation8], %s500
      $region126: #{feature_extractor_forward.15} parent=47 // pred_fallthru
        _
      %p502 = scmp.eq.s32.totalorder %s26, 1
      // Predicated region
      $region158: #{feature_extractor_forward.15} parent=47 // pred_check
        %p503 = pneg %p502
      $region159: #{feature_extractor_forward.15} parent=47 // pred_check_branch
        %505 = sbr.rel (%p503) target = $region161
      $region160: #{feature_extractor_forward.15} parent=47 // pred_region
        %s506 = scalar_lea.vmem [#allocation2], 20
        %507 = vst [vmem:[%s506] sm:$0xf] 0
      $region161: #{feature_extractor_forward.15} parent=47 // pred_fallthru
        _
      %v508 = vld [vmem:[#allocation2] sm:$0xf]
      %v509 = vld [vmem:[#allocation2 + $0x4] sm:$0xf]
      %v510 = vld [vmem:[#allocation2 + $0x8] sm:$0xf]
      %v511 = vld [vmem:[#allocation2 + $0xc] sm:$0xf]
      %v512 = vld [vmem:[#allocation2 + $0x10] sm:$0xf]
      %v513 = vld [vmem:[#allocation2 + $0x14] sm:$0xf]
      %v520 = vunpack.c.l.b16 %v508
      %v521 = vunpack.c.l.b16 %v509
      %v522 = vunpack.c.l.b16 %v510
      %v523 = vunpack.c.l.b16 %v511
      %v524 = vunpack.c.l.b16 %v512
      %v525 = vunpack.c.l.b16 %v513
      %v526 = vpack.c.b16 %v520, %v520
      %v527 = vpack.c.b16 %v521, %v521
      %v528 = vpack.c.b16 %v522, %v522
      %v529 = vpack.c.b16 %v523, %v523
      %v530 = vpack.c.b16 %v524, %v524
      %v531 = vpack.c.b16 %v525, %v525
      %v533 = vshrl.u32 %v526, 16
      %v535 = vrot.slane %v533, 7
      %v536 = vshll.u32 %v526, 16
      %v538 = vor.u32 %v535, %v536
      %v540 = vshrl.u32 %v527, 16
      %v542 = vrot.slane %v540, 7
      %v543 = vshll.u32 %v527, 16
      %v545 = vor.u32 %v542, %v543
      %v547 = vshrl.u32 %v528, 16
      %v549 = vrot.slane %v547, 7
      %v550 = vshll.u32 %v528, 16
      %v552 = vor.u32 %v549, %v550
      %v554 = vshrl.u32 %v529, 16
      %v556 = vrot.slane %v554, 7
      %v557 = vshll.u32 %v529, 16
      %v559 = vor.u32 %v556, %v557
      %v561 = vshrl.u32 %v530, 16
      %v563 = vrot.slane %v561, 7
      %v564 = vshll.u32 %v530, 16
      %v566 = vor.u32 %v563, %v564
      %v568 = vshrl.u32 %v531, 16
      %v570 = vrot.slane %v568, 7
      %v571 = vshll.u32 %v531, 16
      %v573 = vor.u32 %v570, %v571
      %vm580 = vcmask 1040384
      %vm581 = vsmask.f32 256
      %vm582 = vmand %vm580, %vm581
      %v583 = vsel %vm582, 0, %v538
      %v584 = vsel %vm582, 0, %v545
      %v585 = vsel %vm582, 0, %v552
      %v586 = vsel %vm582, 0, %v559
      %v587 = vsel %vm582, 0, %v566
      %v588 = vsel %vm582, 0, %v573
      %v589 = vrot.slane %v536, 1
      %v590 = vor.u32 %v533, %v589
      %v591 = vrot.slane %v543, 1
      %v592 = vor.u32 %v540, %v591
      %v593 = vrot.slane %v550, 1
      %v594 = vor.u32 %v547, %v593
      %v595 = vrot.slane %v557, 1
      %v596 = vor.u32 %v554, %v595
      %v597 = vrot.slane %v564, 1
      %v598 = vor.u32 %v561, %v597
      %v599 = vrot.slane %v571, 1
      %v600 = vor.u32 %v568, %v599
      %vm607 = vcmask 1043456
      %vm608 = vsmask.f32 3328
      %vm609 = vmand %vm607, %vm608
      %v610 = vsel %vm609, %v590, 0
      %v611 = vsel %vm609, %v592, 0
      %v612 = vsel %vm609, %v594, 0
      %v613 = vsel %vm609, %v596, 0
      %v614 = vsel %vm609, %v598, 0
      %v615 = vsel %vm609, %v600, 0
      %v616 = vld [vmem:[%s1] sm:$0xf]
      %v617 = vld [vmem:[%s1 + $0x4] sm:$0x1]
      %v619 = vpack.i.b16 %v616, %v616
      %v621 = vlaneseq
      %v622 = vshrl.u32 %v621, 7
      %v623 = vsub.s32 0, %v622
      %v624 = vrot.slane %v619, %v623
      %v625 = vmul.bf16 %v583, %v624
      %v626 = vmul.bf16 %v584, %v624
      %v627 = vmul.bf16 %v585, %v624
      %v628 = vmul.bf16 %v586, %v624
      %v629 = vunpack.c.l.bf16 %v625
      %v630 = vunpack.c.l.bf16 %v626
      %v631 = vunpack.c.l.bf16 %v627
      %v632 = vunpack.c.l.bf16 %v628
      %v633 = vadd.f32 %v629, 0.0
      %v634 = vadd.f32 %v630, 0.0
      %v635 = vadd.f32 %v631, 0.0
      %v636 = vadd.f32 %v632, 0.0
      %v637 = vshrl.u32 %v616, 16
      %v638 = vpack.i.b16 %v637, %v637
      %v640 = vlaneseq
      %v641 = vshrl.u32 %v640, 7
      %v642 = vsub.s32 0, %v641
      %v643 = vrot.slane %v638, %v642
      %v644 = vmul.bf16 %v508, %v643
      %v645 = vmul.bf16 %v509, %v643
      %v646 = vmul.bf16 %v510, %v643
      %v647 = vmul.bf16 %v511, %v643
      %v648 = vunpack.c.l.bf16 %v644
      %v649 = vunpack.c.l.bf16 %v645
      %v650 = vunpack.c.l.bf16 %v646
      %v651 = vunpack.c.l.bf16 %v647
      %v652 = vadd.f32 %v633, %v648
      %v653 = vadd.f32 %v634, %v649
      %v654 = vadd.f32 %v635, %v650
      %v655 = vadd.f32 %v636, %v651
      %v656 = vlaneseq
      %v657 = vshrl.u32 %v656, 7
      %v658 = vsub.s32 1, %v657
      %v659 = vrot.slane %v619, %v658
      %v660 = vmul.bf16 %v610, %v659
      %v661 = vmul.bf16 %v611, %v659
      %v662 = vmul.bf16 %v612, %v659
      %v663 = vmul.bf16 %v613, %v659
      %v664 = vunpack.c.l.bf16 %v660
      %v665 = vunpack.c.l.bf16 %v661
      %v666 = vunpack.c.l.bf16 %v662
      %v667 = vunpack.c.l.bf16 %v663
      %v668 = vadd.f32 %v652, %v664
      %v669 = vadd.f32 %v653, %v665
      %v670 = vadd.f32 %v654, %v666
      %v671 = vadd.f32 %v655, %v667
      %v672 = vlaneseq
      %v673 = vshrl.u32 %v672, 7
      %v674 = vsub.s32 1, %v673
      %v675 = vrot.slane %v638, %v674
      %v676 = vmul.bf16 %v584, %v675
      %v677 = vmul.bf16 %v585, %v675
      %v678 = vmul.bf16 %v586, %v675
      %v679 = vmul.bf16 %v587, %v675
      %v680 = vunpack.c.l.bf16 %v676
      %v681 = vunpack.c.l.bf16 %v677
      %v682 = vunpack.c.l.bf16 %v678
      %v683 = vunpack.c.l.bf16 %v679
      %v684 = vadd.f32 %v668, %v680
      %v685 = vadd.f32 %v669, %v681
      %v686 = vadd.f32 %v670, %v682
      %v687 = vadd.f32 %v671, %v683
      %v688 = vlaneseq
      %v689 = vshrl.u32 %v688, 7
      %v690 = vsub.s32 2, %v689
      %v691 = vrot.slane %v619, %v690
      %v692 = vmul.bf16 %v509, %v691
      %v693 = vmul.bf16 %v510, %v691
      %v694 = vmul.bf16 %v511, %v691
      %v695 = vmul.bf16 %v512, %v691
      %v696 = vunpack.c.l.bf16 %v692
      %v697 = vunpack.c.l.bf16 %v693
      %v698 = vunpack.c.l.bf16 %v694
      %v699 = vunpack.c.l.bf16 %v695
      %v700 = vadd.f32 %v684, %v696
      %v701 = vadd.f32 %v685, %v697
      %v702 = vadd.f32 %v686, %v698
      %v703 = vadd.f32 %v687, %v699
      %v704 = vlaneseq
      %v705 = vshrl.u32 %v704, 7
      %v706 = vsub.s32 2, %v705
      %v707 = vrot.slane %v638, %v706
      %v708 = vmul.bf16 %v611, %v707
      %v709 = vmul.bf16 %v612, %v707
      %v710 = vmul.bf16 %v613, %v707
      %v711 = vmul.bf16 %v614, %v707
      %v712 = vunpack.c.l.bf16 %v708
      %v713 = vunpack.c.l.bf16 %v709
      %v714 = vunpack.c.l.bf16 %v710
      %v715 = vunpack.c.l.bf16 %v711
      %v716 = vadd.f32 %v700, %v712
      %v717 = vadd.f32 %v701, %v713
      %v718 = vadd.f32 %v702, %v714
      %v719 = vadd.f32 %v703, %v715
      %v720 = vlaneseq
      %v721 = vshrl.u32 %v720, 7
      %v722 = vsub.s32 3, %v721
      %v723 = vrot.slane %v619, %v722
      %v724 = vmul.bf16 %v585, %v723
      %v725 = vmul.bf16 %v586, %v723
      %v726 = vmul.bf16 %v587, %v723
      %v727 = vmul.bf16 %v588, %v723
      %v728 = vunpack.c.l.bf16 %v724
      %v729 = vunpack.c.l.bf16 %v725
      %v730 = vunpack.c.l.bf16 %v726
      %v731 = vunpack.c.l.bf16 %v727
      %v732 = vadd.f32 %v716, %v728
      %v733 = vadd.f32 %v717, %v729
      %v734 = vadd.f32 %v718, %v730
      %v735 = vadd.f32 %v719, %v731
      %v736 = vlaneseq
      %v737 = vshrl.u32 %v736, 7
      %v738 = vsub.s32 3, %v737
      %v739 = vrot.slane %v638, %v738
      %v740 = vmul.bf16 %v510, %v739
      %v741 = vmul.bf16 %v511, %v739
      %v742 = vmul.bf16 %v512, %v739
      %v743 = vmul.bf16 %v513, %v739
      %v744 = vunpack.c.l.bf16 %v740
      %v745 = vunpack.c.l.bf16 %v741
      %v746 = vunpack.c.l.bf16 %v742
      %v747 = vunpack.c.l.bf16 %v743
      %v748 = vadd.f32 %v732, %v744
      %v749 = vadd.f32 %v733, %v745
      %v750 = vadd.f32 %v734, %v746
      %v751 = vadd.f32 %v735, %v747
      %v753 = vpack.i.b16 %v617, %v617
      %v755 = vlaneseq
      %v756 = vshrl.u32 %v755, 7
      %v757 = vsub.s32 0, %v756
      %v758 = vrot.slane %v753, %v757
      %v759 = vmul.bf16 %v612, %v758
      %v760 = vmul.bf16 %v613, %v758
      %v761 = vmul.bf16 %v614, %v758
      %v762 = vmul.bf16 %v615, %v758
      %v763 = vunpack.c.l.bf16 %v759
      %v764 = vunpack.c.l.bf16 %v760
      %v765 = vunpack.c.l.bf16 %v761
      %v766 = vunpack.c.l.bf16 %v762
      %v767 = vadd.f32 %v748, %v763
      %v768 = vadd.f32 %v749, %v764
      %v769 = vadd.f32 %v750, %v765
      %v770 = vadd.f32 %v751, %v766
      %v771 = vld [vmem:[%s2] sm:$0x1]
      %v773 = vlaneseq
      %v774 = vshrl.u32 %v773, 7
      %v775 = vsub.s32 0, %v774
      %v776 = vrot.slane %v771, %v775
      %v778 = vmul.f32 %v767, %v776
      %v779 = vmul.f32 %v768, %v776
      %v780 = vmul.f32 %v769, %v776
      %v781 = vmul.f32 %v770, %v776
      %v782 = vld [vmem:[%s3] sm:$0x1]
      %v784 = vlaneseq
      %v785 = vshrl.u32 %v784, 7
      %v786 = vsub.s32 0, %v785
      %v787 = vrot.slane %v782, %v786
      %v789 = vadd.f32 %v778, %v787
      %v790 = vadd.f32 %v779, %v787
      %v791 = vadd.f32 %v780, %v787
      %v792 = vadd.f32 %v781, %v787
      %v793 = vxor.u32 %v789, 2147483648
      %v794 = vxor.u32 %v790, 2147483648
      %v795 = vxor.u32 %v791, 2147483648
      %v796 = vxor.u32 %v792, 2147483648
      %v797 = vmul.f32 %v793, 1.442695
      %v798 = vpow.pop %v797
      %v799 = vmul.f32 %v794, 1.442695
      %v800 = vpow.pop %v799
      %v801 = vmul.f32 %v795, 1.442695
      %v802 = vpow.pop %v801
      %v803 = vmul.f32 %v796, 1.442695
      %v804 = vpow.pop %v803
      %v805 = vadd.f32 %v798, 1.0
      %v806 = vadd.f32 %v800, 1.0
      %v807 = vadd.f32 %v802, 1.0
      %v808 = vadd.f32 %v804, 1.0
      %v809 = vrcp.pop %v805
      %v810 = vmul.f32 1.0, %v809
      %v811 = vrcp.pop %v806
      %v812 = vmul.f32 1.0, %v811
      %v813 = vrcp.pop %v807
      %v814 = vmul.f32 1.0, %v813
      %v815 = vrcp.pop %v808
      %v816 = vmul.f32 1.0, %v815
      %v817 = vmul.f32 %v789, %v810
      %v818 = vmul.f32 %v790, %v812
      %v819 = vmul.f32 %v791, %v814
      %v820 = vmul.f32 %v792, %v816
      %v821 = vpack.c.bf16 %v817, %v817
      %v822 = vpack.c.bf16 %v818, %v818
      %v823 = vpack.c.bf16 %v819, %v819
      %v824 = vpack.c.bf16 %v820, %v820
      %825 = vst [vmem:[%s314] sm:$0xf] %v821
      %826 = vst [vmem:[%s314 + $0x4] sm:$0xf] %v822
      %827 = vst [vmem:[%s314 + $0x8] sm:$0xf] %v823
      %828 = vst [vmem:[%s314 + $0xc] sm:$0xf] %v824
      // Predicated region
      $region162: #{feature_extractor_forward.15} parent=47 // pred_check
        %p829 = pneg %p436
      $region163: #{feature_extractor_forward.15} parent=47 // pred_check_branch
        %831 = sbr.rel (%p829) target = $region165
      $region164: #{feature_extractor_forward.15} parent=47 // pred_region
        %832 = vst [vmem:[#allocation3] sm:$0x1] 0.0
      $region165: #{feature_extractor_forward.15} parent=47 // pred_fallthru
        _
      %v833 = vld [vmem:[#allocation3] sm:$0x1]
      %v834 = vadd.f32 %v817, %v818
      %v835 = vadd.f32 %v834, %v819
      %v836 = vadd.f32 %v835, %v820
      %v837 = vrot.slane %v836, 4
      %v838 = vadd.f32 %v836, %v837
      %v839 = vrot.slane %v838, 2
      %v840 = vadd.f32 %v838, %v839
      %v841 = vrot.slane %v840, 1
      %v842 = vadd.f32 %v840, %v841
      %v843 = vadd.f32 %v833, %v842
      %844 = vst [vmem:[#allocation3] sm:$0x1] %v843
      // Predicated region
      $region166: #{feature_extractor_forward.15} parent=47 // pred_check
        %p845 = pneg %p502
      $region167: #{feature_extractor_forward.15} parent=47 // pred_check_branch
        %847 = sbr.rel (%p845) target = $region169
      $region168: #{feature_extractor_forward.15} parent=47 // pred_region
        %v848 = vld [vmem:[#allocation3] sm:$0x1]
        %v849 = vmul.f32 %v848, 0.015625
        %v850 = vld [vmem:[%s4] sm:$0xff]
        %v851 = vld [vmem:[%s4 + $0x8] sm:$0xff]
        %v852 = vld [vmem:[%s4 + $0x10] sm:$0xff]
        %v853 = vld [vmem:[%s4 + $0x18] sm:$0xff]
        %v854 = vld [vmem:[%s4 + $0x20] sm:$0xff]
        %v855 = vld [vmem:[%s4 + $0x28] sm:$0xff]
        %v856 = vld [vmem:[%s4 + $0x30] sm:$0xff]
        %v857 = vld [vmem:[%s4 + $0x38] sm:$0xff]
        %v858 = vld [vmem:[%s4 + $0x40] sm:$0xff]
        %v859 = vld [vmem:[%s4 + $0x48] sm:$0xff]
        %v860 = vld [vmem:[%s4 + $0x50] sm:$0xff]
        %v861 = vld [vmem:[%s4 + $0x58] sm:$0xff]
        %v862 = vld [vmem:[%s4 + $0x60] sm:$0xff]
        %v863 = vld [vmem:[%s4 + $0x68] sm:$0xff]
        %v864 = vld [vmem:[%s4 + $0x70] sm:$0xff]
        %v865 = vld [vmem:[%s4 + $0x78] sm:$0xff]
        %v866 = vld [vmem:[%s5] sm:$0x1]
        %867 = vmatprep.subr.mxu0 0.0
        %868 = vmatpush1.msra.mxu0 %v865
        %869 = vmatprep.subr.mxu0 0.0
        %870 = vmatpush1.msra.mxu0 %v864
        %871 = vmatprep.subr.mxu0 0.0
        %872 = vmatpush1.msra.mxu0 %v863
        %873 = vmatprep.subr.mxu0 0.0
        %874 = vmatpush1.msra.mxu0 %v862
        %875 = vmatprep.subr.mxu0 0.0
        %876 = vmatpush1.msra.mxu0 %v861
        %877 = vmatprep.subr.mxu0 0.0
        %878 = vmatpush1.msra.mxu0 %v860
        %879 = vmatprep.subr.mxu0 0.0
        %880 = vmatpush1.msra.mxu0 %v859
        %881 = vmatprep.subr.mxu0 0.0
        %882 = vmatpush1.msra.mxu0 %v858
        %883 = vmatprep.subr.mxu0 0.0
        %884 = vmatpush1.msra.mxu0 %v857
        %885 = vmatprep.subr.mxu0 0.0
        %886 = vmatpush1.msra.mxu0 %v856
        %887 = vmatprep.subr.mxu0 0.0
        %888 = vmatpush1.msra.mxu0 %v855
        %889 = vmatprep.subr.mxu0 0.0
        %890 = vmatpush1.msra.mxu0 %v854
        %891 = vmatprep.subr.mxu0 0.0
        %892 = vmatpush1.msra.mxu0 %v853
        %893 = vmatprep.subr.mxu0 0.0
        %894 = vmatpush1.msra.mxu0 %v852
        %895 = vmatprep.subr.mxu0 0.0
        %896 = vmatpush1.msra.mxu0 %v851
        %897 = vmatprep.subr.mxu0 0.0
        %898 = vmatpush1.msra.mxu0 %v850
        %899 = vmatprep.subr.mxu0 0.0
        %900 = vmatpush2.msra.mxu0 0.0
        %901 = vmatprep.subr.mxu0 0.0
        %902 = vmatpush2.msra.mxu0 0.0
        %903 = vmatprep.subr.mxu0 0.0
        %904 = vmatpush2.msra.mxu0 0.0
        %905 = vmatprep.subr.mxu0 0.0
        %906 = vmatpush2.msra.mxu0 0.0
        %907 = vmatprep.subr.mxu0 0.0
        %908 = vmatpush2.msra.mxu0 0.0
        %909 = vmatprep.subr.mxu0 0.0
        %910 = vmatpush2.msra.mxu0 0.0
        %911 = vmatprep.subr.mxu0 0.0
        %912 = vmatpush2.msra.mxu0 0.0
        %913 = vmatprep.subr.mxu0 0.0
        %914 = vmatpush2.msra.mxu0 0.0
        %915 = vmatprep.subr.mxu0 0.0
        %916 = vmatpush2.msra.mxu0 0.0
        %917 = vmatprep.subr.mxu0 0.0
        %918 = vmatpush2.msra.mxu0 0.0
        %919 = vmatprep.subr.mxu0 0.0
        %920 = vmatpush2.msra.mxu0 0.0
        %921 = vmatprep.subr.mxu0 0.0
        %922 = vmatpush2.msra.mxu0 0.0
        %923 = vmatprep.subr.mxu0 0.0
        %924 = vmatpush2.msra.mxu0 0.0
        %925 = vmatprep.subr.mxu0 0.0
        %926 = vmatpush2.msra.mxu0 0.0
        %927 = vmatprep.subr.mxu0 0.0
        %928 = vmatpush2.msra.mxu0 0.0
        %929 = vmatprep.subr.mxu0 0.0
        %930 = vmatpush2.msra.mxu0 0.0
        %931 = vmatprep.mubr.f32.mxu0 0.0
        %932 = vmatmul.mubr.f32.gmra.mxu0 %v849
        %v933 = vpop.f32.mrf.mxu0
        %v934 = vadd.f32 %v866, %v933
        %v935 = vpop.f32.mrf.mxu0
        %936 = vdwg.mxu0
        %v937 = vxor.u32 %v934, 2147483648
        %v938 = vmul.f32 %v937, 1.442695
        %v939 = vpow.pop %v938
        %v940 = vadd.f32 %v939, 1.0
        %v941 = vrcp.pop %v940
        %v942 = vmul.f32 1.0, %v941
        %v943 = vmul.f32 %v934, %v942
        %v944 = vld [vmem:[%s6] sm:$0xff]
        %v945 = vld [vmem:[%s6 + $0x8] sm:$0xff]
        %v946 = vld [vmem:[%s6 + $0x10] sm:$0xff]
        %v947 = vld [vmem:[%s6 + $0x18] sm:$0xff]
        %v948 = vld [vmem:[%s6 + $0x20] sm:$0xff]
        %v949 = vld [vmem:[%s6 + $0x28] sm:$0xff]
        %v950 = vld [vmem:[%s6 + $0x30] sm:$0xff]
        %v951 = vld [vmem:[%s6 + $0x38] sm:$0xff]
        %v952 = vld [vmem:[%s6 + $0x40] sm:$0xff]
        %v953 = vld [vmem:[%s6 + $0x48] sm:$0xff]
        %v954 = vld [vmem:[%s6 + $0x50] sm:$0xff]
        %v955 = vld [vmem:[%s6 + $0x58] sm:$0xff]
        %v956 = vld [vmem:[%s6 + $0x60] sm:$0xff]
        %v957 = vld [vmem:[%s6 + $0x68] sm:$0xff]
        %v958 = vld [vmem:[%s6 + $0x70] sm:$0xff]
        %v959 = vld [vmem:[%s6 + $0x78] sm:$0xff]
        %v960 = vld [vmem:[%s7] sm:$0x1]
        %961 = vmatprep.subr.mxu0 0.0
        %962 = vmatpush1.msra.mxu0 %v959
        %963 = vmatprep.subr.mxu0 0.0
        %964 = vmatpush1.msra.mxu0 %v958
        %965 = vmatprep.subr.mxu0 0.0
        %966 = vmatpush1.msra.mxu0 %v957
        %967 = vmatprep.subr.mxu0 0.0
        %968 = vmatpush1.msra.mxu0 %v956
        %969 = vmatprep.subr.mxu0 0.0
        %970 = vmatpush1.msra.mxu0 %v955
        %971 = vmatprep.subr.mxu0 0.0
        %972 = vmatpush1.msra.mxu0 %v954
        %973 = vmatprep.subr.mxu0 0.0
        %974 = vmatpush1.msra.mxu0 %v953
        %975 = vmatprep.subr.mxu0 0.0
        %976 = vmatpush1.msra.mxu0 %v952
        %977 = vmatprep.subr.mxu0 0.0
        %978 = vmatpush1.msra.mxu0 %v951
        %979 = vmatprep.subr.mxu0 0.0
        %980 = vmatpush1.msra.mxu0 %v950
        %981 = vmatprep.subr.mxu0 0.0
        %982 = vmatpush1.msra.mxu0 %v949
        %983 = vmatprep.subr.mxu0 0.0
        %984 = vmatpush1.msra.mxu0 %v948
        %985 = vmatprep.subr.mxu0 0.0
        %986 = vmatpush1.msra.mxu0 %v947
        %987 = vmatprep.subr.mxu0 0.0
        %988 = vmatpush1.msra.mxu0 %v946
        %989 = vmatprep.subr.mxu0 0.0
        %990 = vmatpush1.msra.mxu0 %v945
        %991 = vmatprep.subr.mxu0 0.0
        %992 = vmatpush1.msra.mxu0 %v944
        %993 = vmatprep.subr.mxu0 0.0
        %994 = vmatpush2.msra.mxu0 0.0
        %995 = vmatprep.subr.mxu0 0.0
        %996 = vmatpush2.msra.mxu0 0.0
        %997 = vmatprep.subr.mxu0 0.0
        %998 = vmatpush2.msra.mxu0 0.0
        %999 = vmatprep.subr.mxu0 0.0
        %1000 = vmatpush2.msra.mxu0 0.0
        %1001 = vmatprep.subr.mxu0 0.0
        %1002 = vmatpush2.msra.mxu0 0.0
        %1003 = vmatprep.subr.mxu0 0.0
        %1004 = vmatpush2.msra.mxu0 0.0
        %1005 = vmatprep.subr.mxu0 0.0
        %1006 = vmatpush2.msra.mxu0 0.0
        %1007 = vmatprep.subr.mxu0 0.0
        %1008 = vmatpush2.msra.mxu0 0.0
        %1009 = vmatprep.subr.mxu0 0.0
        %1010 = vmatpush2.msra.mxu0 0.0
        %1011 = vmatprep.subr.mxu0 0.0
        %1012 = vmatpush2.msra.mxu0 0.0
        %1013 = vmatprep.subr.mxu0 0.0
        %1014 = vmatpush2.msra.mxu0 0.0
        %1015 = vmatprep.subr.mxu0 0.0
        %1016 = vmatpush2.msra.mxu0 0.0
        %1017 = vmatprep.subr.mxu0 0.0
        %1018 = vmatpush2.msra.mxu0 0.0
        %1019 = vmatprep.subr.mxu0 0.0
        %1020 = vmatpush2.msra.mxu0 0.0
        %1021 = vmatprep.subr.mxu0 0.0
        %1022 = vmatpush2.msra.mxu0 0.0
        %1023 = vmatprep.subr.mxu0 0.0
        %1024 = vmatpush2.msra.mxu0 0.0
        %1025 = vmatprep.mubr.f32.mxu0 0.0
        %1026 = vmatmul.mubr.f32.gmra.mxu0 %v943
        %v1027 = vpop.f32.mrf.mxu0
        %v1028 = vadd.f32 %v960, %v1027
        %v1029 = vpop.f32.mrf.mxu0
        %1030 = vdwg.mxu0
        %v1031 = vxor.u32 %v1028, 2147483648
        %v1032 = vmul.f32 %v1031, 1.442695
        %v1033 = vpow.pop %v1032
        %v1034 = vadd.f32 %v1033, 1.0
        %v1035 = vrcp.pop %v1034
        %v1036 = vmul.f32 1.0, %v1035
        %v1037 = vpack.c.bf16 %v1036, %v1036
        %v1038 = vld [vmem:[%s318] sm:$0x1]
        %v1039 = vsel %vm582, %v1037, %v1038
        %1040 = vst [vmem:[%s318] sm:$0x1] %v1039
      $region169: #{feature_extractor_forward.15} parent=47 // pred_fallthru
        _
      %s1041 = smul.u32 4, %s26
      %p1042 = scmp.lt.s32.totalorder %s25, 1
      %s1043 = scalar_select %p1042, %s25, 1
      %p1044 = scmp.lt.s32.totalorder %s1041, 7
      %s1045 = scalar_select %p1044, %s1041, 7
      %s1046 = smul.addr %s1043, 8
      %s1047 = sadd.s32 %s1045, %s1046
      %s1048 = smul.addr %s1047, 4
      %s1049 = scalar_lea.vmem %s8, %s1048
      %p1050 = scmp.lt.s32.totalorder %s25, 1
      %s1051 = scalar_select %p1050, %s25, 1
      %s1052 = scalar_lea.vmem %s9, %s1051
      // Predicated region
      $region170: #{feature_extractor_forward.15} parent=47 // pred_check
        %p1053 = pneg %p200
      $region171: #{feature_extractor_forward.15} parent=47 // pred_check_branch
        %1055 = sbr.rel (%p1053) target = $region173
      $region172: #{feature_extractor_forward.15} parent=47 // pred_region
        %s1056 = smul.u32 4, %s26
      $region173: #{feature_extractor_forward.15} parent=47 // pred_fallthru
        _
      // Predicated region
      $region174: #{feature_extractor_forward.15} parent=47 // pred_check
        %p1057 = pneg %p226
      $region175: #{feature_extractor_forward.15} parent=47 // pred_check_branch
        %1059 = sbr.rel (%p1057) target = $region177
      $region176: #{feature_extractor_forward.15} parent=47 // pred_region
        _
      $region177: #{feature_extractor_forward.15} parent=47 // pred_fallthru
        _
    $region48: #{feature_extractor_forward.15} parent=5 // pred_fallthru
      _
    %p1060 = scmp.le.s32.totalorder 2, %s16
    // Predicated region
    $region178: #{feature_extractor_forward.15} parent=5 // pred_check
      %p1061 = pneg %p1060
    $region179: #{feature_extractor_forward.15} parent=5 // pred_check_branch
      %1063 = sbr.rel (%p1061) target = $region181
    $region180: #{feature_extractor_forward.15} parent=5 // pred_region
      %s1064 = ssub.s32 %s16, 2
      // Predicated region
      $region182: #{feature_extractor_forward.15} parent=180 // pred_check
        %p1065 = pneg %p206
      $region183: #{feature_extractor_forward.15} parent=180 // pred_check_branch
        %1067 = sbr.rel (%p1065) target = $region185
      $region184: #{feature_extractor_forward.15} parent=180 // pred_region
        %s1068 = smul.u32 4, %s28
        %p1069 = scmp.lt.s32.totalorder %s27, 1
        %s1070 = scalar_select %p1069, %s27, 1
        %p1071 = scmp.lt.s32.totalorder %s1068, 7
        %s1072 = scalar_select %p1071, %s1068, 7
        %s1073 = smul.addr %s1070, 8
        %s1074 = sadd.s32 %s1072, %s1073
        %s1075 = smul.addr %s1074, 4
        %s1076 = scalar_lea.vmem %s8, %s1075
      $region185: #{feature_extractor_forward.15} parent=180 // pred_fallthru
        _
      // Predicated region
      $region186: #{feature_extractor_forward.15} parent=180 // pred_check
        %p1077 = pneg %p232
      $region187: #{feature_extractor_forward.15} parent=180 // pred_check_branch
        %1079 = sbr.rel (%p1077) target = $region189
      $region188: #{feature_extractor_forward.15} parent=180 // pred_region
        %p1080 = scmp.lt.s32.totalorder %s27, 1
        %s1081 = scalar_select %p1080, %s27, 1
        %s1082 = scalar_lea.vmem %s9, %s1081
      $region189: #{feature_extractor_forward.15} parent=180 // pred_fallthru
        _
    $region181: #{feature_extractor_forward.15} parent=5 // pred_fallthru
      _
  $region6: #{feature_extractor_forward.15} parent=0 // loop_footer
    %s20 = sadd.s32 1, %s16
  $region7: #{feature_extractor_forward.15} parent=0 // loop_footer_branch
    %15 = sbr.rel target = $region3
  $region8: #{feature_extractor_forward.15} parent=0 // loop_exit
    _

// kernel: feature_extractor_forward.16
$region0: #{feature_extractor_forward.16}
  #allocation0 [shape = 'u32[]', space=smem, size = 0x4, offset = 0x4, fixed_abs, tag = 'smem constant byte address 0x4 - core index']
  #allocation1 [shape = 'u32[144,128]{1,0:T(1,128)}', space=vmem, size = 0x12000, scoped, tag = 'internal scratch']
  %s0 = inlined_call_operand.vmem [shape: bf16[2,64,128], index: 0, kind: input, shape index: {}]
  %s1 = inlined_call_operand.vmem [shape: bf16[2,1,128], index: 1, kind: input, shape index: {}]
  %s2 = inlined_call_operand.vmem [shape: bf16[128,128], index: 2, kind: input, shape index: {}]
  %s3 = inlined_call_operand.vmem [shape: f32[1,128], index: 3, kind: input, shape index: {}]
  %s4 = inlined_call_operand.vmem [shape: f32[1,128], index: 4, kind: input, shape index: {}]
  %s5 = inlined_call_operand.vmem [shape: bf16[2,64,128], index: 5, kind: input, shape index: {}]
  %s6 = inlined_call_operand.vmem [shape: bf16[2,64,128], index: 6, kind: output, shape index: {}]
  %s7 = sld [smem:[#allocation0]]
  $region57: #{feature_extractor_forward.16} parent=0
    _
  %s9 = ssub.s32 1, %s7
  %s10 = scalar_select 0, %s9, %s7
  loop: start=0, step=1, limit=6
  $region2: #{feature_extractor_forward.16} parent=0 // loop_pre_header
    _
  $region3: #{feature_extractor_forward.16} parent=0 // loop_header
    %s12 = sphi 0, %s16
    %p13 = scmp.ge.s32.totalorder %s12, 6
    %s19 = sphi 0, %s31
    %s20 = sphi 0, %s27
    %s21 = sphi 0, %s19
    %s22 = sphi 0, %s20
    %s23 = sphi 0, %s21
    %s24 = sphi 0, %s22
    %s36 = sphi 0, %s38
    %s39 = sphi 0, %s36
    %s40 = sphi 0, %s39
    %s56 = sphi 0, %s40
    %s62 = sphi 0, %s64
    %s65 = sphi 0, %s62
    %s66 = sphi 0, %s65
    %s82 = sphi 0, %s66
    %s86 = sphi 0, %s86
    %s88 = sphi 0, %s86
    %s89 = sphi 0, %s88
    %s103 = sphi 0, %s89
    %s107 = sphi 0, %s107
    %s109 = sphi 0, %s107
    %s110 = sphi 0, %s109
    %s124 = sphi 0, %s110
    %s128 = sphi 0, %s128
    %s130 = sphi 0, %s128
    %s131 = sphi 0, %s130
    %s145 = sphi 0, %s131
    %s153 = sphi 0, %s155
    %s156 = sphi 0, %s153
    %s157 = sphi 0, %s156
    %s173 = sphi 0, %s157
    %s181 = sphi 0, %s183
    %s184 = sphi 0, %s181
    %s185 = sphi 0, %s184
    %s201 = sphi 0, %s185
  $region4: #{feature_extractor_forward.16} parent=0 // loop_header_branch
    %15 = sbr.rel (%p13) target = $region8
  $region5: #{feature_extractor_forward.16} parent=0 // loop_body
    %s17 = ssub.s32 %s12, 1
    %s18 = ssub.s32 %s12, 2
    %s25 = sadd.s32 1, %s20
    %p26 = scmp.ge.s32.totalorder %s25, 2
    %s27 = scalar_select %p26, 0, %s25
    %s28 = sadd.s32 1, %s19
    %s29 = scalar_select %p26, %s28, %s19
    %p30 = scmp.ge.s32.totalorder %s29, 2
    %s31 = scalar_select %p30, 0, %s29
    %s32 = ssub.s32 %s19, %s31
    %s33 = ssub.s32 %s20, %s27
    %s34 = sor.u32 %s32, %s33
    %p35 = scmp.eq.s32.totalorder %s34, 0
    %s37 = sadd.s32 %s36, 1
    %s38 = scalar_select %p35, %s36, %s37
    %p41 = pneg %p35
    %p42 = scmp.eq.s32.totalorder %s12, 3
    %p43 = por %p41, %p42
    %p44 = scmp.ne.s32.totalorder %s36, %s39
    %p45 = scmp.eq.s32.totalorder %s12, 0
    %p46 = por %p44, %p45
    %p47 = scmp.ne.s32.totalorder %s36, %s39
    %p48 = scmp.eq.s32.totalorder %s17, 3
    %p49 = por %p47, %p48
    %p50 = scmp.ne.s32.totalorder %s39, %s40
    %p51 = scmp.eq.s32.totalorder %s17, 0
    %p52 = por %p50, %p51
    %p53 = scmp.ne.s32.totalorder %s39, %s40
    %p54 = scmp.eq.s32.totalorder %s18, 3
    %p55 = por %p53, %p54
    %p57 = scmp.ne.s32.totalorder %s40, %s56
    %p58 = scmp.eq.s32.totalorder %s18, 0
    %p59 = por %p57, %p58
    %s60 = ssub.s32 %s19, %s31
    %p61 = scmp.eq.s32.totalorder %s60, 0
    %s63 = sadd.s32 %s62, 1
    %s64 = scalar_select %p61, %s62, %s63
    %p67 = pneg %p61
    %p68 = scmp.eq.s32.totalorder %s12, 3
    %p69 = por %p67, %p68
    %p70 = scmp.ne.s32.totalorder %s62, %s65
    %p71 = scmp.eq.s32.totalorder %s12, 0
    %p72 = por %p70, %p71
    %p73 = scmp.ne.s32.totalorder %s62, %s65
    %p74 = scmp.eq.s32.totalorder %s17, 3
    %p75 = por %p73, %p74
    %p76 = scmp.ne.s32.totalorder %s65, %s66
    %p77 = scmp.eq.s32.totalorder %s17, 0
    %p78 = por %p76, %p77
    %p79 = scmp.ne.s32.totalorder %s65, %s66
    %p80 = scmp.eq.s32.totalorder %s18, 3
    %p81 = por %p79, %p80
    %p83 = scmp.ne.s32.totalorder %s66, %s82
    %p84 = scmp.eq.s32.totalorder %s18, 0
    %p85 = por %p83, %p84
    %s87 = sadd.s32 %s86, 1
    %p90 = scmp.eq.s32.totalorder %s12, 3
    %p91 = scmp.ne.s32.totalorder %s86, %s88
    %p92 = scmp.eq.s32.totalorder %s12, 0
    %p93 = por %p91, %p92
    %p94 = scmp.ne.s32.totalorder %s86, %s88
    %p95 = scmp.eq.s32.totalorder %s17, 3
    %p96 = por %p94, %p95
    %p97 = scmp.ne.s32.totalorder %s88, %s89
    %p98 = scmp.eq.s32.totalorder %s17, 0
    %p99 = por %p97, %p98
    %p100 = scmp.ne.s32.totalorder %s88, %s89
    %p101 = scmp.eq.s32.totalorder %s18, 3
    %p102 = por %p100, %p101
    %p104 = scmp.ne.s32.totalorder %s89, %s103
    %p105 = scmp.eq.s32.totalorder %s18, 0
    %p106 = por %p104, %p105
    %s108 = sadd.s32 %s107, 1
    %p111 = scmp.eq.s32.totalorder %s12, 3
    %p112 = scmp.ne.s32.totalorder %s107, %s109
    %p113 = scmp.eq.s32.totalorder %s12, 0
    %p114 = por %p112, %p113
    %p115 = scmp.ne.s32.totalorder %s107, %s109
    %p116 = scmp.eq.s32.totalorder %s17, 3
    %p117 = por %p115, %p116
    %p118 = scmp.ne.s32.totalorder %s109, %s110
    %p119 = scmp.eq.s32.totalorder %s17, 0
    %p120 = por %p118, %p119
    %p121 = scmp.ne.s32.totalorder %s109, %s110
    %p122 = scmp.eq.s32.totalorder %s18, 3
    %p123 = por %p121, %p122
    %p125 = scmp.ne.s32.totalorder %s110, %s124
    %p126 = scmp.eq.s32.totalorder %s18, 0
    %p127 = por %p125, %p126
    %s129 = sadd.s32 %s128, 1
    %p132 = scmp.eq.s32.totalorder %s12, 3
    %p133 = scmp.ne.s32.totalorder %s128, %s130
    %p134 = scmp.eq.s32.totalorder %s12, 0
    %p135 = por %p133, %p134
    %p136 = scmp.ne.s32.totalorder %s128, %s130
    %p137 = scmp.eq.s32.totalorder %s17, 3
    %p138 = por %p136, %p137
    %p139 = scmp.ne.s32.totalorder %s130, %s131
    %p140 = scmp.eq.s32.totalorder %s17, 0
    %p141 = por %p139, %p140
    %p142 = scmp.ne.s32.totalorder %s130, %s131
    %p143 = scmp.eq.s32.totalorder %s18, 3
    %p144 = por %p142, %p143
    %p146 = scmp.ne.s32.totalorder %s131, %s145
    %p147 = scmp.eq.s32.totalorder %s18, 0
    %p148 = por %p146, %p147
    %s149 = ssub.s32 %s19, %s31
    %s150 = ssub.s32 %s20, %s27
    %s151 = sor.u32 %s149, %s150
    %p152 = scmp.eq.s32.totalorder %s151, 0
    %s154 = sadd.s32 %s153, 1
    %s155 = scalar_select %p152, %s153, %s154
    %p158 = pneg %p152
    %p159 = scmp.eq.s32.totalorder %s12, 3
    %p160 = por %p158, %p159
    %p161 = scmp.ne.s32.totalorder %s153, %s156
    %p162 = scmp.eq.s32.totalorder %s12, 0
    %p163 = por %p161, %p162
    %p164 = scmp.ne.s32.totalorder %s153, %s156
    %p165 = scmp.eq.s32.totalorder %s17, 3
    %p166 = por %p164, %p165
    %p167 = scmp.ne.s32.totalorder %s156, %s157
    %p168 = scmp.eq.s32.totalorder %s17, 0
    %p169 = por %p167, %p168
    %p170 = scmp.ne.s32.totalorder %s156, %s157
    %p171 = scmp.eq.s32.totalorder %s18, 3
    %p172 = por %p170, %p171
    %p174 = scmp.ne.s32.totalorder %s157, %s173
    %p175 = scmp.eq.s32.totalorder %s18, 0
    %p176 = por %p174, %p175
    %s177 = ssub.s32 %s19, %s31
    %s178 = ssub.s32 %s20, %s27
    %s179 = sor.u32 %s177, %s178
    %p180 = scmp.eq.s32.totalorder %s179, 0
    %s182 = sadd.s32 %s181, 1
    %s183 = scalar_select %p180, %s181, %s182
    %p186 = pneg %p180
    %p187 = scmp.eq.s32.totalorder %s12, 3
    %p188 = por %p186, %p187
    %p189 = scmp.ne.s32.totalorder %s181, %s184
    %p190 = scmp.eq.s32.totalorder %s12, 0
    %p191 = por %p189, %p190
    %p192 = scmp.ne.s32.totalorder %s181, %s184
    %p193 = scmp.eq.s32.totalorder %s17, 3
    %p194 = por %p192, %p193
    %p195 = scmp.ne.s32.totalorder %s184, %s185
    %p196 = scmp.eq.s32.totalorder %s17, 0
    %p197 = por %p195, %p196
    %p198 = scmp.ne.s32.totalorder %s184, %s185
    %p199 = scmp.eq.s32.totalorder %s18, 3
    %p200 = por %p198, %p199
    %p202 = scmp.ne.s32.totalorder %s185, %s201
    %p203 = scmp.eq.s32.totalorder %s18, 0
    %p204 = por %p202, %p203
    %p205 = scmp.le.s32.totalorder 1, %s12
    %p206 = scmp.lt.s32.totalorder %s12, 5
    %p207 = pnand %p205, %p206
    %p208 = pneg %p207
    // Predicated region
    $region9: #{feature_extractor_forward.16} parent=5 // pred_check
      _
    $region10: #{feature_extractor_forward.16} parent=5 // pred_check_branch
      %210 = sbr.rel (%p207) target = $region12
    $region11: #{feature_extractor_forward.16} parent=5 // pred_region
      %s211 = ssub.s32 %s12, 1
      // Predicated region
      $region13: #{feature_extractor_forward.16} parent=11 // pred_check
        %p212 = pneg %p99
      $region14: #{feature_extractor_forward.16} parent=11 // pred_check_branch
        %214 = sbr.rel (%p212) target = $region16
      $region15: #{feature_extractor_forward.16} parent=11 // pred_region
        _
      $region16: #{feature_extractor_forward.16} parent=11 // pred_fallthru
        _
      // Predicated region
      $region17: #{feature_extractor_forward.16} parent=11 // pred_check
        %p215 = pneg %p120
      $region18: #{feature_extractor_forward.16} parent=11 // pred_check_branch
        %217 = sbr.rel (%p215) target = $region20
      $region19: #{feature_extractor_forward.16} parent=11 // pred_region
        _
      $region20: #{feature_extractor_forward.16} parent=11 // pred_fallthru
        _
      // Predicated region
      $region21: #{feature_extractor_forward.16} parent=11 // pred_check
        %p218 = pneg %p141
      $region22: #{feature_extractor_forward.16} parent=11 // pred_check_branch
        %220 = sbr.rel (%p218) target = $region24
      $region23: #{feature_extractor_forward.16} parent=11 // pred_region
        _
      $region24: #{feature_extractor_forward.16} parent=11 // pred_fallthru
        _
    $region12: #{feature_extractor_forward.16} parent=5 // pred_fallthru
      _
    %p221 = scmp.lt.s32.totalorder %s12, 4
    // Predicated region
    $region25: #{feature_extractor_forward.16} parent=5 // pred_check
      %p222 = pneg %p221
    $region26: #{feature_extractor_forward.16} parent=5 // pred_check_branch
      %224 = sbr.rel (%p222) target = $region28
    $region27: #{feature_extractor_forward.16} parent=5 // pred_region
      // Predicated region
      $region29: #{feature_extractor_forward.16} parent=27 // pred_check
        %p225 = pneg %p46
      $region30: #{feature_extractor_forward.16} parent=27 // pred_check_branch
        %227 = sbr.rel (%p225) target = $region32
      $region31: #{feature_extractor_forward.16} parent=27 // pred_region
        %s228 = smul.u32 4, %s20
        %p229 = scmp.lt.s32.totalorder %s19, 1
        %s230 = scalar_select %p229, %s19, 1
        %p231 = scmp.lt.s32.totalorder %s228, 7
        %s232 = scalar_select %p231, %s228, 7
        %s233 = smul.addr %s230, 8
        %s234 = sadd.s32 %s232, %s233
        %s235 = smul.addr %s234, 4
        %s236 = scalar_lea.vmem %s0, %s235
        %s237 = smul.u32 4, %s20
      $region32: #{feature_extractor_forward.16} parent=27 // pred_fallthru
        _
      // Predicated region
      $region33: #{feature_extractor_forward.16} parent=27 // pred_check
        %p238 = pneg %p72
      $region34: #{feature_extractor_forward.16} parent=27 // pred_check_branch
        %240 = sbr.rel (%p238) target = $region36
      $region35: #{feature_extractor_forward.16} parent=27 // pred_region
        %p241 = scmp.lt.s32.totalorder %s19, 1
        %s242 = scalar_select %p241, %s19, 1
        %s243 = scalar_lea.vmem %s1, %s242
      $region36: #{feature_extractor_forward.16} parent=27 // pred_fallthru
        _
      // Predicated region
      $region37: #{feature_extractor_forward.16} parent=27 // pred_check
        %p244 = pneg %p163
      $region38: #{feature_extractor_forward.16} parent=27 // pred_check_branch
        %246 = sbr.rel (%p244) target = $region40
      $region39: #{feature_extractor_forward.16} parent=27 // pred_region
        %s247 = smul.u32 4, %s20
        %p248 = scmp.lt.s32.totalorder %s19, 1
        %s249 = scalar_select %p248, %s19, 1
        %p250 = scmp.lt.s32.totalorder %s247, 7
        %s251 = scalar_select %p250, %s247, 7
        %s252 = smul.addr %s249, 8
        %s253 = sadd.s32 %s251, %s252
        %s254 = smul.addr %s253, 4
        %s255 = scalar_lea.vmem %s5, %s254
        %s256 = smul.u32 4, %s20
      $region40: #{feature_extractor_forward.16} parent=27 // pred_fallthru
        _
    $region28: #{feature_extractor_forward.16} parent=5 // pred_fallthru
      _
    %p257 = scmp.le.s32.totalorder 1, %s12
    %p258 = scmp.lt.s32.totalorder %s12, 5
    %p259 = pnand %p257, %p258
    %p260 = pneg %p259
    // Predicated region
    $region41: #{feature_extractor_forward.16} parent=5 // pred_check
      _
    $region42: #{feature_extractor_forward.16} parent=5 // pred_check_branch
      %262 = sbr.rel (%p259) target = $region44
    $region43: #{feature_extractor_forward.16} parent=5 // pred_region
      %s263 = ssub.s32 %s12, 1
      %s264 = smul.u32 4, %s22
      %p265 = scmp.lt.s32.totalorder %s21, 1
      %s266 = scalar_select %p265, %s21, 1
      %p267 = scmp.lt.s32.totalorder %s264, 7
      %s268 = scalar_select %p267, %s264, 7
      %s269 = smul.addr %s266, 8
      %s270 = sadd.s32 %s268, %s269
      %s271 = smul.addr %s270, 4
      %s272 = scalar_lea.vmem %s0, %s271
      %p273 = pneg %p52
      %p274 = pneg %p49
      %p275 = scmp.lt.s32.totalorder %s21, 1
      %s276 = scalar_select %p275, %s21, 1
      %s277 = scalar_lea.vmem %s1, %s276
      %p278 = pneg %p78
      %p279 = pneg %p75
      %p280 = pneg %p99
      %p281 = pneg %p96
      %p282 = pneg %p120
      %p283 = pneg %p117
      %p284 = pneg %p141
      %p285 = pneg %p138
      %s286 = smul.u32 4, %s22
      %p287 = scmp.lt.s32.totalorder %s21, 1
      %s288 = scalar_select %p287, %s21, 1
      %p289 = scmp.lt.s32.totalorder %s286, 7
      %s290 = scalar_select %p289, %s286, 7
      %s291 = smul.addr %s288, 8
      %s292 = sadd.s32 %s290, %s291
      %s293 = smul.addr %s292, 4
      %s294 = scalar_lea.vmem %s5, %s293
      %p295 = pneg %p169
      %p296 = pneg %p166
      %p297 = pneg %p197
      %p298 = pneg %p194
      %s299 = smul.u32 4, %s22
      %p300 = scmp.lt.s32.totalorder %s21, 1
      %s301 = scalar_select %p300, %s21, 1
      %p302 = scmp.lt.s32.totalorder %s299, 7
      %s303 = scalar_select %p302, %s299, 7
      %s304 = smul.addr %s301, 8
      %s305 = sadd.s32 %s303, %s304
      %s306 = smul.addr %s305, 4
      %s307 = scalar_lea.vmem %s6, %s306
      %s308 = smul.u32 4, %s22
      %p309 = scmp.lt.s32.totalorder %s21, 1
      %s310 = scalar_select %p309, %s21, 1
      %p311 = scmp.lt.s32.totalorder %s308, 7
      %s312 = scalar_select %p311, %s308, 7
      %s313 = smul.addr %s310, 8
      %s314 = sadd.s32 %s312, %s313
      %s315 = smul.addr %s314, 4
      %s316 = scalar_lea.vmem %s0, %s315
      %s317 = smul.u32 4, %s22
      %p318 = scmp.lt.s32.totalorder %s21, 1
      %s319 = scalar_select %p318, %s21, 1
      %s320 = scalar_lea.vmem %s1, %s319
      %s321 = smul.u32 4, %s22
      %p322 = scmp.lt.s32.totalorder %s21, 1
      %s323 = scalar_select %p322, %s21, 1
      %p324 = scmp.lt.s32.totalorder %s321, 7
      %s325 = scalar_select %p324, %s321, 7
      %s326 = smul.addr %s323, 8
      %s327 = sadd.s32 %s325, %s326
      %s328 = smul.addr %s327, 4
      %s329 = scalar_lea.vmem %s5, %s328
      %s330 = smul.u32 4, %s22
      %s331 = smul.u32 4, %s22
      %p332 = scmp.lt.s32.totalorder %s21, 1
      %s333 = scalar_select %p332, %s21, 1
      %p334 = scmp.lt.s32.totalorder %s331, 7
      %s335 = scalar_select %p334, %s331, 7
      %s336 = smul.addr %s333, 8
      %s337 = sadd.s32 %s335, %s336
      %s338 = smul.addr %s337, 4
      %s339 = scalar_lea.vmem %s6, %s338
      %s340 = smul.u32 4, %s22
      %v342 = vld [vmem:[%s316] sm:$0xf]
      %v343 = vld [vmem:[%s316 + $0x4] sm:$0xf]
      %v344 = vld [vmem:[%s316 + $0x8] sm:$0xf]
      %v345 = vld [vmem:[%s316 + $0xc] sm:$0xf]
      %v346 = vld [vmem:[%s320] sm:$0x1]
      %v348 = vpack.i.b16 %v346, %v346
      %v350 = vlaneseq
      %v351 = vshrl.u32 %v350, 7
      %v352 = vsub.s32 0, %v351
      %v353 = vrot.slane %v348, %v352
      %v355 = vunpack.c.l.b16 %v353
      %v356 = vpack.c.b16 %v355, %v355
      %v358 = vmul.bf16 %v342, %v356
      %v359 = vmul.bf16 %v343, %v356
      %v360 = vmul.bf16 %v344, %v356
      %v361 = vmul.bf16 %v345, %v356
      %v362 = vld [vmem:[%s2] sm:$0xf]
      %v363 = vld [vmem:[%s2 + $0x4] sm:$0xf]
      %v364 = vld [vmem:[%s2 + $0x8] sm:$0xf]
      %v365 = vld [vmem:[%s2 + $0xc] sm:$0xf]
      %v366 = vld [vmem:[%s2 + $0x10] sm:$0xf]
      %v367 = vld [vmem:[%s2 + $0x14] sm:$0xf]
      %v368 = vld [vmem:[%s2 + $0x18] sm:$0xf]
      %v369 = vld [vmem:[%s2 + $0x1c] sm:$0xf]
      %v370 = vld [vmem:[%s2 + $0x20] sm:$0xf]
      %v371 = vld [vmem:[%s2 + $0x24] sm:$0xf]
      %v372 = vld [vmem:[%s2 + $0x28] sm:$0xf]
      %v373 = vld [vmem:[%s2 + $0x2c] sm:$0xf]
      %v374 = vld [vmem:[%s2 + $0x30] sm:$0xf]
      %v375 = vld [vmem:[%s2 + $0x34] sm:$0xf]
      %v376 = vld [vmem:[%s2 + $0x38] sm:$0xf]
      %v377 = vld [vmem:[%s2 + $0x3c] sm:$0xf]
      %v382 = vunpack.c.l.b16 %v358
      %v383 = vunpack.c.l.b16 %v359
      %v384 = vunpack.c.l.b16 %v360
      %v385 = vunpack.c.l.b16 %v361
      %v386 = vpack.c.b16 %v383, %v382
      %v387 = vpack.c.b16 %v385, %v384
      %v406 = vunpack.c.l.b16 %v362
      %v407 = vunpack.c.l.b16 %v363
      %v408 = vunpack.c.l.b16 %v364
      %v409 = vunpack.c.l.b16 %v365
      %v410 = vunpack.c.l.b16 %v366
      %v411 = vunpack.c.l.b16 %v367
      %v412 = vunpack.c.l.b16 %v368
      %v413 = vunpack.c.l.b16 %v369
      %v414 = vunpack.c.l.b16 %v370
      %v415 = vunpack.c.l.b16 %v371
      %v416 = vunpack.c.l.b16 %v372
      %v417 = vunpack.c.l.b16 %v373
      %v418 = vunpack.c.l.b16 %v374
      %v419 = vunpack.c.l.b16 %v375
      %v420 = vunpack.c.l.b16 %v376
      %v421 = vunpack.c.l.b16 %v377
      %v422 = vpack.c.b16 %v407, %v406
      %v423 = vpack.c.b16 %v409, %v408
      %v424 = vpack.c.b16 %v411, %v410
      %v425 = vpack.c.b16 %v413, %v412
      %v426 = vpack.c.b16 %v415, %v414
      %v427 = vpack.c.b16 %v417, %v416
      %v428 = vpack.c.b16 %v419, %v418
      %v429 = vpack.c.b16 %v421, %v420
      %438 = vmatprep.subr.bf16.mxu0 0
      %439 = vmatpush1.bf16.msra.mxu0 %v429
      %440 = vmatprep.subr.bf16.mxu0 0
      %441 = vmatpush1.bf16.msra.mxu0 %v428
      %442 = vmatprep.subr.bf16.mxu0 0
      %443 = vmatpush1.bf16.msra.mxu0 %v427
      %444 = vmatprep.subr.bf16.mxu0 0
      %445 = vmatpush1.bf16.msra.mxu0 %v426
      %446 = vmatprep.subr.bf16.mxu0 0
      %447 = vmatpush1.bf16.msra.mxu0 %v425
      %448 = vmatprep.subr.bf16.mxu0 0
      %449 = vmatpush1.bf16.msra.mxu0 %v424
      %450 = vmatprep.subr.bf16.mxu0 0
      %451 = vmatpush1.bf16.msra.mxu0 %v423
      %452 = vmatprep.subr.bf16.mxu0 0
      %453 = vmatpush1.bf16.msra.mxu0 %v422
      %454 = vmatprep.subr.bf16.mxu0 0
      %455 = vmatpush2.bf16.msra.mxu0 0
      %456 = vmatprep.subr.bf16.mxu0 0
      %457 = vmatpush2.bf16.msra.mxu0 0
      %458 = vmatprep.subr.bf16.mxu0 0
      %459 = vmatpush2.bf16.msra.mxu0 0
      %460 = vmatprep.subr.bf16.mxu0 0
      %461 = vmatpush2.bf16.msra.mxu0 0
      %462 = vmatprep.subr.bf16.mxu0 0
      %463 = vmatpush2.bf16.msra.mxu0 0
      %464 = vmatprep.subr.bf16.mxu0 0
      %465 = vmatpush2.bf16.msra.mxu0 0
      %466 = vmatprep.subr.bf16.mxu0 0
      %467 = vmatpush2.bf16.msra.mxu0 0
      %468 = vmatprep.subr.bf16.mxu0 0
      %469 = vmatpush2.bf16.msra.mxu0 0
      %470 = vmatprep.mubr.bf16.mxu0 0
      %471 = vmatmul.mubr.bf16.gmra.mxu0 %v386
      %v472 = vpop.f32.mrf.mxu0
      %v473 = vadd.f32 0.0, %v472
      %v474 = vpop.f32.mrf.mxu0
      %v475 = vpop.f32.mrf.mxu0
      %v476 = vadd.f32 0.0, %v475
      %v477 = vpop.f32.mrf.mxu0
      %478 = vmatprep.mubr.bf16.mxu0 0
      %479 = vmatmul.mubr.bf16.gmra.mxu0 %v387
      %v480 = vpop.f32.mrf.mxu0
      %v481 = vadd.f32 0.0, %v480
      %v482 = vpop.f32.mrf.mxu0
      %v483 = vpop.f32.mrf.mxu0
      %v484 = vadd.f32 0.0, %v483
      %v485 = vpop.f32.mrf.mxu0
      %486 = vdwg.mxu0
      %v487 = vld [vmem:[%s3] sm:$0x1]
      %v489 = vlaneseq
      %v490 = vshrl.u32 %v489, 7
      %v491 = vsub.s32 0, %v490
      %v492 = vrot.slane %v487, %v491
      %v494 = vmul.f32 %v473, %v492
      %v495 = vmul.f32 %v476, %v492
      %v496 = vmul.f32 %v481, %v492
      %v497 = vmul.f32 %v484, %v492
      %v498 = vld [vmem:[%s4] sm:$0x1]
      %v500 = vlaneseq
      %v501 = vshrl.u32 %v500, 7
      %v502 = vsub.s32 0, %v501
      %v503 = vrot.slane %v498, %v502
      %v505 = vadd.f32 %v494, %v503
      %v506 = vadd.f32 %v495, %v503
      %v507 = vadd.f32 %v496, %v503
      %v508 = vadd.f32 %v497, %v503
      %v509 = vld [vmem:[%s329] sm:$0xf]
      %v510 = vld [vmem:[%s329 + $0x4] sm:$0xf]
      %v511 = vld [vmem:[%s329 + $0x8] sm:$0xf]
      %v512 = vld [vmem:[%s329 + $0xc] sm:$0xf]
      %v513 = vunpack.c.l.bf16 %v509
      %v514 = vunpack.c.l.bf16 %v510
      %v515 = vunpack.c.l.bf16 %v511
      %v516 = vunpack.c.l.bf16 %v512
      %v517 = vadd.f32 %v505, %v513
      %v518 = vadd.f32 %v506, %v514
      %v519 = vadd.f32 %v507, %v515
      %v520 = vadd.f32 %v508, %v516
      %v521 = vpack.c.bf16 %v518, %v517
      %v522 = vpack.c.bf16 %v520, %v519
      %v525 = vunpack.c.l.b16 %v521
      %v526 = vunpack.c.h.b16 %v521
      %v527 = vunpack.c.l.b16 %v522
      %v528 = vunpack.c.h.b16 %v522
      %v529 = vpack.c.b16 %v525, %v525
      %v530 = vpack.c.b16 %v526, %v526
      %v531 = vpack.c.b16 %v527, %v527
      %v532 = vpack.c.b16 %v528, %v528
      %537 = vst [vmem:[%s339] sm:$0xf] %v529
      %538 = vst [vmem:[%s339 + $0x4] sm:$0xf] %v530
      %539 = vst [vmem:[%s339 + $0x8] sm:$0xf] %v531
      %540 = vst [vmem:[%s339 + $0xc] sm:$0xf] %v532
      %s541 = smul.u32 4, %s22
      %p542 = scmp.lt.s32.totalorder %s21, 1
      %s543 = scalar_select %p542, %s21, 1
      %p544 = scmp.lt.s32.totalorder %s541, 7
      %s545 = scalar_select %p544, %s541, 7
      %s546 = smul.addr %s543, 8
      %s547 = sadd.s32 %s545, %s546
      %s548 = smul.addr %s547, 4
      %s549 = scalar_lea.vmem %s6, %s548
      // Predicated region
      $region45: #{feature_extractor_forward.16} parent=43 // pred_check
        %p550 = pneg %p194
      $region46: #{feature_extractor_forward.16} parent=43 // pred_check_branch
        %552 = sbr.rel (%p550) target = $region48
      $region47: #{feature_extractor_forward.16} parent=43 // pred_region
        %s553 = smul.u32 4, %s22
      $region48: #{feature_extractor_forward.16} parent=43 // pred_fallthru
        _
    $region44: #{feature_extractor_forward.16} parent=5 // pred_fallthru
      _
    %p554 = scmp.le.s32.totalorder 2, %s12
    // Predicated region
    $region49: #{feature_extractor_forward.16} parent=5 // pred_check
      %p555 = pneg %p554
    $region50: #{feature_extractor_forward.16} parent=5 // pred_check_branch
      %557 = sbr.rel (%p555) target = $region52
    $region51: #{feature_extractor_forward.16} parent=5 // pred_region
      %s558 = ssub.s32 %s12, 2
      // Predicated region
      $region53: #{feature_extractor_forward.16} parent=51 // pred_check
        %p559 = pneg %p200
      $region54: #{feature_extractor_forward.16} parent=51 // pred_check_branch
        %561 = sbr.rel (%p559) target = $region56
      $region55: #{feature_extractor_forward.16} parent=51 // pred_region
        %s562 = smul.u32 4, %s24
        %p563 = scmp.lt.s32.totalorder %s23, 1
        %s564 = scalar_select %p563, %s23, 1
        %p565 = scmp.lt.s32.totalorder %s562, 7
        %s566 = scalar_select %p565, %s562, 7
        %s567 = smul.addr %s564, 8
        %s568 = sadd.s32 %s566, %s567
        %s569 = smul.addr %s568, 4
        %s570 = scalar_lea.vmem %s6, %s569
      $region56: #{feature_extractor_forward.16} parent=51 // pred_fallthru
        _
    $region52: #{feature_extractor_forward.16} parent=5 // pred_fallthru
      _
  $region6: #{feature_extractor_forward.16} parent=0 // loop_footer
    %s16 = sadd.s32 1, %s12
  $region7: #{feature_extractor_forward.16} parent=0 // loop_footer_branch
    %11 = sbr.rel target = $region3
  $region8: #{feature_extractor_forward.16} parent=0 // loop_exit
    _

// kernel: feature_extractor_forward.19
$region0: #{feature_extractor_forward.19}
  #allocation0 [shape = 'u32[]', space=smem, size = 0x4, offset = 0x4, fixed_abs, tag = 'smem constant byte address 0x4 - core index']
  #allocation1 [shape = 'u32[144,128]{1,0:T(1,128)}', space=vmem, size = 0x12000, scoped, tag = 'internal scratch']
  %s0 = inlined_call_operand.vmem [shape: bf16[2,64,128], index: 0, kind: input, shape index: {}]
  %s1 = inlined_call_operand.vmem [shape: bf16[2,1,128], index: 1, kind: input, shape index: {}]
  %s2 = inlined_call_operand.vmem [shape: bf16[128,128], index: 2, kind: input, shape index: {}]
  %s3 = inlined_call_operand.vmem [shape: f32[1,128], index: 3, kind: input, shape index: {}]
  %s4 = inlined_call_operand.vmem [shape: f32[1,128], index: 4, kind: input, shape index: {}]
  %s5 = inlined_call_operand.vmem [shape: bf16[2,64,128], index: 5, kind: output, shape index: {}]
  %s6 = sld [smem:[#allocation0]]
  $region53: #{feature_extractor_forward.19} parent=0
    _
  %s8 = ssub.s32 1, %s6
  %s9 = scalar_select 0, %s8, %s6
  loop: start=0, step=1, limit=6
  $region2: #{feature_extractor_forward.19} parent=0 // loop_pre_header
    _
  $region3: #{feature_extractor_forward.19} parent=0 // loop_header
    %s11 = sphi 0, %s15
    %p12 = scmp.ge.s32.totalorder %s11, 6
    %s18 = sphi 0, %s30
    %s19 = sphi 0, %s26
    %s20 = sphi 0, %s18
    %s21 = sphi 0, %s19
    %s22 = sphi 0, %s20
    %s23 = sphi 0, %s21
    %s35 = sphi 0, %s37
    %s38 = sphi 0, %s35
    %s39 = sphi 0, %s38
    %s55 = sphi 0, %s39
    %s61 = sphi 0, %s63
    %s64 = sphi 0, %s61
    %s65 = sphi 0, %s64
    %s81 = sphi 0, %s65
    %s85 = sphi 0, %s85
    %s87 = sphi 0, %s85
    %s88 = sphi 0, %s87
    %s102 = sphi 0, %s88
    %s106 = sphi 0, %s106
    %s108 = sphi 0, %s106
    %s109 = sphi 0, %s108
    %s123 = sphi 0, %s109
    %s127 = sphi 0, %s127
    %s129 = sphi 0, %s127
    %s130 = sphi 0, %s129
    %s144 = sphi 0, %s130
    %s152 = sphi 0, %s154
    %s155 = sphi 0, %s152
    %s156 = sphi 0, %s155
    %s172 = sphi 0, %s156
  $region4: #{feature_extractor_forward.19} parent=0 // loop_header_branch
    %14 = sbr.rel (%p12) target = $region8
  $region5: #{feature_extractor_forward.19} parent=0 // loop_body
    %s16 = ssub.s32 %s11, 1
    %s17 = ssub.s32 %s11, 2
    %s24 = sadd.s32 1, %s19
    %p25 = scmp.ge.s32.totalorder %s24, 2
    %s26 = scalar_select %p25, 0, %s24
    %s27 = sadd.s32 1, %s18
    %s28 = scalar_select %p25, %s27, %s18
    %p29 = scmp.ge.s32.totalorder %s28, 2
    %s30 = scalar_select %p29, 0, %s28
    %s31 = ssub.s32 %s18, %s30
    %s32 = ssub.s32 %s19, %s26
    %s33 = sor.u32 %s31, %s32
    %p34 = scmp.eq.s32.totalorder %s33, 0
    %s36 = sadd.s32 %s35, 1
    %s37 = scalar_select %p34, %s35, %s36
    %p40 = pneg %p34
    %p41 = scmp.eq.s32.totalorder %s11, 3
    %p42 = por %p40, %p41
    %p43 = scmp.ne.s32.totalorder %s35, %s38
    %p44 = scmp.eq.s32.totalorder %s11, 0
    %p45 = por %p43, %p44
    %p46 = scmp.ne.s32.totalorder %s35, %s38
    %p47 = scmp.eq.s32.totalorder %s16, 3
    %p48 = por %p46, %p47
    %p49 = scmp.ne.s32.totalorder %s38, %s39
    %p50 = scmp.eq.s32.totalorder %s16, 0
    %p51 = por %p49, %p50
    %p52 = scmp.ne.s32.totalorder %s38, %s39
    %p53 = scmp.eq.s32.totalorder %s17, 3
    %p54 = por %p52, %p53
    %p56 = scmp.ne.s32.totalorder %s39, %s55
    %p57 = scmp.eq.s32.totalorder %s17, 0
    %p58 = por %p56, %p57
    %s59 = ssub.s32 %s18, %s30
    %p60 = scmp.eq.s32.totalorder %s59, 0
    %s62 = sadd.s32 %s61, 1
    %s63 = scalar_select %p60, %s61, %s62
    %p66 = pneg %p60
    %p67 = scmp.eq.s32.totalorder %s11, 3
    %p68 = por %p66, %p67
    %p69 = scmp.ne.s32.totalorder %s61, %s64
    %p70 = scmp.eq.s32.totalorder %s11, 0
    %p71 = por %p69, %p70
    %p72 = scmp.ne.s32.totalorder %s61, %s64
    %p73 = scmp.eq.s32.totalorder %s16, 3
    %p74 = por %p72, %p73
    %p75 = scmp.ne.s32.totalorder %s64, %s65
    %p76 = scmp.eq.s32.totalorder %s16, 0
    %p77 = por %p75, %p76
    %p78 = scmp.ne.s32.totalorder %s64, %s65
    %p79 = scmp.eq.s32.totalorder %s17, 3
    %p80 = por %p78, %p79
    %p82 = scmp.ne.s32.totalorder %s65, %s81
    %p83 = scmp.eq.s32.totalorder %s17, 0
    %p84 = por %p82, %p83
    %s86 = sadd.s32 %s85, 1
    %p89 = scmp.eq.s32.totalorder %s11, 3
    %p90 = scmp.ne.s32.totalorder %s85, %s87
    %p91 = scmp.eq.s32.totalorder %s11, 0
    %p92 = por %p90, %p91
    %p93 = scmp.ne.s32.totalorder %s85, %s87
    %p94 = scmp.eq.s32.totalorder %s16, 3
    %p95 = por %p93, %p94
    %p96 = scmp.ne.s32.totalorder %s87, %s88
    %p97 = scmp.eq.s32.totalorder %s16, 0
    %p98 = por %p96, %p97
    %p99 = scmp.ne.s32.totalorder %s87, %s88
    %p100 = scmp.eq.s32.totalorder %s17, 3
    %p101 = por %p99, %p100
    %p103 = scmp.ne.s32.totalorder %s88, %s102
    %p104 = scmp.eq.s32.totalorder %s17, 0
    %p105 = por %p103, %p104
    %s107 = sadd.s32 %s106, 1
    %p110 = scmp.eq.s32.totalorder %s11, 3
    %p111 = scmp.ne.s32.totalorder %s106, %s108
    %p112 = scmp.eq.s32.totalorder %s11, 0
    %p113 = por %p111, %p112
    %p114 = scmp.ne.s32.totalorder %s106, %s108
    %p115 = scmp.eq.s32.totalorder %s16, 3
    %p116 = por %p114, %p115
    %p117 = scmp.ne.s32.totalorder %s108, %s109
    %p118 = scmp.eq.s32.totalorder %s16, 0
    %p119 = por %p117, %p118
    %p120 = scmp.ne.s32.totalorder %s108, %s109
    %p121 = scmp.eq.s32.totalorder %s17, 3
    %p122 = por %p120, %p121
    %p124 = scmp.ne.s32.totalorder %s109, %s123
    %p125 = scmp.eq.s32.totalorder %s17, 0
    %p126 = por %p124, %p125
    %s128 = sadd.s32 %s127, 1
    %p131 = scmp.eq.s32.totalorder %s11, 3
    %p132 = scmp.ne.s32.totalorder %s127, %s129
    %p133 = scmp.eq.s32.totalorder %s11, 0
    %p134 = por %p132, %p133
    %p135 = scmp.ne.s32.totalorder %s127, %s129
    %p136 = scmp.eq.s32.totalorder %s16, 3
    %p137 = por %p135, %p136
    %p138 = scmp.ne.s32.totalorder %s129, %s130
    %p139 = scmp.eq.s32.totalorder %s16, 0
    %p140 = por %p138, %p139
    %p141 = scmp.ne.s32.totalorder %s129, %s130
    %p142 = scmp.eq.s32.totalorder %s17, 3
    %p143 = por %p141, %p142
    %p145 = scmp.ne.s32.totalorder %s130, %s144
    %p146 = scmp.eq.s32.totalorder %s17, 0
    %p147 = por %p145, %p146
    %s148 = ssub.s32 %s18, %s30
    %s149 = ssub.s32 %s19, %s26
    %s150 = sor.u32 %s148, %s149
    %p151 = scmp.eq.s32.totalorder %s150, 0
    %s153 = sadd.s32 %s152, 1
    %s154 = scalar_select %p151, %s152, %s153
    %p157 = pneg %p151
    %p158 = scmp.eq.s32.totalorder %s11, 3
    %p159 = por %p157, %p158
    %p160 = scmp.ne.s32.totalorder %s152, %s155
    %p161 = scmp.eq.s32.totalorder %s11, 0
    %p162 = por %p160, %p161
    %p163 = scmp.ne.s32.totalorder %s152, %s155
    %p164 = scmp.eq.s32.totalorder %s16, 3
    %p165 = por %p163, %p164
    %p166 = scmp.ne.s32.totalorder %s155, %s156
    %p167 = scmp.eq.s32.totalorder %s16, 0
    %p168 = por %p166, %p167
    %p169 = scmp.ne.s32.totalorder %s155, %s156
    %p170 = scmp.eq.s32.totalorder %s17, 3
    %p171 = por %p169, %p170
    %p173 = scmp.ne.s32.totalorder %s156, %s172
    %p174 = scmp.eq.s32.totalorder %s17, 0
    %p175 = por %p173, %p174
    %p176 = scmp.le.s32.totalorder 1, %s11
    %p177 = scmp.lt.s32.totalorder %s11, 5
    %p178 = pnand %p176, %p177
    %p179 = pneg %p178
    // Predicated region
    $region9: #{feature_extractor_forward.19} parent=5 // pred_check
      _
    $region10: #{feature_extractor_forward.19} parent=5 // pred_check_branch
      %181 = sbr.rel (%p178) target = $region12
    $region11: #{feature_extractor_forward.19} parent=5 // pred_region
      %s182 = ssub.s32 %s11, 1
      // Predicated region
      $region13: #{feature_extractor_forward.19} parent=11 // pred_check
        %p183 = pneg %p98
      $region14: #{feature_extractor_forward.19} parent=11 // pred_check_branch
        %185 = sbr.rel (%p183) target = $region16
      $region15: #{feature_extractor_forward.19} parent=11 // pred_region
        _
      $region16: #{feature_extractor_forward.19} parent=11 // pred_fallthru
        _
      // Predicated region
      $region17: #{feature_extractor_forward.19} parent=11 // pred_check
        %p186 = pneg %p119
      $region18: #{feature_extractor_forward.19} parent=11 // pred_check_branch
        %188 = sbr.rel (%p186) target = $region20
      $region19: #{feature_extractor_forward.19} parent=11 // pred_region
        _
      $region20: #{feature_extractor_forward.19} parent=11 // pred_fallthru
        _
      // Predicated region
      $region21: #{feature_extractor_forward.19} parent=11 // pred_check
        %p189 = pneg %p140
      $region22: #{feature_extractor_forward.19} parent=11 // pred_check_branch
        %191 = sbr.rel (%p189) target = $region24
      $region23: #{feature_extractor_forward.19} parent=11 // pred_region
        _
      $region24: #{feature_extractor_forward.19} parent=11 // pred_fallthru
        _
    $region12: #{feature_extractor_forward.19} parent=5 // pred_fallthru
      _
    %p192 = scmp.lt.s32.totalorder %s11, 4
    // Predicated region
    $region25: #{feature_extractor_forward.19} parent=5 // pred_check
      %p193 = pneg %p192
    $region26: #{feature_extractor_forward.19} parent=5 // pred_check_branch
      %195 = sbr.rel (%p193) target = $region28
    $region27: #{feature_extractor_forward.19} parent=5 // pred_region
      // Predicated region
      $region29: #{feature_extractor_forward.19} parent=27 // pred_check
        %p196 = pneg %p45
      $region30: #{feature_extractor_forward.19} parent=27 // pred_check_branch
        %198 = sbr.rel (%p196) target = $region32
      $region31: #{feature_extractor_forward.19} parent=27 // pred_region
        %s199 = smul.u32 4, %s19
        %p200 = scmp.lt.s32.totalorder %s18, 1
        %s201 = scalar_select %p200, %s18, 1
        %p202 = scmp.lt.s32.totalorder %s199, 7
        %s203 = scalar_select %p202, %s199, 7
        %s204 = smul.addr %s201, 8
        %s205 = sadd.s32 %s203, %s204
        %s206 = smul.addr %s205, 4
        %s207 = scalar_lea.vmem %s0, %s206
        %s208 = smul.u32 4, %s19
      $region32: #{feature_extractor_forward.19} parent=27 // pred_fallthru
        _
      // Predicated region
      $region33: #{feature_extractor_forward.19} parent=27 // pred_check
        %p209 = pneg %p71
      $region34: #{feature_extractor_forward.19} parent=27 // pred_check_branch
        %211 = sbr.rel (%p209) target = $region36
      $region35: #{feature_extractor_forward.19} parent=27 // pred_region
        %p212 = scmp.lt.s32.totalorder %s18, 1
        %s213 = scalar_select %p212, %s18, 1
        %s214 = scalar_lea.vmem %s1, %s213
      $region36: #{feature_extractor_forward.19} parent=27 // pred_fallthru
        _
    $region28: #{feature_extractor_forward.19} parent=5 // pred_fallthru
      _
    %p215 = scmp.le.s32.totalorder 1, %s11
    %p216 = scmp.lt.s32.totalorder %s11, 5
    %p217 = pnand %p215, %p216
    %p218 = pneg %p217
    // Predicated region
    $region37: #{feature_extractor_forward.19} parent=5 // pred_check
      _
    $region38: #{feature_extractor_forward.19} parent=5 // pred_check_branch
      %220 = sbr.rel (%p217) target = $region40
    $region39: #{feature_extractor_forward.19} parent=5 // pred_region
      %s221 = ssub.s32 %s11, 1
      %s222 = smul.u32 4, %s21
      %p223 = scmp.lt.s32.totalorder %s20, 1
      %s224 = scalar_select %p223, %s20, 1
      %p225 = scmp.lt.s32.totalorder %s222, 7
      %s226 = scalar_select %p225, %s222, 7
      %s227 = smul.addr %s224, 8
      %s228 = sadd.s32 %s226, %s227
      %s229 = smul.addr %s228, 4
      %s230 = scalar_lea.vmem %s0, %s229
      %p231 = pneg %p51
      %p232 = pneg %p48
      %p233 = scmp.lt.s32.totalorder %s20, 1
      %s234 = scalar_select %p233, %s20, 1
      %s235 = scalar_lea.vmem %s1, %s234
      %p236 = pneg %p77
      %p237 = pneg %p74
      %p238 = pneg %p98
      %p239 = pneg %p95
      %p240 = pneg %p119
      %p241 = pneg %p116
      %p242 = pneg %p140
      %p243 = pneg %p137
      %p244 = pneg %p168
      %p245 = pneg %p165
      %s246 = smul.u32 4, %s21
      %p247 = scmp.lt.s32.totalorder %s20, 1
      %s248 = scalar_select %p247, %s20, 1
      %p249 = scmp.lt.s32.totalorder %s246, 7
      %s250 = scalar_select %p249, %s246, 7
      %s251 = smul.addr %s248, 8
      %s252 = sadd.s32 %s250, %s251
      %s253 = smul.addr %s252, 4
      %s254 = scalar_lea.vmem %s5, %s253
      %s255 = smul.u32 4, %s21
      %p256 = scmp.lt.s32.totalorder %s20, 1
      %s257 = scalar_select %p256, %s20, 1
      %p258 = scmp.lt.s32.totalorder %s255, 7
      %s259 = scalar_select %p258, %s255, 7
      %s260 = smul.addr %s257, 8
      %s261 = sadd.s32 %s259, %s260
      %s262 = smul.addr %s261, 4
      %s263 = scalar_lea.vmem %s0, %s262
      %s264 = smul.u32 4, %s21
      %p265 = scmp.lt.s32.totalorder %s20, 1
      %s266 = scalar_select %p265, %s20, 1
      %s267 = scalar_lea.vmem %s1, %s266
      %s268 = smul.u32 4, %s21
      %p269 = scmp.lt.s32.totalorder %s20, 1
      %s270 = scalar_select %p269, %s20, 1
      %p271 = scmp.lt.s32.totalorder %s268, 7
      %s272 = scalar_select %p271, %s268, 7
      %s273 = smul.addr %s270, 8
      %s274 = sadd.s32 %s272, %s273
      %s275 = smul.addr %s274, 4
      %s276 = scalar_lea.vmem %s5, %s275
      %s277 = smul.u32 4, %s21
      %v279 = vld [vmem:[%s263] sm:$0xf]
      %v280 = vld [vmem:[%s263 + $0x4] sm:$0xf]
      %v281 = vld [vmem:[%s263 + $0x8] sm:$0xf]
      %v282 = vld [vmem:[%s263 + $0xc] sm:$0xf]
      %v283 = vld [vmem:[%s267] sm:$0x1]
      %v285 = vpack.i.b16 %v283, %v283
      %v287 = vlaneseq
      %v288 = vshrl.u32 %v287, 7
      %v289 = vsub.s32 0, %v288
      %v290 = vrot.slane %v285, %v289
      %v292 = vunpack.c.l.b16 %v290
      %v293 = vpack.c.b16 %v292, %v292
      %v295 = vmul.bf16 %v279, %v293
      %v296 = vmul.bf16 %v280, %v293
      %v297 = vmul.bf16 %v281, %v293
      %v298 = vmul.bf16 %v282, %v293
      %v299 = vld [vmem:[%s2] sm:$0xf]
      %v300 = vld [vmem:[%s2 + $0x4] sm:$0xf]
      %v301 = vld [vmem:[%s2 + $0x8] sm:$0xf]
      %v302 = vld [vmem:[%s2 + $0xc] sm:$0xf]
      %v303 = vld [vmem:[%s2 + $0x10] sm:$0xf]
      %v304 = vld [vmem:[%s2 + $0x14] sm:$0xf]
      %v305 = vld [vmem:[%s2 + $0x18] sm:$0xf]
      %v306 = vld [vmem:[%s2 + $0x1c] sm:$0xf]
      %v307 = vld [vmem:[%s2 + $0x20] sm:$0xf]
      %v308 = vld [vmem:[%s2 + $0x24] sm:$0xf]
      %v309 = vld [vmem:[%s2 + $0x28] sm:$0xf]
      %v310 = vld [vmem:[%s2 + $0x2c] sm:$0xf]
      %v311 = vld [vmem:[%s2 + $0x30] sm:$0xf]
      %v312 = vld [vmem:[%s2 + $0x34] sm:$0xf]
      %v313 = vld [vmem:[%s2 + $0x38] sm:$0xf]
      %v314 = vld [vmem:[%s2 + $0x3c] sm:$0xf]
      %v319 = vunpack.c.l.b16 %v295
      %v320 = vunpack.c.l.b16 %v296
      %v321 = vunpack.c.l.b16 %v297
      %v322 = vunpack.c.l.b16 %v298
      %v323 = vpack.c.b16 %v320, %v319
      %v324 = vpack.c.b16 %v322, %v321
      %v343 = vunpack.c.l.b16 %v299
      %v344 = vunpack.c.l.b16 %v300
      %v345 = vunpack.c.l.b16 %v301
      %v346 = vunpack.c.l.b16 %v302
      %v347 = vunpack.c.l.b16 %v303
      %v348 = vunpack.c.l.b16 %v304
      %v349 = vunpack.c.l.b16 %v305
      %v350 = vunpack.c.l.b16 %v306
      %v351 = vunpack.c.l.b16 %v307
      %v352 = vunpack.c.l.b16 %v308
      %v353 = vunpack.c.l.b16 %v309
      %v354 = vunpack.c.l.b16 %v310
      %v355 = vunpack.c.l.b16 %v311
      %v356 = vunpack.c.l.b16 %v312
      %v357 = vunpack.c.l.b16 %v313
      %v358 = vunpack.c.l.b16 %v314
      %v359 = vpack.c.b16 %v344, %v343
      %v360 = vpack.c.b16 %v346, %v345
      %v361 = vpack.c.b16 %v348, %v347
      %v362 = vpack.c.b16 %v350, %v349
      %v363 = vpack.c.b16 %v352, %v351
      %v364 = vpack.c.b16 %v354, %v353
      %v365 = vpack.c.b16 %v356, %v355
      %v366 = vpack.c.b16 %v358, %v357
      %375 = vmatprep.subr.bf16.mxu0 0
      %376 = vmatpush1.bf16.msra.mxu0 %v366
      %377 = vmatprep.subr.bf16.mxu0 0
      %378 = vmatpush1.bf16.msra.mxu0 %v365
      %379 = vmatprep.subr.bf16.mxu0 0
      %380 = vmatpush1.bf16.msra.mxu0 %v364
      %381 = vmatprep.subr.bf16.mxu0 0
      %382 = vmatpush1.bf16.msra.mxu0 %v363
      %383 = vmatprep.subr.bf16.mxu0 0
      %384 = vmatpush1.bf16.msra.mxu0 %v362
      %385 = vmatprep.subr.bf16.mxu0 0
      %386 = vmatpush1.bf16.msra.mxu0 %v361
      %387 = vmatprep.subr.bf16.mxu0 0
      %388 = vmatpush1.bf16.msra.mxu0 %v360
      %389 = vmatprep.subr.bf16.mxu0 0
      %390 = vmatpush1.bf16.msra.mxu0 %v359
      %391 = vmatprep.subr.bf16.mxu0 0
      %392 = vmatpush2.bf16.msra.mxu0 0
      %393 = vmatprep.subr.bf16.mxu0 0
      %394 = vmatpush2.bf16.msra.mxu0 0
      %395 = vmatprep.subr.bf16.mxu0 0
      %396 = vmatpush2.bf16.msra.mxu0 0
      %397 = vmatprep.subr.bf16.mxu0 0
      %398 = vmatpush2.bf16.msra.mxu0 0
      %399 = vmatprep.subr.bf16.mxu0 0
      %400 = vmatpush2.bf16.msra.mxu0 0
      %401 = vmatprep.subr.bf16.mxu0 0
      %402 = vmatpush2.bf16.msra.mxu0 0
      %403 = vmatprep.subr.bf16.mxu0 0
      %404 = vmatpush2.bf16.msra.mxu0 0
      %405 = vmatprep.subr.bf16.mxu0 0
      %406 = vmatpush2.bf16.msra.mxu0 0
      %407 = vmatprep.mubr.bf16.mxu0 0
      %408 = vmatmul.mubr.bf16.gmra.mxu0 %v323
      %v409 = vpop.f32.mrf.mxu0
      %v410 = vadd.f32 0.0, %v409
      %v411 = vpop.f32.mrf.mxu0
      %v412 = vpop.f32.mrf.mxu0
      %v413 = vadd.f32 0.0, %v412
      %v414 = vpop.f32.mrf.mxu0
      %415 = vmatprep.mubr.bf16.mxu0 0
      %416 = vmatmul.mubr.bf16.gmra.mxu0 %v324
      %v417 = vpop.f32.mrf.mxu0
      %v418 = vadd.f32 0.0, %v417
      %v419 = vpop.f32.mrf.mxu0
      %v420 = vpop.f32.mrf.mxu0
      %v421 = vadd.f32 0.0, %v420
      %v422 = vpop.f32.mrf.mxu0
      %423 = vdwg.mxu0
      %v424 = vld [vmem:[%s3] sm:$0x1]
      %v426 = vlaneseq
      %v427 = vshrl.u32 %v426, 7
      %v428 = vsub.s32 0, %v427
      %v429 = vrot.slane %v424, %v428
      %v431 = vmul.f32 %v410, %v429
      %v432 = vmul.f32 %v413, %v429
      %v433 = vmul.f32 %v418, %v429
      %v434 = vmul.f32 %v421, %v429
      %v435 = vld [vmem:[%s4] sm:$0x1]
      %v437 = vlaneseq
      %v438 = vshrl.u32 %v437, 7
      %v439 = vsub.s32 0, %v438
      %v440 = vrot.slane %v435, %v439
      %v442 = vadd.f32 %v431, %v440
      %v443 = vadd.f32 %v432, %v440
      %v444 = vadd.f32 %v433, %v440
      %v445 = vadd.f32 %v434, %v440
      %v446 = vpack.c.bf16 %v443, %v442
      %v447 = vpack.c.bf16 %v445, %v444
      %v450 = vunpack.c.l.b16 %v446
      %v451 = vunpack.c.h.b16 %v446
      %v452 = vunpack.c.l.b16 %v447
      %v453 = vunpack.c.h.b16 %v447
      %v454 = vpack.c.b16 %v450, %v450
      %v455 = vpack.c.b16 %v451, %v451
      %v456 = vpack.c.b16 %v452, %v452
      %v457 = vpack.c.b16 %v453, %v453
      %462 = vst [vmem:[%s276] sm:$0xf] %v454
      %463 = vst [vmem:[%s276 + $0x4] sm:$0xf] %v455
      %464 = vst [vmem:[%s276 + $0x8] sm:$0xf] %v456
      %465 = vst [vmem:[%s276 + $0xc] sm:$0xf] %v457
      %s466 = smul.u32 4, %s21
      %p467 = scmp.lt.s32.totalorder %s20, 1
      %s468 = scalar_select %p467, %s20, 1
      %p469 = scmp.lt.s32.totalorder %s466, 7
      %s470 = scalar_select %p469, %s466, 7
      %s471 = smul.addr %s468, 8
      %s472 = sadd.s32 %s470, %s471
      %s473 = smul.addr %s472, 4
      %s474 = scalar_lea.vmem %s5, %s473
      // Predicated region
      $region41: #{feature_extractor_forward.19} parent=39 // pred_check
        %p475 = pneg %p165
      $region42: #{feature_extractor_forward.19} parent=39 // pred_check_branch
        %477 = sbr.rel (%p475) target = $region44
      $region43: #{feature_extractor_forward.19} parent=39 // pred_region
        %s478 = smul.u32 4, %s21
      $region44: #{feature_extractor_forward.19} parent=39 // pred_fallthru
        _
    $region40: #{feature_extractor_forward.19} parent=5 // pred_fallthru
      _
    %p479 = scmp.le.s32.totalorder 2, %s11
    // Predicated region
    $region45: #{feature_extractor_forward.19} parent=5 // pred_check
      %p480 = pneg %p479
    $region46: #{feature_extractor_forward.19} parent=5 // pred_check_branch
      %482 = sbr.rel (%p480) target = $region48
    $region47: #{feature_extractor_forward.19} parent=5 // pred_region
      %s483 = ssub.s32 %s11, 2
      // Predicated region
      $region49: #{feature_extractor_forward.19} parent=47 // pred_check
        %p484 = pneg %p171
      $region50: #{feature_extractor_forward.19} parent=47 // pred_check_branch
        %486 = sbr.rel (%p484) target = $region52
      $region51: #{feature_extractor_forward.19} parent=47 // pred_region
        %s487 = smul.u32 4, %s23
        %p488 = scmp.lt.s32.totalorder %s22, 1
        %s489 = scalar_select %p488, %s22, 1
        %p490 = scmp.lt.s32.totalorder %s487, 7
        %s491 = scalar_select %p490, %s487, 7
        %s492 = smul.addr %s489, 8
        %s493 = sadd.s32 %s491, %s492
        %s494 = smul.addr %s493, 4
        %s495 = scalar_lea.vmem %s5, %s494
      $region52: #{feature_extractor_forward.19} parent=47 // pred_fallthru
        _
    $region48: #{feature_extractor_forward.19} parent=5 // pred_fallthru
      _
  $region6: #{feature_extractor_forward.19} parent=0 // loop_footer
    %s15 = sadd.s32 1, %s11
  $region7: #{feature_extractor_forward.19} parent=0 // loop_footer_branch
    %10 = sbr.rel target = $region3
  $region8: #{feature_extractor_forward.19} parent=0 // loop_exit
    _

// kernel: feature_extractor_forward.20
$region0: #{feature_extractor_forward.20}
  #allocation0 [shape = 'u32[]', space=smem, size = 0x4, offset = 0x4, fixed_abs, tag = 'smem constant byte address 0x4 - core index']
  #allocation1 [shape = 'u32[144,128]{1,0:T(1,128)}', space=vmem, size = 0x12000, scoped, tag = 'internal scratch']
  %s0 = inlined_call_operand.vmem [shape: bf16[128,128], index: 0, kind: input, shape index: {}]
  %s1 = inlined_call_operand.vmem [shape: bf16[128,256], index: 1, kind: input, shape index: {}]
  %s2 = inlined_call_operand.vmem [shape: f32[1,256], index: 2, kind: input, shape index: {}]
  %s3 = inlined_call_operand.vmem [shape: f32[1,256], index: 3, kind: input, shape index: {}]
  %s4 = inlined_call_operand.vmem [shape: bf16[128,256], index: 4, kind: output, shape index: {}]
  %s5 = sld [smem:[#allocation0]]
  $region49: #{feature_extractor_forward.20} parent=0
    _
  %s7 = ssub.s32 1, %s5
  %s8 = scalar_select 0, %s7, %s5
  loop: start=0, step=1, limit=4
  $region2: #{feature_extractor_forward.20} parent=0 // loop_pre_header
    _
  $region3: #{feature_extractor_forward.20} parent=0 // loop_header
    %s10 = sphi 0, %s14
    %p11 = scmp.ge.s32.totalorder %s10, 4
    %s20 = sphi 0, %s22
    %s23 = sphi 0, %s20
    %s24 = sphi 0, %s23
    %s40 = sphi 0, %s24
    %s44 = sphi 0, %s44
    %s46 = sphi 0, %s44
    %s47 = sphi 0, %s46
    %s61 = sphi 0, %s47
    %s65 = sphi 0, %s65
    %s67 = sphi 0, %s65
    %s68 = sphi 0, %s67
    %s82 = sphi 0, %s68
    %s86 = sphi 0, %s86
    %s88 = sphi 0, %s86
    %s89 = sphi 0, %s88
    %s103 = sphi 0, %s89
    %s109 = sphi 0, %s111
    %s112 = sphi 0, %s109
    %s113 = sphi 0, %s112
    %s129 = sphi 0, %s113
  $region4: #{feature_extractor_forward.20} parent=0 // loop_header_branch
    %13 = sbr.rel (%p11) target = $region8
  $region5: #{feature_extractor_forward.20} parent=0 // loop_body
    %s15 = ssub.s32 %s10, 1
    %s16 = ssub.s32 %s10, 2
    %s17 = sadd.s32 %s10, 1
    %s18 = ssub.s32 %s10, %s17
    %p19 = scmp.eq.s32.totalorder %s18, 0
    %s21 = sadd.s32 %s20, 1
    %s22 = scalar_select %p19, %s20, %s21
    %p25 = pneg %p19
    %p26 = scmp.eq.s32.totalorder %s10, 1
    %p27 = por %p25, %p26
    %p28 = scmp.ne.s32.totalorder %s20, %s23
    %p29 = scmp.eq.s32.totalorder %s10, 0
    %p30 = por %p28, %p29
    %p31 = scmp.ne.s32.totalorder %s20, %s23
    %p32 = scmp.eq.s32.totalorder %s15, 1
    %p33 = por %p31, %p32
    %p34 = scmp.ne.s32.totalorder %s23, %s24
    %p35 = scmp.eq.s32.totalorder %s15, 0
    %p36 = por %p34, %p35
    %p37 = scmp.ne.s32.totalorder %s23, %s24
    %p38 = scmp.eq.s32.totalorder %s16, 1
    %p39 = por %p37, %p38
    %p41 = scmp.ne.s32.totalorder %s24, %s40
    %p42 = scmp.eq.s32.totalorder %s16, 0
    %p43 = por %p41, %p42
    %s45 = sadd.s32 %s44, 1
    %p48 = scmp.eq.s32.totalorder %s10, 1
    %p49 = scmp.ne.s32.totalorder %s44, %s46
    %p50 = scmp.eq.s32.totalorder %s10, 0
    %p51 = por %p49, %p50
    %p52 = scmp.ne.s32.totalorder %s44, %s46
    %p53 = scmp.eq.s32.totalorder %s15, 1
    %p54 = por %p52, %p53
    %p55 = scmp.ne.s32.totalorder %s46, %s47
    %p56 = scmp.eq.s32.totalorder %s15, 0
    %p57 = por %p55, %p56
    %p58 = scmp.ne.s32.totalorder %s46, %s47
    %p59 = scmp.eq.s32.totalorder %s16, 1
    %p60 = por %p58, %p59
    %p62 = scmp.ne.s32.totalorder %s47, %s61
    %p63 = scmp.eq.s32.totalorder %s16, 0
    %p64 = por %p62, %p63
    %s66 = sadd.s32 %s65, 1
    %p69 = scmp.eq.s32.totalorder %s10, 1
    %p70 = scmp.ne.s32.totalorder %s65, %s67
    %p71 = scmp.eq.s32.totalorder %s10, 0
    %p72 = por %p70, %p71
    %p73 = scmp.ne.s32.totalorder %s65, %s67
    %p74 = scmp.eq.s32.totalorder %s15, 1
    %p75 = por %p73, %p74
    %p76 = scmp.ne.s32.totalorder %s67, %s68
    %p77 = scmp.eq.s32.totalorder %s15, 0
    %p78 = por %p76, %p77
    %p79 = scmp.ne.s32.totalorder %s67, %s68
    %p80 = scmp.eq.s32.totalorder %s16, 1
    %p81 = por %p79, %p80
    %p83 = scmp.ne.s32.totalorder %s68, %s82
    %p84 = scmp.eq.s32.totalorder %s16, 0
    %p85 = por %p83, %p84
    %s87 = sadd.s32 %s86, 1
    %p90 = scmp.eq.s32.totalorder %s10, 1
    %p91 = scmp.ne.s32.totalorder %s86, %s88
    %p92 = scmp.eq.s32.totalorder %s10, 0
    %p93 = por %p91, %p92
    %p94 = scmp.ne.s32.totalorder %s86, %s88
    %p95 = scmp.eq.s32.totalorder %s15, 1
    %p96 = por %p94, %p95
    %p97 = scmp.ne.s32.totalorder %s88, %s89
    %p98 = scmp.eq.s32.totalorder %s15, 0
    %p99 = por %p97, %p98
    %p100 = scmp.ne.s32.totalorder %s88, %s89
    %p101 = scmp.eq.s32.totalorder %s16, 1
    %p102 = por %p100, %p101
    %p104 = scmp.ne.s32.totalorder %s89, %s103
    %p105 = scmp.eq.s32.totalorder %s16, 0
    %p106 = por %p104, %p105
    %s107 = ssub.s32 %s10, %s17
    %p108 = scmp.eq.s32.totalorder %s107, 0
    %s110 = sadd.s32 %s109, 1
    %s111 = scalar_select %p108, %s109, %s110
    %p114 = pneg %p108
    %p115 = scmp.eq.s32.totalorder %s10, 1
    %p116 = por %p114, %p115
    %p117 = scmp.ne.s32.totalorder %s109, %s112
    %p118 = scmp.eq.s32.totalorder %s10, 0
    %p119 = por %p117, %p118
    %p120 = scmp.ne.s32.totalorder %s109, %s112
    %p121 = scmp.eq.s32.totalorder %s15, 1
    %p122 = por %p120, %p121
    %p123 = scmp.ne.s32.totalorder %s112, %s113
    %p124 = scmp.eq.s32.totalorder %s15, 0
    %p125 = por %p123, %p124
    %p126 = scmp.ne.s32.totalorder %s112, %s113
    %p127 = scmp.eq.s32.totalorder %s16, 1
    %p128 = por %p126, %p127
    %p130 = scmp.ne.s32.totalorder %s113, %s129
    %p131 = scmp.eq.s32.totalorder %s16, 0
    %p132 = por %p130, %p131
    %p133 = scmp.le.s32.totalorder 1, %s10
    %p134 = scmp.lt.s32.totalorder %s10, 3
    %p135 = pnand %p133, %p134
    %p136 = pneg %p135
    // Predicated region
    $region9: #{feature_extractor_forward.20} parent=5 // pred_check
      _
    $region10: #{feature_extractor_forward.20} parent=5 // pred_check_branch
      %138 = sbr.rel (%p135) target = $region12
    $region11: #{feature_extractor_forward.20} parent=5 // pred_region
      %s139 = ssub.s32 %s10, 1
      // Predicated region
      $region13: #{feature_extractor_forward.20} parent=11 // pred_check
        %p140 = pneg %p57
      $region14: #{feature_extractor_forward.20} parent=11 // pred_check_branch
        %142 = sbr.rel (%p140) target = $region16
      $region15: #{feature_extractor_forward.20} parent=11 // pred_region
        _
      $region16: #{feature_extractor_forward.20} parent=11 // pred_fallthru
        _
      // Predicated region
      $region17: #{feature_extractor_forward.20} parent=11 // pred_check
        %p143 = pneg %p78
      $region18: #{feature_extractor_forward.20} parent=11 // pred_check_branch
        %145 = sbr.rel (%p143) target = $region20
      $region19: #{feature_extractor_forward.20} parent=11 // pred_region
        _
      $region20: #{feature_extractor_forward.20} parent=11 // pred_fallthru
        _
      // Predicated region
      $region21: #{feature_extractor_forward.20} parent=11 // pred_check
        %p146 = pneg %p99
      $region22: #{feature_extractor_forward.20} parent=11 // pred_check_branch
        %148 = sbr.rel (%p146) target = $region24
      $region23: #{feature_extractor_forward.20} parent=11 // pred_region
        _
      $region24: #{feature_extractor_forward.20} parent=11 // pred_fallthru
        _
    $region12: #{feature_extractor_forward.20} parent=5 // pred_fallthru
      _
    %p149 = scmp.lt.s32.totalorder %s10, 2
    // Predicated region
    $region25: #{feature_extractor_forward.20} parent=5 // pred_check
      %p150 = pneg %p149
    $region26: #{feature_extractor_forward.20} parent=5 // pred_check_branch
      %152 = sbr.rel (%p150) target = $region28
    $region27: #{feature_extractor_forward.20} parent=5 // pred_region
      // Predicated region
      $region29: #{feature_extractor_forward.20} parent=27 // pred_check
        %p153 = pneg %p30
      $region30: #{feature_extractor_forward.20} parent=27 // pred_check_branch
        %155 = sbr.rel (%p153) target = $region32
      $region31: #{feature_extractor_forward.20} parent=27 // pred_region
        %s156 = smul.u32 8, %s10
        %p157 = scmp.lt.s32.totalorder %s156, 15
        %s158 = scalar_select %p157, %s156, 15
        %s159 = smul.addr %s158, 4
        %s160 = scalar_lea.vmem %s0, %s159
        %s161 = smul.u32 8, %s10
      $region32: #{feature_extractor_forward.20} parent=27 // pred_fallthru
        _
    $region28: #{feature_extractor_forward.20} parent=5 // pred_fallthru
      _
    %p162 = scmp.le.s32.totalorder 1, %s10
    %p163 = scmp.lt.s32.totalorder %s10, 3
    %p164 = pnand %p162, %p163
    %p165 = pneg %p164
    // Predicated region
    $region33: #{feature_extractor_forward.20} parent=5 // pred_check
      _
    $region34: #{feature_extractor_forward.20} parent=5 // pred_check_branch
      %167 = sbr.rel (%p164) target = $region36
    $region35: #{feature_extractor_forward.20} parent=5 // pred_region
      %s168 = ssub.s32 %s10, 1
      %s169 = smul.u32 8, %s15
      %p170 = scmp.lt.s32.totalorder %s169, 15
      %s171 = scalar_select %p170, %s169, 15
      %s172 = smul.addr %s171, 4
      %s173 = scalar_lea.vmem %s0, %s172
      %p174 = pneg %p36
      %p175 = pneg %p33
      %p176 = pneg %p57
      %p177 = pneg %p54
      %p178 = pneg %p78
      %p179 = pneg %p75
      %p180 = pneg %p99
      %p181 = pneg %p96
      %p182 = pneg %p125
      %p183 = pneg %p122
      %s184 = smul.u32 8, %s15
      %p185 = scmp.lt.s32.totalorder %s184, 15
      %s186 = scalar_select %p185, %s184, 15
      %s187 = smul.addr %s186, 2
      %s188 = smul.addr %s187, 4
      %s189 = scalar_lea.vmem %s4, %s188
      %s190 = smul.u32 8, %s15
      %p191 = scmp.lt.s32.totalorder %s190, 15
      %s192 = scalar_select %p191, %s190, 15
      %s193 = smul.addr %s192, 4
      %s194 = scalar_lea.vmem %s0, %s193
      %s195 = smul.u32 8, %s15
      %s196 = smul.u32 8, %s15
      %p197 = scmp.lt.s32.totalorder %s196, 15
      %s198 = scalar_select %p197, %s196, 15
      %s199 = smul.addr %s198, 2
      %s200 = smul.addr %s199, 4
      %s201 = scalar_lea.vmem %s4, %s200
      %s202 = smul.u32 8, %s15
      %v204 = vld [vmem:[%s194] sm:$0xf]
      %v205 = vld [vmem:[%s194 + $0x4] sm:$0xf]
      %v206 = vld [vmem:[%s194 + $0x8] sm:$0xf]
      %v207 = vld [vmem:[%s194 + $0xc] sm:$0xf]
      %v208 = vld [vmem:[%s194 + $0x10] sm:$0xf]
      %v209 = vld [vmem:[%s194 + $0x14] sm:$0xf]
      %v210 = vld [vmem:[%s194 + $0x18] sm:$0xf]
      %v211 = vld [vmem:[%s194 + $0x1c] sm:$0xf]
      %v212 = vld [vmem:[%s1] sm:$0xff]
      %v213 = vld [vmem:[%s1 + $0x8] sm:$0xff]
      %v214 = vld [vmem:[%s1 + $0x10] sm:$0xff]
      %v215 = vld [vmem:[%s1 + $0x18] sm:$0xff]
      %v216 = vld [vmem:[%s1 + $0x20] sm:$0xff]
      %v217 = vld [vmem:[%s1 + $0x28] sm:$0xff]
      %v218 = vld [vmem:[%s1 + $0x30] sm:$0xff]
      %v219 = vld [vmem:[%s1 + $0x38] sm:$0xff]
      %v220 = vld [vmem:[%s1 + $0x40] sm:$0xff]
      %v221 = vld [vmem:[%s1 + $0x48] sm:$0xff]
      %v222 = vld [vmem:[%s1 + $0x50] sm:$0xff]
      %v223 = vld [vmem:[%s1 + $0x58] sm:$0xff]
      %v224 = vld [vmem:[%s1 + $0x60] sm:$0xff]
      %v225 = vld [vmem:[%s1 + $0x68] sm:$0xff]
      %v226 = vld [vmem:[%s1 + $0x70] sm:$0xff]
      %v227 = vld [vmem:[%s1 + $0x78] sm:$0xff]
      %v236 = vunpack.c.l.b16 %v204
      %v237 = vunpack.c.l.b16 %v205
      %v238 = vunpack.c.l.b16 %v206
      %v239 = vunpack.c.l.b16 %v207
      %v240 = vunpack.c.l.b16 %v208
      %v241 = vunpack.c.l.b16 %v209
      %v242 = vunpack.c.l.b16 %v210
      %v243 = vunpack.c.l.b16 %v211
      %v244 = vpack.c.b16 %v237, %v236
      %v245 = vpack.c.b16 %v239, %v238
      %v246 = vpack.c.b16 %v241, %v240
      %v247 = vpack.c.b16 %v243, %v242
      %v268 = vunpack.c.l.b16 %v212
      %v269 = vunpack.c.h.b16 %v212
      %v270 = vunpack.c.l.b16 %v213
      %v271 = vunpack.c.h.b16 %v213
      %v272 = vunpack.c.l.b16 %v214
      %v273 = vunpack.c.h.b16 %v214
      %v274 = vunpack.c.l.b16 %v215
      %v275 = vunpack.c.h.b16 %v215
      %v276 = vunpack.c.l.b16 %v216
      %v277 = vunpack.c.h.b16 %v216
      %v278 = vunpack.c.l.b16 %v217
      %v279 = vunpack.c.h.b16 %v217
      %v280 = vunpack.c.l.b16 %v218
      %v281 = vunpack.c.h.b16 %v218
      %v282 = vunpack.c.l.b16 %v219
      %v283 = vunpack.c.h.b16 %v219
      %v284 = vunpack.c.l.b16 %v220
      %v285 = vunpack.c.h.b16 %v220
      %v286 = vunpack.c.l.b16 %v221
      %v287 = vunpack.c.h.b16 %v221
      %v288 = vunpack.c.l.b16 %v222
      %v289 = vunpack.c.h.b16 %v222
      %v290 = vunpack.c.l.b16 %v223
      %v291 = vunpack.c.h.b16 %v223
      %v292 = vunpack.c.l.b16 %v224
      %v293 = vunpack.c.h.b16 %v224
      %v294 = vunpack.c.l.b16 %v225
      %v295 = vunpack.c.h.b16 %v225
      %v296 = vunpack.c.l.b16 %v226
      %v297 = vunpack.c.h.b16 %v226
      %v298 = vunpack.c.l.b16 %v227
      %v299 = vunpack.c.h.b16 %v227
      %v300 = vpack.c.b16 %v270, %v268
      %v301 = vpack.c.b16 %v271, %v269
      %v302 = vpack.c.b16 %v274, %v272
      %v303 = vpack.c.b16 %v275, %v273
      %v304 = vpack.c.b16 %v278, %v276
      %v305 = vpack.c.b16 %v279, %v277
      %v306 = vpack.c.b16 %v282, %v280
      %v307 = vpack.c.b16 %v283, %v281
      %v308 = vpack.c.b16 %v286, %v284
      %v309 = vpack.c.b16 %v287, %v285
      %v310 = vpack.c.b16 %v290, %v288
      %v311 = vpack.c.b16 %v291, %v289
      %v312 = vpack.c.b16 %v294, %v292
      %v313 = vpack.c.b16 %v295, %v293
      %v314 = vpack.c.b16 %v298, %v296
      %v315 = vpack.c.b16 %v299, %v297
      %332 = vmatprep.subr.bf16.mxu0 %v315
      %333 = vmatpush1.bf16.msra.mxu0 %v314
      %334 = vmatprep.subr.bf16.mxu0 %v313
      %335 = vmatpush1.bf16.msra.mxu0 %v312
      %336 = vmatprep.subr.bf16.mxu0 %v311
      %337 = vmatpush1.bf16.msra.mxu0 %v310
      %338 = vmatprep.subr.bf16.mxu0 %v309
      %339 = vmatpush1.bf16.msra.mxu0 %v308
      %340 = vmatprep.subr.bf16.mxu0 %v307
      %341 = vmatpush1.bf16.msra.mxu0 %v306
      %342 = vmatprep.subr.bf16.mxu0 %v305
      %343 = vmatpush1.bf16.msra.mxu0 %v304
      %344 = vmatprep.subr.bf16.mxu0 %v303
      %345 = vmatpush1.bf16.msra.mxu0 %v302
      %346 = vmatprep.subr.bf16.mxu0 %v301
      %347 = vmatpush1.bf16.msra.mxu0 %v300
      %348 = vmatprep.subr.bf16.mxu0 0
      %349 = vmatpush2.bf16.msra.mxu0 0
      %350 = vmatprep.subr.bf16.mxu0 0
      %351 = vmatpush2.bf16.msra.mxu0 0
      %352 = vmatprep.subr.bf16.mxu0 0
      %353 = vmatpush2.bf16.msra.mxu0 0
      %354 = vmatprep.subr.bf16.mxu0 0
      %355 = vmatpush2.bf16.msra.mxu0 0
      %356 = vmatprep.subr.bf16.mxu0 0
      %357 = vmatpush2.bf16.msra.mxu0 0
      %358 = vmatprep.subr.bf16.mxu0 0
      %359 = vmatpush2.bf16.msra.mxu0 0
      %360 = vmatprep.subr.bf16.mxu0 0
      %361 = vmatpush2.bf16.msra.mxu0 0
      %362 = vmatprep.subr.bf16.mxu0 0
      %363 = vmatpush2.bf16.msra.mxu0 0
      %364 = vmatprep.mubr.bf16.mxu0 0
      %365 = vmatmul.mubr.bf16.gmra.mxu0 %v244
      %v366 = vpop.f32.mrf.mxu0
      %v367 = vadd.f32 0.0, %v366
      %v368 = vpop.f32.mrf.mxu0
      %v369 = vadd.f32 0.0, %v368
      %v370 = vpop.f32.mrf.mxu0
      %v371 = vadd.f32 0.0, %v370
      %v372 = vpop.f32.mrf.mxu0
      %v373 = vadd.f32 0.0, %v372
      %374 = vmatprep.mubr.bf16.mxu0 0
      %375 = vmatmul.mubr.bf16.gmra.mxu0 %v245
      %v376 = vpop.f32.mrf.mxu0
      %v377 = vadd.f32 0.0, %v376
      %v378 = vpop.f32.mrf.mxu0
      %v379 = vadd.f32 0.0, %v378
      %v380 = vpop.f32.mrf.mxu0
      %v381 = vadd.f32 0.0, %v380
      %v382 = vpop.f32.mrf.mxu0
      %v383 = vadd.f32 0.0, %v382
      %384 = vmatprep.mubr.bf16.mxu0 0
      %385 = vmatmul.mubr.bf16.gmra.mxu0 %v246
      %v386 = vpop.f32.mrf.mxu0
      %v387 = vadd.f32 0.0, %v386
      %v388 = vpop.f32.mrf.mxu0
      %v389 = vadd.f32 0.0, %v388
      %v390 = vpop.f32.mrf.mxu0
      %v391 = vadd.f32 0.0, %v390
      %v392 = vpop.f32.mrf.mxu0
      %v393 = vadd.f32 0.0, %v392
      %394 = vmatprep.mubr.bf16.mxu0 0
      %395 = vmatmul.mubr.bf16.gmra.mxu0 %v247
      %v396 = vpop.f32.mrf.mxu0
      %v397 = vadd.f32 0.0, %v396
      %v398 = vpop.f32.mrf.mxu0
      %v399 = vadd.f32 0.0, %v398
      %v400 = vpop.f32.mrf.mxu0
      %v401 = vadd.f32 0.0, %v400
      %v402 = vpop.f32.mrf.mxu0
      %v403 = vadd.f32 0.0, %v402
      %404 = vdwg.mxu0
      %v405 = vld [vmem:[%s2] sm:$0x3]
      %v407 = vlaneseq
      %v408 = vshrl.u32 %v407, 7
      %v409 = vsub.s32 0, %v408
      %v410 = vrot.slane %v405, %v409
      %v411 = vlaneseq
      %v412 = vshrl.u32 %v411, 7
      %v413 = vsub.s32 1, %v412
      %v414 = vrot.slane %v405, %v413
      %v417 = vmul.f32 %v367, %v410
      %v418 = vmul.f32 %v369, %v414
      %v419 = vmul.f32 %v371, %v410
      %v420 = vmul.f32 %v373, %v414
      %v421 = vmul.f32 %v377, %v410
      %v422 = vmul.f32 %v379, %v414
      %v423 = vmul.f32 %v381, %v410
      %v424 = vmul.f32 %v383, %v414
      %v425 = vmul.f32 %v387, %v410
      %v426 = vmul.f32 %v389, %v414
      %v427 = vmul.f32 %v391, %v410
      %v428 = vmul.f32 %v393, %v414
      %v429 = vmul.f32 %v397, %v410
      %v430 = vmul.f32 %v399, %v414
      %v431 = vmul.f32 %v401, %v410
      %v432 = vmul.f32 %v403, %v414
      %v433 = vld [vmem:[%s3] sm:$0x3]
      %v435 = vlaneseq
      %v436 = vshrl.u32 %v435, 7
      %v437 = vsub.s32 0, %v436
      %v438 = vrot.slane %v433, %v437
      %v439 = vlaneseq
      %v440 = vshrl.u32 %v439, 7
      %v441 = vsub.s32 1, %v440
      %v442 = vrot.slane %v433, %v441
      %v445 = vadd.f32 %v417, %v438
      %v446 = vadd.f32 %v418, %v442
      %v447 = vadd.f32 %v419, %v438
      %v448 = vadd.f32 %v420, %v442
      %v449 = vadd.f32 %v421, %v438
      %v450 = vadd.f32 %v422, %v442
      %v451 = vadd.f32 %v423, %v438
      %v452 = vadd.f32 %v424, %v442
      %v453 = vadd.f32 %v425, %v438
      %v454 = vadd.f32 %v426, %v442
      %v455 = vadd.f32 %v427, %v438
      %v456 = vadd.f32 %v428, %v442
      %v457 = vadd.f32 %v429, %v438
      %v458 = vadd.f32 %v430, %v442
      %v459 = vadd.f32 %v431, %v438
      %v460 = vadd.f32 %v432, %v442
      %v461 = vxor.u32 %v445, 2147483648
      %v462 = vxor.u32 %v446, 2147483648
      %v463 = vxor.u32 %v447, 2147483648
      %v464 = vxor.u32 %v448, 2147483648
      %v465 = vxor.u32 %v449, 2147483648
      %v466 = vxor.u32 %v450, 2147483648
      %v467 = vxor.u32 %v451, 2147483648
      %v468 = vxor.u32 %v452, 2147483648
      %v469 = vxor.u32 %v453, 2147483648
      %v470 = vxor.u32 %v454, 2147483648
      %v471 = vxor.u32 %v455, 2147483648
      %v472 = vxor.u32 %v456, 2147483648
      %v473 = vxor.u32 %v457, 2147483648
      %v474 = vxor.u32 %v458, 2147483648
      %v475 = vxor.u32 %v459, 2147483648
      %v476 = vxor.u32 %v460, 2147483648
      %v477 = vmul.f32 %v461, 1.442695
      %v478 = vpow.pop %v477
      %v479 = vmul.f32 %v462, 1.442695
      %v480 = vpow.pop %v479
      %v481 = vmul.f32 %v463, 1.442695
      %v482 = vpow.pop %v481
      %v483 = vmul.f32 %v464, 1.442695
      %v484 = vpow.pop %v483
      %v485 = vmul.f32 %v465, 1.442695
      %v486 = vpow.pop %v485
      %v487 = vmul.f32 %v466, 1.442695
      %v488 = vpow.pop %v487
      %v489 = vmul.f32 %v467, 1.442695
      %v490 = vpow.pop %v489
      %v491 = vmul.f32 %v468, 1.442695
      %v492 = vpow.pop %v491
      %v493 = vmul.f32 %v469, 1.442695
      %v494 = vpow.pop %v493
      %v495 = vmul.f32 %v470, 1.442695
      %v496 = vpow.pop %v495
      %v497 = vmul.f32 %v471, 1.442695
      %v498 = vpow.pop %v497
      %v499 = vmul.f32 %v472, 1.442695
      %v500 = vpow.pop %v499
      %v501 = vmul.f32 %v473, 1.442695
      %v502 = vpow.pop %v501
      %v503 = vmul.f32 %v474, 1.442695
      %v504 = vpow.pop %v503
      %v505 = vmul.f32 %v475, 1.442695
      %v506 = vpow.pop %v505
      %v507 = vmul.f32 %v476, 1.442695
      %v508 = vpow.pop %v507
      %v509 = vadd.f32 %v478, 1.0
      %v510 = vadd.f32 %v480, 1.0
      %v511 = vadd.f32 %v482, 1.0
      %v512 = vadd.f32 %v484, 1.0
      %v513 = vadd.f32 %v486, 1.0
      %v514 = vadd.f32 %v488, 1.0
      %v515 = vadd.f32 %v490, 1.0
      %v516 = vadd.f32 %v492, 1.0
      %v517 = vadd.f32 %v494, 1.0
      %v518 = vadd.f32 %v496, 1.0
      %v519 = vadd.f32 %v498, 1.0
      %v520 = vadd.f32 %v500, 1.0
      %v521 = vadd.f32 %v502, 1.0
      %v522 = vadd.f32 %v504, 1.0
      %v523 = vadd.f32 %v506, 1.0
      %v524 = vadd.f32 %v508, 1.0
      %v525 = vrcp.pop %v509
      %v526 = vmul.f32 1.0, %v525
      %v527 = vrcp.pop %v510
      %v528 = vmul.f32 1.0, %v527
      %v529 = vrcp.pop %v511
      %v530 = vmul.f32 1.0, %v529
      %v531 = vrcp.pop %v512
      %v532 = vmul.f32 1.0, %v531
      %v533 = vrcp.pop %v513
      %v534 = vmul.f32 1.0, %v533
      %v535 = vrcp.pop %v514
      %v536 = vmul.f32 1.0, %v535
      %v537 = vrcp.pop %v515
      %v538 = vmul.f32 1.0, %v537
      %v539 = vrcp.pop %v516
      %v540 = vmul.f32 1.0, %v539
      %v541 = vrcp.pop %v517
      %v542 = vmul.f32 1.0, %v541
      %v543 = vrcp.pop %v518
      %v544 = vmul.f32 1.0, %v543
      %v545 = vrcp.pop %v519
      %v546 = vmul.f32 1.0, %v545
      %v547 = vrcp.pop %v520
      %v548 = vmul.f32 1.0, %v547
      %v549 = vrcp.pop %v521
      %v550 = vmul.f32 1.0, %v549
      %v551 = vrcp.pop %v522
      %v552 = vmul.f32 1.0, %v551
      %v553 = vrcp.pop %v523
      %v554 = vmul.f32 1.0, %v553
      %v555 = vrcp.pop %v524
      %v556 = vmul.f32 1.0, %v555
      %v557 = vmul.f32 %v445, %v526
      %v558 = vmul.f32 %v446, %v528
      %v559 = vmul.f32 %v447, %v530
      %v560 = vmul.f32 %v448, %v532
      %v561 = vmul.f32 %v449, %v534
      %v562 = vmul.f32 %v450, %v536
      %v563 = vmul.f32 %v451, %v538
      %v564 = vmul.f32 %v452, %v540
      %v565 = vmul.f32 %v453, %v542
      %v566 = vmul.f32 %v454, %v544
      %v567 = vmul.f32 %v455, %v546
      %v568 = vmul.f32 %v456, %v548
      %v569 = vmul.f32 %v457, %v550
      %v570 = vmul.f32 %v458, %v552
      %v571 = vmul.f32 %v459, %v554
      %v572 = vmul.f32 %v460, %v556
      %v573 = vpack.c.bf16 %v559, %v557
      %v574 = vpack.c.bf16 %v560, %v558
      %v575 = vpack.c.bf16 %v563, %v561
      %v576 = vpack.c.bf16 %v564, %v562
      %v577 = vpack.c.bf16 %v567, %v565
      %v578 = vpack.c.bf16 %v568, %v566
      %v579 = vpack.c.bf16 %v571, %v569
      %v580 = vpack.c.bf16 %v572, %v570
      %v589 = vunpack.c.l.b16 %v573
      %v590 = vunpack.c.l.b16 %v574
      %v591 = vunpack.c.h.b16 %v573
      %v592 = vunpack.c.h.b16 %v574
      %v593 = vunpack.c.l.b16 %v575
      %v594 = vunpack.c.l.b16 %v576
      %v595 = vunpack.c.h.b16 %v575
      %v596 = vunpack.c.h.b16 %v576
      %v597 = vunpack.c.l.b16 %v577
      %v598 = vunpack.c.l.b16 %v578
      %v599 = vunpack.c.h.b16 %v577
      %v600 = vunpack.c.h.b16 %v578
      %v601 = vunpack.c.l.b16 %v579
      %v602 = vunpack.c.l.b16 %v580
      %v603 = vunpack.c.h.b16 %v579
      %v604 = vunpack.c.h.b16 %v580
      %v605 = vpack.c.b16 %v590, %v589
      %v606 = vpack.c.b16 %v592, %v591
      %v607 = vpack.c.b16 %v594, %v593
      %v608 = vpack.c.b16 %v596, %v595
      %v609 = vpack.c.b16 %v598, %v597
      %v610 = vpack.c.b16 %v600, %v599
      %v611 = vpack.c.b16 %v602, %v601
      %v612 = vpack.c.b16 %v604, %v603
      %621 = vst [vmem:[%s201] sm:$0xff] %v605
      %622 = vst [vmem:[%s201 + $0x8] sm:$0xff] %v606
      %623 = vst [vmem:[%s201 + $0x10] sm:$0xff] %v607
      %624 = vst [vmem:[%s201 + $0x18] sm:$0xff] %v608
      %625 = vst [vmem:[%s201 + $0x20] sm:$0xff] %v609
      %626 = vst [vmem:[%s201 + $0x28] sm:$0xff] %v610
      %627 = vst [vmem:[%s201 + $0x30] sm:$0xff] %v611
      %628 = vst [vmem:[%s201 + $0x38] sm:$0xff] %v612
      %s629 = smul.u32 8, %s15
      %p630 = scmp.lt.s32.totalorder %s629, 15
      %s631 = scalar_select %p630, %s629, 15
      %s632 = smul.addr %s631, 2
      %s633 = smul.addr %s632, 4
      %s634 = scalar_lea.vmem %s4, %s633
      // Predicated region
      $region37: #{feature_extractor_forward.20} parent=35 // pred_check
        %p635 = pneg %p122
      $region38: #{feature_extractor_forward.20} parent=35 // pred_check_branch
        %637 = sbr.rel (%p635) target = $region40
      $region39: #{feature_extractor_forward.20} parent=35 // pred_region
        %s638 = smul.u32 8, %s15
      $region40: #{feature_extractor_forward.20} parent=35 // pred_fallthru
        _
    $region36: #{feature_extractor_forward.20} parent=5 // pred_fallthru
      _
    %p639 = scmp.le.s32.totalorder 2, %s10
    // Predicated region
    $region41: #{feature_extractor_forward.20} parent=5 // pred_check
      %p640 = pneg %p639
    $region42: #{feature_extractor_forward.20} parent=5 // pred_check_branch
      %642 = sbr.rel (%p640) target = $region44
    $region43: #{feature_extractor_forward.20} parent=5 // pred_region
      %s643 = ssub.s32 %s10, 2
      // Predicated region
      $region45: #{feature_extractor_forward.20} parent=43 // pred_check
        %p644 = pneg %p128
      $region46: #{feature_extractor_forward.20} parent=43 // pred_check_branch
        %646 = sbr.rel (%p644) target = $region48
      $region47: #{feature_extractor_forward.20} parent=43 // pred_region
        %s647 = smul.u32 8, %s16
        %p648 = scmp.lt.s32.totalorder %s647, 15
        %s649 = scalar_select %p648, %s647, 15
        %s650 = smul.addr %s649, 2
        %s651 = smul.addr %s650, 4
        %s652 = scalar_lea.vmem %s4, %s651
      $region48: #{feature_extractor_forward.20} parent=43 // pred_fallthru
        _
    $region44: #{feature_extractor_forward.20} parent=5 // pred_fallthru
      _
  $region6: #{feature_extractor_forward.20} parent=0 // loop_footer
    %s14 = sadd.s32 1, %s10
  $region7: #{feature_extractor_forward.20} parent=0 // loop_footer_branch
    %9 = sbr.rel target = $region3
  $region8: #{feature_extractor_forward.20} parent=0 // loop_exit
    _

// kernel: feature_extractor_forward.22
$region0: #{feature_extractor_forward.22}
  #allocation0 [shape = 'u32[]', space=smem, size = 0x4, offset = 0x4, fixed_abs, tag = 'smem constant byte address 0x4 - core index']
  #allocation1 [shape = 'u32[144,128]{1,0:T(1,128)}', space=vmem, size = 0x12000, scoped, tag = 'internal scratch']
  %s0 = inlined_call_operand.vmem [shape: bf16[2,64,256], index: 0, kind: input, shape index: {}]
  %s1 = inlined_call_operand.vmem [shape: bf16[2,1,256], index: 1, kind: input, shape index: {}]
  %s2 = inlined_call_operand.vmem [shape: bf16[256,128], index: 2, kind: input, shape index: {}]
  %s3 = inlined_call_operand.vmem [shape: f32[1,128], index: 3, kind: input, shape index: {}]
  %s4 = inlined_call_operand.vmem [shape: f32[1,128], index: 4, kind: input, shape index: {}]
  %s5 = inlined_call_operand.vmem [shape: bf16[2,64,128], index: 5, kind: input, shape index: {}]
  %s6 = inlined_call_operand.vmem [shape: bf16[2,64,128], index: 6, kind: output, shape index: {}]
  %s7 = sld [smem:[#allocation0]]
  $region57: #{feature_extractor_forward.22} parent=0
    _
  %s9 = ssub.s32 1, %s7
  %s10 = scalar_select 0, %s9, %s7
  loop: start=0, step=1, limit=6
  $region2: #{feature_extractor_forward.22} parent=0 // loop_pre_header
    _
  $region3: #{feature_extractor_forward.22} parent=0 // loop_header
    %s12 = sphi 0, %s16
    %p13 = scmp.ge.s32.totalorder %s12, 6
    %s19 = sphi 0, %s31
    %s20 = sphi 0, %s27
    %s21 = sphi 0, %s19
    %s22 = sphi 0, %s20
    %s23 = sphi 0, %s21
    %s24 = sphi 0, %s22
    %s36 = sphi 0, %s38
    %s39 = sphi 0, %s36
    %s40 = sphi 0, %s39
    %s56 = sphi 0, %s40
    %s62 = sphi 0, %s64
    %s65 = sphi 0, %s62
    %s66 = sphi 0, %s65
    %s82 = sphi 0, %s66
    %s86 = sphi 0, %s86
    %s88 = sphi 0, %s86
    %s89 = sphi 0, %s88
    %s103 = sphi 0, %s89
    %s107 = sphi 0, %s107
    %s109 = sphi 0, %s107
    %s110 = sphi 0, %s109
    %s124 = sphi 0, %s110
    %s128 = sphi 0, %s128
    %s130 = sphi 0, %s128
    %s131 = sphi 0, %s130
    %s145 = sphi 0, %s131
    %s153 = sphi 0, %s155
    %s156 = sphi 0, %s153
    %s157 = sphi 0, %s156
    %s173 = sphi 0, %s157
    %s181 = sphi 0, %s183
    %s184 = sphi 0, %s181
    %s185 = sphi 0, %s184
    %s201 = sphi 0, %s185
  $region4: #{feature_extractor_forward.22} parent=0 // loop_header_branch
    %15 = sbr.rel (%p13) target = $region8
  $region5: #{feature_extractor_forward.22} parent=0 // loop_body
    %s17 = ssub.s32 %s12, 1
    %s18 = ssub.s32 %s12, 2
    %s25 = sadd.s32 1, %s20
    %p26 = scmp.ge.s32.totalorder %s25, 2
    %s27 = scalar_select %p26, 0, %s25
    %s28 = sadd.s32 1, %s19
    %s29 = scalar_select %p26, %s28, %s19
    %p30 = scmp.ge.s32.totalorder %s29, 2
    %s31 = scalar_select %p30, 0, %s29
    %s32 = ssub.s32 %s19, %s31
    %s33 = ssub.s32 %s20, %s27
    %s34 = sor.u32 %s32, %s33
    %p35 = scmp.eq.s32.totalorder %s34, 0
    %s37 = sadd.s32 %s36, 1
    %s38 = scalar_select %p35, %s36, %s37
    %p41 = pneg %p35
    %p42 = scmp.eq.s32.totalorder %s12, 3
    %p43 = por %p41, %p42
    %p44 = scmp.ne.s32.totalorder %s36, %s39
    %p45 = scmp.eq.s32.totalorder %s12, 0
    %p46 = por %p44, %p45
    %p47 = scmp.ne.s32.totalorder %s36, %s39
    %p48 = scmp.eq.s32.totalorder %s17, 3
    %p49 = por %p47, %p48
    %p50 = scmp.ne.s32.totalorder %s39, %s40
    %p51 = scmp.eq.s32.totalorder %s17, 0
    %p52 = por %p50, %p51
    %p53 = scmp.ne.s32.totalorder %s39, %s40
    %p54 = scmp.eq.s32.totalorder %s18, 3
    %p55 = por %p53, %p54
    %p57 = scmp.ne.s32.totalorder %s40, %s56
    %p58 = scmp.eq.s32.totalorder %s18, 0
    %p59 = por %p57, %p58
    %s60 = ssub.s32 %s19, %s31
    %p61 = scmp.eq.s32.totalorder %s60, 0
    %s63 = sadd.s32 %s62, 1
    %s64 = scalar_select %p61, %s62, %s63
    %p67 = pneg %p61
    %p68 = scmp.eq.s32.totalorder %s12, 3
    %p69 = por %p67, %p68
    %p70 = scmp.ne.s32.totalorder %s62, %s65
    %p71 = scmp.eq.s32.totalorder %s12, 0
    %p72 = por %p70, %p71
    %p73 = scmp.ne.s32.totalorder %s62, %s65
    %p74 = scmp.eq.s32.totalorder %s17, 3
    %p75 = por %p73, %p74
    %p76 = scmp.ne.s32.totalorder %s65, %s66
    %p77 = scmp.eq.s32.totalorder %s17, 0
    %p78 = por %p76, %p77
    %p79 = scmp.ne.s32.totalorder %s65, %s66
    %p80 = scmp.eq.s32.totalorder %s18, 3
    %p81 = por %p79, %p80
    %p83 = scmp.ne.s32.totalorder %s66, %s82
    %p84 = scmp.eq.s32.totalorder %s18, 0
    %p85 = por %p83, %p84
    %s87 = sadd.s32 %s86, 1
    %p90 = scmp.eq.s32.totalorder %s12, 3
    %p91 = scmp.ne.s32.totalorder %s86, %s88
    %p92 = scmp.eq.s32.totalorder %s12, 0
    %p93 = por %p91, %p92
    %p94 = scmp.ne.s32.totalorder %s86, %s88
    %p95 = scmp.eq.s32.totalorder %s17, 3
    %p96 = por %p94, %p95
    %p97 = scmp.ne.s32.totalorder %s88, %s89
    %p98 = scmp.eq.s32.totalorder %s17, 0
    %p99 = por %p97, %p98
    %p100 = scmp.ne.s32.totalorder %s88, %s89
    %p101 = scmp.eq.s32.totalorder %s18, 3
    %p102 = por %p100, %p101
    %p104 = scmp.ne.s32.totalorder %s89, %s103
    %p105 = scmp.eq.s32.totalorder %s18, 0
    %p106 = por %p104, %p105
    %s108 = sadd.s32 %s107, 1
    %p111 = scmp.eq.s32.totalorder %s12, 3
    %p112 = scmp.ne.s32.totalorder %s107, %s109
    %p113 = scmp.eq.s32.totalorder %s12, 0
    %p114 = por %p112, %p113
    %p115 = scmp.ne.s32.totalorder %s107, %s109
    %p116 = scmp.eq.s32.totalorder %s17, 3
    %p117 = por %p115, %p116
    %p118 = scmp.ne.s32.totalorder %s109, %s110
    %p119 = scmp.eq.s32.totalorder %s17, 0
    %p120 = por %p118, %p119
    %p121 = scmp.ne.s32.totalorder %s109, %s110
    %p122 = scmp.eq.s32.totalorder %s18, 3
    %p123 = por %p121, %p122
    %p125 = scmp.ne.s32.totalorder %s110, %s124
    %p126 = scmp.eq.s32.totalorder %s18, 0
    %p127 = por %p125, %p126
    %s129 = sadd.s32 %s128, 1
    %p132 = scmp.eq.s32.totalorder %s12, 3
    %p133 = scmp.ne.s32.totalorder %s128, %s130
    %p134 = scmp.eq.s32.totalorder %s12, 0
    %p135 = por %p133, %p134
    %p136 = scmp.ne.s32.totalorder %s128, %s130
    %p137 = scmp.eq.s32.totalorder %s17, 3
    %p138 = por %p136, %p137
    %p139 = scmp.ne.s32.totalorder %s130, %s131
    %p140 = scmp.eq.s32.totalorder %s17, 0
    %p141 = por %p139, %p140
    %p142 = scmp.ne.s32.totalorder %s130, %s131
    %p143 = scmp.eq.s32.totalorder %s18, 3
    %p144 = por %p142, %p143
    %p146 = scmp.ne.s32.totalorder %s131, %s145
    %p147 = scmp.eq.s32.totalorder %s18, 0
    %p148 = por %p146, %p147
    %s149 = ssub.s32 %s19, %s31
    %s150 = ssub.s32 %s20, %s27
    %s151 = sor.u32 %s149, %s150
    %p152 = scmp.eq.s32.totalorder %s151, 0
    %s154 = sadd.s32 %s153, 1
    %s155 = scalar_select %p152, %s153, %s154
    %p158 = pneg %p152
    %p159 = scmp.eq.s32.totalorder %s12, 3
    %p160 = por %p158, %p159
    %p161 = scmp.ne.s32.totalorder %s153, %s156
    %p162 = scmp.eq.s32.totalorder %s12, 0
    %p163 = por %p161, %p162
    %p164 = scmp.ne.s32.totalorder %s153, %s156
    %p165 = scmp.eq.s32.totalorder %s17, 3
    %p166 = por %p164, %p165
    %p167 = scmp.ne.s32.totalorder %s156, %s157
    %p168 = scmp.eq.s32.totalorder %s17, 0
    %p169 = por %p167, %p168
    %p170 = scmp.ne.s32.totalorder %s156, %s157
    %p171 = scmp.eq.s32.totalorder %s18, 3
    %p172 = por %p170, %p171
    %p174 = scmp.ne.s32.totalorder %s157, %s173
    %p175 = scmp.eq.s32.totalorder %s18, 0
    %p176 = por %p174, %p175
    %s177 = ssub.s32 %s19, %s31
    %s178 = ssub.s32 %s20, %s27
    %s179 = sor.u32 %s177, %s178
    %p180 = scmp.eq.s32.totalorder %s179, 0
    %s182 = sadd.s32 %s181, 1
    %s183 = scalar_select %p180, %s181, %s182
    %p186 = pneg %p180
    %p187 = scmp.eq.s32.totalorder %s12, 3
    %p188 = por %p186, %p187
    %p189 = scmp.ne.s32.totalorder %s181, %s184
    %p190 = scmp.eq.s32.totalorder %s12, 0
    %p191 = por %p189, %p190
    %p192 = scmp.ne.s32.totalorder %s181, %s184
    %p193 = scmp.eq.s32.totalorder %s17, 3
    %p194 = por %p192, %p193
    %p195 = scmp.ne.s32.totalorder %s184, %s185
    %p196 = scmp.eq.s32.totalorder %s17, 0
    %p197 = por %p195, %p196
    %p198 = scmp.ne.s32.totalorder %s184, %s185
    %p199 = scmp.eq.s32.totalorder %s18, 3
    %p200 = por %p198, %p199
    %p202 = scmp.ne.s32.totalorder %s185, %s201
    %p203 = scmp.eq.s32.totalorder %s18, 0
    %p204 = por %p202, %p203
    %p205 = scmp.le.s32.totalorder 1, %s12
    %p206 = scmp.lt.s32.totalorder %s12, 5
    %p207 = pnand %p205, %p206
    %p208 = pneg %p207
    // Predicated region
    $region9: #{feature_extractor_forward.22} parent=5 // pred_check
      _
    $region10: #{feature_extractor_forward.22} parent=5 // pred_check_branch
      %210 = sbr.rel (%p207) target = $region12
    $region11: #{feature_extractor_forward.22} parent=5 // pred_region
      %s211 = ssub.s32 %s12, 1
      // Predicated region
      $region13: #{feature_extractor_forward.22} parent=11 // pred_check
        %p212 = pneg %p99
      $region14: #{feature_extractor_forward.22} parent=11 // pred_check_branch
        %214 = sbr.rel (%p212) target = $region16
      $region15: #{feature_extractor_forward.22} parent=11 // pred_region
        _
      $region16: #{feature_extractor_forward.22} parent=11 // pred_fallthru
        _
      // Predicated region
      $region17: #{feature_extractor_forward.22} parent=11 // pred_check
        %p215 = pneg %p120
      $region18: #{feature_extractor_forward.22} parent=11 // pred_check_branch
        %217 = sbr.rel (%p215) target = $region20
      $region19: #{feature_extractor_forward.22} parent=11 // pred_region
        _
      $region20: #{feature_extractor_forward.22} parent=11 // pred_fallthru
        _
      // Predicated region
      $region21: #{feature_extractor_forward.22} parent=11 // pred_check
        %p218 = pneg %p141
      $region22: #{feature_extractor_forward.22} parent=11 // pred_check_branch
        %220 = sbr.rel (%p218) target = $region24
      $region23: #{feature_extractor_forward.22} parent=11 // pred_region
        _
      $region24: #{feature_extractor_forward.22} parent=11 // pred_fallthru
        _
    $region12: #{feature_extractor_forward.22} parent=5 // pred_fallthru
      _
    %p221 = scmp.lt.s32.totalorder %s12, 4
    // Predicated region
    $region25: #{feature_extractor_forward.22} parent=5 // pred_check
      %p222 = pneg %p221
    $region26: #{feature_extractor_forward.22} parent=5 // pred_check_branch
      %224 = sbr.rel (%p222) target = $region28
    $region27: #{feature_extractor_forward.22} parent=5 // pred_region
      // Predicated region
      $region29: #{feature_extractor_forward.22} parent=27 // pred_check
        %p225 = pneg %p46
      $region30: #{feature_extractor_forward.22} parent=27 // pred_check_branch
        %227 = sbr.rel (%p225) target = $region32
      $region31: #{feature_extractor_forward.22} parent=27 // pred_region
        %s228 = smul.u32 4, %s20
        %p229 = scmp.lt.s32.totalorder %s19, 1
        %s230 = scalar_select %p229, %s19, 1
        %p231 = scmp.lt.s32.totalorder %s228, 7
        %s232 = scalar_select %p231, %s228, 7
        %s233 = smul.addr %s232, 2
        %s234 = smul.addr %s230, 16
        %s235 = sadd.s32 %s233, %s234
        %s236 = smul.addr %s235, 4
        %s237 = scalar_lea.vmem %s0, %s236
        %s238 = smul.u32 4, %s20
      $region32: #{feature_extractor_forward.22} parent=27 // pred_fallthru
        _
      // Predicated region
      $region33: #{feature_extractor_forward.22} parent=27 // pred_check
        %p239 = pneg %p72
      $region34: #{feature_extractor_forward.22} parent=27 // pred_check_branch
        %241 = sbr.rel (%p239) target = $region36
      $region35: #{feature_extractor_forward.22} parent=27 // pred_region
        %p242 = scmp.lt.s32.totalorder %s19, 1
        %s243 = scalar_select %p242, %s19, 1
        %s244 = smul.addr %s243, 2
        %s245 = scalar_lea.vmem %s1, %s244
      $region36: #{feature_extractor_forward.22} parent=27 // pred_fallthru
        _
      // Predicated region
      $region37: #{feature_extractor_forward.22} parent=27 // pred_check
        %p246 = pneg %p163
      $region38: #{feature_extractor_forward.22} parent=27 // pred_check_branch
        %248 = sbr.rel (%p246) target = $region40
      $region39: #{feature_extractor_forward.22} parent=27 // pred_region
        %s249 = smul.u32 4, %s20
        %p250 = scmp.lt.s32.totalorder %s19, 1
        %s251 = scalar_select %p250, %s19, 1
        %p252 = scmp.lt.s32.totalorder %s249, 7
        %s253 = scalar_select %p252, %s249, 7
        %s254 = smul.addr %s251, 8
        %s255 = sadd.s32 %s253, %s254
        %s256 = smul.addr %s255, 4
        %s257 = scalar_lea.vmem %s5, %s256
        %s258 = smul.u32 4, %s20
      $region40: #{feature_extractor_forward.22} parent=27 // pred_fallthru
        _
    $region28: #{feature_extractor_forward.22} parent=5 // pred_fallthru
      _
    %p259 = scmp.le.s32.totalorder 1, %s12
    %p260 = scmp.lt.s32.totalorder %s12, 5
    %p261 = pnand %p259, %p260
    %p262 = pneg %p261
    // Predicated region
    $region41: #{feature_extractor_forward.22} parent=5 // pred_check
      _
    $region42: #{feature_extractor_forward.22} parent=5 // pred_check_branch
      %264 = sbr.rel (%p261) target = $region44
    $region43: #{feature_extractor_forward.22} parent=5 // pred_region
      %s265 = ssub.s32 %s12, 1
      %s266 = smul.u32 4, %s22
      %p267 = scmp.lt.s32.totalorder %s21, 1
      %s268 = scalar_select %p267, %s21, 1
      %p269 = scmp.lt.s32.totalorder %s266, 7
      %s270 = scalar_select %p269, %s266, 7
      %s271 = smul.addr %s270, 2
      %s272 = smul.addr %s268, 16
      %s273 = sadd.s32 %s271, %s272
      %s274 = smul.addr %s273, 4
      %s275 = scalar_lea.vmem %s0, %s274
      %p276 = pneg %p52
      %p277 = pneg %p49
      %p278 = scmp.lt.s32.totalorder %s21, 1
      %s279 = scalar_select %p278, %s21, 1
      %s280 = smul.addr %s279, 2
      %s281 = scalar_lea.vmem %s1, %s280
      %p282 = pneg %p78
      %p283 = pneg %p75
      %p284 = pneg %p99
      %p285 = pneg %p96
      %p286 = pneg %p120
      %p287 = pneg %p117
      %p288 = pneg %p141
      %p289 = pneg %p138
      %s290 = smul.u32 4, %s22
      %p291 = scmp.lt.s32.totalorder %s21, 1
      %s292 = scalar_select %p291, %s21, 1
      %p293 = scmp.lt.s32.totalorder %s290, 7
      %s294 = scalar_select %p293, %s290, 7
      %s295 = smul.addr %s292, 8
      %s296 = sadd.s32 %s294, %s295
      %s297 = smul.addr %s296, 4
      %s298 = scalar_lea.vmem %s5, %s297
      %p299 = pneg %p169
      %p300 = pneg %p166
      %p301 = pneg %p197
      %p302 = pneg %p194
      %s303 = smul.u32 4, %s22
      %p304 = scmp.lt.s32.totalorder %s21, 1
      %s305 = scalar_select %p304, %s21, 1
      %p306 = scmp.lt.s32.totalorder %s303, 7
      %s307 = scalar_select %p306, %s303, 7
      %s308 = smul.addr %s305, 8
      %s309 = sadd.s32 %s307, %s308
      %s310 = smul.addr %s309, 4
      %s311 = scalar_lea.vmem %s6, %s310
      %s312 = smul.u32 4, %s22
      %p313 = scmp.lt.s32.totalorder %s21, 1
      %s314 = scalar_select %p313, %s21, 1
      %p315 = scmp.lt.s32.totalorder %s312, 7
      %s316 = scalar_select %p315, %s312, 7
      %s317 = smul.addr %s316, 2
      %s318 = smul.addr %s314, 16
      %s319 = sadd.s32 %s317, %s318
      %s320 = smul.addr %s319, 4
      %s321 = scalar_lea.vmem %s0, %s320
      %s322 = smul.u32 4, %s22
      %p323 = scmp.lt.s32.totalorder %s21, 1
      %s324 = scalar_select %p323, %s21, 1
      %s325 = smul.addr %s324, 2
      %s326 = scalar_lea.vmem %s1, %s325
      %s327 = smul.u32 4, %s22
      %p328 = scmp.lt.s32.totalorder %s21, 1
      %s329 = scalar_select %p328, %s21, 1
      %p330 = scmp.lt.s32.totalorder %s327, 7
      %s331 = scalar_select %p330, %s327, 7
      %s332 = smul.addr %s329, 8
      %s333 = sadd.s32 %s331, %s332
      %s334 = smul.addr %s333, 4
      %s335 = scalar_lea.vmem %s5, %s334
      %s336 = smul.u32 4, %s22
      %s337 = smul.u32 4, %s22
      %p338 = scmp.lt.s32.totalorder %s21, 1
      %s339 = scalar_select %p338, %s21, 1
      %p340 = scmp.lt.s32.totalorder %s337, 7
      %s341 = scalar_select %p340, %s337, 7
      %s342 = smul.addr %s339, 8
      %s343 = sadd.s32 %s341, %s342
      %s344 = smul.addr %s343, 4
      %s345 = scalar_lea.vmem %s6, %s344
      %s346 = smul.u32 4, %s22
      %v348 = vld [vmem:[%s321] sm:$0xff]
      %v349 = vld [vmem:[%s321 + $0x8] sm:$0xff]
      %v350 = vld [vmem:[%s321 + $0x10] sm:$0xff]
      %v351 = vld [vmem:[%s321 + $0x18] sm:$0xff]
      %v352 = vld [vmem:[%s326] sm:$0x3]
      %v355 = vunpack.c.l.s4 1966171168
      %v356 = vunpack.c.0.s8 %v355
      %v357 = vlaneseq
      %v358 = vshrl.u32 %v357, 7
      %v359 = vsub.s32 %v356, %v358
      %v360 = vrot.slane %v352, %v359
      %v361 = vcombine.high %v360, %v360
      %v363 = vunpack.c.l.s4 1966171168
      %v364 = vunpack.c.0.s8 %v363
      %v365 = vlaneseq
      %v366 = vshrl.u32 %v365, 7
      %v367 = vsub.s32 %v364, %v366
      %v368 = vrot.slane %v360, %v367
      %v370 = vunpack.c.l.s4 1966171168
      %v371 = vunpack.c.0.s8 %v370
      %v372 = vlaneseq
      %v373 = vshrl.u32 %v372, 7
      %v374 = vsub.s32 %v371, %v373
      %v375 = vrot.slane %v361, %v374
      %v377 = vpack.i.b16 %v368, %v368
      %v379 = vlaneseq
      %v380 = vshrl.u32 %v379, 7
      %v381 = vsub.s32 0, %v380
      %v382 = vrot.slane %v377, %v381
      %v384 = vpack.i.b16 %v375, %v375
      %v386 = vlaneseq
      %v387 = vshrl.u32 %v386, 7
      %v388 = vsub.s32 0, %v387
      %v389 = vrot.slane %v384, %v388
      %v392 = vunpack.c.l.b16 %v382
      %v393 = vunpack.c.l.b16 %v389
      %v394 = vpack.c.b16 %v393, %v392
      %v396 = vmul.bf16 %v348, %v394
      %v397 = vmul.bf16 %v349, %v394
      %v398 = vmul.bf16 %v350, %v394
      %v399 = vmul.bf16 %v351, %v394
      %v400 = vld [vmem:[%s2] sm:$0xf]
      %v401 = vld [vmem:[%s2 + $0x4] sm:$0xf]
      %v402 = vld [vmem:[%s2 + $0x8] sm:$0xf]
      %v403 = vld [vmem:[%s2 + $0xc] sm:$0xf]
      %v404 = vld [vmem:[%s2 + $0x10] sm:$0xf]
      %v405 = vld [vmem:[%s2 + $0x14] sm:$0xf]
      %v406 = vld [vmem:[%s2 + $0x18] sm:$0xf]
      %v407 = vld [vmem:[%s2 + $0x1c] sm:$0xf]
      %v408 = vld [vmem:[%s2 + $0x20] sm:$0xf]
      %v409 = vld [vmem:[%s2 + $0x24] sm:$0xf]
      %v410 = vld [vmem:[%s2 + $0x28] sm:$0xf]
      %v411 = vld [vmem:[%s2 + $0x2c] sm:$0xf]
      %v412 = vld [vmem:[%s2 + $0x30] sm:$0xf]
      %v413 = vld [vmem:[%s2 + $0x34] sm:$0xf]
      %v414 = vld [vmem:[%s2 + $0x38] sm:$0xf]
      %v415 = vld [vmem:[%s2 + $0x3c] sm:$0xf]
      %v416 = vld [vmem:[%s2 + $0x40] sm:$0xf]
      %v417 = vld [vmem:[%s2 + $0x44] sm:$0xf]
      %v418 = vld [vmem:[%s2 + $0x48] sm:$0xf]
      %v419 = vld [vmem:[%s2 + $0x4c] sm:$0xf]
      %v420 = vld [vmem:[%s2 + $0x50] sm:$0xf]
      %v421 = vld [vmem:[%s2 + $0x54] sm:$0xf]
      %v422 = vld [vmem:[%s2 + $0x58] sm:$0xf]
      %v423 = vld [vmem:[%s2 + $0x5c] sm:$0xf]
      %v424 = vld [vmem:[%s2 + $0x60] sm:$0xf]
      %v425 = vld [vmem:[%s2 + $0x64] sm:$0xf]
      %v426 = vld [vmem:[%s2 + $0x68] sm:$0xf]
      %v427 = vld [vmem:[%s2 + $0x6c] sm:$0xf]
      %v428 = vld [vmem:[%s2 + $0x70] sm:$0xf]
      %v429 = vld [vmem:[%s2 + $0x74] sm:$0xf]
      %v430 = vld [vmem:[%s2 + $0x78] sm:$0xf]
      %v431 = vld [vmem:[%s2 + $0x7c] sm:$0xf]
      %v436 = vunpack.c.l.b16 %v396
      %v437 = vunpack.c.h.b16 %v396
      %v438 = vunpack.c.l.b16 %v397
      %v439 = vunpack.c.h.b16 %v397
      %v440 = vunpack.c.l.b16 %v398
      %v441 = vunpack.c.h.b16 %v398
      %v442 = vunpack.c.l.b16 %v399
      %v443 = vunpack.c.h.b16 %v399
      %v444 = vpack.c.b16 %v438, %v436
      %v445 = vpack.c.b16 %v439, %v437
      %v446 = vpack.c.b16 %v442, %v440
      %v447 = vpack.c.b16 %v443, %v441
      %v484 = vunpack.c.l.b16 %v400
      %v485 = vunpack.c.l.b16 %v401
      %v486 = vunpack.c.l.b16 %v402
      %v487 = vunpack.c.l.b16 %v403
      %v488 = vunpack.c.l.b16 %v404
      %v489 = vunpack.c.l.b16 %v405
      %v490 = vunpack.c.l.b16 %v406
      %v491 = vunpack.c.l.b16 %v407
      %v492 = vunpack.c.l.b16 %v408
      %v493 = vunpack.c.l.b16 %v409
      %v494 = vunpack.c.l.b16 %v410
      %v495 = vunpack.c.l.b16 %v411
      %v496 = vunpack.c.l.b16 %v412
      %v497 = vunpack.c.l.b16 %v413
      %v498 = vunpack.c.l.b16 %v414
      %v499 = vunpack.c.l.b16 %v415
      %v500 = vunpack.c.l.b16 %v416
      %v501 = vunpack.c.l.b16 %v417
      %v502 = vunpack.c.l.b16 %v418
      %v503 = vunpack.c.l.b16 %v419
      %v504 = vunpack.c.l.b16 %v420
      %v505 = vunpack.c.l.b16 %v421
      %v506 = vunpack.c.l.b16 %v422
      %v507 = vunpack.c.l.b16 %v423
      %v508 = vunpack.c.l.b16 %v424
      %v509 = vunpack.c.l.b16 %v425
      %v510 = vunpack.c.l.b16 %v426
      %v511 = vunpack.c.l.b16 %v427
      %v512 = vunpack.c.l.b16 %v428
      %v513 = vunpack.c.l.b16 %v429
      %v514 = vunpack.c.l.b16 %v430
      %v515 = vunpack.c.l.b16 %v431
      %v516 = vpack.c.b16 %v485, %v484
      %v517 = vpack.c.b16 %v487, %v486
      %v518 = vpack.c.b16 %v489, %v488
      %v519 = vpack.c.b16 %v491, %v490
      %v520 = vpack.c.b16 %v493, %v492
      %v521 = vpack.c.b16 %v495, %v494
      %v522 = vpack.c.b16 %v497, %v496
      %v523 = vpack.c.b16 %v499, %v498
      %v524 = vpack.c.b16 %v501, %v500
      %v525 = vpack.c.b16 %v503, %v502
      %v526 = vpack.c.b16 %v505, %v504
      %v527 = vpack.c.b16 %v507, %v506
      %v528 = vpack.c.b16 %v509, %v508
      %v529 = vpack.c.b16 %v511, %v510
      %v530 = vpack.c.b16 %v513, %v512
      %v531 = vpack.c.b16 %v515, %v514
      %548 = vmatprep.subr.bf16.mxu0 0
      %549 = vmatpush1.bf16.msra.mxu0 %v523
      %550 = vmatprep.subr.bf16.mxu0 0
      %551 = vmatpush1.bf16.msra.mxu0 %v522
      %552 = vmatprep.subr.bf16.mxu0 0
      %553 = vmatpush1.bf16.msra.mxu0 %v521
      %554 = vmatprep.subr.bf16.mxu0 0
      %555 = vmatpush1.bf16.msra.mxu0 %v520
      %556 = vmatprep.subr.bf16.mxu0 0
      %557 = vmatpush1.bf16.msra.mxu0 %v519
      %558 = vmatprep.subr.bf16.mxu0 0
      %559 = vmatpush1.bf16.msra.mxu0 %v518
      %560 = vmatprep.subr.bf16.mxu0 0
      %561 = vmatpush1.bf16.msra.mxu0 %v517
      %562 = vmatprep.subr.bf16.mxu0 0
      %563 = vmatpush1.bf16.msra.mxu0 %v516
      %564 = vmatprep.subr.bf16.mxu0 0
      %565 = vmatpush2.bf16.msra.mxu0 %v531
      %566 = vmatprep.subr.bf16.mxu0 0
      %567 = vmatpush2.bf16.msra.mxu0 %v530
      %568 = vmatprep.subr.bf16.mxu0 0
      %569 = vmatpush2.bf16.msra.mxu0 %v529
      %570 = vmatprep.subr.bf16.mxu0 0
      %571 = vmatpush2.bf16.msra.mxu0 %v528
      %572 = vmatprep.subr.bf16.mxu0 0
      %573 = vmatpush2.bf16.msra.mxu0 %v527
      %574 = vmatprep.subr.bf16.mxu0 0
      %575 = vmatpush2.bf16.msra.mxu0 %v526
      %576 = vmatprep.subr.bf16.mxu0 0
      %577 = vmatpush2.bf16.msra.mxu0 %v525
      %578 = vmatprep.subr.bf16.mxu0 0
      %579 = vmatpush2.bf16.msra.mxu0 %v524
      %580 = vmatprep.mubr.bf16.mxu0 %v445
      %581 = vmatmul.mubr.bf16.gmra.mxu0 %v444
      %v582 = vpop.f32.mrf.mxu0
      %v583 = vadd.f32 0.0, %v582
      %v584 = vpop.f32.mrf.mxu0
      %v585 = vpop.f32.mrf.mxu0
      %v586 = vadd.f32 0.0, %v585
      %v587 = vpop.f32.mrf.mxu0
      %588 = vmatprep.mubr.bf16.mxu0 %v447
      %589 = vmatmul.mubr.bf16.gmra.mxu0 %v446
      %v590 = vpop.f32.mrf.mxu0
      %v591 = vadd.f32 0.0, %v590
      %v592 = vpop.f32.mrf.mxu0
      %v593 = vpop.f32.mrf.mxu0
      %v594 = vadd.f32 0.0, %v593
      %v595 = vpop.f32.mrf.mxu0
      %596 = vdwg.mxu0
      %v597 = vld [vmem:[%s3] sm:$0x1]
      %v599 = vlaneseq
      %v600 = vshrl.u32 %v599, 7
      %v601 = vsub.s32 0, %v600
      %v602 = vrot.slane %v597, %v601
      %v604 = vmul.f32 %v583, %v602
      %v605 = vmul.f32 %v586, %v602
      %v606 = vmul.f32 %v591, %v602
      %v607 = vmul.f32 %v594, %v602
      %v608 = vld [vmem:[%s4] sm:$0x1]
      %v610 = vlaneseq
      %v611 = vshrl.u32 %v610, 7
      %v612 = vsub.s32 0, %v611
      %v613 = vrot.slane %v608, %v612
      %v615 = vadd.f32 %v604, %v613
      %v616 = vadd.f32 %v605, %v613
      %v617 = vadd.f32 %v606, %v613
      %v618 = vadd.f32 %v607, %v613
      %v619 = vld [vmem:[%s335] sm:$0xf]
      %v620 = vld [vmem:[%s335 + $0x4] sm:$0xf]
      %v621 = vld [vmem:[%s335 + $0x8] sm:$0xf]
      %v622 = vld [vmem:[%s335 + $0xc] sm:$0xf]
      %v623 = vunpack.c.l.bf16 %v619
      %v624 = vunpack.c.l.bf16 %v620
      %v625 = vunpack.c.l.bf16 %v621
      %v626 = vunpack.c.l.bf16 %v622
      %v627 = vadd.f32 %v615, %v623
      %v628 = vadd.f32 %v616, %v624
      %v629 = vadd.f32 %v617, %v625
      %v630 = vadd.f32 %v618, %v626
      %v631 = vpack.c.bf16 %v628, %v627
      %v632 = vpack.c.bf16 %v630, %v629
      %v635 = vunpack.c.l.b16 %v631
      %v636 = vunpack.c.h.b16 %v631
      %v637 = vunpack.c.l.b16 %v632
      %v638 = vunpack.c.h.b16 %v632
      %v639 = vpack.c.b16 %v635, %v635
      %v640 = vpack.c.b16 %v636, %v636
      %v641 = vpack.c.b16 %v637, %v637
      %v642 = vpack.c.b16 %v638, %v638
      %647 = vst [vmem:[%s345] sm:$0xf] %v639
      %648 = vst [vmem:[%s345 + $0x4] sm:$0xf] %v640
      %649 = vst [vmem:[%s345 + $0x8] sm:$0xf] %v641
      %650 = vst [vmem:[%s345 + $0xc] sm:$0xf] %v642
      %s651 = smul.u32 4, %s22
      %p652 = scmp.lt.s32.totalorder %s21, 1
      %s653 = scalar_select %p652, %s21, 1
      %p654 = scmp.lt.s32.totalorder %s651, 7
      %s655 = scalar_select %p654, %s651, 7
      %s656 = smul.addr %s653, 8
      %s657 = sadd.s32 %s655, %s656
      %s658 = smul.addr %s657, 4
      %s659 = scalar_lea.vmem %s6, %s658
      // Predicated region
      $region45: #{feature_extractor_forward.22} parent=43 // pred_check
        %p660 = pneg %p194
      $region46: #{feature_extractor_forward.22} parent=43 // pred_check_branch
        %662 = sbr.rel (%p660) target = $region48
      $region47: #{feature_extractor_forward.22} parent=43 // pred_region
        %s663 = smul.u32 4, %s22
      $region48: #{feature_extractor_forward.22} parent=43 // pred_fallthru
        _
    $region44: #{feature_extractor_forward.22} parent=5 // pred_fallthru
      _
    %p664 = scmp.le.s32.totalorder 2, %s12
    // Predicated region
    $region49: #{feature_extractor_forward.22} parent=5 // pred_check
      %p665 = pneg %p664
    $region50: #{feature_extractor_forward.22} parent=5 // pred_check_branch
      %667 = sbr.rel (%p665) target = $region52
    $region51: #{feature_extractor_forward.22} parent=5 // pred_region
      %s668 = ssub.s32 %s12, 2
      // Predicated region
      $region53: #{feature_extractor_forward.22} parent=51 // pred_check
        %p669 = pneg %p200
      $region54: #{feature_extractor_forward.22} parent=51 // pred_check_branch
        %671 = sbr.rel (%p669) target = $region56
      $region55: #{feature_extractor_forward.22} parent=51 // pred_region
        %s672 = smul.u32 4, %s24
        %p673 = scmp.lt.s32.totalorder %s23, 1
        %s674 = scalar_select %p673, %s23, 1
        %p675 = scmp.lt.s32.totalorder %s672, 7
        %s676 = scalar_select %p675, %s672, 7
        %s677 = smul.addr %s674, 8
        %s678 = sadd.s32 %s676, %s677
        %s679 = smul.addr %s678, 4
        %s680 = scalar_lea.vmem %s6, %s679
      $region56: #{feature_extractor_forward.22} parent=51 // pred_fallthru
        _
    $region52: #{feature_extractor_forward.22} parent=5 // pred_fallthru
      _
  $region6: #{feature_extractor_forward.22} parent=0 // loop_footer
    %s16 = sadd.s32 1, %s12
  $region7: #{feature_extractor_forward.22} parent=0 // loop_footer_branch
    %11 = sbr.rel target = $region3
  $region8: #{feature_extractor_forward.22} parent=0 // loop_exit
    _

// kernel: feature_extractor_forward.21
$region0: #{feature_extractor_forward.21}
  #allocation0 [shape = 'u32[]', space=smem, size = 0x4, offset = 0x4, fixed_abs, tag = 'smem constant byte address 0x4 - core index']
  #allocation1 [shape = 'u32[144,128]{1,0:T(1,128)}', space=vmem, size = 0x12000, scoped, tag = 'internal scratch']
  #allocation2 [shape = 'bf16[6,8,256]{2,1,0:T(8,128)(2,1)}', space=vmem, size = 0x6000, scoped, tag = 'scratch operand']
  #allocation3 [shape = 'f32[1,256]{1,0:T(1,128)}', space=vmem, size = 0x400, scoped, tag = 'scratch operand']
  #allocation5 [shape = 's32[]', space=sflag, size = 0x4, offset = 0, fixed_abs, tag = 'sflag constant byte address 0x0 - dummy sync flag']
  #allocation7 [shape = 's32[]', space=sflag, size = 0x4, offset = 0, fixed_abs, tag = 'sflag constant byte address 0x0 - dummy sync flag']
  #allocation9 [shape = 's32[]', space=sflag, size = 0x4, offset = 0, fixed_abs, tag = 'sflag constant byte address 0x0 - dummy sync flag']
  %s0 = inlined_call_operand.vmem [shape: bf16[2,8,8,256], index: 0, kind: input, shape index: {}]
  %s1 = inlined_call_operand.vmem [shape: bf16[9,256], index: 1, kind: input, shape index: {}]
  %s2 = inlined_call_operand.vmem [shape: f32[1,256], index: 2, kind: input, shape index: {}]
  %s3 = inlined_call_operand.vmem [shape: f32[1,256], index: 3, kind: input, shape index: {}]
  %s4 = inlined_call_operand.vmem [shape: f32[256,128], index: 4, kind: input, shape index: {}]
  %s5 = inlined_call_operand.vmem [shape: f32[1,128], index: 5, kind: input, shape index: {}]
  %s6 = inlined_call_operand.vmem [shape: f32[128,256], index: 6, kind: input, shape index: {}]
  %s7 = inlined_call_operand.vmem [shape: f32[1,256], index: 7, kind: input, shape index: {}]
  %s8 = inlined_call_operand.vmem [shape: bf16[2,8,8,256], index: 8, kind: output, shape index: {0}]
  %s9 = inlined_call_operand.vmem [shape: bf16[2,1,256], index: 9, kind: output, shape index: {1}]
  %10 = xla_tuple %s8, %s9
  %s11 = sld [smem:[#allocation0]]
  $region198: #{feature_extractor_forward.21} parent=0
    _
  %s13 = ssub.s32 1, %s11
  %s14 = scalar_select 0, %s13, %s11
  loop: start=0, step=1, limit=6
  $region2: #{feature_extractor_forward.21} parent=0 // loop_pre_header
    _
  $region3: #{feature_extractor_forward.21} parent=0 // loop_header
    %s16 = sphi 0, %s20
    %p17 = scmp.ge.s32.totalorder %s16, 6
    %s23 = sphi 0, %s35
    %s24 = sphi 0, %s31
    %s25 = sphi 0, %s23
    %s26 = sphi 0, %s24
    %s27 = sphi 0, %s25
    %s28 = sphi 0, %s26
    %s36 = sphi 0, %s36
    %s38 = sphi 0, %s36
    %s39 = sphi 0, %s38
    %s53 = sphi 0, %s39
    %s57 = sphi 0, %s57
    %s59 = sphi 0, %s57
    %s60 = sphi 0, %s59
    %s74 = sphi 0, %s60
    %s78 = sphi 0, %s78
    %s80 = sphi 0, %s78
    %s81 = sphi 0, %s80
    %s95 = sphi 0, %s81
    %s99 = sphi 0, %s99
    %s101 = sphi 0, %s99
    %s102 = sphi 0, %s101
    %s116 = sphi 0, %s102
    %s120 = sphi 0, %s120
    %s122 = sphi 0, %s120
    %s123 = sphi 0, %s122
    %s137 = sphi 0, %s123
    %s141 = sphi 0, %s141
    %s143 = sphi 0, %s141
    %s144 = sphi 0, %s143
    %s158 = sphi 0, %s144
    %s162 = sphi 0, %s162
    %s164 = sphi 0, %s162
    %s165 = sphi 0, %s164
    %s179 = sphi 0, %s165
    %s187 = sphi 0, %s189
    %s190 = sphi 0, %s187
    %s191 = sphi 0, %s190
    %s207 = sphi 0, %s191
    %s213 = sphi 0, %s215
    %s216 = sphi 0, %s213
    %s217 = sphi 0, %s216
    %s233 = sphi 0, %s217
  $region4: #{feature_extractor_forward.21} parent=0 // loop_header_branch
    %19 = sbr.rel (%p17) target = $region8
  $region5: #{feature_extractor_forward.21} parent=0 // loop_body
    %s21 = ssub.s32 %s16, 1
    %s22 = ssub.s32 %s16, 2
    %s29 = sadd.s32 1, %s24
    %p30 = scmp.ge.s32.totalorder %s29, 2
    %s31 = scalar_select %p30, 0, %s29
    %s32 = sadd.s32 1, %s23
    %s33 = scalar_select %p30, %s32, %s23
    %p34 = scmp.ge.s32.totalorder %s33, 2
    %s35 = scalar_select %p34, 0, %s33
    %s37 = sadd.s32 %s36, 1
    %p40 = scmp.eq.s32.totalorder %s16, 3
    %p41 = scmp.ne.s32.totalorder %s36, %s38
    %p42 = scmp.eq.s32.totalorder %s16, 0
    %p43 = por %p41, %p42
    %p44 = scmp.ne.s32.totalorder %s36, %s38
    %p45 = scmp.eq.s32.totalorder %s21, 3
    %p46 = por %p44, %p45
    %p47 = scmp.ne.s32.totalorder %s38, %s39
    %p48 = scmp.eq.s32.totalorder %s21, 0
    %p49 = por %p47, %p48
    %p50 = scmp.ne.s32.totalorder %s38, %s39
    %p51 = scmp.eq.s32.totalorder %s22, 3
    %p52 = por %p50, %p51
    %p54 = scmp.ne.s32.totalorder %s39, %s53
    %p55 = scmp.eq.s32.totalorder %s22, 0
    %p56 = por %p54, %p55
    %s58 = sadd.s32 %s57, 1
    %p61 = scmp.eq.s32.totalorder %s16, 3
    %p62 = scmp.ne.s32.totalorder %s57, %s59
    %p63 = scmp.eq.s32.totalorder %s16, 0
    %p64 = por %p62, %p63
    %p65 = scmp.ne.s32.totalorder %s57, %s59
    %p66 = scmp.eq.s32.totalorder %s21, 3
    %p67 = por %p65, %p66
    %p68 = scmp.ne.s32.totalorder %s59, %s60
    %p69 = scmp.eq.s32.totalorder %s21, 0
    %p70 = por %p68, %p69
    %p71 = scmp.ne.s32.totalorder %s59, %s60
    %p72 = scmp.eq.s32.totalorder %s22, 3
    %p73 = por %p71, %p72
    %p75 = scmp.ne.s32.totalorder %s60, %s74
    %p76 = scmp.eq.s32.totalorder %s22, 0
    %p77 = por %p75, %p76
    %s79 = sadd.s32 %s78, 1
    %p82 = scmp.eq.s32.totalorder %s16, 3
    %p83 = scmp.ne.s32.totalorder %s78, %s80
    %p84 = scmp.eq.s32.totalorder %s16, 0
    %p85 = por %p83, %p84
    %p86 = scmp.ne.s32.totalorder %s78, %s80
    %p87 = scmp.eq.s32.totalorder %s21, 3
    %p88 = por %p86, %p87
    %p89 = scmp.ne.s32.totalorder %s80, %s81
    %p90 = scmp.eq.s32.totalorder %s21, 0
    %p91 = por %p89, %p90
    %p92 = scmp.ne.s32.totalorder %s80, %s81
    %p93 = scmp.eq.s32.totalorder %s22, 3
    %p94 = por %p92, %p93
    %p96 = scmp.ne.s32.totalorder %s81, %s95
    %p97 = scmp.eq.s32.totalorder %s22, 0
    %p98 = por %p96, %p97
    %s100 = sadd.s32 %s99, 1
    %p103 = scmp.eq.s32.totalorder %s16, 3
    %p104 = scmp.ne.s32.totalorder %s99, %s101
    %p105 = scmp.eq.s32.totalorder %s16, 0
    %p106 = por %p104, %p105
    %p107 = scmp.ne.s32.totalorder %s99, %s101
    %p108 = scmp.eq.s32.totalorder %s21, 3
    %p109 = por %p107, %p108
    %p110 = scmp.ne.s32.totalorder %s101, %s102
    %p111 = scmp.eq.s32.totalorder %s21, 0
    %p112 = por %p110, %p111
    %p113 = scmp.ne.s32.totalorder %s101, %s102
    %p114 = scmp.eq.s32.totalorder %s22, 3
    %p115 = por %p113, %p114
    %p117 = scmp.ne.s32.totalorder %s102, %s116
    %p118 = scmp.eq.s32.totalorder %s22, 0
    %p119 = por %p117, %p118
    %s121 = sadd.s32 %s120, 1
    %p124 = scmp.eq.s32.totalorder %s16, 3
    %p125 = scmp.ne.s32.totalorder %s120, %s122
    %p126 = scmp.eq.s32.totalorder %s16, 0
    %p127 = por %p125, %p126
    %p128 = scmp.ne.s32.totalorder %s120, %s122
    %p129 = scmp.eq.s32.totalorder %s21, 3
    %p130 = por %p128, %p129
    %p131 = scmp.ne.s32.totalorder %s122, %s123
    %p132 = scmp.eq.s32.totalorder %s21, 0
    %p133 = por %p131, %p132
    %p134 = scmp.ne.s32.totalorder %s122, %s123
    %p135 = scmp.eq.s32.totalorder %s22, 3
    %p136 = por %p134, %p135
    %p138 = scmp.ne.s32.totalorder %s123, %s137
    %p139 = scmp.eq.s32.totalorder %s22, 0
    %p140 = por %p138, %p139
    %s142 = sadd.s32 %s141, 1
    %p145 = scmp.eq.s32.totalorder %s16, 3
    %p146 = scmp.ne.s32.totalorder %s141, %s143
    %p147 = scmp.eq.s32.totalorder %s16, 0
    %p148 = por %p146, %p147
    %p149 = scmp.ne.s32.totalorder %s141, %s143
    %p150 = scmp.eq.s32.totalorder %s21, 3
    %p151 = por %p149, %p150
    %p152 = scmp.ne.s32.totalorder %s143, %s144
    %p153 = scmp.eq.s32.totalorder %s21, 0
    %p154 = por %p152, %p153
    %p155 = scmp.ne.s32.totalorder %s143, %s144
    %p156 = scmp.eq.s32.totalorder %s22, 3
    %p157 = por %p155, %p156
    %p159 = scmp.ne.s32.totalorder %s144, %s158
    %p160 = scmp.eq.s32.totalorder %s22, 0
    %p161 = por %p159, %p160
    %s163 = sadd.s32 %s162, 1
    %p166 = scmp.eq.s32.totalorder %s16, 3
    %p167 = scmp.ne.s32.totalorder %s162, %s164
    %p168 = scmp.eq.s32.totalorder %s16, 0
    %p169 = por %p167, %p168
    %p170 = scmp.ne.s32.totalorder %s162, %s164
    %p171 = scmp.eq.s32.totalorder %s21, 3
    %p172 = por %p170, %p171
    %p173 = scmp.ne.s32.totalorder %s164, %s165
    %p174 = scmp.eq.s32.totalorder %s21, 0
    %p175 = por %p173, %p174
    %p176 = scmp.ne.s32.totalorder %s164, %s165
    %p177 = scmp.eq.s32.totalorder %s22, 3
    %p178 = por %p176, %p177
    %p180 = scmp.ne.s32.totalorder %s165, %s179
    %p181 = scmp.eq.s32.totalorder %s22, 0
    %p182 = por %p180, %p181
    %s183 = ssub.s32 %s23, %s35
    %s184 = ssub.s32 %s24, %s31
    %s185 = sor.u32 %s183, %s184
    %p186 = scmp.eq.s32.totalorder %s185, 0
    %s188 = sadd.s32 %s187, 1
    %s189 = scalar_select %p186, %s187, %s188
    %p192 = pneg %p186
    %p193 = scmp.eq.s32.totalorder %s16, 3
    %p194 = por %p192, %p193
    %p195 = scmp.ne.s32.totalorder %s187, %s190
    %p196 = scmp.eq.s32.totalorder %s16, 0
    %p197 = por %p195, %p196
    %p198 = scmp.ne.s32.totalorder %s187, %s190
    %p199 = scmp.eq.s32.totalorder %s21, 3
    %p200 = por %p198, %p199
    %p201 = scmp.ne.s32.totalorder %s190, %s191
    %p202 = scmp.eq.s32.totalorder %s21, 0
    %p203 = por %p201, %p202
    %p204 = scmp.ne.s32.totalorder %s190, %s191
    %p205 = scmp.eq.s32.totalorder %s22, 3
    %p206 = por %p204, %p205
    %p208 = scmp.ne.s32.totalorder %s191, %s207
    %p209 = scmp.eq.s32.totalorder %s22, 0
    %p210 = por %p208, %p209
    %s211 = ssub.s32 %s23, %s35
    %p212 = scmp.eq.s32.totalorder %s211, 0
    %s214 = sadd.s32 %s213, 1
    %s215 = scalar_select %p212, %s213, %s214
    %p218 = pneg %p212
    %p219 = scmp.eq.s32.totalorder %s16, 3
    %p220 = por %p218, %p219
    %p221 = scmp.ne.s32.totalorder %s213, %s216
    %p222 = scmp.eq.s32.totalorder %s16, 0
    %p223 = por %p221, %p222
    %p224 = scmp.ne.s32.totalorder %s213, %s216
    %p225 = scmp.eq.s32.totalorder %s21, 3
    %p226 = por %p224, %p225
    %p227 = scmp.ne.s32.totalorder %s216, %s217
    %p228 = scmp.eq.s32.totalorder %s21, 0
    %p229 = por %p227, %p228
    %p230 = scmp.ne.s32.totalorder %s216, %s217
    %p231 = scmp.eq.s32.totalorder %s22, 3
    %p232 = por %p230, %p231
    %p234 = scmp.ne.s32.totalorder %s217, %s233
    %p235 = scmp.eq.s32.totalorder %s22, 0
    %p236 = por %p234, %p235
    %p237 = scmp.le.s32.totalorder 1, %s16
    %p238 = scmp.lt.s32.totalorder %s16, 5
    %p239 = pnand %p237, %p238
    %p240 = pneg %p239
    // Predicated region
    $region9: #{feature_extractor_forward.21} parent=5 // pred_check
      _
    $region10: #{feature_extractor_forward.21} parent=5 // pred_check_branch
      %242 = sbr.rel (%p239) target = $region12
    $region11: #{feature_extractor_forward.21} parent=5 // pred_region
      %s243 = ssub.s32 %s16, 1
      // Predicated region
      $region13: #{feature_extractor_forward.21} parent=11 // pred_check
        %p244 = pneg %p49
      $region14: #{feature_extractor_forward.21} parent=11 // pred_check_branch
        %246 = sbr.rel (%p244) target = $region16
      $region15: #{feature_extractor_forward.21} parent=11 // pred_region
        _
      $region16: #{feature_extractor_forward.21} parent=11 // pred_fallthru
        _
      // Predicated region
      $region17: #{feature_extractor_forward.21} parent=11 // pred_check
        %p247 = pneg %p70
      $region18: #{feature_extractor_forward.21} parent=11 // pred_check_branch
        %249 = sbr.rel (%p247) target = $region20
      $region19: #{feature_extractor_forward.21} parent=11 // pred_region
        _
      $region20: #{feature_extractor_forward.21} parent=11 // pred_fallthru
        _
      // Predicated region
      $region21: #{feature_extractor_forward.21} parent=11 // pred_check
        %p250 = pneg %p91
      $region22: #{feature_extractor_forward.21} parent=11 // pred_check_branch
        %252 = sbr.rel (%p250) target = $region24
      $region23: #{feature_extractor_forward.21} parent=11 // pred_region
        _
      $region24: #{feature_extractor_forward.21} parent=11 // pred_fallthru
        _
      // Predicated region
      $region25: #{feature_extractor_forward.21} parent=11 // pred_check
        %p253 = pneg %p112
      $region26: #{feature_extractor_forward.21} parent=11 // pred_check_branch
        %255 = sbr.rel (%p253) target = $region28
      $region27: #{feature_extractor_forward.21} parent=11 // pred_region
        _
      $region28: #{feature_extractor_forward.21} parent=11 // pred_fallthru
        _
      // Predicated region
      $region29: #{feature_extractor_forward.21} parent=11 // pred_check
        %p256 = pneg %p133
      $region30: #{feature_extractor_forward.21} parent=11 // pred_check_branch
        %258 = sbr.rel (%p256) target = $region32
      $region31: #{feature_extractor_forward.21} parent=11 // pred_region
        _
      $region32: #{feature_extractor_forward.21} parent=11 // pred_fallthru
        _
      // Predicated region
      $region33: #{feature_extractor_forward.21} parent=11 // pred_check
        %p259 = pneg %p154
      $region34: #{feature_extractor_forward.21} parent=11 // pred_check_branch
        %261 = sbr.rel (%p259) target = $region36
      $region35: #{feature_extractor_forward.21} parent=11 // pred_region
        _
      $region36: #{feature_extractor_forward.21} parent=11 // pred_fallthru
        _
      // Predicated region
      $region37: #{feature_extractor_forward.21} parent=11 // pred_check
        %p262 = pneg %p175
      $region38: #{feature_extractor_forward.21} parent=11 // pred_check_branch
        %264 = sbr.rel (%p262) target = $region40
      $region39: #{feature_extractor_forward.21} parent=11 // pred_region
        _
      $region40: #{feature_extractor_forward.21} parent=11 // pred_fallthru
        _
    $region12: #{feature_extractor_forward.21} parent=5 // pred_fallthru
      _
    %p265 = scmp.lt.s32.totalorder %s16, 4
    // Predicated region
    $region41: #{feature_extractor_forward.21} parent=5 // pred_check
      %p266 = pneg %p265
    $region42: #{feature_extractor_forward.21} parent=5 // pred_check_branch
      %268 = sbr.rel (%p266) target = $region44
    $region43: #{feature_extractor_forward.21} parent=5 // pred_region
      _
    $region44: #{feature_extractor_forward.21} parent=5 // pred_fallthru
      _
    %p269 = scmp.le.s32.totalorder 1, %s16
    %p270 = scmp.lt.s32.totalorder %s16, 5
    %p271 = pnand %p269, %p270
    %p272 = pneg %p271
    // Predicated region
    $region45: #{feature_extractor_forward.21} parent=5 // pred_check
      _
    $region46: #{feature_extractor_forward.21} parent=5 // pred_check_branch
      %274 = sbr.rel (%p271) target = $region48
    $region47: #{feature_extractor_forward.21} parent=5 // pred_region
      %s275 = ssub.s32 %s16, 1
      %p276 = pneg %p49
      %p277 = pneg %p46
      %p278 = pneg %p70
      %p279 = pneg %p67
      %p280 = pneg %p91
      %p281 = pneg %p88
      %p282 = pneg %p112
      %p283 = pneg %p109
      %p284 = pneg %p133
      %p285 = pneg %p130
      %p286 = pneg %p154
      %p287 = pneg %p151
      %p288 = pneg %p175
      %p289 = pneg %p172
      %p290 = pneg %p203
      %p291 = pneg %p200
      %s292 = smul.u32 4, %s26
      %p293 = scmp.lt.s32.totalorder %s25, 1
      %s294 = scalar_select %p293, %s25, 1
      %p295 = scmp.lt.s32.totalorder %s292, 7
      %s296 = scalar_select %p295, %s292, 7
      %s297 = smul.addr %s296, 2
      %s298 = smul.addr %s294, 16
      %s299 = sadd.s32 %s297, %s298
      %s300 = smul.addr %s299, 4
      %s301 = scalar_lea.vmem %s8, %s300
      %p302 = pneg %p229
      %p303 = pneg %p226
      %p304 = scmp.lt.s32.totalorder %s25, 1
      %s305 = scalar_select %p304, %s25, 1
      %s306 = smul.addr %s305, 2
      %s307 = scalar_lea.vmem %s9, %s306
      %s308 = smul.u32 4, %s26
      %p309 = scmp.lt.s32.totalorder %s25, 1
      %s310 = scalar_select %p309, %s25, 1
      %p311 = scmp.lt.s32.totalorder %s308, 7
      %s312 = scalar_select %p311, %s308, 7
      %s313 = smul.addr %s312, 2
      %s314 = smul.addr %s310, 16
      %s315 = sadd.s32 %s313, %s314
      %s316 = smul.addr %s315, 4
      %s317 = scalar_lea.vmem %s8, %s316
      %s318 = smul.u32 4, %s26
      %p319 = scmp.lt.s32.totalorder %s25, 1
      %s320 = scalar_select %p319, %s25, 1
      %s321 = smul.addr %s320, 2
      %s322 = scalar_lea.vmem %s9, %s321
      %s324 = smul.u32 %s26, 4
      $region49: #{feature_extractor_forward.21} parent=47
        #allocation4 [shape = 's32[1]{0}', space=sflag, size = 0x4, scoped, tag = 'scoped memory for feature_extractor_forward.21']
        %s325 = smul.u32 %s324, 2
        %s326 = smul.u32 %s25, 16
        %s327 = sadd.s32 %s325, %s326
        %s328 = smul.addr %s327, 4
        %s329 = scalar_lea.vmem %s0, %s328
        %s330 = scalar_lea.vmem [#allocation2], 8
        %p332 = scmp.lt.u32.totalorder 32, 8
        %p333 = pneg %p332
        // Predicated region
        $region50: #{feature_extractor_forward.21} parent=49 // pred_check
          _
        $region51: #{feature_extractor_forward.21} parent=49 // pred_check_branch
          %335 = sbr.rel (%p332) target = $region53
        $region52: #{feature_extractor_forward.21} parent=49 // pred_region
          %s351 = sand.u32 32, 7
          %p352 = scmp.eq.s32.totalorder %s351, 0
          // Predicated region
          $region65: #{feature_extractor_forward.21} parent=52 // pred_check
            %p353 = pneg %p352
          $region66: #{feature_extractor_forward.21} parent=52 // pred_check_branch
            %355 = sbr.rel (%p353) target = $region68
          $region67: #{feature_extractor_forward.21} parent=52 // pred_region
            loop: start=0, step=1, limit=1
            $region69: #{feature_extractor_forward.21} parent=67 // loop_pre_header
              _
            $region70: #{feature_extractor_forward.21} parent=67 // loop_header
              %s357 = sphi 0, %s361
              %p358 = scmp.ge.s32.totalorder %s357, 1
              %s362 = sphi %s329, %s329
              %s363 = sphi %s330, %s330
            $region71: #{feature_extractor_forward.21} parent=67 // loop_header_branch
              %360 = sbr.rel (%p358) target = $region75
            $region72: #{feature_extractor_forward.21} parent=67 // loop_body
              %v364 = vld [vmem:[%s362] sm:$0xff]
              %365 = vst [vmem:[%s363] sm:$0xff] %v364
              %v366 = vld [vmem:[%s362 + $0x8] sm:$0xff]
              %367 = vst [vmem:[%s363 + $0x8] sm:$0xff] %v366
              %v368 = vld [vmem:[%s362 + $0x10] sm:$0xff]
              %369 = vst [vmem:[%s363 + $0x10] sm:$0xff] %v368
              %v370 = vld [vmem:[%s362 + $0x18] sm:$0xff]
              %371 = vst [vmem:[%s363 + $0x18] sm:$0xff] %v370
            $region73: #{feature_extractor_forward.21} parent=67 // loop_footer
              %s361 = sadd.s32 1, %s357
            $region74: #{feature_extractor_forward.21} parent=67 // loop_footer_branch
              %356 = sbr.rel target = $region70
            $region75: #{feature_extractor_forward.21} parent=67 // loop_exit
              _
          $region68: #{feature_extractor_forward.21} parent=52 // pred_fallthru
            _
          %p372 = pneg %p352
          // Predicated region
          $region76: #{feature_extractor_forward.21} parent=52 // pred_check
            _
          $region77: #{feature_extractor_forward.21} parent=52 // pred_check_branch
            %374 = sbr.rel (%p352) target = $region79
          $region78: #{feature_extractor_forward.21} parent=52 // pred_region
            %s375 = sand.u32 32, 7
          $region79: #{feature_extractor_forward.21} parent=52 // pred_fallthru
            _
        $region53: #{feature_extractor_forward.21} parent=49 // pred_fallthru
          _
        // Predicated region
        $region54: #{feature_extractor_forward.21} parent=49 // pred_check
          %p336 = pneg %p332
        $region55: #{feature_extractor_forward.21} parent=49 // pred_check_branch
          %338 = sbr.rel (%p336) target = $region57
        $region56: #{feature_extractor_forward.21} parent=49 // pred_region
          %s339 = sshll.u32 1, 32
          %s340 = ssub.s32 %s339, 1
          loop: start=0, step=1, limit=1
          $region58: #{feature_extractor_forward.21} parent=56 // loop_pre_header
            _
          $region59: #{feature_extractor_forward.21} parent=56 // loop_header
            %s342 = sphi 0, %s346
            %p343 = scmp.ge.s32.totalorder %s342, 1
            %s347 = sphi %s329, %s329
            %s348 = sphi %s330, %s330
          $region60: #{feature_extractor_forward.21} parent=56 // loop_header_branch
            %345 = sbr.rel (%p343) target = $region64
          $region61: #{feature_extractor_forward.21} parent=56 // loop_body
            %v349 = vld [vmem:[%s347] sm:%s340]
            %350 = vst [vmem:[%s348] sm:%s340] %v349
          $region62: #{feature_extractor_forward.21} parent=56 // loop_footer
            %s346 = sadd.s32 1, %s342
          $region63: #{feature_extractor_forward.21} parent=56 // loop_footer_branch
            %341 = sbr.rel target = $region59
          $region64: #{feature_extractor_forward.21} parent=56 // loop_exit
            _
        $region57: #{feature_extractor_forward.21} parent=49 // pred_fallthru
          _
        // Predicated region
        $region80: #{feature_extractor_forward.21} parent=49 // pred_check
          _
        $region81: #{feature_extractor_forward.21} parent=49 // pred_check_branch
          %378 = sbr.rel (0) target = $region83
        $region82: #{feature_extractor_forward.21} parent=49 // pred_region
          %379 = vsyncadd [#allocation4], 512
        $region83: #{feature_extractor_forward.21} parent=49 // pred_fallthru
          _
        %s380 = smul.u32 4, 4
        %s381 = smul.u32 %s380, 1
        %s382 = smul.u32 %s381, 2
        %s383 = sshll.u32 %s382, 4
        %384 = dma.done [#allocation4], %s383
      %p385 = scmp.gt.s32.totalorder %s26, 0
      // Predicated region
      $region84: #{feature_extractor_forward.21} parent=47 // pred_check
        %p386 = pneg %p385
      $region85: #{feature_extractor_forward.21} parent=47 // pred_check_branch
        %388 = sbr.rel (%p386) target = $region87
      $region86: #{feature_extractor_forward.21} parent=47 // pred_region
        %s389 = ssub.s32 %s324, 1
        $region88: #{feature_extractor_forward.21} parent=86
          #allocation6 [shape = 's32[1]{0}', space=sflag, size = 0x4, scoped, tag = 'scoped memory for feature_extractor_forward.21']
          %s390 = smul.u32 %s389, 2
          %s391 = smul.u32 %s25, 16
          %s392 = sadd.s32 %s390, %s391
          %s393 = smul.addr %s392, 4
          %s394 = scalar_lea.vmem %s0, %s393
          %p396 = scmp.lt.u32.totalorder 8, 8
          %p397 = pneg %p396
          // Predicated region
          $region89: #{feature_extractor_forward.21} parent=88 // pred_check
            _
          $region90: #{feature_extractor_forward.21} parent=88 // pred_check_branch
            %399 = sbr.rel (%p396) target = $region92
          $region91: #{feature_extractor_forward.21} parent=88 // pred_region
            %s415 = sand.u32 8, 7
            %p416 = scmp.eq.s32.totalorder %s415, 0
            // Predicated region
            $region104: #{feature_extractor_forward.21} parent=91 // pred_check
              %p417 = pneg %p416
            $region105: #{feature_extractor_forward.21} parent=91 // pred_check_branch
              %419 = sbr.rel (%p417) target = $region107
            $region106: #{feature_extractor_forward.21} parent=91 // pred_region
              loop: start=0, step=1, limit=1
              $region108: #{feature_extractor_forward.21} parent=106 // loop_pre_header
                _
              $region109: #{feature_extractor_forward.21} parent=106 // loop_header
                %s421 = sphi 0, %s425
                %p422 = scmp.ge.s32.totalorder %s421, 1
                %s426 = sphi %s394, %s394
                %s427 = sphi [#allocation2], [#allocation2]
              $region110: #{feature_extractor_forward.21} parent=106 // loop_header_branch
                %424 = sbr.rel (%p422) target = $region114
              $region111: #{feature_extractor_forward.21} parent=106 // loop_body
                %v428 = vld [vmem:[%s426] sm:$0xff]
                %429 = vst [vmem:[%s427] sm:$0xff] %v428
              $region112: #{feature_extractor_forward.21} parent=106 // loop_footer
                %s425 = sadd.s32 1, %s421
              $region113: #{feature_extractor_forward.21} parent=106 // loop_footer_branch
                %420 = sbr.rel target = $region109
              $region114: #{feature_extractor_forward.21} parent=106 // loop_exit
                _
            $region107: #{feature_extractor_forward.21} parent=91 // pred_fallthru
              _
            %p430 = pneg %p416
            // Predicated region
            $region115: #{feature_extractor_forward.21} parent=91 // pred_check
              _
            $region116: #{feature_extractor_forward.21} parent=91 // pred_check_branch
              %432 = sbr.rel (%p416) target = $region118
            $region117: #{feature_extractor_forward.21} parent=91 // pred_region
              %s433 = sand.u32 8, 7
            $region118: #{feature_extractor_forward.21} parent=91 // pred_fallthru
              _
          $region92: #{feature_extractor_forward.21} parent=88 // pred_fallthru
            _
          // Predicated region
          $region93: #{feature_extractor_forward.21} parent=88 // pred_check
            %p400 = pneg %p396
          $region94: #{feature_extractor_forward.21} parent=88 // pred_check_branch
            %402 = sbr.rel (%p400) target = $region96
          $region95: #{feature_extractor_forward.21} parent=88 // pred_region
            %s403 = sshll.u32 1, 8
            %s404 = ssub.s32 %s403, 1
            loop: start=0, step=1, limit=1
            $region97: #{feature_extractor_forward.21} parent=95 // loop_pre_header
              _
            $region98: #{feature_extractor_forward.21} parent=95 // loop_header
              %s406 = sphi 0, %s410
              %p407 = scmp.ge.s32.totalorder %s406, 1
              %s411 = sphi %s394, %s394
              %s412 = sphi [#allocation2], [#allocation2]
            $region99: #{feature_extractor_forward.21} parent=95 // loop_header_branch
              %409 = sbr.rel (%p407) target = $region103
            $region100: #{feature_extractor_forward.21} parent=95 // loop_body
              %v413 = vld [vmem:[%s411] sm:%s404]
              %414 = vst [vmem:[%s412] sm:%s404] %v413
            $region101: #{feature_extractor_forward.21} parent=95 // loop_footer
              %s410 = sadd.s32 1, %s406
            $region102: #{feature_extractor_forward.21} parent=95 // loop_footer_branch
              %405 = sbr.rel target = $region98
            $region103: #{feature_extractor_forward.21} parent=95 // loop_exit
              _
          $region96: #{feature_extractor_forward.21} parent=88 // pred_fallthru
            _
          // Predicated region
          $region119: #{feature_extractor_forward.21} parent=88 // pred_check
            _
          $region120: #{feature_extractor_forward.21} parent=88 // pred_check_branch
            %436 = sbr.rel (0) target = $region122
          $region121: #{feature_extractor_forward.21} parent=88 // pred_region
            %437 = vsyncadd [#allocation6], 128
          $region122: #{feature_extractor_forward.21} parent=88 // pred_fallthru
            _
          %s438 = smul.u32 4, 1
          %s439 = smul.u32 %s438, 1
          %s440 = smul.u32 %s439, 2
          %s441 = sshll.u32 %s440, 4
          %442 = dma.done [#allocation6], %s441
      $region87: #{feature_extractor_forward.21} parent=47 // pred_fallthru
        _
      %p443 = scmp.eq.s32.totalorder %s26, 0
      // Predicated region
      $region123: #{feature_extractor_forward.21} parent=47 // pred_check
        %p444 = pneg %p443
      $region124: #{feature_extractor_forward.21} parent=47 // pred_check_branch
        %446 = sbr.rel (%p444) target = $region126
      $region125: #{feature_extractor_forward.21} parent=47 // pred_region
        %447 = vst [vmem:[#allocation2] sm:$0xff] 0
      $region126: #{feature_extractor_forward.21} parent=47 // pred_fallthru
        _
      %p448 = scmp.lt.s32.totalorder %s26, 1
      // Predicated region
      $region127: #{feature_extractor_forward.21} parent=47 // pred_check
        %p449 = pneg %p448
      $region128: #{feature_extractor_forward.21} parent=47 // pred_check_branch
        %451 = sbr.rel (%p449) target = $region130
      $region129: #{feature_extractor_forward.21} parent=47 // pred_region
        %s452 = sadd.s32 %s324, 4
        $region131: #{feature_extractor_forward.21} parent=129
          #allocation8 [shape = 's32[1]{0}', space=sflag, size = 0x4, scoped, tag = 'scoped memory for feature_extractor_forward.21']
          %s453 = smul.u32 %s452, 2
          %s454 = smul.u32 %s25, 16
          %s455 = sadd.s32 %s453, %s454
          %s456 = smul.addr %s455, 4
          %s457 = scalar_lea.vmem %s0, %s456
          %s458 = scalar_lea.vmem [#allocation2], 40
          %p460 = scmp.lt.u32.totalorder 8, 8
          %p461 = pneg %p460
          // Predicated region
          $region132: #{feature_extractor_forward.21} parent=131 // pred_check
            _
          $region133: #{feature_extractor_forward.21} parent=131 // pred_check_branch
            %463 = sbr.rel (%p460) target = $region135
          $region134: #{feature_extractor_forward.21} parent=131 // pred_region
            %s479 = sand.u32 8, 7
            %p480 = scmp.eq.s32.totalorder %s479, 0
            // Predicated region
            $region147: #{feature_extractor_forward.21} parent=134 // pred_check
              %p481 = pneg %p480
            $region148: #{feature_extractor_forward.21} parent=134 // pred_check_branch
              %483 = sbr.rel (%p481) target = $region150
            $region149: #{feature_extractor_forward.21} parent=134 // pred_region
              loop: start=0, step=1, limit=1
              $region151: #{feature_extractor_forward.21} parent=149 // loop_pre_header
                _
              $region152: #{feature_extractor_forward.21} parent=149 // loop_header
                %s485 = sphi 0, %s489
                %p486 = scmp.ge.s32.totalorder %s485, 1
                %s490 = sphi %s457, %s457
                %s491 = sphi %s458, %s458
              $region153: #{feature_extractor_forward.21} parent=149 // loop_header_branch
                %488 = sbr.rel (%p486) target = $region157
              $region154: #{feature_extractor_forward.21} parent=149 // loop_body
                %v492 = vld [vmem:[%s490] sm:$0xff]
                %493 = vst [vmem:[%s491] sm:$0xff] %v492
              $region155: #{feature_extractor_forward.21} parent=149 // loop_footer
                %s489 = sadd.s32 1, %s485
              $region156: #{feature_extractor_forward.21} parent=149 // loop_footer_branch
                %484 = sbr.rel target = $region152
              $region157: #{feature_extractor_forward.21} parent=149 // loop_exit
                _
            $region150: #{feature_extractor_forward.21} parent=134 // pred_fallthru
              _
            %p494 = pneg %p480
            // Predicated region
            $region158: #{feature_extractor_forward.21} parent=134 // pred_check
              _
            $region159: #{feature_extractor_forward.21} parent=134 // pred_check_branch
              %496 = sbr.rel (%p480) target = $region161
            $region160: #{feature_extractor_forward.21} parent=134 // pred_region
              %s497 = sand.u32 8, 7
            $region161: #{feature_extractor_forward.21} parent=134 // pred_fallthru
              _
          $region135: #{feature_extractor_forward.21} parent=131 // pred_fallthru
            _
          // Predicated region
          $region136: #{feature_extractor_forward.21} parent=131 // pred_check
            %p464 = pneg %p460
          $region137: #{feature_extractor_forward.21} parent=131 // pred_check_branch
            %466 = sbr.rel (%p464) target = $region139
          $region138: #{feature_extractor_forward.21} parent=131 // pred_region
            %s467 = sshll.u32 1, 8
            %s468 = ssub.s32 %s467, 1
            loop: start=0, step=1, limit=1
            $region140: #{feature_extractor_forward.21} parent=138 // loop_pre_header
              _
            $region141: #{feature_extractor_forward.21} parent=138 // loop_header
              %s470 = sphi 0, %s474
              %p471 = scmp.ge.s32.totalorder %s470, 1
              %s475 = sphi %s457, %s457
              %s476 = sphi %s458, %s458
            $region142: #{feature_extractor_forward.21} parent=138 // loop_header_branch
              %473 = sbr.rel (%p471) target = $region146
            $region143: #{feature_extractor_forward.21} parent=138 // loop_body
              %v477 = vld [vmem:[%s475] sm:%s468]
              %478 = vst [vmem:[%s476] sm:%s468] %v477
            $region144: #{feature_extractor_forward.21} parent=138 // loop_footer
              %s474 = sadd.s32 1, %s470
            $region145: #{feature_extractor_forward.21} parent=138 // loop_footer_branch
              %469 = sbr.rel target = $region141
            $region146: #{feature_extractor_forward.21} parent=138 // loop_exit
              _
          $region139: #{feature_extractor_forward.21} parent=131 // pred_fallthru
            _
          // Predicated region
          $region162: #{feature_extractor_forward.21} parent=131 // pred_check
            _
          $region163: #{feature_extractor_forward.21} parent=131 // pred_check_branch
            %500 = sbr.rel (0) target = $region165
          $region164: #{feature_extractor_forward.21} parent=131 // pred_region
            %501 = vsyncadd [#allocation8], 128
          $region165: #{feature_extractor_forward.21} parent=131 // pred_fallthru
            _
          %s502 = smul.u32 4, 1
          %s503 = smul.u32 %s502, 1
          %s504 = smul.u32 %s503, 2
          %s505 = sshll.u32 %s504, 4
          %506 = dma.done [#allocation8], %s505
      $region130: #{feature_extractor_forward.21} parent=47 // pred_fallthru
        _
      %p507 = scmp.eq.s32.totalorder %s26, 1
      // Predicated region
      $region166: #{feature_extractor_forward.21} parent=47 // pred_check
        %p508 = pneg %p507
      $region167: #{feature_extractor_forward.21} parent=47 // pred_check_branch
        %510 = sbr.rel (%p508) target = $region169
      $region168: #{feature_extractor_forward.21} parent=47 // pred_region
        %s511 = scalar_lea.vmem [#allocation2], 40
        %512 = vst [vmem:[%s511] sm:$0xff] 0
      $region169: #{feature_extractor_forward.21} parent=47 // pred_fallthru
        _
      %v513 = vld [vmem:[#allocation2] sm:$0xff]
      %v514 = vld [vmem:[#allocation2 + $0x8] sm:$0xff]
      %v515 = vld [vmem:[#allocation2 + $0x10] sm:$0xff]
      %v516 = vld [vmem:[#allocation2 + $0x18] sm:$0xff]
      %v517 = vld [vmem:[#allocation2 + $0x20] sm:$0xff]
      %v518 = vld [vmem:[#allocation2 + $0x28] sm:$0xff]
      %v525 = vunpack.c.l.b16 %v513
      %v526 = vunpack.c.h.b16 %v513
      %v527 = vunpack.c.l.b16 %v514
      %v528 = vunpack.c.h.b16 %v514
      %v529 = vunpack.c.l.b16 %v515
      %v530 = vunpack.c.h.b16 %v515
      %v531 = vunpack.c.l.b16 %v516
      %v532 = vunpack.c.h.b16 %v516
      %v533 = vunpack.c.l.b16 %v517
      %v534 = vunpack.c.h.b16 %v517
      %v535 = vunpack.c.l.b16 %v518
      %v536 = vunpack.c.h.b16 %v518
      %v537 = vpack.c.b16 %v525, %v525
      %v538 = vpack.c.b16 %v526, %v526
      %v539 = vpack.c.b16 %v527, %v527
      %v540 = vpack.c.b16 %v528, %v528
      %v541 = vpack.c.b16 %v529, %v529
      %v542 = vpack.c.b16 %v530, %v530
      %v543 = vpack.c.b16 %v531, %v531
      %v544 = vpack.c.b16 %v532, %v532
      %v545 = vpack.c.b16 %v533, %v533
      %v546 = vpack.c.b16 %v534, %v534
      %v547 = vpack.c.b16 %v535, %v535
      %v548 = vpack.c.b16 %v536, %v536
      %v550 = vshrl.u32 %v537, 16
      %v552 = vrot.slane %v550, 7
      %v553 = vshll.u32 %v537, 16
      %v555 = vor.u32 %v552, %v553
      %v557 = vshrl.u32 %v538, 16
      %v559 = vrot.slane %v557, 7
      %v560 = vshll.u32 %v538, 16
      %v562 = vor.u32 %v559, %v560
      %v564 = vshrl.u32 %v539, 16
      %v566 = vrot.slane %v564, 7
      %v567 = vshll.u32 %v539, 16
      %v569 = vor.u32 %v566, %v567
      %v571 = vshrl.u32 %v540, 16
      %v573 = vrot.slane %v571, 7
      %v574 = vshll.u32 %v540, 16
      %v576 = vor.u32 %v573, %v574
      %v578 = vshrl.u32 %v541, 16
      %v580 = vrot.slane %v578, 7
      %v581 = vshll.u32 %v541, 16
      %v583 = vor.u32 %v580, %v581
      %v585 = vshrl.u32 %v542, 16
      %v587 = vrot.slane %v585, 7
      %v588 = vshll.u32 %v542, 16
      %v590 = vor.u32 %v587, %v588
      %v592 = vshrl.u32 %v543, 16
      %v594 = vrot.slane %v592, 7
      %v595 = vshll.u32 %v543, 16
      %v597 = vor.u32 %v594, %v595
      %v599 = vshrl.u32 %v544, 16
      %v601 = vrot.slane %v599, 7
      %v602 = vshll.u32 %v544, 16
      %v604 = vor.u32 %v601, %v602
      %v606 = vshrl.u32 %v545, 16
      %v608 = vrot.slane %v606, 7
      %v609 = vshll.u32 %v545, 16
      %v611 = vor.u32 %v608, %v609
      %v613 = vshrl.u32 %v546, 16
      %v615 = vrot.slane %v613, 7
      %v616 = vshll.u32 %v546, 16
      %v618 = vor.u32 %v615, %v616
      %v620 = vshrl.u32 %v547, 16
      %v622 = vrot.slane %v620, 7
      %v623 = vshll.u32 %v547, 16
      %v625 = vor.u32 %v622, %v623
      %v627 = vshrl.u32 %v548, 16
      %v629 = vrot.slane %v627, 7
      %v630 = vshll.u32 %v548, 16
      %v632 = vor.u32 %v629, %v630
      %vm645 = vcmask 1040384
      %vm646 = vsmask.f32 256
      %vm647 = vmand %vm645, %vm646
      %v648 = vsel %vm647, 0, %v555
      %v649 = vsel %vm647, 0, %v562
      %v650 = vsel %vm647, 0, %v569
      %v651 = vsel %vm647, 0, %v576
      %v652 = vsel %vm647, 0, %v583
      %v653 = vsel %vm647, 0, %v590
      %v654 = vsel %vm647, 0, %v597
      %v655 = vsel %vm647, 0, %v604
      %v656 = vsel %vm647, 0, %v611
      %v657 = vsel %vm647, 0, %v618
      %v658 = vsel %vm647, 0, %v625
      %v659 = vsel %vm647, 0, %v632
      %v660 = vrot.slane %v553, 1
      %v661 = vor.u32 %v550, %v660
      %v662 = vrot.slane %v560, 1
      %v663 = vor.u32 %v557, %v662
      %v664 = vrot.slane %v567, 1
      %v665 = vor.u32 %v564, %v664
      %v666 = vrot.slane %v574, 1
      %v667 = vor.u32 %v571, %v666
      %v668 = vrot.slane %v581, 1
      %v669 = vor.u32 %v578, %v668
      %v670 = vrot.slane %v588, 1
      %v671 = vor.u32 %v585, %v670
      %v672 = vrot.slane %v595, 1
      %v673 = vor.u32 %v592, %v672
      %v674 = vrot.slane %v602, 1
      %v675 = vor.u32 %v599, %v674
      %v676 = vrot.slane %v609, 1
      %v677 = vor.u32 %v606, %v676
      %v678 = vrot.slane %v616, 1
      %v679 = vor.u32 %v613, %v678
      %v680 = vrot.slane %v623, 1
      %v681 = vor.u32 %v620, %v680
      %v682 = vrot.slane %v630, 1
      %v683 = vor.u32 %v627, %v682
      %vm696 = vcmask 1043456
      %vm697 = vsmask.f32 3328
      %vm698 = vmand %vm696, %vm697
      %v699 = vsel %vm698, %v661, 0
      %v700 = vsel %vm698, %v663, 0
      %v701 = vsel %vm698, %v665, 0
      %v702 = vsel %vm698, %v667, 0
      %v703 = vsel %vm698, %v669, 0
      %v704 = vsel %vm698, %v671, 0
      %v705 = vsel %vm698, %v673, 0
      %v706 = vsel %vm698, %v675, 0
      %v707 = vsel %vm698, %v677, 0
      %v708 = vsel %vm698, %v679, 0
      %v709 = vsel %vm698, %v681, 0
      %v710 = vsel %vm698, %v683, 0
      %v711 = vld [vmem:[%s1] sm:$0xff]
      %v712 = vld [vmem:[%s1 + $0x8] sm:$0x11]
      %v714 = vunpack.c.l.b16 %v711
      %v715 = vunpack.c.h.b16 %v711
      %v716 = vpack.c.b16 %v714, %v714
      %v717 = vpack.c.b16 %v715, %v715
      %v719 = vpack.i.b16 %v716, %v716
      %v721 = vlaneseq
      %v722 = vshrl.u32 %v721, 7
      %v723 = vsub.s32 0, %v722
      %v724 = vrot.slane %v719, %v723
      %v726 = vpack.i.b16 %v717, %v717
      %v728 = vlaneseq
      %v729 = vshrl.u32 %v728, 7
      %v730 = vsub.s32 0, %v729
      %v731 = vrot.slane %v726, %v730
      %v732 = vmul.bf16 %v648, %v724
      %v733 = vmul.bf16 %v649, %v731
      %v734 = vmul.bf16 %v650, %v724
      %v735 = vmul.bf16 %v651, %v731
      %v736 = vmul.bf16 %v652, %v724
      %v737 = vmul.bf16 %v653, %v731
      %v738 = vmul.bf16 %v654, %v724
      %v739 = vmul.bf16 %v655, %v731
      %v740 = vunpack.c.l.bf16 %v732
      %v741 = vunpack.c.l.bf16 %v733
      %v742 = vunpack.c.l.bf16 %v734
      %v743 = vunpack.c.l.bf16 %v735
      %v744 = vunpack.c.l.bf16 %v736
      %v745 = vunpack.c.l.bf16 %v737
      %v746 = vunpack.c.l.bf16 %v738
      %v747 = vunpack.c.l.bf16 %v739
      %v748 = vadd.f32 %v740, 0.0
      %v749 = vadd.f32 %v741, 0.0
      %v750 = vadd.f32 %v742, 0.0
      %v751 = vadd.f32 %v743, 0.0
      %v752 = vadd.f32 %v744, 0.0
      %v753 = vadd.f32 %v745, 0.0
      %v754 = vadd.f32 %v746, 0.0
      %v755 = vadd.f32 %v747, 0.0
      %v756 = vshrl.u32 %v716, 16
      %v757 = vpack.i.b16 %v756, %v756
      %v759 = vlaneseq
      %v760 = vshrl.u32 %v759, 7
      %v761 = vsub.s32 0, %v760
      %v762 = vrot.slane %v757, %v761
      %v763 = vshrl.u32 %v717, 16
      %v764 = vpack.i.b16 %v763, %v763
      %v766 = vlaneseq
      %v767 = vshrl.u32 %v766, 7
      %v768 = vsub.s32 0, %v767
      %v769 = vrot.slane %v764, %v768
      %v772 = vunpack.c.l.b16 %v762
      %v773 = vunpack.c.l.b16 %v769
      %v774 = vpack.c.b16 %v773, %v772
      %v776 = vmul.bf16 %v513, %v774
      %v777 = vmul.bf16 %v514, %v774
      %v778 = vmul.bf16 %v515, %v774
      %v779 = vmul.bf16 %v516, %v774
      %v780 = vunpack.c.l.bf16 %v776
      %v781 = vunpack.c.h.bf16 %v776
      %v782 = vunpack.c.l.bf16 %v777
      %v783 = vunpack.c.h.bf16 %v777
      %v784 = vunpack.c.l.bf16 %v778
      %v785 = vunpack.c.h.bf16 %v778
      %v786 = vunpack.c.l.bf16 %v779
      %v787 = vunpack.c.h.bf16 %v779
      %v788 = vadd.f32 %v748, %v780
      %v789 = vadd.f32 %v749, %v781
      %v790 = vadd.f32 %v750, %v782
      %v791 = vadd.f32 %v751, %v783
      %v792 = vadd.f32 %v752, %v784
      %v793 = vadd.f32 %v753, %v785
      %v794 = vadd.f32 %v754, %v786
      %v795 = vadd.f32 %v755, %v787
      %v796 = vlaneseq
      %v797 = vshrl.u32 %v796, 7
      %v798 = vsub.s32 1, %v797
      %v799 = vrot.slane %v719, %v798
      %v800 = vlaneseq
      %v801 = vshrl.u32 %v800, 7
      %v802 = vsub.s32 1, %v801
      %v803 = vrot.slane %v726, %v802
      %v804 = vmul.bf16 %v699, %v799
      %v805 = vmul.bf16 %v700, %v803
      %v806 = vmul.bf16 %v701, %v799
      %v807 = vmul.bf16 %v702, %v803
      %v808 = vmul.bf16 %v703, %v799
      %v809 = vmul.bf16 %v704, %v803
      %v810 = vmul.bf16 %v705, %v799
      %v811 = vmul.bf16 %v706, %v803
      %v812 = vunpack.c.l.bf16 %v804
      %v813 = vunpack.c.l.bf16 %v805
      %v814 = vunpack.c.l.bf16 %v806
      %v815 = vunpack.c.l.bf16 %v807
      %v816 = vunpack.c.l.bf16 %v808
      %v817 = vunpack.c.l.bf16 %v809
      %v818 = vunpack.c.l.bf16 %v810
      %v819 = vunpack.c.l.bf16 %v811
      %v820 = vadd.f32 %v788, %v812
      %v821 = vadd.f32 %v789, %v813
      %v822 = vadd.f32 %v790, %v814
      %v823 = vadd.f32 %v791, %v815
      %v824 = vadd.f32 %v792, %v816
      %v825 = vadd.f32 %v793, %v817
      %v826 = vadd.f32 %v794, %v818
      %v827 = vadd.f32 %v795, %v819
      %v828 = vlaneseq
      %v829 = vshrl.u32 %v828, 7
      %v830 = vsub.s32 1, %v829
      %v831 = vrot.slane %v757, %v830
      %v832 = vlaneseq
      %v833 = vshrl.u32 %v832, 7
      %v834 = vsub.s32 1, %v833
      %v835 = vrot.slane %v764, %v834
      %v836 = vmul.bf16 %v650, %v831
      %v837 = vmul.bf16 %v651, %v835
      %v838 = vmul.bf16 %v652, %v831
      %v839 = vmul.bf16 %v653, %v835
      %v840 = vmul.bf16 %v654, %v831
      %v841 = vmul.bf16 %v655, %v835
      %v842 = vmul.bf16 %v656, %v831
      %v843 = vmul.bf16 %v657, %v835
      %v844 = vunpack.c.l.bf16 %v836
      %v845 = vunpack.c.l.bf16 %v837
      %v846 = vunpack.c.l.bf16 %v838
      %v847 = vunpack.c.l.bf16 %v839
      %v848 = vunpack.c.l.bf16 %v840
      %v849 = vunpack.c.l.bf16 %v841
      %v850 = vunpack.c.l.bf16 %v842
      %v851 = vunpack.c.l.bf16 %v843
      %v852 = vadd.f32 %v820, %v844
      %v853 = vadd.f32 %v821, %v845
      %v854 = vadd.f32 %v822, %v846
      %v855 = vadd.f32 %v823, %v847
      %v856 = vadd.f32 %v824, %v848
      %v857 = vadd.f32 %v825, %v849
      %v858 = vadd.f32 %v826, %v850
      %v859 = vadd.f32 %v827, %v851
      %v860 = vlaneseq
      %v861 = vshrl.u32 %v860, 7
      %v862 = vsub.s32 2, %v861
      %v863 = vrot.slane %v719, %v862
      %v864 = vlaneseq
      %v865 = vshrl.u32 %v864, 7
      %v866 = vsub.s32 2, %v865
      %v867 = vrot.slane %v726, %v866
      %v870 = vunpack.c.l.b16 %v863
      %v871 = vunpack.c.l.b16 %v867
      %v872 = vpack.c.b16 %v871, %v870
      %v874 = vmul.bf16 %v514, %v872
      %v875 = vmul.bf16 %v515, %v872
      %v876 = vmul.bf16 %v516, %v872
      %v877 = vmul.bf16 %v517, %v872
      %v878 = vunpack.c.l.bf16 %v874
      %v879 = vunpack.c.h.bf16 %v874
      %v880 = vunpack.c.l.bf16 %v875
      %v881 = vunpack.c.h.bf16 %v875
      %v882 = vunpack.c.l.bf16 %v876
      %v883 = vunpack.c.h.bf16 %v876
      %v884 = vunpack.c.l.bf16 %v877
      %v885 = vunpack.c.h.bf16 %v877
      %v886 = vadd.f32 %v852, %v878
      %v887 = vadd.f32 %v853, %v879
      %v888 = vadd.f32 %v854, %v880
      %v889 = vadd.f32 %v855, %v881
      %v890 = vadd.f32 %v856, %v882
      %v891 = vadd.f32 %v857, %v883
      %v892 = vadd.f32 %v858, %v884
      %v893 = vadd.f32 %v859, %v885
      %v894 = vlaneseq
      %v895 = vshrl.u32 %v894, 7
      %v896 = vsub.s32 2, %v895
      %v897 = vrot.slane %v757, %v896
      %v898 = vlaneseq
      %v899 = vshrl.u32 %v898, 7
      %v900 = vsub.s32 2, %v899
      %v901 = vrot.slane %v764, %v900
      %v902 = vmul.bf16 %v701, %v897
      %v903 = vmul.bf16 %v702, %v901
      %v904 = vmul.bf16 %v703, %v897
      %v905 = vmul.bf16 %v704, %v901
      %v906 = vmul.bf16 %v705, %v897
      %v907 = vmul.bf16 %v706, %v901
      %v908 = vmul.bf16 %v707, %v897
      %v909 = vmul.bf16 %v708, %v901
      %v910 = vunpack.c.l.bf16 %v902
      %v911 = vunpack.c.l.bf16 %v903
      %v912 = vunpack.c.l.bf16 %v904
      %v913 = vunpack.c.l.bf16 %v905
      %v914 = vunpack.c.l.bf16 %v906
      %v915 = vunpack.c.l.bf16 %v907
      %v916 = vunpack.c.l.bf16 %v908
      %v917 = vunpack.c.l.bf16 %v909
      %v918 = vadd.f32 %v886, %v910
      %v919 = vadd.f32 %v887, %v911
      %v920 = vadd.f32 %v888, %v912
      %v921 = vadd.f32 %v889, %v913
      %v922 = vadd.f32 %v890, %v914
      %v923 = vadd.f32 %v891, %v915
      %v924 = vadd.f32 %v892, %v916
      %v925 = vadd.f32 %v893, %v917
      %v926 = vlaneseq
      %v927 = vshrl.u32 %v926, 7
      %v928 = vsub.s32 3, %v927
      %v929 = vrot.slane %v719, %v928
      %v930 = vlaneseq
      %v931 = vshrl.u32 %v930, 7
      %v932 = vsub.s32 3, %v931
      %v933 = vrot.slane %v726, %v932
      %v934 = vmul.bf16 %v652, %v929
      %v935 = vmul.bf16 %v653, %v933
      %v936 = vmul.bf16 %v654, %v929
      %v937 = vmul.bf16 %v655, %v933
      %v938 = vmul.bf16 %v656, %v929
      %v939 = vmul.bf16 %v657, %v933
      %v940 = vmul.bf16 %v658, %v929
      %v941 = vmul.bf16 %v659, %v933
      %v942 = vunpack.c.l.bf16 %v934
      %v943 = vunpack.c.l.bf16 %v935
      %v944 = vunpack.c.l.bf16 %v936
      %v945 = vunpack.c.l.bf16 %v937
      %v946 = vunpack.c.l.bf16 %v938
      %v947 = vunpack.c.l.bf16 %v939
      %v948 = vunpack.c.l.bf16 %v940
      %v949 = vunpack.c.l.bf16 %v941
      %v950 = vadd.f32 %v918, %v942
      %v951 = vadd.f32 %v919, %v943
      %v952 = vadd.f32 %v920, %v944
      %v953 = vadd.f32 %v921, %v945
      %v954 = vadd.f32 %v922, %v946
      %v955 = vadd.f32 %v923, %v947
      %v956 = vadd.f32 %v924, %v948
      %v957 = vadd.f32 %v925, %v949
      %v958 = vlaneseq
      %v959 = vshrl.u32 %v958, 7
      %v960 = vsub.s32 3, %v959
      %v961 = vrot.slane %v757, %v960
      %v962 = vlaneseq
      %v963 = vshrl.u32 %v962, 7
      %v964 = vsub.s32 3, %v963
      %v965 = vrot.slane %v764, %v964
      %v968 = vunpack.c.l.b16 %v961
      %v969 = vunpack.c.l.b16 %v965
      %v970 = vpack.c.b16 %v969, %v968
      %v972 = vmul.bf16 %v515, %v970
      %v973 = vmul.bf16 %v516, %v970
      %v974 = vmul.bf16 %v517, %v970
      %v975 = vmul.bf16 %v518, %v970
      %v976 = vunpack.c.l.bf16 %v972
      %v977 = vunpack.c.h.bf16 %v972
      %v978 = vunpack.c.l.bf16 %v973
      %v979 = vunpack.c.h.bf16 %v973
      %v980 = vunpack.c.l.bf16 %v974
      %v981 = vunpack.c.h.bf16 %v974
      %v982 = vunpack.c.l.bf16 %v975
      %v983 = vunpack.c.h.bf16 %v975
      %v984 = vadd.f32 %v950, %v976
      %v985 = vadd.f32 %v951, %v977
      %v986 = vadd.f32 %v952, %v978
      %v987 = vadd.f32 %v953, %v979
      %v988 = vadd.f32 %v954, %v980
      %v989 = vadd.f32 %v955, %v981
      %v990 = vadd.f32 %v956, %v982
      %v991 = vadd.f32 %v957, %v983
      %v993 = vunpack.c.l.b16 %v712
      %v994 = vunpack.c.h.b16 %v712
      %v995 = vpack.c.b16 %v993, %v993
      %v996 = vpack.c.b16 %v994, %v994
      %v998 = vpack.i.b16 %v995, %v995
      %v1000 = vlaneseq
      %v1001 = vshrl.u32 %v1000, 7
      %v1002 = vsub.s32 0, %v1001
      %v1003 = vrot.slane %v998, %v1002
      %v1005 = vpack.i.b16 %v996, %v996
      %v1007 = vlaneseq
      %v1008 = vshrl.u32 %v1007, 7
      %v1009 = vsub.s32 0, %v1008
      %v1010 = vrot.slane %v1005, %v1009
      %v1011 = vmul.bf16 %v703, %v1003
      %v1012 = vmul.bf16 %v704, %v1010
      %v1013 = vmul.bf16 %v705, %v1003
      %v1014 = vmul.bf16 %v706, %v1010
      %v1015 = vmul.bf16 %v707, %v1003
      %v1016 = vmul.bf16 %v708, %v1010
      %v1017 = vmul.bf16 %v709, %v1003
      %v1018 = vmul.bf16 %v710, %v1010
      %v1019 = vunpack.c.l.bf16 %v1011
      %v1020 = vunpack.c.l.bf16 %v1012
      %v1021 = vunpack.c.l.bf16 %v1013
      %v1022 = vunpack.c.l.bf16 %v1014
      %v1023 = vunpack.c.l.bf16 %v1015
      %v1024 = vunpack.c.l.bf16 %v1016
      %v1025 = vunpack.c.l.bf16 %v1017
      %v1026 = vunpack.c.l.bf16 %v1018
      %v1027 = vadd.f32 %v984, %v1019
      %v1028 = vadd.f32 %v985, %v1020
      %v1029 = vadd.f32 %v986, %v1021
      %v1030 = vadd.f32 %v987, %v1022
      %v1031 = vadd.f32 %v988, %v1023
      %v1032 = vadd.f32 %v989, %v1024
      %v1033 = vadd.f32 %v990, %v1025
      %v1034 = vadd.f32 %v991, %v1026
      %v1035 = vld [vmem:[%s2] sm:$0x3]
      %v1037 = vlaneseq
      %v1038 = vshrl.u32 %v1037, 7
      %v1039 = vsub.s32 0, %v1038
      %v1040 = vrot.slane %v1035, %v1039
      %v1041 = vlaneseq
      %v1042 = vshrl.u32 %v1041, 7
      %v1043 = vsub.s32 1, %v1042
      %v1044 = vrot.slane %v1035, %v1043
      %v1047 = vmul.f32 %v1027, %v1040
      %v1048 = vmul.f32 %v1028, %v1044
      %v1049 = vmul.f32 %v1029, %v1040
      %v1050 = vmul.f32 %v1030, %v1044
      %v1051 = vmul.f32 %v1031, %v1040
      %v1052 = vmul.f32 %v1032, %v1044
      %v1053 = vmul.f32 %v1033, %v1040
      %v1054 = vmul.f32 %v1034, %v1044
      %v1055 = vld [vmem:[%s3] sm:$0x3]
      %v1057 = vlaneseq
      %v1058 = vshrl.u32 %v1057, 7
      %v1059 = vsub.s32 0, %v1058
      %v1060 = vrot.slane %v1055, %v1059
      %v1061 = vlaneseq
      %v1062 = vshrl.u32 %v1061, 7
      %v1063 = vsub.s32 1, %v1062
      %v1064 = vrot.slane %v1055, %v1063
      %v1067 = vadd.f32 %v1047, %v1060
      %v1068 = vadd.f32 %v1048, %v1064
      %v1069 = vadd.f32 %v1049, %v1060
      %v1070 = vadd.f32 %v1050, %v1064
      %v1071 = vadd.f32 %v1051, %v1060
      %v1072 = vadd.f32 %v1052, %v1064
      %v1073 = vadd.f32 %v1053, %v1060
      %v1074 = vadd.f32 %v1054, %v1064
      %v1075 = vxor.u32 %v1067, 2147483648
      %v1076 = vxor.u32 %v1068, 2147483648
      %v1077 = vxor.u32 %v1069, 2147483648
      %v1078 = vxor.u32 %v1070, 2147483648
      %v1079 = vxor.u32 %v1071, 2147483648
      %v1080 = vxor.u32 %v1072, 2147483648
      %v1081 = vxor.u32 %v1073, 2147483648
      %v1082 = vxor.u32 %v1074, 2147483648
      %v1083 = vmul.f32 %v1075, 1.442695
      %v1084 = vpow.pop %v1083
      %v1085 = vmul.f32 %v1076, 1.442695
      %v1086 = vpow.pop %v1085
      %v1087 = vmul.f32 %v1077, 1.442695
      %v1088 = vpow.pop %v1087
      %v1089 = vmul.f32 %v1078, 1.442695
      %v1090 = vpow.pop %v1089
      %v1091 = vmul.f32 %v1079, 1.442695
      %v1092 = vpow.pop %v1091
      %v1093 = vmul.f32 %v1080, 1.442695
      %v1094 = vpow.pop %v1093
      %v1095 = vmul.f32 %v1081, 1.442695
      %v1096 = vpow.pop %v1095
      %v1097 = vmul.f32 %v1082, 1.442695
      %v1098 = vpow.pop %v1097
      %v1099 = vadd.f32 %v1084, 1.0
      %v1100 = vadd.f32 %v1086, 1.0
      %v1101 = vadd.f32 %v1088, 1.0
      %v1102 = vadd.f32 %v1090, 1.0
      %v1103 = vadd.f32 %v1092, 1.0
      %v1104 = vadd.f32 %v1094, 1.0
      %v1105 = vadd.f32 %v1096, 1.0
      %v1106 = vadd.f32 %v1098, 1.0
      %v1107 = vrcp.pop %v1099
      %v1108 = vmul.f32 1.0, %v1107
      %v1109 = vrcp.pop %v1100
      %v1110 = vmul.f32 1.0, %v1109
      %v1111 = vrcp.pop %v1101
      %v1112 = vmul.f32 1.0, %v1111
      %v1113 = vrcp.pop %v1102
      %v1114 = vmul.f32 1.0, %v1113
      %v1115 = vrcp.pop %v1103
      %v1116 = vmul.f32 1.0, %v1115
      %v1117 = vrcp.pop %v1104
      %v1118 = vmul.f32 1.0, %v1117
      %v1119 = vrcp.pop %v1105
      %v1120 = vmul.f32 1.0, %v1119
      %v1121 = vrcp.pop %v1106
      %v1122 = vmul.f32 1.0, %v1121
      %v1123 = vmul.f32 %v1067, %v1108
      %v1124 = vmul.f32 %v1068, %v1110
      %v1125 = vmul.f32 %v1069, %v1112
      %v1126 = vmul.f32 %v1070, %v1114
      %v1127 = vmul.f32 %v1071, %v1116
      %v1128 = vmul.f32 %v1072, %v1118
      %v1129 = vmul.f32 %v1073, %v1120
      %v1130 = vmul.f32 %v1074, %v1122
      %v1131 = vpack.c.bf16 %v1123, %v1123
      %v1132 = vpack.c.bf16 %v1124, %v1124
      %v1133 = vpack.c.bf16 %v1125, %v1125
      %v1134 = vpack.c.bf16 %v1126, %v1126
      %v1135 = vpack.c.bf16 %v1127, %v1127
      %v1136 = vpack.c.bf16 %v1128, %v1128
      %v1137 = vpack.c.bf16 %v1129, %v1129
      %v1138 = vpack.c.bf16 %v1130, %v1130
      %v1147 = vunpack.c.l.b16 %v1131
      %v1148 = vunpack.c.l.b16 %v1132
      %v1149 = vunpack.c.l.b16 %v1133
      %v1150 = vunpack.c.l.b16 %v1134
      %v1151 = vunpack.c.l.b16 %v1135
      %v1152 = vunpack.c.l.b16 %v1136
      %v1153 = vunpack.c.l.b16 %v1137
      %v1154 = vunpack.c.l.b16 %v1138
      %v1155 = vpack.c.b16 %v1148, %v1147
      %v1156 = vpack.c.b16 %v1150, %v1149
      %v1157 = vpack.c.b16 %v1152, %v1151
      %v1158 = vpack.c.b16 %v1154, %v1153
      %1163 = vst [vmem:[%s317] sm:$0xff] %v1155
      %1164 = vst [vmem:[%s317 + $0x8] sm:$0xff] %v1156
      %1165 = vst [vmem:[%s317 + $0x10] sm:$0xff] %v1157
      %1166 = vst [vmem:[%s317 + $0x18] sm:$0xff] %v1158
      // Predicated region
      $region170: #{feature_extractor_forward.21} parent=47 // pred_check
        %p1167 = pneg %p443
      $region171: #{feature_extractor_forward.21} parent=47 // pred_check_branch
        %1169 = sbr.rel (%p1167) target = $region173
      $region172: #{feature_extractor_forward.21} parent=47 // pred_region
        %v1170 = vlaneseq
        %vm1171 = vcmp.ge.s32.totalorder %v1170, 0
        %vm1172 = vcmp.lt.s32.totalorder %v1170, 256
        %vm1173 = vmand %vm1171, %vm1172
        %1174 = vst.msk [vmem:[#allocation3] sm:$0x3] %vm1173, 0.0
      $region173: #{feature_extractor_forward.21} parent=47 // pred_fallthru
        _
      %v1175 = vld [vmem:[#allocation3] sm:$0x3]
      %v1176 = vadd.f32 %v1123, %v1125
      %v1177 = vadd.f32 %v1176, %v1127
      %v1178 = vadd.f32 %v1177, %v1129
      %v1179 = vrot.slane %v1178, 4
      %v1180 = vadd.f32 %v1178, %v1179
      %v1181 = vrot.slane %v1180, 2
      %v1182 = vadd.f32 %v1180, %v1181
      %v1183 = vrot.slane %v1182, 1
      %v1184 = vadd.f32 %v1182, %v1183
      %v1185 = vadd.f32 %v1124, %v1126
      %v1186 = vadd.f32 %v1185, %v1128
      %v1187 = vadd.f32 %v1186, %v1130
      %v1188 = vrot.slane %v1187, 4
      %v1189 = vadd.f32 %v1187, %v1188
      %v1190 = vrot.slane %v1189, 2
      %v1191 = vadd.f32 %v1189, %v1190
      %v1192 = vrot.slane %v1191, 1
      %v1193 = vadd.f32 %v1191, %v1192
      %v1196 = vcombine.low %v1184, %v1193
      %v1198 = vunpack.c.l.s4 1966171168
      %v1199 = vunpack.c.0.s8 %v1198
      %v1200 = vlaneseq
      %v1201 = vshrl.u32 %v1200, 7
      %v1202 = vsub.s32 %v1199, %v1201
      %v1203 = vrot.slane %v1196, %v1202
      %v1205 = vunpack.c.l.s4 1966171168
      %v1206 = vunpack.c.0.s8 %v1205
      %v1207 = vlaneseq
      %v1208 = vshrl.u32 %v1207, 7
      %v1209 = vsub.s32 %v1206, %v1208
      %v1210 = vrot.slane %v1203, %v1209
      %v1212 = vadd.f32 %v1175, %v1210
      %v1213 = vlaneseq
      %vm1214 = vcmp.ge.s32.totalorder %v1213, 0
      %vm1215 = vcmp.lt.s32.totalorder %v1213, 256
      %vm1216 = vmand %vm1214, %vm1215
      %1217 = vst.msk [vmem:[#allocation3] sm:$0x3] %vm1216, %v1212
      // Predicated region
      $region174: #{feature_extractor_forward.21} parent=47 // pred_check
        %p1218 = pneg %p507
      $region175: #{feature_extractor_forward.21} parent=47 // pred_check_branch
        %1220 = sbr.rel (%p1218) target = $region177
      $region176: #{feature_extractor_forward.21} parent=47 // pred_region
        %v1221 = vld [vmem:[#allocation3] sm:$0x3]
        %v1222 = vmul.f32 %v1221, 0.015625
        %v1223 = vld [vmem:[%s4] sm:$0xff]
        %v1224 = vld [vmem:[%s4 + $0x8] sm:$0xff]
        %v1225 = vld [vmem:[%s4 + $0x10] sm:$0xff]
        %v1226 = vld [vmem:[%s4 + $0x18] sm:$0xff]
        %v1227 = vld [vmem:[%s4 + $0x20] sm:$0xff]
        %v1228 = vld [vmem:[%s4 + $0x28] sm:$0xff]
        %v1229 = vld [vmem:[%s4 + $0x30] sm:$0xff]
        %v1230 = vld [vmem:[%s4 + $0x38] sm:$0xff]
        %v1231 = vld [vmem:[%s4 + $0x40] sm:$0xff]
        %v1232 = vld [vmem:[%s4 + $0x48] sm:$0xff]
        %v1233 = vld [vmem:[%s4 + $0x50] sm:$0xff]
        %v1234 = vld [vmem:[%s4 + $0x58] sm:$0xff]
        %v1235 = vld [vmem:[%s4 + $0x60] sm:$0xff]
        %v1236 = vld [vmem:[%s4 + $0x68] sm:$0xff]
        %v1237 = vld [vmem:[%s4 + $0x70] sm:$0xff]
        %v1238 = vld [vmem:[%s4 + $0x78] sm:$0xff]
        %v1239 = vld [vmem:[%s4 + $0x80] sm:$0xff]
        %v1240 = vld [vmem:[%s4 + $0x88] sm:$0xff]
        %v1241 = vld [vmem:[%s4 + $0x90] sm:$0xff]
        %v1242 = vld [vmem:[%s4 + $0x98] sm:$0xff]
        %v1243 = vld [vmem:[%s4 + $0xa0] sm:$0xff]
        %v1244 = vld [vmem:[%s4 + $0xa8] sm:$0xff]
        %v1245 = vld [vmem:[%s4 + $0xb0] sm:$0xff]
        %v1246 = vld [vmem:[%s4 + $0xb8] sm:$0xff]
        %v1247 = vld [vmem:[%s4 + $0xc0] sm:$0xff]
        %v1248 = vld [vmem:[%s4 + $0xc8] sm:$0xff]
        %v1249 = vld [vmem:[%s4 + $0xd0] sm:$0xff]
        %v1250 = vld [vmem:[%s4 + $0xd8] sm:$0xff]
        %v1251 = vld [vmem:[%s4 + $0xe0] sm:$0xff]
        %v1252 = vld [vmem:[%s4 + $0xe8] sm:$0xff]
        %v1253 = vld [vmem:[%s4 + $0xf0] sm:$0xff]
        %v1254 = vld [vmem:[%s4 + $0xf8] sm:$0xff]
        %v1255 = vld [vmem:[%s5] sm:$0x1]
        %v1257 = vlaneseq
        %v1258 = vshrl.u32 %v1257, 7
        %v1259 = vsub.s32 0, %v1258
        %v1260 = vrot.slane %v1222, %v1259
        %v1261 = vlaneseq
        %v1262 = vshrl.u32 %v1261, 7
        %v1263 = vsub.s32 1, %v1262
        %v1264 = vrot.slane %v1222, %v1263
        %1267 = vmatprep.subr.mxu0 0.0
        %1268 = vmatpush1.msra.mxu0 %v1238
        %1269 = vmatprep.subr.mxu0 0.0
        %1270 = vmatpush1.msra.mxu0 %v1237
        %1271 = vmatprep.subr.mxu0 0.0
        %1272 = vmatpush1.msra.mxu0 %v1236
        %1273 = vmatprep.subr.mxu0 0.0
        %1274 = vmatpush1.msra.mxu0 %v1235
        %1275 = vmatprep.subr.mxu0 0.0
        %1276 = vmatpush1.msra.mxu0 %v1234
        %1277 = vmatprep.subr.mxu0 0.0
        %1278 = vmatpush1.msra.mxu0 %v1233
        %1279 = vmatprep.subr.mxu0 0.0
        %1280 = vmatpush1.msra.mxu0 %v1232
        %1281 = vmatprep.subr.mxu0 0.0
        %1282 = vmatpush1.msra.mxu0 %v1231
        %1283 = vmatprep.subr.mxu0 0.0
        %1284 = vmatpush1.msra.mxu0 %v1230
        %1285 = vmatprep.subr.mxu0 0.0
        %1286 = vmatpush1.msra.mxu0 %v1229
        %1287 = vmatprep.subr.mxu0 0.0
        %1288 = vmatpush1.msra.mxu0 %v1228
        %1289 = vmatprep.subr.mxu0 0.0
        %1290 = vmatpush1.msra.mxu0 %v1227
        %1291 = vmatprep.subr.mxu0 0.0
        %1292 = vmatpush1.msra.mxu0 %v1226
        %1293 = vmatprep.subr.mxu0 0.0
        %1294 = vmatpush1.msra.mxu0 %v1225
        %1295 = vmatprep.subr.mxu0 0.0
        %1296 = vmatpush1.msra.mxu0 %v1224
        %1297 = vmatprep.subr.mxu0 0.0
        %1298 = vmatpush1.msra.mxu0 %v1223
        %1299 = vmatprep.subr.mxu0 0.0
        %1300 = vmatpush2.msra.mxu0 %v1254
        %1301 = vmatprep.subr.mxu0 0.0
        %1302 = vmatpush2.msra.mxu0 %v1253
        %1303 = vmatprep.subr.mxu0 0.0
        %1304 = vmatpush2.msra.mxu0 %v1252
        %1305 = vmatprep.subr.mxu0 0.0
        %1306 = vmatpush2.msra.mxu0 %v1251
        %1307 = vmatprep.subr.mxu0 0.0
        %1308 = vmatpush2.msra.mxu0 %v1250
        %1309 = vmatprep.subr.mxu0 0.0
        %1310 = vmatpush2.msra.mxu0 %v1249
        %1311 = vmatprep.subr.mxu0 0.0
        %1312 = vmatpush2.msra.mxu0 %v1248
        %1313 = vmatprep.subr.mxu0 0.0
        %1314 = vmatpush2.msra.mxu0 %v1247
        %1315 = vmatprep.subr.mxu0 0.0
        %1316 = vmatpush2.msra.mxu0 %v1246
        %1317 = vmatprep.subr.mxu0 0.0
        %1318 = vmatpush2.msra.mxu0 %v1245
        %1319 = vmatprep.subr.mxu0 0.0
        %1320 = vmatpush2.msra.mxu0 %v1244
        %1321 = vmatprep.subr.mxu0 0.0
        %1322 = vmatpush2.msra.mxu0 %v1243
        %1323 = vmatprep.subr.mxu0 0.0
        %1324 = vmatpush2.msra.mxu0 %v1242
        %1325 = vmatprep.subr.mxu0 0.0
        %1326 = vmatpush2.msra.mxu0 %v1241
        %1327 = vmatprep.subr.mxu0 0.0
        %1328 = vmatpush2.msra.mxu0 %v1240
        %1329 = vmatprep.subr.mxu0 0.0
        %1330 = vmatpush2.msra.mxu0 %v1239
        %1331 = vmatprep.mubr.f32.mxu0 %v1264
        %1332 = vmatmul.mubr.f32.gmra.mxu0 %v1260
        %v1333 = vpop.f32.mrf.mxu0
        %v1334 = vadd.f32 %v1255, %v1333
        %v1335 = vpop.f32.mrf.mxu0
        %1336 = vdwg.mxu0
        %v1337 = vxor.u32 %v1334, 2147483648
        %v1338 = vmul.f32 %v1337, 1.442695
        %v1339 = vpow.pop %v1338
        %v1340 = vadd.f32 %v1339, 1.0
        %v1341 = vrcp.pop %v1340
        %v1342 = vmul.f32 1.0, %v1341
        %v1343 = vmul.f32 %v1334, %v1342
        %v1344 = vld [vmem:[%s6] sm:$0xff]
        %v1345 = vld [vmem:[%s6 + $0x8] sm:$0xff]
        %v1346 = vld [vmem:[%s6 + $0x10] sm:$0xff]
        %v1347 = vld [vmem:[%s6 + $0x18] sm:$0xff]
        %v1348 = vld [vmem:[%s6 + $0x20] sm:$0xff]
        %v1349 = vld [vmem:[%s6 + $0x28] sm:$0xff]
        %v1350 = vld [vmem:[%s6 + $0x30] sm:$0xff]
        %v1351 = vld [vmem:[%s6 + $0x38] sm:$0xff]
        %v1352 = vld [vmem:[%s6 + $0x40] sm:$0xff]
        %v1353 = vld [vmem:[%s6 + $0x48] sm:$0xff]
        %v1354 = vld [vmem:[%s6 + $0x50] sm:$0xff]
        %v1355 = vld [vmem:[%s6 + $0x58] sm:$0xff]
        %v1356 = vld [vmem:[%s6 + $0x60] sm:$0xff]
        %v1357 = vld [vmem:[%s6 + $0x68] sm:$0xff]
        %v1358 = vld [vmem:[%s6 + $0x70] sm:$0xff]
        %v1359 = vld [vmem:[%s6 + $0x78] sm:$0xff]
        %v1360 = vld [vmem:[%s6 + $0x80] sm:$0xff]
        %v1361 = vld [vmem:[%s6 + $0x88] sm:$0xff]
        %v1362 = vld [vmem:[%s6 + $0x90] sm:$0xff]
        %v1363 = vld [vmem:[%s6 + $0x98] sm:$0xff]
        %v1364 = vld [vmem:[%s6 + $0xa0] sm:$0xff]
        %v1365 = vld [vmem:[%s6 + $0xa8] sm:$0xff]
        %v1366 = vld [vmem:[%s6 + $0xb0] sm:$0xff]
        %v1367 = vld [vmem:[%s6 + $0xb8] sm:$0xff]
        %v1368 = vld [vmem:[%s6 + $0xc0] sm:$0xff]
        %v1369 = vld [vmem:[%s6 + $0xc8] sm:$0xff]
        %v1370 = vld [vmem:[%s6 + $0xd0] sm:$0xff]
        %v1371 = vld [vmem:[%s6 + $0xd8] sm:$0xff]
        %v1372 = vld [vmem:[%s6 + $0xe0] sm:$0xff]
        %v1373 = vld [vmem:[%s6 + $0xe8] sm:$0xff]
        %v1374 = vld [vmem:[%s6 + $0xf0] sm:$0xff]
        %v1375 = vld [vmem:[%s6 + $0xf8] sm:$0xff]
        %v1376 = vld [vmem:[%s7] sm:$0x3]
        %v1378 = vlaneseq
        %v1379 = vshrl.u32 %v1378, 7
        %v1380 = vsub.s32 0, %v1379
        %v1381 = vrot.slane %v1376, %v1380
        %v1382 = vlaneseq
        %v1383 = vshrl.u32 %v1382, 7
        %v1384 = vsub.s32 1, %v1383
        %v1385 = vrot.slane %v1376, %v1384
        %1388 = vmatprep.subr.mxu0 %v1375
        %1389 = vmatpush1.msra.mxu0 %v1374
        %1390 = vmatprep.subr.mxu0 %v1373
        %1391 = vmatpush1.msra.mxu0 %v1372
        %1392 = vmatprep.subr.mxu0 %v1371
        %1393 = vmatpush1.msra.mxu0 %v1370
        %1394 = vmatprep.subr.mxu0 %v1369
        %1395 = vmatpush1.msra.mxu0 %v1368
        %1396 = vmatprep.subr.mxu0 %v1367
        %1397 = vmatpush1.msra.mxu0 %v1366
        %1398 = vmatprep.subr.mxu0 %v1365
        %1399 = vmatpush1.msra.mxu0 %v1364
        %1400 = vmatprep.subr.mxu0 %v1363
        %1401 = vmatpush1.msra.mxu0 %v1362
        %1402 = vmatprep.subr.mxu0 %v1361
        %1403 = vmatpush1.msra.mxu0 %v1360
        %1404 = vmatprep.subr.mxu0 %v1359
        %1405 = vmatpush1.msra.mxu0 %v1358
        %1406 = vmatprep.subr.mxu0 %v1357
        %1407 = vmatpush1.msra.mxu0 %v1356
        %1408 = vmatprep.subr.mxu0 %v1355
        %1409 = vmatpush1.msra.mxu0 %v1354
        %1410 = vmatprep.subr.mxu0 %v1353
        %1411 = vmatpush1.msra.mxu0 %v1352
        %1412 = vmatprep.subr.mxu0 %v1351
        %1413 = vmatpush1.msra.mxu0 %v1350
        %1414 = vmatprep.subr.mxu0 %v1349
        %1415 = vmatpush1.msra.mxu0 %v1348
        %1416 = vmatprep.subr.mxu0 %v1347
        %1417 = vmatpush1.msra.mxu0 %v1346
        %1418 = vmatprep.subr.mxu0 %v1345
        %1419 = vmatpush1.msra.mxu0 %v1344
        %1420 = vmatprep.subr.mxu0 0.0
        %1421 = vmatpush2.msra.mxu0 0.0
        %1422 = vmatprep.subr.mxu0 0.0
        %1423 = vmatpush2.msra.mxu0 0.0
        %1424 = vmatprep.subr.mxu0 0.0
        %1425 = vmatpush2.msra.mxu0 0.0
        %1426 = vmatprep.subr.mxu0 0.0
        %1427 = vmatpush2.msra.mxu0 0.0
        %1428 = vmatprep.subr.mxu0 0.0
        %1429 = vmatpush2.msra.mxu0 0.0
        %1430 = vmatprep.subr.mxu0 0.0
        %1431 = vmatpush2.msra.mxu0 0.0
        %1432 = vmatprep.subr.mxu0 0.0
        %1433 = vmatpush2.msra.mxu0 0.0
        %1434 = vmatprep.subr.mxu0 0.0
        %1435 = vmatpush2.msra.mxu0 0.0
        %1436 = vmatprep.subr.mxu0 0.0
        %1437 = vmatpush2.msra.mxu0 0.0
        %1438 = vmatprep.subr.mxu0 0.0
        %1439 = vmatpush2.msra.mxu0 0.0
        %1440 = vmatprep.subr.mxu0 0.0
        %1441 = vmatpush2.msra.mxu0 0.0
        %1442 = vmatprep.subr.mxu0 0.0
        %1443 = vmatpush2.msra.mxu0 0.0
        %1444 = vmatprep.subr.mxu0 0.0
        %1445 = vmatpush2.msra.mxu0 0.0
        %1446 = vmatprep.subr.mxu0 0.0
        %1447 = vmatpush2.msra.mxu0 0.0
        %1448 = vmatprep.subr.mxu0 0.0
        %1449 = vmatpush2.msra.mxu0 0.0
        %1450 = vmatprep.subr.mxu0 0.0
        %1451 = vmatpush2.msra.mxu0 0.0
        %1452 = vmatprep.mubr.f32.mxu0 0.0
        %1453 = vmatmul.mubr.f32.gmra.mxu0 %v1343
        %v1454 = vpop.f32.mrf.mxu0
        %v1455 = vadd.f32 %v1381, %v1454
        %v1456 = vpop.f32.mrf.mxu0
        %v1457 = vadd.f32 %v1385, %v1456
        %1458 = vdwg.mxu0
        %v1459 = vxor.u32 %v1455, 2147483648
        %v1460 = vxor.u32 %v1457, 2147483648
        %v1461 = vmul.f32 %v1459, 1.442695
        %v1462 = vpow.pop %v1461
        %v1463 = vmul.f32 %v1460, 1.442695
        %v1464 = vpow.pop %v1463
        %v1465 = vadd.f32 %v1462, 1.0
        %v1466 = vadd.f32 %v1464, 1.0
        %v1467 = vrcp.pop %v1465
        %v1468 = vmul.f32 1.0, %v1467
        %v1469 = vrcp.pop %v1466
        %v1470 = vmul.f32 1.0, %v1469
        %v1471 = vpack.c.bf16 %v1468, %v1468
        %v1472 = vpack.c.bf16 %v1470, %v1470
        %v1475 = vcombine.low %v1471, %v1472
        %v1477 = vunpack.c.l.s4 1966171168
        %v1478 = vunpack.c.0.s8 %v1477
        %v1479 = vlaneseq
        %v1480 = vshrl.u32 %v1479, 7
        %v1481 = vsub.s32 %v1478, %v1480
        %v1482 = vrot.slane %v1475, %v1481
        %v1484 = vunpack.c.l.s4 1966171168
        %v1485 = vunpack.c.0.s8 %v1484
        %v1486 = vlaneseq
        %v1487 = vshrl.u32 %v1486, 7
        %v1488 = vsub.s32 %v1485, %v1487
        %v1489 = vrot.slane %v1482, %v1488
        %vm1491 = vcmask 1041409
        %vm1492 = vsmask.f32 1280
        %vm1493 = vmand %vm1491, %vm1492
        %vm1494 = vmor %vm1493, %vm647
        %v1495 = vld [vmem:[%s322] sm:$0x3]
        %v1496 = vsel %vm1494, %v1489, %v1495
        %1497 = vst [vmem:[%s322] sm:$0x3] %v1496
      $region177: #{feature_extractor_forward.21} parent=47 // pred_fallthru
        _
      %s1498 = smul.u32 4, %s26
      %p1499 = scmp.lt.s32.totalorder %s25, 1
      %s1500 = scalar_select %p1499, %s25, 1
      %p1501 = scmp.lt.s32.totalorder %s1498, 7
      %s1502 = scalar_select %p1501, %s1498, 7
      %s1503 = smul.addr %s1502, 2
      %s1504 = smul.addr %s1500, 16
      %s1505 = sadd.s32 %s1503, %s1504
      %s1506 = smul.addr %s1505, 4
      %s1507 = scalar_lea.vmem %s8, %s1506
      %p1508 = scmp.lt.s32.totalorder %s25, 1
      %s1509 = scalar_select %p1508, %s25, 1
      %s1510 = smul.addr %s1509, 2
      %s1511 = scalar_lea.vmem %s9, %s1510
      // Predicated region
      $region178: #{feature_extractor_forward.21} parent=47 // pred_check
        %p1512 = pneg %p200
      $region179: #{feature_extractor_forward.21} parent=47 // pred_check_branch
        %1514 = sbr.rel (%p1512) target = $region181
      $region180: #{feature_extractor_forward.21} parent=47 // pred_region
        %s1515 = smul.u32 4, %s26
      $region181: #{feature_extractor_forward.21} parent=47 // pred_fallthru
        _
      // Predicated region
      $region182: #{feature_extractor_forward.21} parent=47 // pred_check
        %p1516 = pneg %p226
      $region183: #{feature_extractor_forward.21} parent=47 // pred_check_branch
        %1518 = sbr.rel (%p1516) target = $region185
      $region184: #{feature_extractor_forward.21} parent=47 // pred_region
        _
      $region185: #{feature_extractor_forward.21} parent=47 // pred_fallthru
        _
    $region48: #{feature_extractor_forward.21} parent=5 // pred_fallthru
      _
    %p1519 = scmp.le.s32.totalorder 2, %s16
    // Predicated region
    $region186: #{feature_extractor_forward.21} parent=5 // pred_check
      %p1520 = pneg %p1519
    $region187: #{feature_extractor_forward.21} parent=5 // pred_check_branch
      %1522 = sbr.rel (%p1520) target = $region189
    $region188: #{feature_extractor_forward.21} parent=5 // pred_region
      %s1523 = ssub.s32 %s16, 2
      // Predicated region
      $region190: #{feature_extractor_forward.21} parent=188 // pred_check
        %p1524 = pneg %p206
      $region191: #{feature_extractor_forward.21} parent=188 // pred_check_branch
        %1526 = sbr.rel (%p1524) target = $region193
      $region192: #{feature_extractor_forward.21} parent=188 // pred_region
        %s1527 = smul.u32 4, %s28
        %p1528 = scmp.lt.s32.totalorder %s27, 1
        %s1529 = scalar_select %p1528, %s27, 1
        %p1530 = scmp.lt.s32.totalorder %s1527, 7
        %s1531 = scalar_select %p1530, %s1527, 7
        %s1532 = smul.addr %s1531, 2
        %s1533 = smul.addr %s1529, 16
        %s1534 = sadd.s32 %s1532, %s1533
        %s1535 = smul.addr %s1534, 4
        %s1536 = scalar_lea.vmem %s8, %s1535
      $region193: #{feature_extractor_forward.21} parent=188 // pred_fallthru
        _
      // Predicated region
      $region194: #{feature_extractor_forward.21} parent=188 // pred_check
        %p1537 = pneg %p232
      $region195: #{feature_extractor_forward.21} parent=188 // pred_check_branch
        %1539 = sbr.rel (%p1537) target = $region197
      $region196: #{feature_extractor_forward.21} parent=188 // pred_region
        %p1540 = scmp.lt.s32.totalorder %s27, 1
        %s1541 = scalar_select %p1540, %s27, 1
        %s1542 = smul.addr %s1541, 2
        %s1543 = scalar_lea.vmem %s9, %s1542
      $region197: #{feature_extractor_forward.21} parent=188 // pred_fallthru
        _
    $region189: #{feature_extractor_forward.21} parent=5 // pred_fallthru
      _
  $region6: #{feature_extractor_forward.21} parent=0 // loop_footer
    %s20 = sadd.s32 1, %s16
  $region7: #{feature_extractor_forward.21} parent=0 // loop_footer_branch
    %15 = sbr.rel target = $region3
  $region8: #{feature_extractor_forward.21} parent=0 // loop_exit
    _

</llo_original>
